<compile_context>
chip_gen: v7x
topology: tpu7x:2x2x1
jax: 0.10.0
libtpu: 0.0.40
codegen_flags: <defaults>
</compile_context>

<pallas_src>
import numpy as np
import jax
import jax.numpy as jnp
from jax import lax
from jax.experimental import pallas as pl
from jax.experimental.pallas import tpu as pltpu

IMG_C = 3
CPAD = 8            # intro input channels zero-padded to 8 (aligned tap stacking)
WIDTH = 16
DW = 2 * WIDTH      # dw_channel (DW_Expand=2) == FFN hidden (FFN_Expand=2)
H = 16
W = 16
HW = H * W
EPS = 1e-6

# ----- packed weight slab layout (row offsets / contraction widths) -----
_R_INTRO = 0                    # intro 3x3: (WIDTH, 9*CPAD) weight + bias col
_R_C1 = _R_INTRO + WIDTH        # conv1 (LN1 affine folded): (DW, WIDTH) + bias
_R_DW = _R_C1 + DW              # depthwise 3x3: (DW, 9) per-tap scales + bias
_R_SCA = _R_DW + DW             # SCA 1x1: (WIDTH, WIDTH) + bias
_R_C3 = _R_SCA + WIDTH          # conv3 (beta folded): (WIDTH, WIDTH) + bias
_R_C4 = _R_C3 + WIDTH           # conv4 (LN2 affine folded): (DW, WIDTH) + bias
_R_C5 = _R_C4 + DW              # conv5 (gamma folded): (WIDTH, WIDTH) + bias
_R_END = _R_C5 + WIDTH          # ending 3x3: (IMG_C, 9*WIDTH) + bias
_R_TOT = _R_END + IMG_C         # 163 rows
_K_INTRO = 9 * CPAD             # 72
_K_END = 9 * WIDTH              # 144
_SLAB_W = _K_END + 1            # 145 cols (last col of each block = bias)

_N_MASK = 9                     # aux rows 0..8 = per-tap masks (row 4 = ones)


def _tap_shifts(n):
    """Static lane-roll per tap k = ky*3 + kx: shifted[n] = x[n + dy*W + dx]."""
    shifts = []
    for ky in range(3):
        for kx in range(3):
            dy, dx = ky - 1, kx - 1
            shifts.append((-(dy * W + dx)) % n)
    return shifts


# --------------------------------- kernel ----------------------------------

def _nafknet_kernel(x_ref, aux_ref, w_ref, out_ref, stack_ref):
    # x_ref   : (CPAD, N), lane index = sample*HW + h*W + w, N = bt*HW
    # aux_ref : (9 + bt, N) constants: rows 0..8 tap boundary masks (row 4 is
    #           all ones), rows 9..9+bt per-sample broadcast matrix.
    # w_ref   : (_R_TOT, _SLAB_W) packed weight slab (constant across grid).
    # stack_ref: (_K_END + 1, N) VMEM scratch reused by both 3x3 convs.
    n = x_ref.shape[1]
    bt = n // HW
    shifts = _tap_shifts(n)

    def mask(k):
        return aux_ref[k:k + 1, :]                      # (1, N) 0/1 f32

    def tap(v, k):
        """Lane-rolled, boundary-masked copy of v for tap k."""
        s = shifts[k]
        t = v if s == 0 else pltpu.roll(v, shift=s, axis=1)
        return t if k == 4 else t * mask(k)

    def conv3x3(v, r0, cout, cin):
        """Dense 3x3 same-conv as ONE MXU matmul; taps streamed into the
        shared scratch (sublane-aligned offsets k*cin); bias folded via a
        constant-ones row at row 9*cin."""
        kdim = 9 * cin
        for k in range(9):
            stack_ref[k * cin:(k + 1) * cin, :] = tap(v, k)
        stack_ref[kdim:kdim + 1, :] = mask(4)           # ones row (bias fold)
        wmat = w_ref[r0:r0 + cout, 0:kdim + 1]          # bias in last column
        return jnp.dot(wmat, stack_ref[0:kdim + 1, :],
                       preferred_element_type=jnp.float32)

    def conv1x1(v, r0, cout, cin):
        wmat = w_ref[r0:r0 + cout, 0:cin]
        bias = w_ref[r0:r0 + cout, cin:cin + 1]
        return jnp.dot(wmat, v, preferred_element_type=jnp.float32) + bias

    # ------------------------------ forward ------------------------------
    x = x_ref[...].astype(jnp.float32)

    # intro: 3x3 conv (CPAD -> WIDTH), fused taps, K = 72 (+1 bias row)
    h0 = conv3x3(x, _R_INTRO, WIDTH, CPAD)              # (WIDTH, N)

    # ----- NAFBlock branch 1 -----
    mu = jnp.mean(h0, axis=0, keepdims=True)
    xc = h0 - mu
    var = jnp.mean(xc * xc, axis=0, keepdims=True)
    xn = xc * lax.rsqrt(var + EPS)          # LN1 affine folded into conv1
    t = conv1x1(xn, _R_C1, DW, WIDTH)                   # (DW, N)

    # depthwise 3x3 conv: streaming accumulate, <=2 taps live at a time
    acc = (w_ref[_R_DW:_R_DW + DW, 9:10]                # bias (DW, 1)
           + w_ref[_R_DW:_R_DW + DW, 4:5] * t)          # center tap (no roll)
    for k in (0, 1, 2, 3, 5, 6, 7, 8):
        acc = acc + w_ref[_R_DW:_R_DW + DW, k:k + 1] * tap(t, k)
    t = acc                                             # (DW, N)

    # SimpleGate
    t = t[:WIDTH, :] * t[WIDTH:, :]                     # (WIDTH, N)

    # SCA: per-sample global average pooling (MXU contraction over lanes)
    bcast = aux_ref[_N_MASK:_N_MASK + bt, :]            # (bt, N) block-diag 1s
    pooled = lax.dot_general(t, bcast, (((1,), (1,)), ((), ())),
                             preferred_element_type=jnp.float32) * (1.0 / HW)
    att = conv1x1(pooled, _R_SCA, WIDTH, WIDTH)         # (WIDTH, bt)
    t = t * jnp.dot(att, bcast, preferred_element_type=jnp.float32)

    t = conv1x1(t, _R_C3, WIDTH, WIDTH)                 # beta folded
    y = h0 + t

    # ----- NAFBlock branch 2 -----
    mu = jnp.mean(y, axis=0, keepdims=True)
    yc = y - mu
    var = jnp.mean(yc * yc, axis=0, keepdims=True)
    yn = yc * lax.rsqrt(var + EPS)          # LN2 affine folded into conv4
    t = conv1x1(yn, _R_C4, DW, WIDTH)                   # (DW, N)
    t = t[:WIDTH, :] * t[WIDTH:, :]                     # SimpleGate
    t = conv1x1(t, _R_C5, WIDTH, WIDTH)                 # gamma folded
    z = y + t

    # ending: 3x3 conv (WIDTH -> IMG_C), K = 144 (+1 bias row), + residual
    o = conv3x3(z, _R_END, IMG_C, WIDTH)                # (IMG_C, N)
    out_ref[...] = (o + x_ref[0:IMG_C, :]).astype(out_ref.dtype)


# ---------------------------- parameter packing -----------------------------

def _tap_mat(w_oihw, cin_pad):
    """PyTorch (O, I, 3, 3) conv weight -> (O, 9*cin_pad); tap k = ky*3+kx."""
    o, i, kh, kw = w_oihw.shape
    m = np.zeros((o, kh * kw * cin_pad), np.float32)
    w = np.asarray(w_oihw, np.float32)
    for ky in range(kh):
        for kx in range(kw):
            k = ky * kw + kx
            m[:, k * cin_pad:k * cin_pad + i] = w[:, :, ky, kx]
    return m


def _pack_params(p):
    """Fold LN affines / beta / gamma and pack everything into one f32 slab."""
    slab = np.zeros((_R_TOT, _SLAB_W), np.float32)

    slab[_R_INTRO:_R_INTRO + WIDTH, :_K_INTRO] = _tap_mat(p["intro_w"], CPAD)
    slab[_R_INTRO:_R_INTRO + WIDTH, _K_INTRO] = np.asarray(p["intro_b"])

    c1w = np.asarray(p["c1_w"], np.float32)[:, :, 0, 0]
    g1 = np.asarray(p["n1_g"], np.float32)
    b1 = np.asarray(p["n1_b"], np.float32)
    slab[_R_C1:_R_C1 + DW, :WIDTH] = c1w * g1[None, :]
    slab[_R_C1:_R_C1 + DW, WIDTH] = c1w @ b1 + np.asarray(p["c1_b"])

    dww = np.asarray(p["c2_w"], np.float32)[:, 0, :, :]        # (DW, 3, 3)
    slab[_R_DW:_R_DW + DW, :9] = dww.reshape(DW, 9)
    slab[_R_DW:_R_DW + DW, 9] = np.asarray(p["c2_b"])

    slab[_R_SCA:_R_SCA + WIDTH, :WIDTH] = np.asarray(p["sca_w"])[:, :, 0, 0]
    slab[_R_SCA:_R_SCA + WIDTH, WIDTH] = np.asarray(p["sca_b"])

    c3w = np.asarray(p["c3_w"], np.float32)[:, :, 0, 0]
    beta = np.asarray(p["beta"], np.float32)
    slab[_R_C3:_R_C3 + WIDTH, :WIDTH] = beta[:, None] * c3w
    slab[_R_C3:_R_C3 + WIDTH, WIDTH] = beta * np.asarray(p["c3_b"])

    c4w = np.asarray(p["c4_w"], np.float32)[:, :, 0, 0]
    g2 = np.asarray(p["n2_g"], np.float32)
    b2 = np.asarray(p["n2_b"], np.float32)
    slab[_R_C4:_R_C4 + DW, :WIDTH] = c4w * g2[None, :]
    slab[_R_C4:_R_C4 + DW, WIDTH] = c4w @ b2 + np.asarray(p["c4_b"])

    c5w = np.asarray(p["c5_w"], np.float32)[:, :, 0, 0]
    gamma = np.asarray(p["gamma"], np.float32)
    slab[_R_C5:_R_C5 + WIDTH, :WIDTH] = gamma[:, None] * c5w
    slab[_R_C5:_R_C5 + WIDTH, WIDTH] = gamma * np.asarray(p["c5_b"])

    slab[_R_END:_R_END + IMG_C, :_K_END] = _tap_mat(p["end_w"], WIDTH)
    slab[_R_END:_R_END + IMG_C, _K_END] = np.asarray(p["end_b"])

    return jnp.asarray(slab)


def _build_aux(bt):
    """Per-step constants (DMA'd once, constant index_map):
       rows 0..8  : boundary mask per tap k = ky*3+kx (row 4 = all ones),
       rows 9..9+bt: per-sample broadcast matrix (1 where lane//HW == sample)."""
    n = bt * HW
    lane = np.arange(n)
    wpos = lane % W
    hpos = (lane // W) % H
    hm = {-1: hpos >= 1, 0: np.ones(n, bool), 1: hpos <= H - 2}
    wm = {-1: wpos >= 1, 0: np.ones(n, bool), 1: wpos <= W - 2}
    aux = np.zeros((_N_MASK + bt, n), np.float32)
    for ky in range(3):
        for kx in range(3):
            aux[ky * 3 + kx] = (hm[ky - 1] & wm[kx - 1]).astype(np.float32)
    aux[_N_MASK:] = (lane[None, :] // HW ==
                     np.arange(bt)[:, None]).astype(np.float32)
    return jnp.asarray(aux)


# ------------------------------- host wrapper -------------------------------

def nafknet_forward(x_nchw, params, latent_list=(), *, samples_per_step=8,
                    vmem_limit_bytes=48 * 1024 * 1024):
    """samples_per_step (bt): batch tile per grid step.
       v7x (64 MiB VMEM, 2 TCs): bt ~16-32, keep grid >= 2, limit <= ~56 MiB.
       v5e/v6e (128 MiB, 1 TC): bt ~32-64, raise vmem_limit_bytes toward ~96 MiB."""
    del latent_list  # unused: no decoders in the default config
    b, c, h, w = x_nchw.shape
    assert (c, h, w) == (IMG_C, H, W)

    slab = _pack_params(params)

    bt = max(1, min(samples_per_step, b))
    b_pad = ((b + bt - 1) // bt) * bt
    n_steps = b_pad // bt
    n_lane = bt * HW
    # Cross-sample roll-wrap safety: every tap that can cross a sample boundary
    # is an image-boundary tap and is zero-masked (aux rows 0..8); this relies
    # on each sample occupying exactly HW consecutive lanes.
    assert n_lane % HW == 0

    aux = _build_aux(bt)

    # NCHW -> channels-first with batch folded into the lane axis:
    # (CPAD, B_pad*HW), lane index = sample*HW + h*W + w.
    xf = jnp.transpose(x_nchw.reshape(b, IMG_C, HW), (1, 0, 2))
    xf = jnp.pad(xf.astype(jnp.float32),
                 ((0, CPAD - IMG_C), (0, b_pad - b), (0, 0)))
    xf = xf.reshape(CPAD, b_pad * HW)

    out = pl.pallas_call(
        _nafknet_kernel,
        out_shape=jax.ShapeDtypeStruct((IMG_C, b_pad * HW), jnp.float32),
        grid_spec=pltpu.PrefetchScalarGridSpec(
            num_scalar_prefetch=0,
            grid=(n_steps,),
            in_specs=[
                pl.BlockSpec((CPAD, n_lane), lambda i: (0, i)),
                pl.BlockSpec((_N_MASK + bt, n_lane), lambda i: (0, 0)),
                pl.BlockSpec((_R_TOT, _SLAB_W), lambda i: (0, 0)),
            ],
            out_specs=pl.BlockSpec((IMG_C, n_lane), lambda i: (0, i)),
            scratch_shapes=[pltpu.VMEM((_K_END + 1, n_lane), jnp.float32)],
        ),
        compiler_params=pltpu.CompilerParams(
            dimension_semantics=("parallel",),
            vmem_limit_bytes=vmem_limit_bytes),
    )(xf, aux, slab)

    out = out.reshape(IMG_C, b_pad, HW)[:, :b]
    return jnp.transpose(out, (1, 0, 2)).reshape(b, IMG_C, H, W)


# ------------------------ pure-JAX reference (NCHW) -------------------------

def _conv_ref(x, w, b, pad=1, groups=1):
    dn = lax.conv_dimension_numbers(x.shape, w.shape, ('NCHW', 'OIHW', 'NCHW'))
    y = lax.conv_general_dilated(x, w, (1, 1), [(pad, pad), (pad, pad)],
                                 dimension_numbers=dn,
                                 feature_group_count=groups)
    return y + b.reshape(1, -1, 1, 1)


def _ln2d_ref(x, g, b):
    mu = x.mean(axis=1, keepdims=True)
    var = ((x - mu) ** 2).mean(axis=1, keepdims=True)
    y = (x - mu) / jnp.sqrt(var + EPS)
    return y * g.reshape(1, -1, 1, 1) + b.reshape(1, -1, 1, 1)


def nafknet_ref(x, p):
    inp = x
    h = _conv_ref(inp, p["intro_w"], p["intro_b"], pad=1)
    blk_in = h
    t = _ln2d_ref(blk_in, p["n1_g"], p["n1_b"])
    t = _conv_ref(t, p["c1_w"], p["c1_b"], pad=0)
    t = _conv_ref(t, p["c2_w"], p["c2_b"], pad=1, groups=t.shape[1])
    t = t[:, :WIDTH] * t[:, WIDTH:]
    pooled = t.mean(axis=(2, 3), keepdims=True)
    att = _conv_ref(pooled, p["sca_w"], p["sca_b"], pad=0)
    t = t * att
    t = _conv_ref(t, p["c3_w"], p["c3_b"], pad=0)
    y = blk_in + t * p["beta"].reshape(1, -1, 1, 1)
    t = _ln2d_ref(y, p["n2_g"], p["n2_b"])
    t = _conv_ref(t, p["c4_w"], p["c4_b"], pad=0)
    t = t[:, :WIDTH] * t[:, WIDTH:]
    t = _conv_ref(t, p["c5_w"], p["c5_b"], pad=0)
    h = y + t * p["gamma"].reshape(1, -1, 1, 1)
    h = _conv_ref(h, p["end_w"], p["end_b"], pad=1)
    return h + inp


# ----------------------------- parameter init -------------------------------

def init_params(key):
    ks = list(jax.random.split(key, 24))
    it = iter(ks)

    def nrm(shape, s=0.1):
        return jax.random.normal(next(it), shape, jnp.float32) * s

    dw = 2 * WIDTH
    ffn = 2 * WIDTH
    p = {}
    p["intro_w"] = nrm((WIDTH, IMG_C, 3, 3))
    p["intro_b"] = nrm((WIDTH,))
    p["n1_g"] = 1.0 + nrm((WIDTH,))
    p["n1_b"] = nrm((WIDTH,))
    p["c1_w"] = nrm((dw, WIDTH, 1, 1))
    p["c1_b"] = nrm((dw,))
    p["c2_w"] = nrm((dw, 1, 3, 3))           # depthwise (groups = dw)
    p["c2_b"] = nrm((dw,))
    p["sca_w"] = nrm((WIDTH, WIDTH, 1, 1))
    p["sca_b"] = nrm((WIDTH,))
    p["c3_w"] = nrm((WIDTH, WIDTH, 1, 1))
    p["c3_b"] = nrm((WIDTH,))
    p["beta"] = nrm((WIDTH,), 0.5)
    p["n2_g"] = 1.0 + nrm((WIDTH,))
    p["n2_b"] = nrm((WIDTH,))
    p["c4_w"] = nrm((ffn, WIDTH, 1, 1))
    p["c4_b"] = nrm((ffn,))
    p["c5_w"] = nrm((WIDTH, ffn // 2, 1, 1))
    p["c5_b"] = nrm((WIDTH,))
    p["gamma"] = nrm((WIDTH,), 0.5)
    p["end_w"] = nrm((IMG_C, WIDTH, 3, 3))
    p["end_b"] = nrm((IMG_C,))
    return p


if __name__ == "__main__":
    key = jax.random.PRNGKey(0)
    kx, kp = jax.random.split(key)
    B = 8
    x = jax.random.normal(kx, (B, IMG_C, H, W), jnp.float32)
    params = init_params(kp)

    # 4 samples per grid step -> grid=(2,): >= 2 parallel steps for the two
    # TensorCores on v7x; raise samples_per_step (and vmem_limit_bytes) for
    # larger batches per the notes in nafknet_forward.
    out = nafknet_forward(x, params, latent_list=(), samples_per_step=4)
    out = jax.block_until_ready(out)

    ref = nafknet_ref(x, params)
    np.testing.assert_allclose(np.asarray(out), np.asarray(ref),
                               rtol=1e-4, atol=1e-4)
    print("KERNEL_OK")
</pallas_src>

<mosaic_0001>
module attributes {stable_mosaic.version = 11 : i64} {
  func.func @_nafknet_kernel(%arg0: i32, %arg1: memref<8x1024xf32, #tpu.memory_space<vmem>>, %arg2: memref<13x1024xf32, #tpu.memory_space<vmem>>, %arg3: memref<163x145xf32, #tpu.memory_space<vmem>>, %arg4: memref<3x1024xf32, #tpu.memory_space<vmem>>, %arg5: memref<145x1024xf32, #tpu.memory_space<vmem>>) attributes {dimension_semantics = [#tpu.dimension_semantics<parallel>], iteration_bounds = array<i64: 2>, scalar_prefetch = 0 : i64, scratch_operands = 1 : i64, tpu.core_type = #tpu.core_type<tc>, window_params = [{transform_indices = @transform_0, window_bounds = array<i64: 8, 1024>}, {pipeline_mode = #tpu.pipeline_mode<synchronous>, transform_indices = @transform_1, window_bounds = array<i64: 13, 1024>}, {pipeline_mode = #tpu.pipeline_mode<synchronous>, transform_indices = @transform_2, window_bounds = array<i64: 163, 145>}, {transform_indices = @transform_3, window_bounds = array<i64: 3, 1024>}]} {
    %c0 = arith.constant 0 : index
    %c0_0 = arith.constant 0 : index
    %0 = vector.load %arg1[%c0, %c0_0] : memref<8x1024xf32, #tpu.memory_space<vmem>>, vector<8x1024xf32>
    %c17_i32 = arith.constant 17 : i32
    %1 = tpu.dynamic_rotate %0 by %c17_i32 dim 1 : vector<8x1024xf32>, i32 -> vector<8x1024xf32>
    %c0_1 = arith.constant 0 : index
    %c0_2 = arith.constant 0 : index
    %2 = vector.load %arg2[%c0_1, %c0_2] : memref<13x1024xf32, #tpu.memory_space<vmem>>, vector<1x1024xf32>
    %3 = vector.broadcast %2 : vector<1x1024xf32> to vector<8x1024xf32>
    %4 = arith.mulf %1, %3 : vector<8x1024xf32>
    %c0_3 = arith.constant 0 : index
    %c0_4 = arith.constant 0 : index
    %5 = vector.load %arg5[%c0_3, %c0_4] : memref<145x1024xf32, #tpu.memory_space<vmem>>, vector<8x1024xf32>
    tpu.vector_store %arg5[%c0_3, %c0_4], %4 {strides = array<i32>} : memref<145x1024xf32, #tpu.memory_space<vmem>>, vector<8x1024xf32>,
    %c16_i32 = arith.constant 16 : i32
    %6 = tpu.dynamic_rotate %0 by %c16_i32 dim 1 : vector<8x1024xf32>, i32 -> vector<8x1024xf32>
    %c1 = arith.constant 1 : index
    %c0_5 = arith.constant 0 : index
    %7 = vector.load %arg2[%c1, %c0_5] : memref<13x1024xf32, #tpu.memory_space<vmem>>, vector<1x1024xf32>
    %8 = vector.broadcast %7 : vector<1x1024xf32> to vector<8x1024xf32>
    %9 = arith.mulf %6, %8 : vector<8x1024xf32>
    %c8 = arith.constant 8 : index
    %c0_6 = arith.constant 0 : index
    %10 = vector.load %arg5[%c8, %c0_6] : memref<145x1024xf32, #tpu.memory_space<vmem>>, vector<8x1024xf32>
    tpu.vector_store %arg5[%c8, %c0_6], %9 {strides = array<i32>} : memref<145x1024xf32, #tpu.memory_space<vmem>>, vector<8x1024xf32>,
    %c15_i32 = arith.constant 15 : i32
    %11 = tpu.dynamic_rotate %0 by %c15_i32 dim 1 : vector<8x1024xf32>, i32 -> vector<8x1024xf32>
    %c2 = arith.constant 2 : index
    %c0_7 = arith.constant 0 : index
    %12 = vector.load %arg2[%c2, %c0_7] : memref<13x1024xf32, #tpu.memory_space<vmem>>, vector<1x1024xf32>
    %13 = vector.broadcast %12 : vector<1x1024xf32> to vector<8x1024xf32>
    %14 = arith.mulf %11, %13 : vector<8x1024xf32>
    %c16 = arith.constant 16 : index
    %c0_8 = arith.constant 0 : index
    %15 = vector.load %arg5[%c16, %c0_8] : memref<145x1024xf32, #tpu.memory_space<vmem>>, vector<8x1024xf32>
    tpu.vector_store %arg5[%c16, %c0_8], %14 {strides = array<i32>} : memref<145x1024xf32, #tpu.memory_space<vmem>>, vector<8x1024xf32>,
    %c1_i32 = arith.constant 1 : i32
    %16 = tpu.dynamic_rotate %0 by %c1_i32 dim 1 : vector<8x1024xf32>, i32 -> vector<8x1024xf32>
    %c3 = arith.constant 3 : index
    %c0_9 = arith.constant 0 : index
    %17 = vector.load %arg2[%c3, %c0_9] : memref<13x1024xf32, #tpu.memory_space<vmem>>, vector<1x1024xf32>
    %18 = vector.broadcast %17 : vector<1x1024xf32> to vector<8x1024xf32>
    %19 = arith.mulf %16, %18 : vector<8x1024xf32>
    %c24 = arith.constant 24 : index
    %c0_10 = arith.constant 0 : index
    %20 = vector.load %arg5[%c24, %c0_10] : memref<145x1024xf32, #tpu.memory_space<vmem>>, vector<8x1024xf32>
    tpu.vector_store %arg5[%c24, %c0_10], %19 {strides = array<i32>} : memref<145x1024xf32, #tpu.memory_space<vmem>>, vector<8x1024xf32>,
    %c32 = arith.constant 32 : index
    %c0_11 = arith.constant 0 : index
    %21 = vector.load %arg5[%c32, %c0_11] : memref<145x1024xf32, #tpu.memory_space<vmem>>, vector<8x1024xf32>
    tpu.vector_store %arg5[%c32, %c0_11], %0 {strides = array<i32>} : memref<145x1024xf32, #tpu.memory_space<vmem>>, vector<8x1024xf32>,
    %c1023_i32 = arith.constant 1023 : i32
    %22 = tpu.dynamic_rotate %0 by %c1023_i32 dim 1 : vector<8x1024xf32>, i32 -> vector<8x1024xf32>
    %c5 = arith.constant 5 : index
    %c0_12 = arith.constant 0 : index
    %23 = vector.load %arg2[%c5, %c0_12] : memref<13x1024xf32, #tpu.memory_space<vmem>>, vector<1x1024xf32>
    %24 = vector.broadcast %23 : vector<1x1024xf32> to vector<8x1024xf32>
    %25 = arith.mulf %22, %24 : vector<8x1024xf32>
    %c40 = arith.constant 40 : index
    %c0_13 = arith.constant 0 : index
    %26 = vector.load %arg5[%c40, %c0_13] : memref<145x1024xf32, #tpu.memory_space<vmem>>, vector<8x1024xf32>
    tpu.vector_store %arg5[%c40, %c0_13], %25 {strides = array<i32>} : memref<145x1024xf32, #tpu.memory_space<vmem>>, vector<8x1024xf32>,
    %c1009_i32 = arith.constant 1009 : i32
    %27 = tpu.dynamic_rotate %0 by %c1009_i32 dim 1 : vector<8x1024xf32>, i32 -> vector<8x1024xf32>
    %c6 = arith.constant 6 : index
    %c0_14 = arith.constant 0 : index
    %28 = vector.load %arg2[%c6, %c0_14] : memref<13x1024xf32, #tpu.memory_space<vmem>>, vector<1x1024xf32>
    %29 = vector.broadcast %28 : vector<1x1024xf32> to vector<8x1024xf32>
    %30 = arith.mulf %27, %29 : vector<8x1024xf32>
    %c48 = arith.constant 48 : index
    %c0_15 = arith.constant 0 : index
    %31 = vector.load %arg5[%c48, %c0_15] : memref<145x1024xf32, #tpu.memory_space<vmem>>, vector<8x1024xf32>
    tpu.vector_store %arg5[%c48, %c0_15], %30 {strides = array<i32>} : memref<145x1024xf32, #tpu.memory_space<vmem>>, vector<8x1024xf32>,
    %c1008_i32 = arith.constant 1008 : i32
    %32 = tpu.dynamic_rotate %0 by %c1008_i32 dim 1 : vector<8x1024xf32>, i32 -> vector<8x1024xf32>
    %c7 = arith.constant 7 : index
    %c0_16 = arith.constant 0 : index
    %33 = vector.load %arg2[%c7, %c0_16] : memref<13x1024xf32, #tpu.memory_space<vmem>>, vector<1x1024xf32>
    %34 = vector.broadcast %33 : vector<1x1024xf32> to vector<8x1024xf32>
    %35 = arith.mulf %32, %34 : vector<8x1024xf32>
    %c56 = arith.constant 56 : index
    %c0_17 = arith.constant 0 : index
    %36 = vector.load %arg5[%c56, %c0_17] : memref<145x1024xf32, #tpu.memory_space<vmem>>, vector<8x1024xf32>
    tpu.vector_store %arg5[%c56, %c0_17], %35 {strides = array<i32>} : memref<145x1024xf32, #tpu.memory_space<vmem>>, vector<8x1024xf32>,
    %c1007_i32 = arith.constant 1007 : i32
    %37 = tpu.dynamic_rotate %0 by %c1007_i32 dim 1 : vector<8x1024xf32>, i32 -> vector<8x1024xf32>
    %c8_18 = arith.constant 8 : index
    %c0_19 = arith.constant 0 : index
    %38 = vector.load %arg2[%c8_18, %c0_19] : memref<13x1024xf32, #tpu.memory_space<vmem>>, vector<1x1024xf32>
    %39 = vector.broadcast %38 : vector<1x1024xf32> to vector<8x1024xf32>
    %40 = arith.mulf %37, %39 : vector<8x1024xf32>
    %c64 = arith.constant 64 : index
    %c0_20 = arith.constant 0 : index
    %41 = vector.load %arg5[%c64, %c0_20] : memref<145x1024xf32, #tpu.memory_space<vmem>>, vector<8x1024xf32>
    tpu.vector_store %arg5[%c64, %c0_20], %40 {strides = array<i32>} : memref<145x1024xf32, #tpu.memory_space<vmem>>, vector<8x1024xf32>,
    %c4 = arith.constant 4 : index
    %c0_21 = arith.constant 0 : index
    %42 = vector.load %arg2[%c4, %c0_21] : memref<13x1024xf32, #tpu.memory_space<vmem>>, vector<1x1024xf32>
    %c72 = arith.constant 72 : index
    %c0_22 = arith.constant 0 : index
    %43 = vector.load %arg5[%c72, %c0_22] : memref<145x1024xf32, #tpu.memory_space<vmem>>, vector<1x1024xf32>
    tpu.vector_store %arg5[%c72, %c0_22], %42 {strides = array<i32>} : memref<145x1024xf32, #tpu.memory_space<vmem>>, vector<1x1024xf32>,
    %c0_23 = arith.constant 0 : index
    %c0_24 = arith.constant 0 : index
    %44 = vector.load %arg3[%c0_23, %c0_24] : memref<163x145xf32, #tpu.memory_space<vmem>>, vector<16x73xf32>
    %c0_25 = arith.constant 0 : index
    %c0_26 = arith.constant 0 : index
    %45 = vector.load %arg5[%c0_25, %c0_26] : memref<145x1024xf32, #tpu.memory_space<vmem>>, vector<73x1024xf32>
    %cst = arith.constant dense<0.000000e+00> : vector<16x1024xf32>
    %46 = tpu.matmul %44, %45, %cst {dimension_numbers = #tpu.dot_dimension_numbers<[1], [0], [0], [1], [0, 0, 1, 1], [], []>} : vector<16x73xf32>, vector<73x1024xf32>, vector<16x1024xf32> -> vector<16x1024xf32>
    %cst_27 = arith.constant dense<0.000000e+00> : vector<1024xf32>
    %47 = vector.multi_reduction <add>, %46, %cst_27 [0] : vector<16x1024xf32> to vector<1024xf32>
    %48 = vector.shape_cast %47 : vector<1024xf32> to vector<1x1024xf32>
    %cst_28 = arith.constant 1.600000e+01 : f32
    %49 = vector.broadcast %cst_28 : f32 to vector<1x1024xf32>
    %50 = arith.divf %48, %49 : vector<1x1024xf32>
    %51 = vector.broadcast %50 : vector<1x1024xf32> to vector<16x1024xf32>
    %52 = arith.subf %46, %51 : vector<16x1024xf32>
    %53 = arith.mulf %52, %52 : vector<16x1024xf32>
    %cst_29 = arith.constant dense<0.000000e+00> : vector<1024xf32>
    %54 = vector.multi_reduction <add>, %53, %cst_29 [0] : vector<16x1024xf32> to vector<1024xf32>
    %55 = vector.shape_cast %54 : vector<1024xf32> to vector<1x1024xf32>
    %cst_30 = arith.constant 1.600000e+01 : f32
    %56 = vector.broadcast %cst_30 : f32 to vector<1x1024xf32>
    %57 = arith.divf %55, %56 : vector<1x1024xf32>
    %cst_31 = arith.constant 9.99999997E-7 : f32
    %58 = vector.broadcast %cst_31 : f32 to vector<1x1024xf32>
    %59 = arith.addf %57, %58 : vector<1x1024xf32>
    %60 = math.rsqrt %59 : vector<1x1024xf32>
    %61 = vector.broadcast %60 : vector<1x1024xf32> to vector<16x1024xf32>
    %62 = arith.mulf %52, %61 : vector<16x1024xf32>
    %c16_32 = arith.constant 16 : index
    %c0_33 = arith.constant 0 : index
    %63 = vector.load %arg3[%c16_32, %c0_33] : memref<163x145xf32, #tpu.memory_space<vmem>>, vector<32x16xf32>
    %c16_34 = arith.constant 16 : index
    %c16_35 = arith.constant 16 : index
    %64 = vector.load %arg3[%c16_34, %c16_35] : memref<163x145xf32, #tpu.memory_space<vmem>>, vector<32x1xf32>
    %cst_36 = arith.constant dense<0.000000e+00> : vector<32x1024xf32>
    %65 = tpu.matmul %63, %62, %cst_36 {dimension_numbers = #tpu.dot_dimension_numbers<[1], [0], [0], [1], [0, 0, 1, 1], [], []>} : vector<32x16xf32>, vector<16x1024xf32>, vector<32x1024xf32> -> vector<32x1024xf32>
    %66 = vector.broadcast %64 : vector<32x1xf32> to vector<32x1024xf32>
    %67 = arith.addf %65, %66 : vector<32x1024xf32>
    %c48_37 = arith.constant 48 : index
    %c9 = arith.constant 9 : index
    %68 = vector.load %arg3[%c48_37, %c9] : memref<163x145xf32, #tpu.memory_space<vmem>>, vector<32x1xf32>
    %c48_38 = arith.constant 48 : index
    %c4_39 = arith.constant 4 : index
    %69 = vector.load %arg3[%c48_38, %c4_39] : memref<163x145xf32, #tpu.memory_space<vmem>>, vector<32x1xf32>
    %70 = vector.broadcast %69 : vector<32x1xf32> to vector<32x1024xf32>
    %71 = arith.mulf %70, %67 : vector<32x1024xf32>
    %72 = vector.broadcast %68 : vector<32x1xf32> to vector<32x1024xf32>
    %73 = arith.addf %72, %71 : vector<32x1024xf32>
    %c48_40 = arith.constant 48 : index
    %c0_41 = arith.constant 0 : index
    %74 = vector.load %arg3[%c48_40, %c0_41] : memref<163x145xf32, #tpu.memory_space<vmem>>, vector<32x1xf32>
    %c17_i32_42 = arith.constant 17 : i32
    %75 = tpu.dynamic_rotate %67 by %c17_i32_42 dim 1 : vector<32x1024xf32>, i32 -> vector<32x1024xf32>
    %c0_43 = arith.constant 0 : index
    %c0_44 = arith.constant 0 : index
    %76 = vector.load %arg2[%c0_43, %c0_44] : memref<13x1024xf32, #tpu.memory_space<vmem>>, vector<1x1024xf32>
    %77 = vector.broadcast %76 : vector<1x1024xf32> to vector<32x1024xf32>
    %78 = arith.mulf %75, %77 : vector<32x1024xf32>
    %79 = vector.broadcast %74 : vector<32x1xf32> to vector<32x1024xf32>
    %80 = arith.mulf %79, %78 : vector<32x1024xf32>
    %81 = arith.addf %73, %80 : vector<32x1024xf32>
    %c48_45 = arith.constant 48 : index
    %c1_46 = arith.constant 1 : index
    %82 = vector.load %arg3[%c48_45, %c1_46] : memref<163x145xf32, #tpu.memory_space<vmem>>, vector<32x1xf32>
    %c16_i32_47 = arith.constant 16 : i32
    %83 = tpu.dynamic_rotate %67 by %c16_i32_47 dim 1 : vector<32x1024xf32>, i32 -> vector<32x1024xf32>
    %c1_48 = arith.constant 1 : index
    %c0_49 = arith.constant 0 : index
    %84 = vector.load %arg2[%c1_48, %c0_49] : memref<13x1024xf32, #tpu.memory_space<vmem>>, vector<1x1024xf32>
    %85 = vector.broadcast %84 : vector<1x1024xf32> to vector<32x1024xf32>
    %86 = arith.mulf %83, %85 : vector<32x1024xf32>
    %87 = vector.broadcast %82 : vector<32x1xf32> to vector<32x1024xf32>
    %88 = arith.mulf %87, %86 : vector<32x1024xf32>
    %89 = arith.addf %81, %88 : vector<32x1024xf32>
    %c48_50 = arith.constant 48 : index
    %c2_51 = arith.constant 2 : index
    %90 = vector.load %arg3[%c48_50, %c2_51] : memref<163x145xf32, #tpu.memory_space<vmem>>, vector<32x1xf32>
    %c15_i32_52 = arith.constant 15 : i32
    %91 = tpu.dynamic_rotate %67 by %c15_i32_52 dim 1 : vector<32x1024xf32>, i32 -> vector<32x1024xf32>
    %c2_53 = arith.constant 2 : index
    %c0_54 = arith.constant 0 : index
    %92 = vector.load %arg2[%c2_53, %c0_54] : memref<13x1024xf32, #tpu.memory_space<vmem>>, vector<1x1024xf32>
    %93 = vector.broadcast %92 : vector<1x1024xf32> to vector<32x1024xf32>
    %94 = arith.mulf %91, %93 : vector<32x1024xf32>
    %95 = vector.broadcast %90 : vector<32x1xf32> to vector<32x1024xf32>
    %96 = arith.mulf %95, %94 : vector<32x1024xf32>
    %97 = arith.addf %89, %96 : vector<32x1024xf32>
    %c48_55 = arith.constant 48 : index
    %c3_56 = arith.constant 3 : index
    %98 = vector.load %arg3[%c48_55, %c3_56] : memref<163x145xf32, #tpu.memory_space<vmem>>, vector<32x1xf32>
    %c1_i32_57 = arith.constant 1 : i32
    %99 = tpu.dynamic_rotate %67 by %c1_i32_57 dim 1 : vector<32x1024xf32>, i32 -> vector<32x1024xf32>
    %c3_58 = arith.constant 3 : index
    %c0_59 = arith.constant 0 : index
    %100 = vector.load %arg2[%c3_58, %c0_59] : memref<13x1024xf32, #tpu.memory_space<vmem>>, vector<1x1024xf32>
    %101 = vector.broadcast %100 : vector<1x1024xf32> to vector<32x1024xf32>
    %102 = arith.mulf %99, %101 : vector<32x1024xf32>
    %103 = vector.broadcast %98 : vector<32x1xf32> to vector<32x1024xf32>
    %104 = arith.mulf %103, %102 : vector<32x1024xf32>
    %105 = arith.addf %97, %104 : vector<32x1024xf32>
    %c48_60 = arith.constant 48 : index
    %c5_61 = arith.constant 5 : index
    %106 = vector.load %arg3[%c48_60, %c5_61] : memref<163x145xf32, #tpu.memory_space<vmem>>, vector<32x1xf32>
    %c1023_i32_62 = arith.constant 1023 : i32
    %107 = tpu.dynamic_rotate %67 by %c1023_i32_62 dim 1 : vector<32x1024xf32>, i32 -> vector<32x1024xf32>
    %c5_63 = arith.constant 5 : index
    %c0_64 = arith.constant 0 : index
    %108 = vector.load %arg2[%c5_63, %c0_64] : memref<13x1024xf32, #tpu.memory_space<vmem>>, vector<1x1024xf32>
    %109 = vector.broadcast %108 : vector<1x1024xf32> to vector<32x1024xf32>
    %110 = arith.mulf %107, %109 : vector<32x1024xf32>
    %111 = vector.broadcast %106 : vector<32x1xf32> to vector<32x1024xf32>
    %112 = arith.mulf %111, %110 : vector<32x1024xf32>
    %113 = arith.addf %105, %112 : vector<32x1024xf32>
    %c48_65 = arith.constant 48 : index
    %c6_66 = arith.constant 6 : index
    %114 = vector.load %arg3[%c48_65, %c6_66] : memref<163x145xf32, #tpu.memory_space<vmem>>, vector<32x1xf32>
    %c1009_i32_67 = arith.constant 1009 : i32
    %115 = tpu.dynamic_rotate %67 by %c1009_i32_67 dim 1 : vector<32x1024xf32>, i32 -> vector<32x1024xf32>
    %c6_68 = arith.constant 6 : index
    %c0_69 = arith.constant 0 : index
    %116 = vector.load %arg2[%c6_68, %c0_69] : memref<13x1024xf32, #tpu.memory_space<vmem>>, vector<1x1024xf32>
    %117 = vector.broadcast %116 : vector<1x1024xf32> to vector<32x1024xf32>
    %118 = arith.mulf %115, %117 : vector<32x1024xf32>
    %119 = vector.broadcast %114 : vector<32x1xf32> to vector<32x1024xf32>
    %120 = arith.mulf %119, %118 : vector<32x1024xf32>
    %121 = arith.addf %113, %120 : vector<32x1024xf32>
    %c48_70 = arith.constant 48 : index
    %c7_71 = arith.constant 7 : index
    %122 = vector.load %arg3[%c48_70, %c7_71] : memref<163x145xf32, #tpu.memory_space<vmem>>, vector<32x1xf32>
    %c1008_i32_72 = arith.constant 1008 : i32
    %123 = tpu.dynamic_rotate %67 by %c1008_i32_72 dim 1 : vector<32x1024xf32>, i32 -> vector<32x1024xf32>
    %c7_73 = arith.constant 7 : index
    %c0_74 = arith.constant 0 : index
    %124 = vector.load %arg2[%c7_73, %c0_74] : memref<13x1024xf32, #tpu.memory_space<vmem>>, vector<1x1024xf32>
    %125 = vector.broadcast %124 : vector<1x1024xf32> to vector<32x1024xf32>
    %126 = arith.mulf %123, %125 : vector<32x1024xf32>
    %127 = vector.broadcast %122 : vector<32x1xf32> to vector<32x1024xf32>
    %128 = arith.mulf %127, %126 : vector<32x1024xf32>
    %129 = arith.addf %121, %128 : vector<32x1024xf32>
    %c48_75 = arith.constant 48 : index
    %c8_76 = arith.constant 8 : index
    %130 = vector.load %arg3[%c48_75, %c8_76] : memref<163x145xf32, #tpu.memory_space<vmem>>, vector<32x1xf32>
    %c1007_i32_77 = arith.constant 1007 : i32
    %131 = tpu.dynamic_rotate %67 by %c1007_i32_77 dim 1 : vector<32x1024xf32>, i32 -> vector<32x1024xf32>
    %c8_78 = arith.constant 8 : index
    %c0_79 = arith.constant 0 : index
    %132 = vector.load %arg2[%c8_78, %c0_79] : memref<13x1024xf32, #tpu.memory_space<vmem>>, vector<1x1024xf32>
    %133 = vector.broadcast %132 : vector<1x1024xf32> to vector<32x1024xf32>
    %134 = arith.mulf %131, %133 : vector<32x1024xf32>
    %135 = vector.broadcast %130 : vector<32x1xf32> to vector<32x1024xf32>
    %136 = arith.mulf %135, %134 : vector<32x1024xf32>
    %137 = arith.addf %129, %136 : vector<32x1024xf32>
    %138 = vector.extract_strided_slice %137 {offsets = [0, 0], sizes = [16, 1024], strides = [1, 1]} : vector<32x1024xf32> to vector<16x1024xf32>
    %139 = vector.extract_strided_slice %137 {offsets = [16, 0], sizes = [16, 1024], strides = [1, 1]} : vector<32x1024xf32> to vector<16x1024xf32>
    %140 = arith.mulf %138, %139 : vector<16x1024xf32>
    %c9_80 = arith.constant 9 : index
    %c0_81 = arith.constant 0 : index
    %141 = vector.load %arg2[%c9_80, %c0_81] : memref<13x1024xf32, #tpu.memory_space<vmem>>, vector<4x1024xf32>
    %cst_82 = arith.constant dense<0.000000e+00> : vector<16x4xf32>
    %142 = tpu.matmul %140, %141, %cst_82 {dimension_numbers = #tpu.dot_dimension_numbers<[1], [1], [0], [0], [0, 0, 1, 0], [], []>} : vector<16x1024xf32>, vector<4x1024xf32>, vector<16x4xf32> -> vector<16x4xf32>
    %cst_83 = arith.constant 3.906250e-03 : f32
    %143 = vector.broadcast %cst_83 : f32 to vector<16x4xf32>
    %144 = arith.mulf %142, %143 : vector<16x4xf32>
    %c80 = arith.constant 80 : index
    %c0_84 = arith.constant 0 : index
    %145 = vector.load %arg3[%c80, %c0_84] : memref<163x145xf32, #tpu.memory_space<vmem>>, vector<16x16xf32>
    %c80_85 = arith.constant 80 : index
    %c16_86 = arith.constant 16 : index
    %146 = vector.load %arg3[%c80_85, %c16_86] : memref<163x145xf32, #tpu.memory_space<vmem>>, vector<16x1xf32>
    %cst_87 = arith.constant dense<0.000000e+00> : vector<16x4xf32>
    %147 = tpu.matmul %145, %144, %cst_87 {dimension_numbers = #tpu.dot_dimension_numbers<[1], [0], [0], [1], [0, 0, 1, 1], [], []>} : vector<16x16xf32>, vector<16x4xf32>, vector<16x4xf32> -> vector<16x4xf32>
    %148 = vector.broadcast %146 : vector<16x1xf32> to vector<16x4xf32>
    %149 = arith.addf %147, %148 : vector<16x4xf32>
    %cst_88 = arith.constant dense<0.000000e+00> : vector<16x1024xf32>
    %150 = tpu.matmul %149, %141, %cst_88 {dimension_numbers = #tpu.dot_dimension_numbers<[1], [0], [0], [1], [0, 0, 1, 1], [], []>} : vector<16x4xf32>, vector<4x1024xf32>, vector<16x1024xf32> -> vector<16x1024xf32>
    %151 = arith.mulf %140, %150 : vector<16x1024xf32>
    %c96 = arith.constant 96 : index
    %c0_89 = arith.constant 0 : index
    %152 = vector.load %arg3[%c96, %c0_89] : memref<163x145xf32, #tpu.memory_space<vmem>>, vector<16x16xf32>
    %c96_90 = arith.constant 96 : index
    %c16_91 = arith.constant 16 : index
    %153 = vector.load %arg3[%c96_90, %c16_91] : memref<163x145xf32, #tpu.memory_space<vmem>>, vector<16x1xf32>
    %cst_92 = arith.constant dense<0.000000e+00> : vector<16x1024xf32>
    %154 = tpu.matmul %152, %151, %cst_92 {dimension_numbers = #tpu.dot_dimension_numbers<[1], [0], [0], [1], [0, 0, 1, 1], [], []>} : vector<16x16xf32>, vector<16x1024xf32>, vector<16x1024xf32> -> vector<16x1024xf32>
    %155 = vector.broadcast %153 : vector<16x1xf32> to vector<16x1024xf32>
    %156 = arith.addf %154, %155 : vector<16x1024xf32>
    %157 = arith.addf %46, %156 : vector<16x1024xf32>
    %cst_93 = arith.constant dense<0.000000e+00> : vector<1024xf32>
    %158 = vector.multi_reduction <add>, %157, %cst_93 [0] : vector<16x1024xf32> to vector<1024xf32>
    %159 = vector.shape_cast %158 : vector<1024xf32> to vector<1x1024xf32>
    %cst_94 = arith.constant 1.600000e+01 : f32
    %160 = vector.broadcast %cst_94 : f32 to vector<1x1024xf32>
    %161 = arith.divf %159, %160 : vector<1x1024xf32>
    %162 = vector.broadcast %161 : vector<1x1024xf32> to vector<16x1024xf32>
    %163 = arith.subf %157, %162 : vector<16x1024xf32>
    %164 = arith.mulf %163, %163 : vector<16x1024xf32>
    %cst_95 = arith.constant dense<0.000000e+00> : vector<1024xf32>
    %165 = vector.multi_reduction <add>, %164, %cst_95 [0] : vector<16x1024xf32> to vector<1024xf32>
    %166 = vector.shape_cast %165 : vector<1024xf32> to vector<1x1024xf32>
    %cst_96 = arith.constant 1.600000e+01 : f32
    %167 = vector.broadcast %cst_96 : f32 to vector<1x1024xf32>
    %168 = arith.divf %166, %167 : vector<1x1024xf32>
    %cst_97 = arith.constant 9.99999997E-7 : f32
    %169 = vector.broadcast %cst_97 : f32 to vector<1x1024xf32>
    %170 = arith.addf %168, %169 : vector<1x1024xf32>
    %171 = math.rsqrt %170 : vector<1x1024xf32>
    %172 = vector.broadcast %171 : vector<1x1024xf32> to vector<16x1024xf32>
    %173 = arith.mulf %163, %172 : vector<16x1024xf32>
    %c112 = arith.constant 112 : index
    %c0_98 = arith.constant 0 : index
    %174 = vector.load %arg3[%c112, %c0_98] : memref<163x145xf32, #tpu.memory_space<vmem>>, vector<32x16xf32>
    %c112_99 = arith.constant 112 : index
    %c16_100 = arith.constant 16 : index
    %175 = vector.load %arg3[%c112_99, %c16_100] : memref<163x145xf32, #tpu.memory_space<vmem>>, vector<32x1xf32>
    %cst_101 = arith.constant dense<0.000000e+00> : vector<32x1024xf32>
    %176 = tpu.matmul %174, %173, %cst_101 {dimension_numbers = #tpu.dot_dimension_numbers<[1], [0], [0], [1], [0, 0, 1, 1], [], []>} : vector<32x16xf32>, vector<16x1024xf32>, vector<32x1024xf32> -> vector<32x1024xf32>
    %177 = vector.broadcast %175 : vector<32x1xf32> to vector<32x1024xf32>
    %178 = arith.addf %176, %177 : vector<32x1024xf32>
    %179 = vector.extract_strided_slice %178 {offsets = [0, 0], sizes = [16, 1024], strides = [1, 1]} : vector<32x1024xf32> to vector<16x1024xf32>
    %180 = vector.extract_strided_slice %178 {offsets = [16, 0], sizes = [16, 1024], strides = [1, 1]} : vector<32x1024xf32> to vector<16x1024xf32>
    %181 = arith.mulf %179, %180 : vector<16x1024xf32>
    %c144 = arith.constant 144 : index
    %c0_102 = arith.constant 0 : index
    %182 = vector.load %arg3[%c144, %c0_102] : memref<163x145xf32, #tpu.memory_space<vmem>>, vector<16x16xf32>
    %c144_103 = arith.constant 144 : index
    %c16_104 = arith.constant 16 : index
    %183 = vector.load %arg3[%c144_103, %c16_104] : memref<163x145xf32, #tpu.memory_space<vmem>>, vector<16x1xf32>
    %cst_105 = arith.constant dense<0.000000e+00> : vector<16x1024xf32>
    %184 = tpu.matmul %182, %181, %cst_105 {dimension_numbers = #tpu.dot_dimension_numbers<[1], [0], [0], [1], [0, 0, 1, 1], [], []>} : vector<16x16xf32>, vector<16x1024xf32>, vector<16x1024xf32> -> vector<16x1024xf32>
    %185 = vector.broadcast %183 : vector<16x1xf32> to vector<16x1024xf32>
    %186 = arith.addf %184, %185 : vector<16x1024xf32>
    %187 = arith.addf %157, %186 : vector<16x1024xf32>
    %c17_i32_106 = arith.constant 17 : i32
    %188 = tpu.dynamic_rotate %187 by %c17_i32_106 dim 1 : vector<16x1024xf32>, i32 -> vector<16x1024xf32>
    %c0_107 = arith.constant 0 : index
    %c0_108 = arith.constant 0 : index
    %189 = vector.load %arg2[%c0_107, %c0_108] : memref<13x1024xf32, #tpu.memory_space<vmem>>, vector<1x1024xf32>
    %190 = vector.broadcast %189 : vector<1x1024xf32> to vector<16x1024xf32>
    %191 = arith.mulf %188, %190 : vector<16x1024xf32>
    %c0_109 = arith.constant 0 : index
    %c0_110 = arith.constant 0 : index
    %192 = vector.load %arg5[%c0_109, %c0_110] : memref<145x1024xf32, #tpu.memory_space<vmem>>, vector<16x1024xf32>
    tpu.vector_store %arg5[%c0_109, %c0_110], %191 {strides = array<i32>} : memref<145x1024xf32, #tpu.memory_space<vmem>>, vector<16x1024xf32>,
    %c16_i32_111 = arith.constant 16 : i32
    %193 = tpu.dynamic_rotate %187 by %c16_i32_111 dim 1 : vector<16x1024xf32>, i32 -> vector<16x1024xf32>
    %c1_112 = arith.constant 1 : index
    %c0_113 = arith.constant 0 : index
    %194 = vector.load %arg2[%c1_112, %c0_113] : memref<13x1024xf32, #tpu.memory_space<vmem>>, vector<1x1024xf32>
    %195 = vector.broadcast %194 : vector<1x1024xf32> to vector<16x1024xf32>
    %196 = arith.mulf %193, %195 : vector<16x1024xf32>
    %c16_114 = arith.constant 16 : index
    %c0_115 = arith.constant 0 : index
    %197 = vector.load %arg5[%c16_114, %c0_115] : memref<145x1024xf32, #tpu.memory_space<vmem>>, vector<16x1024xf32>
    tpu.vector_store %arg5[%c16_114, %c0_115], %196 {strides = array<i32>} : memref<145x1024xf32, #tpu.memory_space<vmem>>, vector<16x1024xf32>,
    %c15_i32_116 = arith.constant 15 : i32
    %198 = tpu.dynamic_rotate %187 by %c15_i32_116 dim 1 : vector<16x1024xf32>, i32 -> vector<16x1024xf32>
    %c2_117 = arith.constant 2 : index
    %c0_118 = arith.constant 0 : index
    %199 = vector.load %arg2[%c2_117, %c0_118] : memref<13x1024xf32, #tpu.memory_space<vmem>>, vector<1x1024xf32>
    %200 = vector.broadcast %199 : vector<1x1024xf32> to vector<16x1024xf32>
    %201 = arith.mulf %198, %200 : vector<16x1024xf32>
    %c32_119 = arith.constant 32 : index
    %c0_120 = arith.constant 0 : index
    %202 = vector.load %arg5[%c32_119, %c0_120] : memref<145x1024xf32, #tpu.memory_space<vmem>>, vector<16x1024xf32>
    tpu.vector_store %arg5[%c32_119, %c0_120], %201 {strides = array<i32>} : memref<145x1024xf32, #tpu.memory_space<vmem>>, vector<16x1024xf32>,
    %c1_i32_121 = arith.constant 1 : i32
    %203 = tpu.dynamic_rotate %187 by %c1_i32_121 dim 1 : vector<16x1024xf32>, i32 -> vector<16x1024xf32>
    %c3_122 = arith.constant 3 : index
    %c0_123 = arith.constant 0 : index
    %204 = vector.load %arg2[%c3_122, %c0_123] : memref<13x1024xf32, #tpu.memory_space<vmem>>, vector<1x1024xf32>
    %205 = vector.broadcast %204 : vector<1x1024xf32> to vector<16x1024xf32>
    %206 = arith.mulf %203, %205 : vector<16x1024xf32>
    %c48_124 = arith.constant 48 : index
    %c0_125 = arith.constant 0 : index
    %207 = vector.load %arg5[%c48_124, %c0_125] : memref<145x1024xf32, #tpu.memory_space<vmem>>, vector<16x1024xf32>
    tpu.vector_store %arg5[%c48_124, %c0_125], %206 {strides = array<i32>} : memref<145x1024xf32, #tpu.memory_space<vmem>>, vector<16x1024xf32>,
    %c64_126 = arith.constant 64 : index
    %c0_127 = arith.constant 0 : index
    %208 = vector.load %arg5[%c64_126, %c0_127] : memref<145x1024xf32, #tpu.memory_space<vmem>>, vector<16x1024xf32>
    tpu.vector_store %arg5[%c64_126, %c0_127], %187 {strides = array<i32>} : memref<145x1024xf32, #tpu.memory_space<vmem>>, vector<16x1024xf32>,
    %c1023_i32_128 = arith.constant 1023 : i32
    %209 = tpu.dynamic_rotate %187 by %c1023_i32_128 dim 1 : vector<16x1024xf32>, i32 -> vector<16x1024xf32>
    %c5_129 = arith.constant 5 : index
    %c0_130 = arith.constant 0 : index
    %210 = vector.load %arg2[%c5_129, %c0_130] : memref<13x1024xf32, #tpu.memory_space<vmem>>, vector<1x1024xf32>
    %211 = vector.broadcast %210 : vector<1x1024xf32> to vector<16x1024xf32>
    %212 = arith.mulf %209, %211 : vector<16x1024xf32>
    %c80_131 = arith.constant 80 : index
    %c0_132 = arith.constant 0 : index
    %213 = vector.load %arg5[%c80_131, %c0_132] : memref<145x1024xf32, #tpu.memory_space<vmem>>, vector<16x1024xf32>
    tpu.vector_store %arg5[%c80_131, %c0_132], %212 {strides = array<i32>} : memref<145x1024xf32, #tpu.memory_space<vmem>>, vector<16x1024xf32>,
    %c1009_i32_133 = arith.constant 1009 : i32
    %214 = tpu.dynamic_rotate %187 by %c1009_i32_133 dim 1 : vector<16x1024xf32>, i32 -> vector<16x1024xf32>
    %c6_134 = arith.constant 6 : index
    %c0_135 = arith.constant 0 : index
    %215 = vector.load %arg2[%c6_134, %c0_135] : memref<13x1024xf32, #tpu.memory_space<vmem>>, vector<1x1024xf32>
    %216 = vector.broadcast %215 : vector<1x1024xf32> to vector<16x1024xf32>
    %217 = arith.mulf %214, %216 : vector<16x1024xf32>
    %c96_136 = arith.constant 96 : index
    %c0_137 = arith.constant 0 : index
    %218 = vector.load %arg5[%c96_136, %c0_137] : memref<145x1024xf32, #tpu.memory_space<vmem>>, vector<16x1024xf32>
    tpu.vector_store %arg5[%c96_136, %c0_137], %217 {strides = array<i32>} : memref<145x1024xf32, #tpu.memory_space<vmem>>, vector<16x1024xf32>,
    %c1008_i32_138 = arith.constant 1008 : i32
    %219 = tpu.dynamic_rotate %187 by %c1008_i32_138 dim 1 : vector<16x1024xf32>, i32 -> vector<16x1024xf32>
    %c7_139 = arith.constant 7 : index
    %c0_140 = arith.constant 0 : index
    %220 = vector.load %arg2[%c7_139, %c0_140] : memref<13x1024xf32, #tpu.memory_space<vmem>>, vector<1x1024xf32>
    %221 = vector.broadcast %220 : vector<1x1024xf32> to vector<16x1024xf32>
    %222 = arith.mulf %219, %221 : vector<16x1024xf32>
    %c112_141 = arith.constant 112 : index
    %c0_142 = arith.constant 0 : index
    %223 = vector.load %arg5[%c112_141, %c0_142] : memref<145x1024xf32, #tpu.memory_space<vmem>>, vector<16x1024xf32>
    tpu.vector_store %arg5[%c112_141, %c0_142], %222 {strides = array<i32>} : memref<145x1024xf32, #tpu.memory_space<vmem>>, vector<16x1024xf32>,
    %c1007_i32_143 = arith.constant 1007 : i32
    %224 = tpu.dynamic_rotate %187 by %c1007_i32_143 dim 1 : vector<16x1024xf32>, i32 -> vector<16x1024xf32>
    %c8_144 = arith.constant 8 : index
    %c0_145 = arith.constant 0 : index
    %225 = vector.load %arg2[%c8_144, %c0_145] : memref<13x1024xf32, #tpu.memory_space<vmem>>, vector<1x1024xf32>
    %226 = vector.broadcast %225 : vector<1x1024xf32> to vector<16x1024xf32>
    %227 = arith.mulf %224, %226 : vector<16x1024xf32>
    %c128 = arith.constant 128 : index
    %c0_146 = arith.constant 0 : index
    %228 = vector.load %arg5[%c128, %c0_146] : memref<145x1024xf32, #tpu.memory_space<vmem>>, vector<16x1024xf32>
    tpu.vector_store %arg5[%c128, %c0_146], %227 {strides = array<i32>} : memref<145x1024xf32, #tpu.memory_space<vmem>>, vector<16x1024xf32>,
    %c4_147 = arith.constant 4 : index
    %c0_148 = arith.constant 0 : index
    %229 = vector.load %arg2[%c4_147, %c0_148] : memref<13x1024xf32, #tpu.memory_space<vmem>>, vector<1x1024xf32>
    %c144_149 = arith.constant 144 : index
    %c0_150 = arith.constant 0 : index
    %230 = vector.load %arg5[%c144_149, %c0_150] : memref<145x1024xf32, #tpu.memory_space<vmem>>, vector<1x1024xf32>
    tpu.vector_store %arg5[%c144_149, %c0_150], %229 {strides = array<i32>} : memref<145x1024xf32, #tpu.memory_space<vmem>>, vector<1x1024xf32>,
    %c160 = arith.constant 160 : index
    %c0_151 = arith.constant 0 : index
    %231 = vector.load %arg3[%c160, %c0_151] : memref<163x145xf32, #tpu.memory_space<vmem>>, vector<3x145xf32>
    %c0_152 = arith.constant 0 : index
    %c0_153 = arith.constant 0 : index
    %232 = vector.load %arg5[%c0_152, %c0_153] : memref<145x1024xf32, #tpu.memory_space<vmem>>, vector<145x1024xf32>
    %cst_154 = arith.constant dense<0.000000e+00> : vector<3x1024xf32>
    %233 = tpu.matmul %231, %232, %cst_154 {dimension_numbers = #tpu.dot_dimension_numbers<[1], [0], [0], [1], [0, 0, 1, 1], [], []>} : vector<3x145xf32>, vector<145x1024xf32>, vector<3x1024xf32> -> vector<3x1024xf32>
    %c0_155 = arith.constant 0 : index
    %c0_156 = arith.constant 0 : index
    %234 = vector.load %arg1[%c0_155, %c0_156] : memref<8x1024xf32, #tpu.memory_space<vmem>>, vector<3x1024xf32>
    %235 = arith.addf %233, %234 : vector<3x1024xf32>
    %c0_157 = arith.constant 0 : index
    %c0_158 = arith.constant 0 : index
    %236 = vector.load %arg4[%c0_157, %c0_158] : memref<3x1024xf32, #tpu.memory_space<vmem>>, vector<3x1024xf32>
    tpu.vector_store %arg4[%c0_157, %c0_158], %235 {strides = array<i32>} : memref<3x1024xf32, #tpu.memory_space<vmem>>, vector<3x1024xf32>,
    return
  }
  func.func @transform_0(%arg0: i32) -> (i32, i32) {
    %c0_i32 = arith.constant 0 : i32
    %c0_i32_0 = arith.constant 0 : i32
    return %c0_i32, %arg0 : i32, i32
  }
  func.func @transform_1(%arg0: i32) -> (i32, i32) {
    %c0_i32 = arith.constant 0 : i32
    %c0_i32_0 = arith.constant 0 : i32
    %c0_i32_1 = arith.constant 0 : i32
    return %c0_i32, %c0_i32_0 : i32, i32
  }
  func.func @transform_2(%arg0: i32) -> (i32, i32) {
    %c0_i32 = arith.constant 0 : i32
    %c0_i32_0 = arith.constant 0 : i32
    %c0_i32_1 = arith.constant 0 : i32
    return %c0_i32, %c0_i32_0 : i32, i32
  }
  func.func @transform_3(%arg0: i32) -> (i32, i32) {
    %c0_i32 = arith.constant 0 : i32
    %c0_i32_0 = arith.constant 0 : i32
    return %c0_i32, %arg0 : i32, i32
  }
}

</mosaic_0001>

<llo_original>
// kernel: tpu_custom_call.1
$region0: #{tpu_custom_call.1}
  #allocation0 [shape = 'u32[]', space=smem, size = 0x4, offset = 0x4, fixed_abs, tag = 'smem constant byte address 0x4 - core index']
  #allocation1 [shape = 'u32[144,128]{1,0:T(1,128)}', space=vmem, size = 0x12000, scoped, tag = 'internal scratch']
  #allocation2 [shape = 'f32[145,1024]{1,0:T(8,128)}', space=vmem, size = 0x98000, scoped, tag = 'scratch operand']
  %s0 = inlined_call_operand.vmem [shape: f32[8,2048], index: 0, kind: input, shape index: {}]
  %s1 = inlined_call_operand.vmem [shape: f32[13,1024], index: 1, kind: input, shape index: {}]
  %s2 = inlined_call_operand.vmem [shape: f32[163,145], index: 2, kind: input, shape index: {}]
  %s3 = inlined_call_operand.hbm [shape: f32[3,2048], index: 3, kind: output, shape index: {}]
  %s4 = sld [smem:[#allocation0]]
  $region45: #{tpu_custom_call.1} parent=0
    _
  %s6 = ssub.s32 1, %s4
  %s7 = scalar_select 0, %s6, %s4
  $region1: #{tpu_custom_call.1} parent=0
    #allocation3 [shape = 'u8[32768]{0}', space=vmem, size = 0x8000, scoped, tag = 'output window, operand 0']
    #allocation4 [shape = 's32[2]{0}', space=sflag, size = 0x8, scoped, tag = 'scoped memory for tpu_custom_call.1']
    %8 = vsyncpa [#allocation4], 0
    %s9 = scalar_lea.sflag [#allocation4], 1
    %10 = vsyncpa %s9, 0
    loop: start=0, step=1, limit=4
    $region2: #{tpu_custom_call.1} parent=1 // loop_pre_header
      _
    $region3: #{tpu_custom_call.1} parent=1 // loop_header
      %s12 = sphi 0, %s16
      %p13 = scmp.ge.s32.totalorder %s12, 4
      %s22 = sphi 0, %s24
      %s25 = sphi 0, %s22
      %s26 = sphi 0, %s25
      %s42 = sphi 0, %s26
      %s46 = sphi 0, %s46
      %s48 = sphi 0, %s46
      %s49 = sphi 0, %s48
      %s63 = sphi 0, %s49
      %s67 = sphi 0, %s67
      %s69 = sphi 0, %s67
      %s70 = sphi 0, %s69
      %s84 = sphi 0, %s70
      %s90 = sphi 0, %s92
      %s93 = sphi 0, %s90
      %s94 = sphi 0, %s93
      %s110 = sphi 0, %s94
    $region4: #{tpu_custom_call.1} parent=1 // loop_header_branch
      %15 = sbr.rel (%p13) target = $region8
    $region5: #{tpu_custom_call.1} parent=1 // loop_body
      %s17 = ssub.s32 %s12, 1
      %s18 = ssub.s32 %s12, 2
      %s19 = sadd.s32 %s12, 1
      %s20 = ssub.s32 %s12, %s19
      %p21 = scmp.eq.s32.totalorder %s20, 0
      %s23 = sadd.s32 %s22, 1
      %s24 = scalar_select %p21, %s22, %s23
      %p27 = pneg %p21
      %p28 = scmp.eq.s32.totalorder %s12, 1
      %p29 = por %p27, %p28
      %p30 = scmp.ne.s32.totalorder %s22, %s25
      %p31 = scmp.eq.s32.totalorder %s12, 0
      %p32 = por %p30, %p31
      %p33 = scmp.ne.s32.totalorder %s22, %s25
      %p34 = scmp.eq.s32.totalorder %s17, 1
      %p35 = por %p33, %p34
      %p36 = scmp.ne.s32.totalorder %s25, %s26
      %p37 = scmp.eq.s32.totalorder %s17, 0
      %p38 = por %p36, %p37
      %p39 = scmp.ne.s32.totalorder %s25, %s26
      %p40 = scmp.eq.s32.totalorder %s18, 1
      %p41 = por %p39, %p40
      %p43 = scmp.ne.s32.totalorder %s26, %s42
      %p44 = scmp.eq.s32.totalorder %s18, 0
      %p45 = por %p43, %p44
      %s47 = sadd.s32 %s46, 1
      %p50 = scmp.eq.s32.totalorder %s12, 1
      %p51 = scmp.ne.s32.totalorder %s46, %s48
      %p52 = scmp.eq.s32.totalorder %s12, 0
      %p53 = por %p51, %p52
      %p54 = scmp.ne.s32.totalorder %s46, %s48
      %p55 = scmp.eq.s32.totalorder %s17, 1
      %p56 = por %p54, %p55
      %p57 = scmp.ne.s32.totalorder %s48, %s49
      %p58 = scmp.eq.s32.totalorder %s17, 0
      %p59 = por %p57, %p58
      %p60 = scmp.ne.s32.totalorder %s48, %s49
      %p61 = scmp.eq.s32.totalorder %s18, 1
      %p62 = por %p60, %p61
      %p64 = scmp.ne.s32.totalorder %s49, %s63
      %p65 = scmp.eq.s32.totalorder %s18, 0
      %p66 = por %p64, %p65
      %s68 = sadd.s32 %s67, 1
      %p71 = scmp.eq.s32.totalorder %s12, 1
      %p72 = scmp.ne.s32.totalorder %s67, %s69
      %p73 = scmp.eq.s32.totalorder %s12, 0
      %p74 = por %p72, %p73
      %p75 = scmp.ne.s32.totalorder %s67, %s69
      %p76 = scmp.eq.s32.totalorder %s17, 1
      %p77 = por %p75, %p76
      %p78 = scmp.ne.s32.totalorder %s69, %s70
      %p79 = scmp.eq.s32.totalorder %s17, 0
      %p80 = por %p78, %p79
      %p81 = scmp.ne.s32.totalorder %s69, %s70
      %p82 = scmp.eq.s32.totalorder %s18, 1
      %p83 = por %p81, %p82
      %p85 = scmp.ne.s32.totalorder %s70, %s84
      %p86 = scmp.eq.s32.totalorder %s18, 0
      %p87 = por %p85, %p86
      %s88 = ssub.s32 %s12, %s19
      %p89 = scmp.eq.s32.totalorder %s88, 0
      %s91 = sadd.s32 %s90, 1
      %s92 = scalar_select %p89, %s90, %s91
      %p95 = pneg %p89
      %p96 = scmp.eq.s32.totalorder %s12, 1
      %p97 = por %p95, %p96
      %p98 = scmp.ne.s32.totalorder %s90, %s93
      %p99 = scmp.eq.s32.totalorder %s12, 0
      %p100 = por %p98, %p99
      %p101 = scmp.ne.s32.totalorder %s90, %s93
      %p102 = scmp.eq.s32.totalorder %s17, 1
      %p103 = por %p101, %p102
      %p104 = scmp.ne.s32.totalorder %s93, %s94
      %p105 = scmp.eq.s32.totalorder %s17, 0
      %p106 = por %p104, %p105
      %p107 = scmp.ne.s32.totalorder %s93, %s94
      %p108 = scmp.eq.s32.totalorder %s18, 1
      %p109 = por %p107, %p108
      %p111 = scmp.ne.s32.totalorder %s94, %s110
      %p112 = scmp.eq.s32.totalorder %s18, 0
      %p113 = por %p111, %p112
      %p114 = scmp.le.s32.totalorder 1, %s12
      %p115 = scmp.lt.s32.totalorder %s12, 3
      %p116 = pnand %p114, %p115
      %p117 = pneg %p116
      // Predicated region
      $region9: #{tpu_custom_call.1} parent=5 // pred_check
        _
      $region10: #{tpu_custom_call.1} parent=5 // pred_check_branch
        %119 = sbr.rel (%p116) target = $region12
      $region11: #{tpu_custom_call.1} parent=5 // pred_region
        %s120 = ssub.s32 %s12, 1
        // Predicated region
        $region13: #{tpu_custom_call.1} parent=11 // pred_check
          %p121 = pneg %p59
        $region14: #{tpu_custom_call.1} parent=11 // pred_check_branch
          %123 = sbr.rel (%p121) target = $region16
        $region15: #{tpu_custom_call.1} parent=11 // pred_region
          _
        $region16: #{tpu_custom_call.1} parent=11 // pred_fallthru
          _
        // Predicated region
        $region17: #{tpu_custom_call.1} parent=11 // pred_check
          %p124 = pneg %p80
        $region18: #{tpu_custom_call.1} parent=11 // pred_check_branch
          %126 = sbr.rel (%p124) target = $region20
        $region19: #{tpu_custom_call.1} parent=11 // pred_region
          _
        $region20: #{tpu_custom_call.1} parent=11 // pred_fallthru
          _
      $region12: #{tpu_custom_call.1} parent=5 // pred_fallthru
        _
      %p127 = scmp.lt.s32.totalorder %s12, 2
      // Predicated region
      $region21: #{tpu_custom_call.1} parent=5 // pred_check
        %p128 = pneg %p127
      $region22: #{tpu_custom_call.1} parent=5 // pred_check_branch
        %130 = sbr.rel (%p128) target = $region24
      $region23: #{tpu_custom_call.1} parent=5 // pred_region
        // Predicated region
        $region25: #{tpu_custom_call.1} parent=23 // pred_check
          %p131 = pneg %p32
        $region26: #{tpu_custom_call.1} parent=23 // pred_check_branch
          %133 = sbr.rel (%p131) target = $region28
        $region27: #{tpu_custom_call.1} parent=23 // pred_region
          %s134 = smul.u32 8, %s12
          %p135 = scmp.lt.s32.totalorder %s134, 15
          %s136 = scalar_select %p135, %s134, 15
          %s137 = smul.addr %s136, 8
          %s138 = scalar_lea.vmem %s0, %s137
          %s139 = smul.u32 8, %s12
        $region28: #{tpu_custom_call.1} parent=23 // pred_fallthru
          _
      $region24: #{tpu_custom_call.1} parent=5 // pred_fallthru
        _
      %p140 = scmp.le.s32.totalorder 1, %s12
      %p141 = scmp.lt.s32.totalorder %s12, 3
      %p142 = pnand %p140, %p141
      %p143 = pneg %p142
      // Predicated region
      $region29: #{tpu_custom_call.1} parent=5 // pred_check
        _
      $region30: #{tpu_custom_call.1} parent=5 // pred_check_branch
        %145 = sbr.rel (%p142) target = $region32
      $region31: #{tpu_custom_call.1} parent=5 // pred_region
        %s146 = ssub.s32 %s12, 1
        %s147 = smul.u32 8, %s17
        %p148 = scmp.lt.s32.totalorder %s147, 15
        %s149 = scalar_select %p148, %s147, 15
        %s150 = smul.addr %s149, 8
        %s151 = scalar_lea.vmem %s0, %s150
        %p152 = pneg %p38
        %p153 = pneg %p35
        %p154 = pneg %p59
        %p155 = pneg %p56
        %p156 = pneg %p80
        %p157 = pneg %p77
        %p158 = pneg %p106
        %p159 = pneg %p103
        %s160 = sand.u32 %s93, 1
        %s161 = scalar_lea.sflag [#allocation4], %s160
        %s162 = sand.u32 %s93, 1
        %s163 = smul.addr %s162, 32
        %s164 = scalar_lea.vmem [#allocation3], %s163
        %s165 = smul.u32 8, %s17
        %p166 = scmp.lt.s32.totalorder %s165, 15
        %s167 = scalar_select %p166, %s165, 15
        %s168 = smul.addr %s167, 8
        %s169 = scalar_lea.vmem %s0, %s168
        %s170 = smul.u32 8, %s17
        %s171 = smul.u32 8, %s17
        %v172 = vld [vmem:[%s169] sm:$0xff]
        %v173 = vld [vmem:[%s169 + $0x8] sm:$0xff]
        %v174 = vld [vmem:[%s169 + $0x10] sm:$0xff]
        %v175 = vld [vmem:[%s169 + $0x18] sm:$0xff]
        %v176 = vld [vmem:[%s169 + $0x20] sm:$0xff]
        %v177 = vld [vmem:[%s169 + $0x28] sm:$0xff]
        %v178 = vld [vmem:[%s169 + $0x30] sm:$0xff]
        %v179 = vld [vmem:[%s169 + $0x38] sm:$0xff]
        %180 = vrot.lane.b32.xlu0 %v172, 17
        %v181 = vpop.permute.xlu0 %180
        %182 = vrot.lane.b32.xlu0 %v173, 17
        %v183 = vpop.permute.xlu0 %182
        %184 = vrot.lane.b32.xlu0 %v174, 17
        %v185 = vpop.permute.xlu0 %184
        %186 = vrot.lane.b32.xlu0 %v175, 17
        %v187 = vpop.permute.xlu0 %186
        %188 = vrot.lane.b32.xlu0 %v176, 17
        %v189 = vpop.permute.xlu0 %188
        %190 = vrot.lane.b32.xlu0 %v177, 17
        %v191 = vpop.permute.xlu0 %190
        %192 = vrot.lane.b32.xlu0 %v178, 17
        %v193 = vpop.permute.xlu0 %192
        %194 = vrot.lane.b32.xlu0 %v179, 17
        %v195 = vpop.permute.xlu0 %194
        %v196 = vlaneseq
        %v197 = vand.u32 %v196, 127
        %vm198 = vcmp.lt.s32.totalorder %v197, 17
        %v199 = vsel %vm198, %v193, %v195
        %v200 = vsel %vm198, %v191, %v193
        %v201 = vsel %vm198, %v189, %v191
        %v202 = vsel %vm198, %v187, %v189
        %v203 = vsel %vm198, %v185, %v187
        %v204 = vsel %vm198, %v183, %v185
        %v205 = vsel %vm198, %v181, %v183
        %v206 = vsel %vm198, %v195, %v181
        %v207 = vld [vmem:[%s1] ss:$8 sm:$0xf]
        %v208 = vld [vmem:[%s1] ss:$8 sm:$0xf0]
        %v209 = vor.u32 %v207, %v208
        %v211 = vlaneseq
        %v212 = vshrl.u32 %v211, 7
        %v213 = vsub.s32 0, %v212
        %v214 = vrot.slane %v209, %v213
        %v215 = vlaneseq
        %v216 = vshrl.u32 %v215, 7
        %v217 = vsub.s32 1, %v216
        %v218 = vrot.slane %v209, %v217
        %v219 = vlaneseq
        %v220 = vshrl.u32 %v219, 7
        %v221 = vsub.s32 2, %v220
        %v222 = vrot.slane %v209, %v221
        %v223 = vlaneseq
        %v224 = vshrl.u32 %v223, 7
        %v225 = vsub.s32 3, %v224
        %v226 = vrot.slane %v209, %v225
        %v227 = vlaneseq
        %v228 = vshrl.u32 %v227, 7
        %v229 = vsub.s32 4, %v228
        %v230 = vrot.slane %v209, %v229
        %v231 = vlaneseq
        %v232 = vshrl.u32 %v231, 7
        %v233 = vsub.s32 5, %v232
        %v234 = vrot.slane %v209, %v233
        %v235 = vlaneseq
        %v236 = vshrl.u32 %v235, 7
        %v237 = vsub.s32 6, %v236
        %v238 = vrot.slane %v209, %v237
        %v239 = vlaneseq
        %v240 = vshrl.u32 %v239, 7
        %v241 = vsub.s32 7, %v240
        %v242 = vrot.slane %v209, %v241
        %v251 = vmul.f32 %v206, %v214
        %v252 = vmul.f32 %v205, %v218
        %v253 = vmul.f32 %v204, %v222
        %v254 = vmul.f32 %v203, %v226
        %v255 = vmul.f32 %v202, %v230
        %v256 = vmul.f32 %v201, %v234
        %v257 = vmul.f32 %v200, %v238
        %v258 = vmul.f32 %v199, %v242
        %259 = vst [vmem:[#allocation2] sm:$0xff] %v251
        %260 = vst [vmem:[#allocation2 + $0x8] sm:$0xff] %v252
        %261 = vst [vmem:[#allocation2 + $0x10] sm:$0xff] %v253
        %262 = vst [vmem:[#allocation2 + $0x18] sm:$0xff] %v254
        %263 = vst [vmem:[#allocation2 + $0x20] sm:$0xff] %v255
        %264 = vst [vmem:[#allocation2 + $0x28] sm:$0xff] %v256
        %265 = vst [vmem:[#allocation2 + $0x30] sm:$0xff] %v257
        %266 = vst [vmem:[#allocation2 + $0x38] sm:$0xff] %v258
        %267 = vrot.lane.b32.xlu0 %v172, 16
        %v268 = vpop.permute.xlu0 %267
        %269 = vrot.lane.b32.xlu0 %v173, 16
        %v270 = vpop.permute.xlu0 %269
        %271 = vrot.lane.b32.xlu0 %v174, 16
        %v272 = vpop.permute.xlu0 %271
        %273 = vrot.lane.b32.xlu0 %v175, 16
        %v274 = vpop.permute.xlu0 %273
        %275 = vrot.lane.b32.xlu0 %v176, 16
        %v276 = vpop.permute.xlu0 %275
        %277 = vrot.lane.b32.xlu0 %v177, 16
        %v278 = vpop.permute.xlu0 %277
        %279 = vrot.lane.b32.xlu0 %v178, 16
        %v280 = vpop.permute.xlu0 %279
        %281 = vrot.lane.b32.xlu0 %v179, 16
        %v282 = vpop.permute.xlu0 %281
        %vm283 = vcmp.lt.s32.totalorder %v197, 16
        %v284 = vsel %vm283, %v280, %v282
        %v285 = vsel %vm283, %v278, %v280
        %v286 = vsel %vm283, %v276, %v278
        %v287 = vsel %vm283, %v274, %v276
        %v288 = vsel %vm283, %v272, %v274
        %v289 = vsel %vm283, %v270, %v272
        %v290 = vsel %vm283, %v268, %v270
        %v291 = vsel %vm283, %v282, %v268
        %s292 = scalar_lea.vmem %s1, 1
        %v293 = vld [vmem:[%s292] ss:$8 sm:$0xf]
        %v294 = vld [vmem:[%s292] ss:$8 sm:$0xf0]
        %v295 = vor.u32 %v293, %v294
        %v297 = vlaneseq
        %v298 = vshrl.u32 %v297, 7
        %v299 = vsub.s32 0, %v298
        %v300 = vrot.slane %v295, %v299
        %v301 = vlaneseq
        %v302 = vshrl.u32 %v301, 7
        %v303 = vsub.s32 1, %v302
        %v304 = vrot.slane %v295, %v303
        %v305 = vlaneseq
        %v306 = vshrl.u32 %v305, 7
        %v307 = vsub.s32 2, %v306
        %v308 = vrot.slane %v295, %v307
        %v309 = vlaneseq
        %v310 = vshrl.u32 %v309, 7
        %v311 = vsub.s32 3, %v310
        %v312 = vrot.slane %v295, %v311
        %v313 = vlaneseq
        %v314 = vshrl.u32 %v313, 7
        %v315 = vsub.s32 4, %v314
        %v316 = vrot.slane %v295, %v315
        %v317 = vlaneseq
        %v318 = vshrl.u32 %v317, 7
        %v319 = vsub.s32 5, %v318
        %v320 = vrot.slane %v295, %v319
        %v321 = vlaneseq
        %v322 = vshrl.u32 %v321, 7
        %v323 = vsub.s32 6, %v322
        %v324 = vrot.slane %v295, %v323
        %v325 = vlaneseq
        %v326 = vshrl.u32 %v325, 7
        %v327 = vsub.s32 7, %v326
        %v328 = vrot.slane %v295, %v327
        %v337 = vmul.f32 %v291, %v300
        %v338 = vmul.f32 %v290, %v304
        %v339 = vmul.f32 %v289, %v308
        %v340 = vmul.f32 %v288, %v312
        %v341 = vmul.f32 %v287, %v316
        %v342 = vmul.f32 %v286, %v320
        %v343 = vmul.f32 %v285, %v324
        %v344 = vmul.f32 %v284, %v328
        %345 = vst [vmem:[#allocation2 + $0x40] sm:$0xff] %v337
        %346 = vst [vmem:[#allocation2 + $0x48] sm:$0xff] %v338
        %347 = vst [vmem:[#allocation2 + $0x50] sm:$0xff] %v339
        %348 = vst [vmem:[#allocation2 + $0x58] sm:$0xff] %v340
        %349 = vst [vmem:[#allocation2 + $0x60] sm:$0xff] %v341
        %350 = vst [vmem:[#allocation2 + $0x68] sm:$0xff] %v342
        %351 = vst [vmem:[#allocation2 + $0x70] sm:$0xff] %v343
        %352 = vst [vmem:[#allocation2 + $0x78] sm:$0xff] %v344
        %353 = vrot.lane.b32.xlu0 %v172, 15
        %v354 = vpop.permute.xlu0 %353
        %355 = vrot.lane.b32.xlu0 %v173, 15
        %v356 = vpop.permute.xlu0 %355
        %357 = vrot.lane.b32.xlu0 %v174, 15
        %v358 = vpop.permute.xlu0 %357
        %359 = vrot.lane.b32.xlu0 %v175, 15
        %v360 = vpop.permute.xlu0 %359
        %361 = vrot.lane.b32.xlu0 %v176, 15
        %v362 = vpop.permute.xlu0 %361
        %363 = vrot.lane.b32.xlu0 %v177, 15
        %v364 = vpop.permute.xlu0 %363
        %365 = vrot.lane.b32.xlu0 %v178, 15
        %v366 = vpop.permute.xlu0 %365
        %367 = vrot.lane.b32.xlu0 %v179, 15
        %v368 = vpop.permute.xlu0 %367
        %vm369 = vcmp.lt.s32.totalorder %v197, 15
        %v370 = vsel %vm369, %v366, %v368
        %v371 = vsel %vm369, %v364, %v366
        %v372 = vsel %vm369, %v362, %v364
        %v373 = vsel %vm369, %v360, %v362
        %v374 = vsel %vm369, %v358, %v360
        %v375 = vsel %vm369, %v356, %v358
        %v376 = vsel %vm369, %v354, %v356
        %v377 = vsel %vm369, %v368, %v354
        %s378 = scalar_lea.vmem %s1, 2
        %v379 = vld [vmem:[%s378] ss:$8 sm:$0xf]
        %v380 = vld [vmem:[%s378] ss:$8 sm:$0xf0]
        %v381 = vor.u32 %v379, %v380
        %v383 = vlaneseq
        %v384 = vshrl.u32 %v383, 7
        %v385 = vsub.s32 0, %v384
        %v386 = vrot.slane %v381, %v385
        %v387 = vlaneseq
        %v388 = vshrl.u32 %v387, 7
        %v389 = vsub.s32 1, %v388
        %v390 = vrot.slane %v381, %v389
        %v391 = vlaneseq
        %v392 = vshrl.u32 %v391, 7
        %v393 = vsub.s32 2, %v392
        %v394 = vrot.slane %v381, %v393
        %v395 = vlaneseq
        %v396 = vshrl.u32 %v395, 7
        %v397 = vsub.s32 3, %v396
        %v398 = vrot.slane %v381, %v397
        %v399 = vlaneseq
        %v400 = vshrl.u32 %v399, 7
        %v401 = vsub.s32 4, %v400
        %v402 = vrot.slane %v381, %v401
        %v403 = vlaneseq
        %v404 = vshrl.u32 %v403, 7
        %v405 = vsub.s32 5, %v404
        %v406 = vrot.slane %v381, %v405
        %v407 = vlaneseq
        %v408 = vshrl.u32 %v407, 7
        %v409 = vsub.s32 6, %v408
        %v410 = vrot.slane %v381, %v409
        %v411 = vlaneseq
        %v412 = vshrl.u32 %v411, 7
        %v413 = vsub.s32 7, %v412
        %v414 = vrot.slane %v381, %v413
        %v423 = vmul.f32 %v377, %v386
        %v424 = vmul.f32 %v376, %v390
        %v425 = vmul.f32 %v375, %v394
        %v426 = vmul.f32 %v374, %v398
        %v427 = vmul.f32 %v373, %v402
        %v428 = vmul.f32 %v372, %v406
        %v429 = vmul.f32 %v371, %v410
        %v430 = vmul.f32 %v370, %v414
        %431 = vst [vmem:[#allocation2 + $0x80] sm:$0xff] %v423
        %432 = vst [vmem:[#allocation2 + $0x88] sm:$0xff] %v424
        %433 = vst [vmem:[#allocation2 + $0x90] sm:$0xff] %v425
        %434 = vst [vmem:[#allocation2 + $0x98] sm:$0xff] %v426
        %435 = vst [vmem:[#allocation2 + $0xa0] sm:$0xff] %v427
        %436 = vst [vmem:[#allocation2 + $0xa8] sm:$0xff] %v428
        %437 = vst [vmem:[#allocation2 + $0xb0] sm:$0xff] %v429
        %438 = vst [vmem:[#allocation2 + $0xb8] sm:$0xff] %v430
        %439 = vrot.lane.b32.xlu0 %v172, 1
        %v440 = vpop.permute.xlu0 %439
        %441 = vrot.lane.b32.xlu0 %v173, 1
        %v442 = vpop.permute.xlu0 %441
        %443 = vrot.lane.b32.xlu0 %v174, 1
        %v444 = vpop.permute.xlu0 %443
        %445 = vrot.lane.b32.xlu0 %v175, 1
        %v446 = vpop.permute.xlu0 %445
        %447 = vrot.lane.b32.xlu0 %v176, 1
        %v448 = vpop.permute.xlu0 %447
        %449 = vrot.lane.b32.xlu0 %v177, 1
        %v450 = vpop.permute.xlu0 %449
        %451 = vrot.lane.b32.xlu0 %v178, 1
        %v452 = vpop.permute.xlu0 %451
        %453 = vrot.lane.b32.xlu0 %v179, 1
        %v454 = vpop.permute.xlu0 %453
        %vm455 = vcmp.lt.s32.totalorder %v197, 1
        %v456 = vsel %vm455, %v452, %v454
        %v457 = vsel %vm455, %v450, %v452
        %v458 = vsel %vm455, %v448, %v450
        %v459 = vsel %vm455, %v446, %v448
        %v460 = vsel %vm455, %v444, %v446
        %v461 = vsel %vm455, %v442, %v444
        %v462 = vsel %vm455, %v440, %v442
        %v463 = vsel %vm455, %v454, %v440
        %s464 = scalar_lea.vmem %s1, 3
        %v465 = vld [vmem:[%s464] ss:$8 sm:$0xf]
        %v466 = vld [vmem:[%s464] ss:$8 sm:$0xf0]
        %v467 = vor.u32 %v465, %v466
        %v469 = vlaneseq
        %v470 = vshrl.u32 %v469, 7
        %v471 = vsub.s32 0, %v470
        %v472 = vrot.slane %v467, %v471
        %v473 = vlaneseq
        %v474 = vshrl.u32 %v473, 7
        %v475 = vsub.s32 1, %v474
        %v476 = vrot.slane %v467, %v475
        %v477 = vlaneseq
        %v478 = vshrl.u32 %v477, 7
        %v479 = vsub.s32 2, %v478
        %v480 = vrot.slane %v467, %v479
        %v481 = vlaneseq
        %v482 = vshrl.u32 %v481, 7
        %v483 = vsub.s32 3, %v482
        %v484 = vrot.slane %v467, %v483
        %v485 = vlaneseq
        %v486 = vshrl.u32 %v485, 7
        %v487 = vsub.s32 4, %v486
        %v488 = vrot.slane %v467, %v487
        %v489 = vlaneseq
        %v490 = vshrl.u32 %v489, 7
        %v491 = vsub.s32 5, %v490
        %v492 = vrot.slane %v467, %v491
        %v493 = vlaneseq
        %v494 = vshrl.u32 %v493, 7
        %v495 = vsub.s32 6, %v494
        %v496 = vrot.slane %v467, %v495
        %v497 = vlaneseq
        %v498 = vshrl.u32 %v497, 7
        %v499 = vsub.s32 7, %v498
        %v500 = vrot.slane %v467, %v499
        %v509 = vmul.f32 %v463, %v472
        %v510 = vmul.f32 %v462, %v476
        %v511 = vmul.f32 %v461, %v480
        %v512 = vmul.f32 %v460, %v484
        %v513 = vmul.f32 %v459, %v488
        %v514 = vmul.f32 %v458, %v492
        %v515 = vmul.f32 %v457, %v496
        %v516 = vmul.f32 %v456, %v500
        %517 = vst [vmem:[#allocation2 + $0xc0] sm:$0xff] %v509
        %518 = vst [vmem:[#allocation2 + $0xc8] sm:$0xff] %v510
        %519 = vst [vmem:[#allocation2 + $0xd0] sm:$0xff] %v511
        %520 = vst [vmem:[#allocation2 + $0xd8] sm:$0xff] %v512
        %521 = vst [vmem:[#allocation2 + $0xe0] sm:$0xff] %v513
        %522 = vst [vmem:[#allocation2 + $0xe8] sm:$0xff] %v514
        %523 = vst [vmem:[#allocation2 + $0xf0] sm:$0xff] %v515
        %524 = vst [vmem:[#allocation2 + $0xf8] sm:$0xff] %v516
        %525 = vst [vmem:[#allocation2 + $0x100] sm:$0xff] %v172
        %526 = vst [vmem:[#allocation2 + $0x108] sm:$0xff] %v173
        %527 = vst [vmem:[#allocation2 + $0x110] sm:$0xff] %v174
        %528 = vst [vmem:[#allocation2 + $0x118] sm:$0xff] %v175
        %529 = vst [vmem:[#allocation2 + $0x120] sm:$0xff] %v176
        %530 = vst [vmem:[#allocation2 + $0x128] sm:$0xff] %v177
        %531 = vst [vmem:[#allocation2 + $0x130] sm:$0xff] %v178
        %532 = vst [vmem:[#allocation2 + $0x138] sm:$0xff] %v179
        %533 = vrot.lane.b32.xlu0 %v172, 127
        %v534 = vpop.permute.xlu0 %533
        %535 = vrot.lane.b32.xlu0 %v173, 127
        %v536 = vpop.permute.xlu0 %535
        %537 = vrot.lane.b32.xlu0 %v174, 127
        %v538 = vpop.permute.xlu0 %537
        %539 = vrot.lane.b32.xlu0 %v175, 127
        %v540 = vpop.permute.xlu0 %539
        %541 = vrot.lane.b32.xlu0 %v176, 127
        %v542 = vpop.permute.xlu0 %541
        %543 = vrot.lane.b32.xlu0 %v177, 127
        %v544 = vpop.permute.xlu0 %543
        %545 = vrot.lane.b32.xlu0 %v178, 127
        %v546 = vpop.permute.xlu0 %545
        %547 = vrot.lane.b32.xlu0 %v179, 127
        %v548 = vpop.permute.xlu0 %547
        %vm549 = vcmp.lt.s32.totalorder %v197, 127
        %v550 = vsel %vm549, %v546, %v548
        %v551 = vsel %vm549, %v544, %v546
        %v552 = vsel %vm549, %v542, %v544
        %v553 = vsel %vm549, %v540, %v542
        %v554 = vsel %vm549, %v538, %v540
        %v555 = vsel %vm549, %v536, %v538
        %v556 = vsel %vm549, %v534, %v536
        %v557 = vsel %vm549, %v548, %v534
        %s558 = scalar_lea.vmem %s1, 5
        %v559 = vld [vmem:[%s558] ss:$8 sm:$0xf]
        %v560 = vld [vmem:[%s558] ss:$8 sm:$0xf0]
        %v561 = vor.u32 %v559, %v560
        %v563 = vlaneseq
        %v564 = vshrl.u32 %v563, 7
        %v565 = vsub.s32 0, %v564
        %v566 = vrot.slane %v561, %v565
        %v567 = vlaneseq
        %v568 = vshrl.u32 %v567, 7
        %v569 = vsub.s32 1, %v568
        %v570 = vrot.slane %v561, %v569
        %v571 = vlaneseq
        %v572 = vshrl.u32 %v571, 7
        %v573 = vsub.s32 2, %v572
        %v574 = vrot.slane %v561, %v573
        %v575 = vlaneseq
        %v576 = vshrl.u32 %v575, 7
        %v577 = vsub.s32 3, %v576
        %v578 = vrot.slane %v561, %v577
        %v579 = vlaneseq
        %v580 = vshrl.u32 %v579, 7
        %v581 = vsub.s32 4, %v580
        %v582 = vrot.slane %v561, %v581
        %v583 = vlaneseq
        %v584 = vshrl.u32 %v583, 7
        %v585 = vsub.s32 5, %v584
        %v586 = vrot.slane %v561, %v585
        %v587 = vlaneseq
        %v588 = vshrl.u32 %v587, 7
        %v589 = vsub.s32 6, %v588
        %v590 = vrot.slane %v561, %v589
        %v591 = vlaneseq
        %v592 = vshrl.u32 %v591, 7
        %v593 = vsub.s32 7, %v592
        %v594 = vrot.slane %v561, %v593
        %v603 = vmul.f32 %v556, %v566
        %v604 = vmul.f32 %v555, %v570
        %v605 = vmul.f32 %v554, %v574
        %v606 = vmul.f32 %v553, %v578
        %v607 = vmul.f32 %v552, %v582
        %v608 = vmul.f32 %v551, %v586
        %v609 = vmul.f32 %v550, %v590
        %v610 = vmul.f32 %v557, %v594
        %611 = vst [vmem:[#allocation2 + $0x140] sm:$0xff] %v603
        %612 = vst [vmem:[#allocation2 + $0x148] sm:$0xff] %v604
        %613 = vst [vmem:[#allocation2 + $0x150] sm:$0xff] %v605
        %614 = vst [vmem:[#allocation2 + $0x158] sm:$0xff] %v606
        %615 = vst [vmem:[#allocation2 + $0x160] sm:$0xff] %v607
        %616 = vst [vmem:[#allocation2 + $0x168] sm:$0xff] %v608
        %617 = vst [vmem:[#allocation2 + $0x170] sm:$0xff] %v609
        %618 = vst [vmem:[#allocation2 + $0x178] sm:$0xff] %v610
        %619 = vrot.lane.b32.xlu0 %v172, 113
        %v620 = vpop.permute.xlu0 %619
        %621 = vrot.lane.b32.xlu0 %v173, 113
        %v622 = vpop.permute.xlu0 %621
        %623 = vrot.lane.b32.xlu0 %v174, 113
        %v624 = vpop.permute.xlu0 %623
        %625 = vrot.lane.b32.xlu0 %v175, 113
        %v626 = vpop.permute.xlu0 %625
        %627 = vrot.lane.b32.xlu0 %v176, 113
        %v628 = vpop.permute.xlu0 %627
        %629 = vrot.lane.b32.xlu0 %v177, 113
        %v630 = vpop.permute.xlu0 %629
        %631 = vrot.lane.b32.xlu0 %v178, 113
        %v632 = vpop.permute.xlu0 %631
        %633 = vrot.lane.b32.xlu0 %v179, 113
        %v634 = vpop.permute.xlu0 %633
        %vm635 = vcmp.lt.s32.totalorder %v197, 113
        %v636 = vsel %vm635, %v632, %v634
        %v637 = vsel %vm635, %v630, %v632
        %v638 = vsel %vm635, %v628, %v630
        %v639 = vsel %vm635, %v626, %v628
        %v640 = vsel %vm635, %v624, %v626
        %v641 = vsel %vm635, %v622, %v624
        %v642 = vsel %vm635, %v620, %v622
        %v643 = vsel %vm635, %v634, %v620
        %s644 = scalar_lea.vmem %s1, 6
        %v645 = vld [vmem:[%s644] ss:$8 sm:$0xf]
        %v646 = vld [vmem:[%s644] ss:$8 sm:$0xf0]
        %v647 = vor.u32 %v645, %v646
        %v649 = vlaneseq
        %v650 = vshrl.u32 %v649, 7
        %v651 = vsub.s32 0, %v650
        %v652 = vrot.slane %v647, %v651
        %v653 = vlaneseq
        %v654 = vshrl.u32 %v653, 7
        %v655 = vsub.s32 1, %v654
        %v656 = vrot.slane %v647, %v655
        %v657 = vlaneseq
        %v658 = vshrl.u32 %v657, 7
        %v659 = vsub.s32 2, %v658
        %v660 = vrot.slane %v647, %v659
        %v661 = vlaneseq
        %v662 = vshrl.u32 %v661, 7
        %v663 = vsub.s32 3, %v662
        %v664 = vrot.slane %v647, %v663
        %v665 = vlaneseq
        %v666 = vshrl.u32 %v665, 7
        %v667 = vsub.s32 4, %v666
        %v668 = vrot.slane %v647, %v667
        %v669 = vlaneseq
        %v670 = vshrl.u32 %v669, 7
        %v671 = vsub.s32 5, %v670
        %v672 = vrot.slane %v647, %v671
        %v673 = vlaneseq
        %v674 = vshrl.u32 %v673, 7
        %v675 = vsub.s32 6, %v674
        %v676 = vrot.slane %v647, %v675
        %v677 = vlaneseq
        %v678 = vshrl.u32 %v677, 7
        %v679 = vsub.s32 7, %v678
        %v680 = vrot.slane %v647, %v679
        %v689 = vmul.f32 %v642, %v652
        %v690 = vmul.f32 %v641, %v656
        %v691 = vmul.f32 %v640, %v660
        %v692 = vmul.f32 %v639, %v664
        %v693 = vmul.f32 %v638, %v668
        %v694 = vmul.f32 %v637, %v672
        %v695 = vmul.f32 %v636, %v676
        %v696 = vmul.f32 %v643, %v680
        %697 = vst [vmem:[#allocation2 + $0x180] sm:$0xff] %v689
        %698 = vst [vmem:[#allocation2 + $0x188] sm:$0xff] %v690
        %699 = vst [vmem:[#allocation2 + $0x190] sm:$0xff] %v691
        %700 = vst [vmem:[#allocation2 + $0x198] sm:$0xff] %v692
        %701 = vst [vmem:[#allocation2 + $0x1a0] sm:$0xff] %v693
        %702 = vst [vmem:[#allocation2 + $0x1a8] sm:$0xff] %v694
        %703 = vst [vmem:[#allocation2 + $0x1b0] sm:$0xff] %v695
        %704 = vst [vmem:[#allocation2 + $0x1b8] sm:$0xff] %v696
        %705 = vrot.lane.b32.xlu0 %v172, 112
        %v706 = vpop.permute.xlu0 %705
        %707 = vrot.lane.b32.xlu0 %v173, 112
        %v708 = vpop.permute.xlu0 %707
        %709 = vrot.lane.b32.xlu0 %v174, 112
        %v710 = vpop.permute.xlu0 %709
        %711 = vrot.lane.b32.xlu0 %v175, 112
        %v712 = vpop.permute.xlu0 %711
        %713 = vrot.lane.b32.xlu0 %v176, 112
        %v714 = vpop.permute.xlu0 %713
        %715 = vrot.lane.b32.xlu0 %v177, 112
        %v716 = vpop.permute.xlu0 %715
        %717 = vrot.lane.b32.xlu0 %v178, 112
        %v718 = vpop.permute.xlu0 %717
        %719 = vrot.lane.b32.xlu0 %v179, 112
        %v720 = vpop.permute.xlu0 %719
        %vm721 = vcmp.lt.s32.totalorder %v197, 112
        %v722 = vsel %vm721, %v718, %v720
        %v723 = vsel %vm721, %v716, %v718
        %v724 = vsel %vm721, %v714, %v716
        %v725 = vsel %vm721, %v712, %v714
        %v726 = vsel %vm721, %v710, %v712
        %v727 = vsel %vm721, %v708, %v710
        %v728 = vsel %vm721, %v706, %v708
        %v729 = vsel %vm721, %v720, %v706
        %s730 = scalar_lea.vmem %s1, 7
        %v731 = vld [vmem:[%s730] ss:$8 sm:$0xf]
        %v732 = vld [vmem:[%s730] ss:$8 sm:$0xf0]
        %v733 = vor.u32 %v731, %v732
        %v735 = vlaneseq
        %v736 = vshrl.u32 %v735, 7
        %v737 = vsub.s32 0, %v736
        %v738 = vrot.slane %v733, %v737
        %v739 = vlaneseq
        %v740 = vshrl.u32 %v739, 7
        %v741 = vsub.s32 1, %v740
        %v742 = vrot.slane %v733, %v741
        %v743 = vlaneseq
        %v744 = vshrl.u32 %v743, 7
        %v745 = vsub.s32 2, %v744
        %v746 = vrot.slane %v733, %v745
        %v747 = vlaneseq
        %v748 = vshrl.u32 %v747, 7
        %v749 = vsub.s32 3, %v748
        %v750 = vrot.slane %v733, %v749
        %v751 = vlaneseq
        %v752 = vshrl.u32 %v751, 7
        %v753 = vsub.s32 4, %v752
        %v754 = vrot.slane %v733, %v753
        %v755 = vlaneseq
        %v756 = vshrl.u32 %v755, 7
        %v757 = vsub.s32 5, %v756
        %v758 = vrot.slane %v733, %v757
        %v759 = vlaneseq
        %v760 = vshrl.u32 %v759, 7
        %v761 = vsub.s32 6, %v760
        %v762 = vrot.slane %v733, %v761
        %v763 = vlaneseq
        %v764 = vshrl.u32 %v763, 7
        %v765 = vsub.s32 7, %v764
        %v766 = vrot.slane %v733, %v765
        %v775 = vmul.f32 %v728, %v738
        %v776 = vmul.f32 %v727, %v742
        %v777 = vmul.f32 %v726, %v746
        %v778 = vmul.f32 %v725, %v750
        %v779 = vmul.f32 %v724, %v754
        %v780 = vmul.f32 %v723, %v758
        %v781 = vmul.f32 %v722, %v762
        %v782 = vmul.f32 %v729, %v766
        %783 = vst [vmem:[#allocation2 + $0x1c0] sm:$0xff] %v775
        %784 = vst [vmem:[#allocation2 + $0x1c8] sm:$0xff] %v776
        %785 = vst [vmem:[#allocation2 + $0x1d0] sm:$0xff] %v777
        %786 = vst [vmem:[#allocation2 + $0x1d8] sm:$0xff] %v778
        %787 = vst [vmem:[#allocation2 + $0x1e0] sm:$0xff] %v779
        %788 = vst [vmem:[#allocation2 + $0x1e8] sm:$0xff] %v780
        %789 = vst [vmem:[#allocation2 + $0x1f0] sm:$0xff] %v781
        %790 = vst [vmem:[#allocation2 + $0x1f8] sm:$0xff] %v782
        %791 = vrot.lane.b32.xlu0 %v172, 111
        %v792 = vpop.permute.xlu0 %791
        %793 = vrot.lane.b32.xlu0 %v173, 111
        %v794 = vpop.permute.xlu0 %793
        %795 = vrot.lane.b32.xlu0 %v174, 111
        %v796 = vpop.permute.xlu0 %795
        %797 = vrot.lane.b32.xlu0 %v175, 111
        %v798 = vpop.permute.xlu0 %797
        %799 = vrot.lane.b32.xlu0 %v176, 111
        %v800 = vpop.permute.xlu0 %799
        %801 = vrot.lane.b32.xlu0 %v177, 111
        %v802 = vpop.permute.xlu0 %801
        %803 = vrot.lane.b32.xlu0 %v178, 111
        %v804 = vpop.permute.xlu0 %803
        %805 = vrot.lane.b32.xlu0 %v179, 111
        %v806 = vpop.permute.xlu0 %805
        %vm807 = vcmp.lt.s32.totalorder %v197, 111
        %v808 = vsel %vm807, %v804, %v806
        %v809 = vsel %vm807, %v802, %v804
        %v810 = vsel %vm807, %v800, %v802
        %v811 = vsel %vm807, %v798, %v800
        %v812 = vsel %vm807, %v796, %v798
        %v813 = vsel %vm807, %v794, %v796
        %v814 = vsel %vm807, %v792, %v794
        %v815 = vsel %vm807, %v806, %v792
        %s816 = scalar_lea.vmem %s1, 64
        %v817 = vld [vmem:[%s816] ss:$8 sm:$0xf]
        %v818 = vld [vmem:[%s816] ss:$8 sm:$0xf0]
        %v819 = vor.u32 %v817, %v818
        %v821 = vlaneseq
        %v822 = vshrl.u32 %v821, 7
        %v823 = vsub.s32 0, %v822
        %v824 = vrot.slane %v819, %v823
        %v825 = vlaneseq
        %v826 = vshrl.u32 %v825, 7
        %v827 = vsub.s32 1, %v826
        %v828 = vrot.slane %v819, %v827
        %v829 = vlaneseq
        %v830 = vshrl.u32 %v829, 7
        %v831 = vsub.s32 2, %v830
        %v832 = vrot.slane %v819, %v831
        %v833 = vlaneseq
        %v834 = vshrl.u32 %v833, 7
        %v835 = vsub.s32 3, %v834
        %v836 = vrot.slane %v819, %v835
        %v837 = vlaneseq
        %v838 = vshrl.u32 %v837, 7
        %v839 = vsub.s32 4, %v838
        %v840 = vrot.slane %v819, %v839
        %v841 = vlaneseq
        %v842 = vshrl.u32 %v841, 7
        %v843 = vsub.s32 5, %v842
        %v844 = vrot.slane %v819, %v843
        %v845 = vlaneseq
        %v846 = vshrl.u32 %v845, 7
        %v847 = vsub.s32 6, %v846
        %v848 = vrot.slane %v819, %v847
        %v849 = vlaneseq
        %v850 = vshrl.u32 %v849, 7
        %v851 = vsub.s32 7, %v850
        %v852 = vrot.slane %v819, %v851
        %v861 = vmul.f32 %v814, %v824
        %v862 = vmul.f32 %v813, %v828
        %v863 = vmul.f32 %v812, %v832
        %v864 = vmul.f32 %v811, %v836
        %v865 = vmul.f32 %v810, %v840
        %v866 = vmul.f32 %v809, %v844
        %v867 = vmul.f32 %v808, %v848
        %v868 = vmul.f32 %v815, %v852
        %869 = vst [vmem:[#allocation2 + $0x200] sm:$0xff] %v861
        %870 = vst [vmem:[#allocation2 + $0x208] sm:$0xff] %v862
        %871 = vst [vmem:[#allocation2 + $0x210] sm:$0xff] %v863
        %872 = vst [vmem:[#allocation2 + $0x218] sm:$0xff] %v864
        %873 = vst [vmem:[#allocation2 + $0x220] sm:$0xff] %v865
        %874 = vst [vmem:[#allocation2 + $0x228] sm:$0xff] %v866
        %875 = vst [vmem:[#allocation2 + $0x230] sm:$0xff] %v867
        %876 = vst [vmem:[#allocation2 + $0x238] sm:$0xff] %v868
        %s877 = scalar_lea.vmem %s1, 4
        %v878 = vld [vmem:[%s877] ss:$8 sm:$0xf]
        %v879 = vld [vmem:[%s877] ss:$8 sm:$0xf0]
        %v880 = vor.u32 %v878, %v879
        %s881 = scalar_lea.vmem [#allocation2], 576
        %882 = vst [vmem:[%s881] ss:$8 sm:$0xf] %v880
        %883 = vst [vmem:[%s881] ss:$8 sm:$0xf0] %v880
        %v884 = vld [vmem:[%s2] sm:$0xff]
        %v885 = vld [vmem:[%s2 + $0x10] sm:$0xff]
        %v886 = vld [vmem:[#allocation2] sm:$0xff]
        %v887 = vld [vmem:[#allocation2 + $0x8] sm:$0xff]
        %v888 = vld [vmem:[#allocation2 + $0x10] sm:$0xff]
        %v889 = vld [vmem:[#allocation2 + $0x18] sm:$0xff]
        %v890 = vld [vmem:[#allocation2 + $0x20] sm:$0xff]
        %v891 = vld [vmem:[#allocation2 + $0x28] sm:$0xff]
        %v892 = vld [vmem:[#allocation2 + $0x30] sm:$0xff]
        %v893 = vld [vmem:[#allocation2 + $0x38] sm:$0xff]
        %v894 = vld [vmem:[#allocation2 + $0x40] sm:$0xff]
        %v895 = vld [vmem:[#allocation2 + $0x48] sm:$0xff]
        %v896 = vld [vmem:[#allocation2 + $0x50] sm:$0xff]
        %v897 = vld [vmem:[#allocation2 + $0x58] sm:$0xff]
        %v898 = vld [vmem:[#allocation2 + $0x60] sm:$0xff]
        %v899 = vld [vmem:[#allocation2 + $0x68] sm:$0xff]
        %v900 = vld [vmem:[#allocation2 + $0x70] sm:$0xff]
        %v901 = vld [vmem:[#allocation2 + $0x78] sm:$0xff]
        %v902 = vld [vmem:[#allocation2 + $0x80] sm:$0xff]
        %v903 = vld [vmem:[#allocation2 + $0x88] sm:$0xff]
        %v904 = vld [vmem:[#allocation2 + $0x90] sm:$0xff]
        %v905 = vld [vmem:[#allocation2 + $0x98] sm:$0xff]
        %v906 = vld [vmem:[#allocation2 + $0xa0] sm:$0xff]
        %v907 = vld [vmem:[#allocation2 + $0xa8] sm:$0xff]
        %v908 = vld [vmem:[#allocation2 + $0xb0] sm:$0xff]
        %v909 = vld [vmem:[#allocation2 + $0xb8] sm:$0xff]
        %v910 = vld [vmem:[#allocation2 + $0xc0] sm:$0xff]
        %v911 = vld [vmem:[#allocation2 + $0xc8] sm:$0xff]
        %v912 = vld [vmem:[#allocation2 + $0xd0] sm:$0xff]
        %v913 = vld [vmem:[#allocation2 + $0xd8] sm:$0xff]
        %v914 = vld [vmem:[#allocation2 + $0xe0] sm:$0xff]
        %v915 = vld [vmem:[#allocation2 + $0xe8] sm:$0xff]
        %v916 = vld [vmem:[#allocation2 + $0xf0] sm:$0xff]
        %v917 = vld [vmem:[#allocation2 + $0xf8] sm:$0xff]
        %v918 = vld [vmem:[#allocation2 + $0x100] sm:$0xff]
        %v919 = vld [vmem:[#allocation2 + $0x108] sm:$0xff]
        %v920 = vld [vmem:[#allocation2 + $0x110] sm:$0xff]
        %v921 = vld [vmem:[#allocation2 + $0x118] sm:$0xff]
        %v922 = vld [vmem:[#allocation2 + $0x120] sm:$0xff]
        %v923 = vld [vmem:[#allocation2 + $0x128] sm:$0xff]
        %v924 = vld [vmem:[#allocation2 + $0x130] sm:$0xff]
        %v925 = vld [vmem:[#allocation2 + $0x138] sm:$0xff]
        %v926 = vld [vmem:[#allocation2 + $0x140] sm:$0xff]
        %v927 = vld [vmem:[#allocation2 + $0x148] sm:$0xff]
        %v928 = vld [vmem:[#allocation2 + $0x150] sm:$0xff]
        %v929 = vld [vmem:[#allocation2 + $0x158] sm:$0xff]
        %v930 = vld [vmem:[#allocation2 + $0x160] sm:$0xff]
        %v931 = vld [vmem:[#allocation2 + $0x168] sm:$0xff]
        %v932 = vld [vmem:[#allocation2 + $0x170] sm:$0xff]
        %v933 = vld [vmem:[#allocation2 + $0x178] sm:$0xff]
        %v934 = vld [vmem:[#allocation2 + $0x180] sm:$0xff]
        %v935 = vld [vmem:[#allocation2 + $0x188] sm:$0xff]
        %v936 = vld [vmem:[#allocation2 + $0x190] sm:$0xff]
        %v937 = vld [vmem:[#allocation2 + $0x198] sm:$0xff]
        %v938 = vld [vmem:[#allocation2 + $0x1a0] sm:$0xff]
        %v939 = vld [vmem:[#allocation2 + $0x1a8] sm:$0xff]
        %v940 = vld [vmem:[#allocation2 + $0x1b0] sm:$0xff]
        %v941 = vld [vmem:[#allocation2 + $0x1b8] sm:$0xff]
        %v942 = vld [vmem:[#allocation2 + $0x1c0] sm:$0xff]
        %v943 = vld [vmem:[#allocation2 + $0x1c8] sm:$0xff]
        %v944 = vld [vmem:[#allocation2 + $0x1d0] sm:$0xff]
        %v945 = vld [vmem:[#allocation2 + $0x1d8] sm:$0xff]
        %v946 = vld [vmem:[#allocation2 + $0x1e0] sm:$0xff]
        %v947 = vld [vmem:[#allocation2 + $0x1e8] sm:$0xff]
        %v948 = vld [vmem:[#allocation2 + $0x1f0] sm:$0xff]
        %v949 = vld [vmem:[#allocation2 + $0x1f8] sm:$0xff]
        %v950 = vld [vmem:[#allocation2 + $0x200] sm:$0xff]
        %v951 = vld [vmem:[#allocation2 + $0x208] sm:$0xff]
        %v952 = vld [vmem:[#allocation2 + $0x210] sm:$0xff]
        %v953 = vld [vmem:[#allocation2 + $0x218] sm:$0xff]
        %v954 = vld [vmem:[#allocation2 + $0x220] sm:$0xff]
        %v955 = vld [vmem:[#allocation2 + $0x228] sm:$0xff]
        %v956 = vld [vmem:[#allocation2 + $0x230] sm:$0xff]
        %v957 = vld [vmem:[#allocation2 + $0x238] sm:$0xff]
        %v958 = vld [vmem:[#allocation2 + $0x240] sm:$0x1]
        %v959 = vld [vmem:[#allocation2 + $0x248] sm:$0x1]
        %v960 = vld [vmem:[#allocation2 + $0x250] sm:$0x1]
        %v961 = vld [vmem:[#allocation2 + $0x258] sm:$0x1]
        %v962 = vld [vmem:[#allocation2 + $0x260] sm:$0x1]
        %v963 = vld [vmem:[#allocation2 + $0x268] sm:$0x1]
        %v964 = vld [vmem:[#allocation2 + $0x270] sm:$0x1]
        %v965 = vld [vmem:[#allocation2 + $0x278] sm:$0x1]
        %vm966 = vcmask 596992
        %v968 = vsel %vm966, %v884, 0
        %v971 = vsel %vm966, %v885, 0
        %vm973 = vcmask 1040384
        %v975 = vsel %vm973, %v958, 0
        %v978 = vsel %vm973, %v959, 0
        %v981 = vsel %vm973, %v960, 0
        %v984 = vsel %vm973, %v961, 0
        %v987 = vsel %vm973, %v962, 0
        %v990 = vsel %vm973, %v963, 0
        %v993 = vsel %vm973, %v964, 0
        %v996 = vsel %vm973, %v965, 0
        %998 = vmatprep.subr.mxu0 %v887
        %999 = vmatpush1.msra.mxu0 %v886
        %1000 = vmatprep.subr.mxu0 %v895
        %1001 = vmatpush1.msra.mxu0 %v894
        %1002 = vmatprep.subr.mxu0 %v903
        %1003 = vmatpush1.msra.mxu0 %v902
        %1004 = vmatprep.subr.mxu0 %v911
        %1005 = vmatpush1.msra.mxu0 %v910
        %1006 = vmatprep.subr.mxu0 %v919
        %1007 = vmatpush1.msra.mxu0 %v918
        %1008 = vmatprep.subr.mxu0 %v927
        %1009 = vmatpush1.msra.mxu0 %v926
        %1010 = vmatprep.subr.mxu0 %v935
        %1011 = vmatpush1.msra.mxu0 %v934
        %1012 = vmatprep.subr.mxu0 %v943
        %1013 = vmatpush1.msra.mxu0 %v942
        %1014 = vmatprep.subr.mxu0 %v951
        %1015 = vmatpush1.msra.mxu0 %v950
        %1016 = vmatprep.subr.mxu0 %v978
        %1017 = vmatpush1.msra.mxu0 %v975
        %1018 = vmatprep.subr.mxu0 0.0
        %1019 = vmatpush1.msra.mxu0 0.0
        %1020 = vmatprep.subr.mxu0 0.0
        %1021 = vmatpush1.msra.mxu0 0.0
        %1022 = vmatprep.subr.mxu0 0.0
        %1023 = vmatpush1.msra.mxu0 0.0
        %1024 = vmatprep.subr.mxu0 0.0
        %1025 = vmatpush1.msra.mxu0 0.0
        %1026 = vmatprep.subr.mxu0 0.0
        %1027 = vmatpush1.msra.mxu0 0.0
        %1028 = vmatprep.subr.mxu0 0.0
        %1029 = vmatpush1.msra.mxu0 0.0
        %1030 = vmatprep.subr.mxu0 0.0
        %1031 = vmatpush1.msra.mxu0 0.0
        %1032 = vmatprep.subr.mxu0 0.0
        %1033 = vmatpush1.msra.mxu0 0.0
        %1034 = vmatprep.subr.mxu0 0.0
        %1035 = vmatpush1.msra.mxu0 0.0
        %1036 = vmatprep.subr.mxu0 0.0
        %1037 = vmatpush1.msra.mxu0 0.0
        %1038 = vmatprep.subr.mxu0 0.0
        %1039 = vmatpush1.msra.mxu0 0.0
        %1040 = vmatprep.subr.mxu0 0.0
        %1041 = vmatpush1.msra.mxu0 0.0
        %1042 = vmatprep.subr.mxu0 0.0
        %1043 = vmatpush1.msra.mxu0 0.0
        %1044 = vmatprep.subr.mxu0 0.0
        %1045 = vmatpush1.msra.mxu0 0.0
        %1046 = vmatprep.subr.mxu0 0.0
        %1047 = vmatpush1.msra.mxu0 0.0
        %1048 = vmatprep.subr.mxu0 0.0
        %1049 = vmatpush1.msra.mxu0 0.0
        %1050 = vmatprep.subr.mxu0 0.0
        %1051 = vmatpush1.msra.mxu0 0.0
        %1052 = vmatprep.subr.mxu0 0.0
        %1053 = vmatpush1.msra.mxu0 0.0
        %1054 = vmatprep.subr.mxu0 0.0
        %1055 = vmatpush1.msra.mxu0 0.0
        %1056 = vmatprep.subr.mxu0 0.0
        %1057 = vmatpush1.msra.mxu0 0.0
        %1058 = vmatprep.subr.mxu0 0.0
        %1059 = vmatpush1.msra.mxu0 0.0
        %1060 = vmatprep.subr.mxu0 0.0
        %1061 = vmatpush1.msra.mxu0 0.0
        %1062 = vmatprep.mubr.f32.mxu0 0.0
        %1063 = vmatmul.mubr.f32.gmra.mrb[0].mxu0 %v968
        %v1064 = vpop.f32.mrb[0].mxu0
        %v1065 = vadd.f32 0.0, %v1064
        %v1066 = vpop.f32.mrb[0].mxu0
        %v1067 = vadd.f32 0.0, %v1066
        %1068 = vmatprep.mubr.f32.mxu0 0.0
        %1069 = vmatmul.mubr.f32.gmra.mrb[0].mxu0 %v971
        %v1070 = vpop.f32.mrb[0].mxu0
        %v1071 = vadd.f32 0.0, %v1070
        %v1072 = vpop.f32.mrb[0].mxu0
        %v1073 = vadd.f32 0.0, %v1072
        %1074 = vdwg.mxu0
        %1075 = vmatprep.subr.mxu0 %v889
        %1076 = vmatpush1.msra.mxu0 %v888
        %1077 = vmatprep.subr.mxu0 %v897
        %1078 = vmatpush1.msra.mxu0 %v896
        %1079 = vmatprep.subr.mxu0 %v905
        %1080 = vmatpush1.msra.mxu0 %v904
        %1081 = vmatprep.subr.mxu0 %v913
        %1082 = vmatpush1.msra.mxu0 %v912
        %1083 = vmatprep.subr.mxu0 %v921
        %1084 = vmatpush1.msra.mxu0 %v920
        %1085 = vmatprep.subr.mxu0 %v929
        %1086 = vmatpush1.msra.mxu0 %v928
        %1087 = vmatprep.subr.mxu0 %v937
        %1088 = vmatpush1.msra.mxu0 %v936
        %1089 = vmatprep.subr.mxu0 %v945
        %1090 = vmatpush1.msra.mxu0 %v944
        %1091 = vmatprep.subr.mxu0 %v953
        %1092 = vmatpush1.msra.mxu0 %v952
        %1093 = vmatprep.subr.mxu0 %v984
        %1094 = vmatpush1.msra.mxu0 %v981
        %1095 = vmatprep.subr.mxu0 0.0
        %1096 = vmatpush1.msra.mxu0 0.0
        %1097 = vmatprep.subr.mxu0 0.0
        %1098 = vmatpush1.msra.mxu0 0.0
        %1099 = vmatprep.subr.mxu0 0.0
        %1100 = vmatpush1.msra.mxu0 0.0
        %1101 = vmatprep.subr.mxu0 0.0
        %1102 = vmatpush1.msra.mxu0 0.0
        %1103 = vmatprep.subr.mxu0 0.0
        %1104 = vmatpush1.msra.mxu0 0.0
        %1105 = vmatprep.subr.mxu0 0.0
        %1106 = vmatpush1.msra.mxu0 0.0
        %1107 = vmatprep.subr.mxu0 0.0
        %1108 = vmatpush1.msra.mxu0 0.0
        %1109 = vmatprep.subr.mxu0 0.0
        %1110 = vmatpush1.msra.mxu0 0.0
        %1111 = vmatprep.subr.mxu0 0.0
        %1112 = vmatpush1.msra.mxu0 0.0
        %1113 = vmatprep.subr.mxu0 0.0
        %1114 = vmatpush1.msra.mxu0 0.0
        %1115 = vmatprep.subr.mxu0 0.0
        %1116 = vmatpush1.msra.mxu0 0.0
        %1117 = vmatprep.subr.mxu0 0.0
        %1118 = vmatpush1.msra.mxu0 0.0
        %1119 = vmatprep.subr.mxu0 0.0
        %1120 = vmatpush1.msra.mxu0 0.0
        %1121 = vmatprep.subr.mxu0 0.0
        %1122 = vmatpush1.msra.mxu0 0.0
        %1123 = vmatprep.subr.mxu0 0.0
        %1124 = vmatpush1.msra.mxu0 0.0
        %1125 = vmatprep.subr.mxu0 0.0
        %1126 = vmatpush1.msra.mxu0 0.0
        %1127 = vmatprep.subr.mxu0 0.0
        %1128 = vmatpush1.msra.mxu0 0.0
        %1129 = vmatprep.subr.mxu0 0.0
        %1130 = vmatpush1.msra.mxu0 0.0
        %1131 = vmatprep.subr.mxu0 0.0
        %1132 = vmatpush1.msra.mxu0 0.0
        %1133 = vmatprep.subr.mxu0 0.0
        %1134 = vmatpush1.msra.mxu0 0.0
        %1135 = vmatprep.subr.mxu0 0.0
        %1136 = vmatpush1.msra.mxu0 0.0
        %1137 = vmatprep.subr.mxu0 0.0
        %1138 = vmatpush1.msra.mxu0 0.0
        %1139 = vmatprep.mubr.f32.mxu0 0.0
        %1140 = vmatmul.mubr.f32.gmra.mrb[0].mxu0 %v968
        %v1141 = vpop.f32.mrb[0].mxu0
        %v1142 = vadd.f32 0.0, %v1141
        %v1143 = vpop.f32.mrb[0].mxu0
        %v1144 = vadd.f32 0.0, %v1143
        %1145 = vmatprep.mubr.f32.mxu0 0.0
        %1146 = vmatmul.mubr.f32.gmra.mrb[0].mxu0 %v971
        %v1147 = vpop.f32.mrb[0].mxu0
        %v1148 = vadd.f32 0.0, %v1147
        %v1149 = vpop.f32.mrb[0].mxu0
        %v1150 = vadd.f32 0.0, %v1149
        %1151 = vdwg.mxu0
        %1152 = vmatprep.subr.mxu0 %v891
        %1153 = vmatpush1.msra.mxu0 %v890
        %1154 = vmatprep.subr.mxu0 %v899
        %1155 = vmatpush1.msra.mxu0 %v898
        %1156 = vmatprep.subr.mxu0 %v907
        %1157 = vmatpush1.msra.mxu0 %v906
        %1158 = vmatprep.subr.mxu0 %v915
        %1159 = vmatpush1.msra.mxu0 %v914
        %1160 = vmatprep.subr.mxu0 %v923
        %1161 = vmatpush1.msra.mxu0 %v922
        %1162 = vmatprep.subr.mxu0 %v931
        %1163 = vmatpush1.msra.mxu0 %v930
        %1164 = vmatprep.subr.mxu0 %v939
        %1165 = vmatpush1.msra.mxu0 %v938
        %1166 = vmatprep.subr.mxu0 %v947
        %1167 = vmatpush1.msra.mxu0 %v946
        %1168 = vmatprep.subr.mxu0 %v955
        %1169 = vmatpush1.msra.mxu0 %v954
        %1170 = vmatprep.subr.mxu0 %v990
        %1171 = vmatpush1.msra.mxu0 %v987
        %1172 = vmatprep.subr.mxu0 0.0
        %1173 = vmatpush1.msra.mxu0 0.0
        %1174 = vmatprep.subr.mxu0 0.0
        %1175 = vmatpush1.msra.mxu0 0.0
        %1176 = vmatprep.subr.mxu0 0.0
        %1177 = vmatpush1.msra.mxu0 0.0
        %1178 = vmatprep.subr.mxu0 0.0
        %1179 = vmatpush1.msra.mxu0 0.0
        %1180 = vmatprep.subr.mxu0 0.0
        %1181 = vmatpush1.msra.mxu0 0.0
        %1182 = vmatprep.subr.mxu0 0.0
        %1183 = vmatpush1.msra.mxu0 0.0
        %1184 = vmatprep.subr.mxu0 0.0
        %1185 = vmatpush1.msra.mxu0 0.0
        %1186 = vmatprep.subr.mxu0 0.0
        %1187 = vmatpush1.msra.mxu0 0.0
        %1188 = vmatprep.subr.mxu0 0.0
        %1189 = vmatpush1.msra.mxu0 0.0
        %1190 = vmatprep.subr.mxu0 0.0
        %1191 = vmatpush1.msra.mxu0 0.0
        %1192 = vmatprep.subr.mxu0 0.0
        %1193 = vmatpush1.msra.mxu0 0.0
        %1194 = vmatprep.subr.mxu0 0.0
        %1195 = vmatpush1.msra.mxu0 0.0
        %1196 = vmatprep.subr.mxu0 0.0
        %1197 = vmatpush1.msra.mxu0 0.0
        %1198 = vmatprep.subr.mxu0 0.0
        %1199 = vmatpush1.msra.mxu0 0.0
        %1200 = vmatprep.subr.mxu0 0.0
        %1201 = vmatpush1.msra.mxu0 0.0
        %1202 = vmatprep.subr.mxu0 0.0
        %1203 = vmatpush1.msra.mxu0 0.0
        %1204 = vmatprep.subr.mxu0 0.0
        %1205 = vmatpush1.msra.mxu0 0.0
        %1206 = vmatprep.subr.mxu0 0.0
        %1207 = vmatpush1.msra.mxu0 0.0
        %1208 = vmatprep.subr.mxu0 0.0
        %1209 = vmatpush1.msra.mxu0 0.0
        %1210 = vmatprep.subr.mxu0 0.0
        %1211 = vmatpush1.msra.mxu0 0.0
        %1212 = vmatprep.subr.mxu0 0.0
        %1213 = vmatpush1.msra.mxu0 0.0
        %1214 = vmatprep.subr.mxu0 0.0
        %1215 = vmatpush1.msra.mxu0 0.0
        %1216 = vmatprep.mubr.f32.mxu0 0.0
        %1217 = vmatmul.mubr.f32.gmra.mrb[0].mxu0 %v968
        %v1218 = vpop.f32.mrb[0].mxu0
        %v1219 = vadd.f32 0.0, %v1218
        %v1220 = vpop.f32.mrb[0].mxu0
        %v1221 = vadd.f32 0.0, %v1220
        %1222 = vmatprep.mubr.f32.mxu0 0.0
        %1223 = vmatmul.mubr.f32.gmra.mrb[0].mxu0 %v971
        %v1224 = vpop.f32.mrb[0].mxu0
        %v1225 = vadd.f32 0.0, %v1224
        %v1226 = vpop.f32.mrb[0].mxu0
        %v1227 = vadd.f32 0.0, %v1226
        %1228 = vdwg.mxu0
        %1229 = vmatprep.subr.mxu0 %v893
        %1230 = vmatpush1.msra.mxu0 %v892
        %1231 = vmatprep.subr.mxu0 %v901
        %1232 = vmatpush1.msra.mxu0 %v900
        %1233 = vmatprep.subr.mxu0 %v909
        %1234 = vmatpush1.msra.mxu0 %v908
        %1235 = vmatprep.subr.mxu0 %v917
        %1236 = vmatpush1.msra.mxu0 %v916
        %1237 = vmatprep.subr.mxu0 %v925
        %1238 = vmatpush1.msra.mxu0 %v924
        %1239 = vmatprep.subr.mxu0 %v933
        %1240 = vmatpush1.msra.mxu0 %v932
        %1241 = vmatprep.subr.mxu0 %v941
        %1242 = vmatpush1.msra.mxu0 %v940
        %1243 = vmatprep.subr.mxu0 %v949
        %1244 = vmatpush1.msra.mxu0 %v948
        %1245 = vmatprep.subr.mxu0 %v957
        %1246 = vmatpush1.msra.mxu0 %v956
        %1247 = vmatprep.subr.mxu0 %v996
        %1248 = vmatpush1.msra.mxu0 %v993
        %1249 = vmatprep.subr.mxu0 0.0
        %1250 = vmatpush1.msra.mxu0 0.0
        %1251 = vmatprep.subr.mxu0 0.0
        %1252 = vmatpush1.msra.mxu0 0.0
        %1253 = vmatprep.subr.mxu0 0.0
        %1254 = vmatpush1.msra.mxu0 0.0
        %1255 = vmatprep.subr.mxu0 0.0
        %1256 = vmatpush1.msra.mxu0 0.0
        %1257 = vmatprep.subr.mxu0 0.0
        %1258 = vmatpush1.msra.mxu0 0.0
        %1259 = vmatprep.subr.mxu0 0.0
        %1260 = vmatpush1.msra.mxu0 0.0
        %1261 = vmatprep.subr.mxu0 0.0
        %1262 = vmatpush1.msra.mxu0 0.0
        %1263 = vmatprep.subr.mxu0 0.0
        %1264 = vmatpush1.msra.mxu0 0.0
        %1265 = vmatprep.subr.mxu0 0.0
        %1266 = vmatpush1.msra.mxu0 0.0
        %1267 = vmatprep.subr.mxu0 0.0
        %1268 = vmatpush1.msra.mxu0 0.0
        %1269 = vmatprep.subr.mxu0 0.0
        %1270 = vmatpush1.msra.mxu0 0.0
        %1271 = vmatprep.subr.mxu0 0.0
        %1272 = vmatpush1.msra.mxu0 0.0
        %1273 = vmatprep.subr.mxu0 0.0
        %1274 = vmatpush1.msra.mxu0 0.0
        %1275 = vmatprep.subr.mxu0 0.0
        %1276 = vmatpush1.msra.mxu0 0.0
        %1277 = vmatprep.subr.mxu0 0.0
        %1278 = vmatpush1.msra.mxu0 0.0
        %1279 = vmatprep.subr.mxu0 0.0
        %1280 = vmatpush1.msra.mxu0 0.0
        %1281 = vmatprep.subr.mxu0 0.0
        %1282 = vmatpush1.msra.mxu0 0.0
        %1283 = vmatprep.subr.mxu0 0.0
        %1284 = vmatpush1.msra.mxu0 0.0
        %1285 = vmatprep.subr.mxu0 0.0
        %1286 = vmatpush1.msra.mxu0 0.0
        %1287 = vmatprep.subr.mxu0 0.0
        %1288 = vmatpush1.msra.mxu0 0.0
        %1289 = vmatprep.subr.mxu0 0.0
        %1290 = vmatpush1.msra.mxu0 0.0
        %1291 = vmatprep.subr.mxu0 0.0
        %1292 = vmatpush1.msra.mxu0 0.0
        %1293 = vmatprep.mubr.f32.mxu0 0.0
        %1294 = vmatmul.mubr.f32.gmra.mrb[0].mxu0 %v968
        %v1295 = vpop.f32.mrb[0].mxu0
        %v1296 = vadd.f32 0.0, %v1295
        %v1297 = vpop.f32.mrb[0].mxu0
        %v1298 = vadd.f32 0.0, %v1297
        %1299 = vmatprep.mubr.f32.mxu0 0.0
        %1300 = vmatmul.mubr.f32.gmra.mrb[0].mxu0 %v971
        %v1301 = vpop.f32.mrb[0].mxu0
        %v1302 = vadd.f32 0.0, %v1301
        %v1303 = vpop.f32.mrb[0].mxu0
        %v1304 = vadd.f32 0.0, %v1303
        %1305 = vdwg.mxu0
        %v1306 = vadd.f32 %v1065, %v1071
        %v1307 = vrot.slane %v1306, 4
        %v1308 = vadd.f32 %v1306, %v1307
        %v1309 = vrot.slane %v1308, 2
        %v1310 = vadd.f32 %v1308, %v1309
        %v1311 = vrot.slane %v1310, 1
        %v1312 = vadd.f32 %v1310, %v1311
        %v1313 = vadd.f32 %v1067, %v1073
        %v1314 = vrot.slane %v1313, 4
        %v1315 = vadd.f32 %v1313, %v1314
        %v1316 = vrot.slane %v1315, 2
        %v1317 = vadd.f32 %v1315, %v1316
        %v1318 = vrot.slane %v1317, 1
        %v1319 = vadd.f32 %v1317, %v1318
        %v1320 = vadd.f32 %v1142, %v1148
        %v1321 = vrot.slane %v1320, 4
        %v1322 = vadd.f32 %v1320, %v1321
        %v1323 = vrot.slane %v1322, 2
        %v1324 = vadd.f32 %v1322, %v1323
        %v1325 = vrot.slane %v1324, 1
        %v1326 = vadd.f32 %v1324, %v1325
        %v1327 = vadd.f32 %v1144, %v1150
        %v1328 = vrot.slane %v1327, 4
        %v1329 = vadd.f32 %v1327, %v1328
        %v1330 = vrot.slane %v1329, 2
        %v1331 = vadd.f32 %v1329, %v1330
        %v1332 = vrot.slane %v1331, 1
        %v1333 = vadd.f32 %v1331, %v1332
        %v1334 = vadd.f32 %v1219, %v1225
        %v1335 = vrot.slane %v1334, 4
        %v1336 = vadd.f32 %v1334, %v1335
        %v1337 = vrot.slane %v1336, 2
        %v1338 = vadd.f32 %v1336, %v1337
        %v1339 = vrot.slane %v1338, 1
        %v1340 = vadd.f32 %v1338, %v1339
        %v1341 = vadd.f32 %v1221, %v1227
        %v1342 = vrot.slane %v1341, 4
        %v1343 = vadd.f32 %v1341, %v1342
        %v1344 = vrot.slane %v1343, 2
        %v1345 = vadd.f32 %v1343, %v1344
        %v1346 = vrot.slane %v1345, 1
        %v1347 = vadd.f32 %v1345, %v1346
        %v1348 = vadd.f32 %v1296, %v1302
        %v1349 = vrot.slane %v1348, 4
        %v1350 = vadd.f32 %v1348, %v1349
        %v1351 = vrot.slane %v1350, 2
        %v1352 = vadd.f32 %v1350, %v1351
        %v1353 = vrot.slane %v1352, 1
        %v1354 = vadd.f32 %v1352, %v1353
        %v1355 = vadd.f32 %v1298, %v1304
        %v1356 = vrot.slane %v1355, 4
        %v1357 = vadd.f32 %v1355, %v1356
        %v1358 = vrot.slane %v1357, 2
        %v1359 = vadd.f32 %v1357, %v1358
        %v1360 = vrot.slane %v1359, 1
        %v1361 = vadd.f32 %v1359, %v1360
        %v1362 = vrcp.pop 16.0
        %v1363 = vmul.f32 %v1312, %v1362
        %v1364 = vmul.f32 %v1319, %v1362
        %v1365 = vmul.f32 %v1326, %v1362
        %v1366 = vmul.f32 %v1333, %v1362
        %v1367 = vmul.f32 %v1340, %v1362
        %v1368 = vmul.f32 %v1347, %v1362
        %v1369 = vmul.f32 %v1354, %v1362
        %v1370 = vmul.f32 %v1361, %v1362
        %v1371 = vsub.f32 %v1065, %v1363
        %v1372 = vsub.f32 %v1067, %v1364
        %v1373 = vsub.f32 %v1142, %v1365
        %v1374 = vsub.f32 %v1144, %v1366
        %v1375 = vsub.f32 %v1219, %v1367
        %v1376 = vsub.f32 %v1221, %v1368
        %v1377 = vsub.f32 %v1296, %v1369
        %v1378 = vsub.f32 %v1298, %v1370
        %v1379 = vsub.f32 %v1071, %v1363
        %v1380 = vsub.f32 %v1073, %v1364
        %v1381 = vsub.f32 %v1148, %v1365
        %v1382 = vsub.f32 %v1150, %v1366
        %v1383 = vsub.f32 %v1225, %v1367
        %v1384 = vsub.f32 %v1227, %v1368
        %v1385 = vsub.f32 %v1302, %v1369
        %v1386 = vsub.f32 %v1304, %v1370
        %v1387 = vmul.f32 %v1371, %v1371
        %v1388 = vmul.f32 %v1372, %v1372
        %v1389 = vmul.f32 %v1373, %v1373
        %v1390 = vmul.f32 %v1374, %v1374
        %v1391 = vmul.f32 %v1375, %v1375
        %v1392 = vmul.f32 %v1376, %v1376
        %v1393 = vmul.f32 %v1377, %v1377
        %v1394 = vmul.f32 %v1378, %v1378
        %v1395 = vmul.f32 %v1379, %v1379
        %v1396 = vmul.f32 %v1380, %v1380
        %v1397 = vmul.f32 %v1381, %v1381
        %v1398 = vmul.f32 %v1382, %v1382
        %v1399 = vmul.f32 %v1383, %v1383
        %v1400 = vmul.f32 %v1384, %v1384
        %v1401 = vmul.f32 %v1385, %v1385
        %v1402 = vmul.f32 %v1386, %v1386
        %v1403 = vadd.f32 %v1387, %v1395
        %v1404 = vrot.slane %v1403, 4
        %v1405 = vadd.f32 %v1403, %v1404
        %v1406 = vrot.slane %v1405, 2
        %v1407 = vadd.f32 %v1405, %v1406
        %v1408 = vrot.slane %v1407, 1
        %v1409 = vadd.f32 %v1407, %v1408
        %v1410 = vadd.f32 %v1388, %v1396
        %v1411 = vrot.slane %v1410, 4
        %v1412 = vadd.f32 %v1410, %v1411
        %v1413 = vrot.slane %v1412, 2
        %v1414 = vadd.f32 %v1412, %v1413
        %v1415 = vrot.slane %v1414, 1
        %v1416 = vadd.f32 %v1414, %v1415
        %v1417 = vadd.f32 %v1389, %v1397
        %v1418 = vrot.slane %v1417, 4
        %v1419 = vadd.f32 %v1417, %v1418
        %v1420 = vrot.slane %v1419, 2
        %v1421 = vadd.f32 %v1419, %v1420
        %v1422 = vrot.slane %v1421, 1
        %v1423 = vadd.f32 %v1421, %v1422
        %v1424 = vadd.f32 %v1390, %v1398
        %v1425 = vrot.slane %v1424, 4
        %v1426 = vadd.f32 %v1424, %v1425
        %v1427 = vrot.slane %v1426, 2
        %v1428 = vadd.f32 %v1426, %v1427
        %v1429 = vrot.slane %v1428, 1
        %v1430 = vadd.f32 %v1428, %v1429
        %v1431 = vadd.f32 %v1391, %v1399
        %v1432 = vrot.slane %v1431, 4
        %v1433 = vadd.f32 %v1431, %v1432
        %v1434 = vrot.slane %v1433, 2
        %v1435 = vadd.f32 %v1433, %v1434
        %v1436 = vrot.slane %v1435, 1
        %v1437 = vadd.f32 %v1435, %v1436
        %v1438 = vadd.f32 %v1392, %v1400
        %v1439 = vrot.slane %v1438, 4
        %v1440 = vadd.f32 %v1438, %v1439
        %v1441 = vrot.slane %v1440, 2
        %v1442 = vadd.f32 %v1440, %v1441
        %v1443 = vrot.slane %v1442, 1
        %v1444 = vadd.f32 %v1442, %v1443
        %v1445 = vadd.f32 %v1393, %v1401
        %v1446 = vrot.slane %v1445, 4
        %v1447 = vadd.f32 %v1445, %v1446
        %v1448 = vrot.slane %v1447, 2
        %v1449 = vadd.f32 %v1447, %v1448
        %v1450 = vrot.slane %v1449, 1
        %v1451 = vadd.f32 %v1449, %v1450
        %v1452 = vadd.f32 %v1394, %v1402
        %v1453 = vrot.slane %v1452, 4
        %v1454 = vadd.f32 %v1452, %v1453
        %v1455 = vrot.slane %v1454, 2
        %v1456 = vadd.f32 %v1454, %v1455
        %v1457 = vrot.slane %v1456, 1
        %v1458 = vadd.f32 %v1456, %v1457
        %v1459 = vmul.f32 %v1409, %v1362
        %v1460 = vmul.f32 %v1416, %v1362
        %v1461 = vmul.f32 %v1423, %v1362
        %v1462 = vmul.f32 %v1430, %v1362
        %v1463 = vmul.f32 %v1437, %v1362
        %v1464 = vmul.f32 %v1444, %v1362
        %v1465 = vmul.f32 %v1451, %v1362
        %v1466 = vmul.f32 %v1458, %v1362
        %v1467 = vadd.f32 %v1459, 1e-06
        %v1468 = vadd.f32 %v1460, 1e-06
        %v1469 = vadd.f32 %v1461, 1e-06
        %v1470 = vadd.f32 %v1462, 1e-06
        %v1471 = vadd.f32 %v1463, 1e-06
        %v1472 = vadd.f32 %v1464, 1e-06
        %v1473 = vadd.f32 %v1465, 1e-06
        %v1474 = vadd.f32 %v1466, 1e-06
        %v1475 = vrsqrt.pop %v1467
        %v1476 = vrsqrt.pop %v1468
        %v1477 = vrsqrt.pop %v1469
        %v1478 = vrsqrt.pop %v1470
        %v1479 = vrsqrt.pop %v1471
        %v1480 = vrsqrt.pop %v1472
        %v1481 = vrsqrt.pop %v1473
        %v1482 = vrsqrt.pop %v1474
        %v1483 = vmul.f32 %v1371, %v1475
        %v1484 = vmul.f32 %v1372, %v1476
        %v1485 = vmul.f32 %v1373, %v1477
        %v1486 = vmul.f32 %v1374, %v1478
        %v1487 = vmul.f32 %v1375, %v1479
        %v1488 = vmul.f32 %v1376, %v1480
        %v1489 = vmul.f32 %v1377, %v1481
        %v1490 = vmul.f32 %v1378, %v1482
        %v1491 = vmul.f32 %v1379, %v1475
        %v1492 = vmul.f32 %v1380, %v1476
        %v1493 = vmul.f32 %v1381, %v1477
        %v1494 = vmul.f32 %v1382, %v1478
        %v1495 = vmul.f32 %v1383, %v1479
        %v1496 = vmul.f32 %v1384, %v1480
        %v1497 = vmul.f32 %v1385, %v1481
        %v1498 = vmul.f32 %v1386, %v1482
        %v1499 = vld [vmem:[%s2 + $0x20] sm:$0xff]
        %v1500 = vld [vmem:[%s2 + $0x30] sm:$0xff]
        %v1501 = vld [vmem:[%s2 + $0x40] sm:$0xff]
        %v1502 = vld [vmem:[%s2 + $0x50] sm:$0xff]
        %1504 = vset.pattern.permute.xlu0 16
        %1505 = vperm.xlu0 %1504, %v1499
        %v1506 = vpop.permute.xlu0 %1505
        %1509 = vset.pattern.permute.xlu0 16
        %1510 = vperm.xlu0 %1509, %v1500
        %v1511 = vpop.permute.xlu0 %1510
        %1514 = vset.pattern.permute.xlu0 16
        %1515 = vperm.xlu0 %1514, %v1501
        %v1516 = vpop.permute.xlu0 %1515
        %1519 = vset.pattern.permute.xlu0 16
        %1520 = vperm.xlu0 %1519, %v1502
        %v1521 = vpop.permute.xlu0 %1520
        %vm1523 = vcmask 130048
        %v1524 = vsel %vm1523, %v1499, 0
        %v1526 = vsel %vm1523, %v1500, 0
        %v1528 = vsel %vm1523, %v1501, 0
        %v1530 = vsel %vm1523, %v1502, 0
        %1532 = vmatprep.subr.mxu0 %v1484
        %1533 = vmatpush1.msra.mxu0 %v1483
        %1534 = vmatprep.subr.mxu0 %v1492
        %1535 = vmatpush1.msra.mxu0 %v1491
        %1536 = vmatprep.subr.mxu0 0.0
        %1537 = vmatpush1.msra.mxu0 0.0
        %1538 = vmatprep.subr.mxu0 0.0
        %1539 = vmatpush1.msra.mxu0 0.0
        %1540 = vmatprep.subr.mxu0 0.0
        %1541 = vmatpush1.msra.mxu0 0.0
        %1542 = vmatprep.subr.mxu0 0.0
        %1543 = vmatpush1.msra.mxu0 0.0
        %1544 = vmatprep.subr.mxu0 0.0
        %1545 = vmatpush1.msra.mxu0 0.0
        %1546 = vmatprep.subr.mxu0 0.0
        %1547 = vmatpush1.msra.mxu0 0.0
        %1548 = vmatprep.subr.mxu0 0.0
        %1549 = vmatpush1.msra.mxu0 0.0
        %1550 = vmatprep.subr.mxu0 0.0
        %1551 = vmatpush1.msra.mxu0 0.0
        %1552 = vmatprep.subr.mxu0 0.0
        %1553 = vmatpush1.msra.mxu0 0.0
        %1554 = vmatprep.subr.mxu0 0.0
        %1555 = vmatpush1.msra.mxu0 0.0
        %1556 = vmatprep.subr.mxu0 0.0
        %1557 = vmatpush1.msra.mxu0 0.0
        %1558 = vmatprep.subr.mxu0 0.0
        %1559 = vmatpush1.msra.mxu0 0.0
        %1560 = vmatprep.subr.mxu0 0.0
        %1561 = vmatpush1.msra.mxu0 0.0
        %1562 = vmatprep.subr.mxu0 0.0
        %1563 = vmatpush1.msra.mxu0 0.0
        %1564 = vmatprep.subr.mxu0 0.0
        %1565 = vmatpush1.msra.mxu0 0.0
        %1566 = vmatprep.subr.mxu0 0.0
        %1567 = vmatpush1.msra.mxu0 0.0
        %1568 = vmatprep.subr.mxu0 0.0
        %1569 = vmatpush1.msra.mxu0 0.0
        %1570 = vmatprep.subr.mxu0 0.0
        %1571 = vmatpush1.msra.mxu0 0.0
        %1572 = vmatprep.subr.mxu0 0.0
        %1573 = vmatpush1.msra.mxu0 0.0
        %1574 = vmatprep.subr.mxu0 0.0
        %1575 = vmatpush1.msra.mxu0 0.0
        %1576 = vmatprep.subr.mxu0 0.0
        %1577 = vmatpush1.msra.mxu0 0.0
        %1578 = vmatprep.subr.mxu0 0.0
        %1579 = vmatpush1.msra.mxu0 0.0
        %1580 = vmatprep.subr.mxu0 0.0
        %1581 = vmatpush1.msra.mxu0 0.0
        %1582 = vmatprep.subr.mxu0 0.0
        %1583 = vmatpush1.msra.mxu0 0.0
        %1584 = vmatprep.subr.mxu0 0.0
        %1585 = vmatpush1.msra.mxu0 0.0
        %1586 = vmatprep.subr.mxu0 0.0
        %1587 = vmatpush1.msra.mxu0 0.0
        %1588 = vmatprep.subr.mxu0 0.0
        %1589 = vmatpush1.msra.mxu0 0.0
        %1590 = vmatprep.subr.mxu0 0.0
        %1591 = vmatpush1.msra.mxu0 0.0
        %1592 = vmatprep.subr.mxu0 0.0
        %1593 = vmatpush1.msra.mxu0 0.0
        %1594 = vmatprep.subr.mxu0 0.0
        %1595 = vmatpush1.msra.mxu0 0.0
        %1596 = vmatprep.mubr.f32.mxu0 0.0
        %1597 = vmatmul.mubr.f32.gmra.mrb[0].mxu0 %v1524
        %v1598 = vpop.f32.mrb[0].mxu0
        %v1599 = vadd.f32 %v1506, %v1598
        %v1600 = vpop.f32.mrb[0].mxu0
        %v1601 = vadd.f32 %v1506, %v1600
        %1602 = vmatprep.mubr.f32.mxu0 0.0
        %1603 = vmatmul.mubr.f32.gmra.mrb[0].mxu0 %v1526
        %v1604 = vpop.f32.mrb[0].mxu0
        %v1605 = vadd.f32 %v1511, %v1604
        %v1606 = vpop.f32.mrb[0].mxu0
        %v1607 = vadd.f32 %v1511, %v1606
        %1608 = vmatprep.mubr.f32.mxu0 0.0
        %1609 = vmatmul.mubr.f32.gmra.mrb[0].mxu0 %v1528
        %v1610 = vpop.f32.mrb[0].mxu0
        %v1611 = vadd.f32 %v1516, %v1610
        %v1612 = vpop.f32.mrb[0].mxu0
        %v1613 = vadd.f32 %v1516, %v1612
        %1614 = vmatprep.mubr.f32.mxu0 0.0
        %1615 = vmatmul.mubr.f32.gmra.mrb[0].mxu0 %v1530
        %v1616 = vpop.f32.mrb[0].mxu0
        %v1617 = vadd.f32 %v1521, %v1616
        %v1618 = vpop.f32.mrb[0].mxu0
        %v1619 = vadd.f32 %v1521, %v1618
        %1620 = vdwg.mxu0
        %1621 = vmatprep.subr.mxu0 %v1486
        %1622 = vmatpush1.msra.mxu0 %v1485
        %1623 = vmatprep.subr.mxu0 %v1494
        %1624 = vmatpush1.msra.mxu0 %v1493
        %1625 = vmatprep.subr.mxu0 0.0
        %1626 = vmatpush1.msra.mxu0 0.0
        %1627 = vmatprep.subr.mxu0 0.0
        %1628 = vmatpush1.msra.mxu0 0.0
        %1629 = vmatprep.subr.mxu0 0.0
        %1630 = vmatpush1.msra.mxu0 0.0
        %1631 = vmatprep.subr.mxu0 0.0
        %1632 = vmatpush1.msra.mxu0 0.0
        %1633 = vmatprep.subr.mxu0 0.0
        %1634 = vmatpush1.msra.mxu0 0.0
        %1635 = vmatprep.subr.mxu0 0.0
        %1636 = vmatpush1.msra.mxu0 0.0
        %1637 = vmatprep.subr.mxu0 0.0
        %1638 = vmatpush1.msra.mxu0 0.0
        %1639 = vmatprep.subr.mxu0 0.0
        %1640 = vmatpush1.msra.mxu0 0.0
        %1641 = vmatprep.subr.mxu0 0.0
        %1642 = vmatpush1.msra.mxu0 0.0
        %1643 = vmatprep.subr.mxu0 0.0
        %1644 = vmatpush1.msra.mxu0 0.0
        %1645 = vmatprep.subr.mxu0 0.0
        %1646 = vmatpush1.msra.mxu0 0.0
        %1647 = vmatprep.subr.mxu0 0.0
        %1648 = vmatpush1.msra.mxu0 0.0
        %1649 = vmatprep.subr.mxu0 0.0
        %1650 = vmatpush1.msra.mxu0 0.0
        %1651 = vmatprep.subr.mxu0 0.0
        %1652 = vmatpush1.msra.mxu0 0.0
        %1653 = vmatprep.subr.mxu0 0.0
        %1654 = vmatpush1.msra.mxu0 0.0
        %1655 = vmatprep.subr.mxu0 0.0
        %1656 = vmatpush1.msra.mxu0 0.0
        %1657 = vmatprep.subr.mxu0 0.0
        %1658 = vmatpush1.msra.mxu0 0.0
        %1659 = vmatprep.subr.mxu0 0.0
        %1660 = vmatpush1.msra.mxu0 0.0
        %1661 = vmatprep.subr.mxu0 0.0
        %1662 = vmatpush1.msra.mxu0 0.0
        %1663 = vmatprep.subr.mxu0 0.0
        %1664 = vmatpush1.msra.mxu0 0.0
        %1665 = vmatprep.subr.mxu0 0.0
        %1666 = vmatpush1.msra.mxu0 0.0
        %1667 = vmatprep.subr.mxu0 0.0
        %1668 = vmatpush1.msra.mxu0 0.0
        %1669 = vmatprep.subr.mxu0 0.0
        %1670 = vmatpush1.msra.mxu0 0.0
        %1671 = vmatprep.subr.mxu0 0.0
        %1672 = vmatpush1.msra.mxu0 0.0
        %1673 = vmatprep.subr.mxu0 0.0
        %1674 = vmatpush1.msra.mxu0 0.0
        %1675 = vmatprep.subr.mxu0 0.0
        %1676 = vmatpush1.msra.mxu0 0.0
        %1677 = vmatprep.subr.mxu0 0.0
        %1678 = vmatpush1.msra.mxu0 0.0
        %1679 = vmatprep.subr.mxu0 0.0
        %1680 = vmatpush1.msra.mxu0 0.0
        %1681 = vmatprep.subr.mxu0 0.0
        %1682 = vmatpush1.msra.mxu0 0.0
        %1683 = vmatprep.subr.mxu0 0.0
        %1684 = vmatpush1.msra.mxu0 0.0
        %1685 = vmatprep.mubr.f32.mxu0 0.0
        %1686 = vmatmul.mubr.f32.gmra.mrb[0].mxu0 %v1524
        %v1687 = vpop.f32.mrb[0].mxu0
        %v1688 = vadd.f32 %v1506, %v1687
        %v1689 = vpop.f32.mrb[0].mxu0
        %v1690 = vadd.f32 %v1506, %v1689
        %1691 = vmatprep.mubr.f32.mxu0 0.0
        %1692 = vmatmul.mubr.f32.gmra.mrb[0].mxu0 %v1526
        %v1693 = vpop.f32.mrb[0].mxu0
        %v1694 = vadd.f32 %v1511, %v1693
        %v1695 = vpop.f32.mrb[0].mxu0
        %v1696 = vadd.f32 %v1511, %v1695
        %1697 = vmatprep.mubr.f32.mxu0 0.0
        %1698 = vmatmul.mubr.f32.gmra.mrb[0].mxu0 %v1528
        %v1699 = vpop.f32.mrb[0].mxu0
        %v1700 = vadd.f32 %v1516, %v1699
        %v1701 = vpop.f32.mrb[0].mxu0
        %v1702 = vadd.f32 %v1516, %v1701
        %1703 = vmatprep.mubr.f32.mxu0 0.0
        %1704 = vmatmul.mubr.f32.gmra.mrb[0].mxu0 %v1530
        %v1705 = vpop.f32.mrb[0].mxu0
        %v1706 = vadd.f32 %v1521, %v1705
        %v1707 = vpop.f32.mrb[0].mxu0
        %v1708 = vadd.f32 %v1521, %v1707
        %1709 = vdwg.mxu0
        %1710 = vmatprep.subr.mxu0 %v1488
        %1711 = vmatpush1.msra.mxu0 %v1487
        %1712 = vmatprep.subr.mxu0 %v1496
        %1713 = vmatpush1.msra.mxu0 %v1495
        %1714 = vmatprep.subr.mxu0 0.0
        %1715 = vmatpush1.msra.mxu0 0.0
        %1716 = vmatprep.subr.mxu0 0.0
        %1717 = vmatpush1.msra.mxu0 0.0
        %1718 = vmatprep.subr.mxu0 0.0
        %1719 = vmatpush1.msra.mxu0 0.0
        %1720 = vmatprep.subr.mxu0 0.0
        %1721 = vmatpush1.msra.mxu0 0.0
        %1722 = vmatprep.subr.mxu0 0.0
        %1723 = vmatpush1.msra.mxu0 0.0
        %1724 = vmatprep.subr.mxu0 0.0
        %1725 = vmatpush1.msra.mxu0 0.0
        %1726 = vmatprep.subr.mxu0 0.0
        %1727 = vmatpush1.msra.mxu0 0.0
        %1728 = vmatprep.subr.mxu0 0.0
        %1729 = vmatpush1.msra.mxu0 0.0
        %1730 = vmatprep.subr.mxu0 0.0
        %1731 = vmatpush1.msra.mxu0 0.0
        %1732 = vmatprep.subr.mxu0 0.0
        %1733 = vmatpush1.msra.mxu0 0.0
        %1734 = vmatprep.subr.mxu0 0.0
        %1735 = vmatpush1.msra.mxu0 0.0
        %1736 = vmatprep.subr.mxu0 0.0
        %1737 = vmatpush1.msra.mxu0 0.0
        %1738 = vmatprep.subr.mxu0 0.0
        %1739 = vmatpush1.msra.mxu0 0.0
        %1740 = vmatprep.subr.mxu0 0.0
        %1741 = vmatpush1.msra.mxu0 0.0
        %1742 = vmatprep.subr.mxu0 0.0
        %1743 = vmatpush1.msra.mxu0 0.0
        %1744 = vmatprep.subr.mxu0 0.0
        %1745 = vmatpush1.msra.mxu0 0.0
        %1746 = vmatprep.subr.mxu0 0.0
        %1747 = vmatpush1.msra.mxu0 0.0
        %1748 = vmatprep.subr.mxu0 0.0
        %1749 = vmatpush1.msra.mxu0 0.0
        %1750 = vmatprep.subr.mxu0 0.0
        %1751 = vmatpush1.msra.mxu0 0.0
        %1752 = vmatprep.subr.mxu0 0.0
        %1753 = vmatpush1.msra.mxu0 0.0
        %1754 = vmatprep.subr.mxu0 0.0
        %1755 = vmatpush1.msra.mxu0 0.0
        %1756 = vmatprep.subr.mxu0 0.0
        %1757 = vmatpush1.msra.mxu0 0.0
        %1758 = vmatprep.subr.mxu0 0.0
        %1759 = vmatpush1.msra.mxu0 0.0
        %1760 = vmatprep.subr.mxu0 0.0
        %1761 = vmatpush1.msra.mxu0 0.0
        %1762 = vmatprep.subr.mxu0 0.0
        %1763 = vmatpush1.msra.mxu0 0.0
        %1764 = vmatprep.subr.mxu0 0.0
        %1765 = vmatpush1.msra.mxu0 0.0
        %1766 = vmatprep.subr.mxu0 0.0
        %1767 = vmatpush1.msra.mxu0 0.0
        %1768 = vmatprep.subr.mxu0 0.0
        %1769 = vmatpush1.msra.mxu0 0.0
        %1770 = vmatprep.subr.mxu0 0.0
        %1771 = vmatpush1.msra.mxu0 0.0
        %1772 = vmatprep.subr.mxu0 0.0
        %1773 = vmatpush1.msra.mxu0 0.0
        %1774 = vmatprep.mubr.f32.mxu0 0.0
        %1775 = vmatmul.mubr.f32.gmra.mrb[0].mxu0 %v1524
        %v1776 = vpop.f32.mrb[0].mxu0
        %v1777 = vadd.f32 %v1506, %v1776
        %v1778 = vpop.f32.mrb[0].mxu0
        %v1779 = vadd.f32 %v1506, %v1778
        %1780 = vmatprep.mubr.f32.mxu0 0.0
        %1781 = vmatmul.mubr.f32.gmra.mrb[0].mxu0 %v1526
        %v1782 = vpop.f32.mrb[0].mxu0
        %v1783 = vadd.f32 %v1511, %v1782
        %v1784 = vpop.f32.mrb[0].mxu0
        %v1785 = vadd.f32 %v1511, %v1784
        %1786 = vmatprep.mubr.f32.mxu0 0.0
        %1787 = vmatmul.mubr.f32.gmra.mrb[0].mxu0 %v1528
        %v1788 = vpop.f32.mrb[0].mxu0
        %v1789 = vadd.f32 %v1516, %v1788
        %v1790 = vpop.f32.mrb[0].mxu0
        %v1791 = vadd.f32 %v1516, %v1790
        %1792 = vmatprep.mubr.f32.mxu0 0.0
        %1793 = vmatmul.mubr.f32.gmra.mrb[0].mxu0 %v1530
        %v1794 = vpop.f32.mrb[0].mxu0
        %v1795 = vadd.f32 %v1521, %v1794
        %v1796 = vpop.f32.mrb[0].mxu0
        %v1797 = vadd.f32 %v1521, %v1796
        %1798 = vdwg.mxu0
        %1799 = vmatprep.subr.mxu0 %v1490
        %1800 = vmatpush1.msra.mxu0 %v1489
        %1801 = vmatprep.subr.mxu0 %v1498
        %1802 = vmatpush1.msra.mxu0 %v1497
        %1803 = vmatprep.subr.mxu0 0.0
        %1804 = vmatpush1.msra.mxu0 0.0
        %1805 = vmatprep.subr.mxu0 0.0
        %1806 = vmatpush1.msra.mxu0 0.0
        %1807 = vmatprep.subr.mxu0 0.0
        %1808 = vmatpush1.msra.mxu0 0.0
        %1809 = vmatprep.subr.mxu0 0.0
        %1810 = vmatpush1.msra.mxu0 0.0
        %1811 = vmatprep.subr.mxu0 0.0
        %1812 = vmatpush1.msra.mxu0 0.0
        %1813 = vmatprep.subr.mxu0 0.0
        %1814 = vmatpush1.msra.mxu0 0.0
        %1815 = vmatprep.subr.mxu0 0.0
        %1816 = vmatpush1.msra.mxu0 0.0
        %1817 = vmatprep.subr.mxu0 0.0
        %1818 = vmatpush1.msra.mxu0 0.0
        %1819 = vmatprep.subr.mxu0 0.0
        %1820 = vmatpush1.msra.mxu0 0.0
        %1821 = vmatprep.subr.mxu0 0.0
        %1822 = vmatpush1.msra.mxu0 0.0
        %1823 = vmatprep.subr.mxu0 0.0
        %1824 = vmatpush1.msra.mxu0 0.0
        %1825 = vmatprep.subr.mxu0 0.0
        %1826 = vmatpush1.msra.mxu0 0.0
        %1827 = vmatprep.subr.mxu0 0.0
        %1828 = vmatpush1.msra.mxu0 0.0
        %1829 = vmatprep.subr.mxu0 0.0
        %1830 = vmatpush1.msra.mxu0 0.0
        %1831 = vmatprep.subr.mxu0 0.0
        %1832 = vmatpush1.msra.mxu0 0.0
        %1833 = vmatprep.subr.mxu0 0.0
        %1834 = vmatpush1.msra.mxu0 0.0
        %1835 = vmatprep.subr.mxu0 0.0
        %1836 = vmatpush1.msra.mxu0 0.0
        %1837 = vmatprep.subr.mxu0 0.0
        %1838 = vmatpush1.msra.mxu0 0.0
        %1839 = vmatprep.subr.mxu0 0.0
        %1840 = vmatpush1.msra.mxu0 0.0
        %1841 = vmatprep.subr.mxu0 0.0
        %1842 = vmatpush1.msra.mxu0 0.0
        %1843 = vmatprep.subr.mxu0 0.0
        %1844 = vmatpush1.msra.mxu0 0.0
        %1845 = vmatprep.subr.mxu0 0.0
        %1846 = vmatpush1.msra.mxu0 0.0
        %1847 = vmatprep.subr.mxu0 0.0
        %1848 = vmatpush1.msra.mxu0 0.0
        %1849 = vmatprep.subr.mxu0 0.0
        %1850 = vmatpush1.msra.mxu0 0.0
        %1851 = vmatprep.subr.mxu0 0.0
        %1852 = vmatpush1.msra.mxu0 0.0
        %1853 = vmatprep.subr.mxu0 0.0
        %1854 = vmatpush1.msra.mxu0 0.0
        %1855 = vmatprep.subr.mxu0 0.0
        %1856 = vmatpush1.msra.mxu0 0.0
        %1857 = vmatprep.subr.mxu0 0.0
        %1858 = vmatpush1.msra.mxu0 0.0
        %1859 = vmatprep.subr.mxu0 0.0
        %1860 = vmatpush1.msra.mxu0 0.0
        %1861 = vmatprep.subr.mxu0 0.0
        %1862 = vmatpush1.msra.mxu0 0.0
        %1863 = vmatprep.mubr.f32.mxu0 0.0
        %1864 = vmatmul.mubr.f32.gmra.mrb[0].mxu0 %v1524
        %v1865 = vpop.f32.mrb[0].mxu0
        %v1866 = vadd.f32 %v1506, %v1865
        %v1867 = vpop.f32.mrb[0].mxu0
        %v1868 = vadd.f32 %v1506, %v1867
        %1869 = vmatprep.mubr.f32.mxu0 0.0
        %1870 = vmatmul.mubr.f32.gmra.mrb[0].mxu0 %v1526
        %v1871 = vpop.f32.mrb[0].mxu0
        %v1872 = vadd.f32 %v1511, %v1871
        %v1873 = vpop.f32.mrb[0].mxu0
        %v1874 = vadd.f32 %v1511, %v1873
        %1875 = vmatprep.mubr.f32.mxu0 0.0
        %1876 = vmatmul.mubr.f32.gmra.mrb[0].mxu0 %v1528
        %v1877 = vpop.f32.mrb[0].mxu0
        %v1878 = vadd.f32 %v1516, %v1877
        %v1879 = vpop.f32.mrb[0].mxu0
        %v1880 = vadd.f32 %v1516, %v1879
        %1881 = vmatprep.mubr.f32.mxu0 0.0
        %1882 = vmatmul.mubr.f32.gmra.mrb[0].mxu0 %v1530
        %v1883 = vpop.f32.mrb[0].mxu0
        %v1884 = vadd.f32 %v1521, %v1883
        %v1885 = vpop.f32.mrb[0].mxu0
        %v1886 = vadd.f32 %v1521, %v1885
        %1887 = vdwg.mxu0
        %v1888 = vld [vmem:[%s2 + $0x60] sm:$0xff]
        %v1889 = vld [vmem:[%s2 + $0x70] sm:$0xff]
        %v1890 = vld [vmem:[%s2 + $0x80] sm:$0xff]
        %v1891 = vld [vmem:[%s2 + $0x90] sm:$0xff]
        %1893 = vset.pattern.permute.xlu0 4
        %1894 = vperm.xlu0 %1893, %v1888
        %v1895 = vpop.permute.xlu0 %1894
        %1898 = vset.pattern.permute.xlu0 4
        %1899 = vperm.xlu0 %1898, %v1889
        %v1900 = vpop.permute.xlu0 %1899
        %1903 = vset.pattern.permute.xlu0 4
        %1904 = vperm.xlu0 %1903, %v1890
        %v1905 = vpop.permute.xlu0 %1904
        %1908 = vset.pattern.permute.xlu0 4
        %1909 = vperm.xlu0 %1908, %v1891
        %v1910 = vpop.permute.xlu0 %1909
        %v1912 = vmul.f32 %v1895, %v1599
        %v1913 = vmul.f32 %v1895, %v1601
        %v1914 = vmul.f32 %v1895, %v1688
        %v1915 = vmul.f32 %v1895, %v1690
        %v1916 = vmul.f32 %v1895, %v1777
        %v1917 = vmul.f32 %v1895, %v1779
        %v1918 = vmul.f32 %v1895, %v1866
        %v1919 = vmul.f32 %v1895, %v1868
        %v1920 = vmul.f32 %v1900, %v1605
        %v1921 = vmul.f32 %v1900, %v1607
        %v1922 = vmul.f32 %v1900, %v1694
        %v1923 = vmul.f32 %v1900, %v1696
        %v1924 = vmul.f32 %v1900, %v1783
        %v1925 = vmul.f32 %v1900, %v1785
        %v1926 = vmul.f32 %v1900, %v1872
        %v1927 = vmul.f32 %v1900, %v1874
        %v1928 = vmul.f32 %v1905, %v1611
        %v1929 = vmul.f32 %v1905, %v1613
        %v1930 = vmul.f32 %v1905, %v1700
        %v1931 = vmul.f32 %v1905, %v1702
        %v1932 = vmul.f32 %v1905, %v1789
        %v1933 = vmul.f32 %v1905, %v1791
        %v1934 = vmul.f32 %v1905, %v1878
        %v1935 = vmul.f32 %v1905, %v1880
        %v1936 = vmul.f32 %v1910, %v1617
        %v1937 = vmul.f32 %v1910, %v1619
        %v1938 = vmul.f32 %v1910, %v1706
        %v1939 = vmul.f32 %v1910, %v1708
        %v1940 = vmul.f32 %v1910, %v1795
        %v1941 = vmul.f32 %v1910, %v1797
        %v1942 = vmul.f32 %v1910, %v1884
        %v1943 = vmul.f32 %v1910, %v1886
        %1944 = vset.pattern.permute.xlu0 9
        %1945 = vperm.xlu0 %1944, %v1888
        %v1946 = vpop.permute.xlu0 %1945
        %1948 = vset.pattern.permute.xlu0 9
        %1949 = vperm.xlu0 %1948, %v1889
        %v1950 = vpop.permute.xlu0 %1949
        %1952 = vset.pattern.permute.xlu0 9
        %1953 = vperm.xlu0 %1952, %v1890
        %v1954 = vpop.permute.xlu0 %1953
        %1956 = vset.pattern.permute.xlu0 9
        %1957 = vperm.xlu0 %1956, %v1891
        %v1958 = vpop.permute.xlu0 %1957
        %v1960 = vadd.f32 %v1946, %v1912
        %v1961 = vadd.f32 %v1946, %v1913
        %v1962 = vadd.f32 %v1946, %v1914
        %v1963 = vadd.f32 %v1946, %v1915
        %v1964 = vadd.f32 %v1946, %v1916
        %v1965 = vadd.f32 %v1946, %v1917
        %v1966 = vadd.f32 %v1946, %v1918
        %v1967 = vadd.f32 %v1946, %v1919
        %v1968 = vadd.f32 %v1950, %v1920
        %v1969 = vadd.f32 %v1950, %v1921
        %v1970 = vadd.f32 %v1950, %v1922
        %v1971 = vadd.f32 %v1950, %v1923
        %v1972 = vadd.f32 %v1950, %v1924
        %v1973 = vadd.f32 %v1950, %v1925
        %v1974 = vadd.f32 %v1950, %v1926
        %v1975 = vadd.f32 %v1950, %v1927
        %v1976 = vadd.f32 %v1954, %v1928
        %v1977 = vadd.f32 %v1954, %v1929
        %v1978 = vadd.f32 %v1954, %v1930
        %v1979 = vadd.f32 %v1954, %v1931
        %v1980 = vadd.f32 %v1954, %v1932
        %v1981 = vadd.f32 %v1954, %v1933
        %v1982 = vadd.f32 %v1954, %v1934
        %v1983 = vadd.f32 %v1954, %v1935
        %v1984 = vadd.f32 %v1958, %v1936
        %v1985 = vadd.f32 %v1958, %v1937
        %v1986 = vadd.f32 %v1958, %v1938
        %v1987 = vadd.f32 %v1958, %v1939
        %v1988 = vadd.f32 %v1958, %v1940
        %v1989 = vadd.f32 %v1958, %v1941
        %v1990 = vadd.f32 %v1958, %v1942
        %v1991 = vadd.f32 %v1958, %v1943
        %1992 = vrot.lane.b32.xlu0 %v1599, 17
        %v1993 = vpop.permute.xlu0 %1992
        %1994 = vrot.lane.b32.xlu0 %v1605, 17
        %v1995 = vpop.permute.xlu0 %1994
        %1996 = vrot.lane.b32.xlu0 %v1611, 17
        %v1997 = vpop.permute.xlu0 %1996
        %1998 = vrot.lane.b32.xlu0 %v1617, 17
        %v1999 = vpop.permute.xlu0 %1998
        %2000 = vrot.lane.b32.xlu0 %v1601, 17
        %v2001 = vpop.permute.xlu0 %2000
        %2002 = vrot.lane.b32.xlu0 %v1607, 17
        %v2003 = vpop.permute.xlu0 %2002
        %2004 = vrot.lane.b32.xlu0 %v1613, 17
        %v2005 = vpop.permute.xlu0 %2004
        %2006 = vrot.lane.b32.xlu0 %v1619, 17
        %v2007 = vpop.permute.xlu0 %2006
        %2008 = vrot.lane.b32.xlu0 %v1688, 17
        %v2009 = vpop.permute.xlu0 %2008
        %2010 = vrot.lane.b32.xlu0 %v1694, 17
        %v2011 = vpop.permute.xlu0 %2010
        %2012 = vrot.lane.b32.xlu0 %v1700, 17
        %v2013 = vpop.permute.xlu0 %2012
        %2014 = vrot.lane.b32.xlu0 %v1706, 17
        %v2015 = vpop.permute.xlu0 %2014
        %2016 = vrot.lane.b32.xlu0 %v1690, 17
        %v2017 = vpop.permute.xlu0 %2016
        %2018 = vrot.lane.b32.xlu0 %v1696, 17
        %v2019 = vpop.permute.xlu0 %2018
        %2020 = vrot.lane.b32.xlu0 %v1702, 17
        %v2021 = vpop.permute.xlu0 %2020
        %2022 = vrot.lane.b32.xlu0 %v1708, 17
        %v2023 = vpop.permute.xlu0 %2022
        %2024 = vrot.lane.b32.xlu0 %v1777, 17
        %v2025 = vpop.permute.xlu0 %2024
        %2026 = vrot.lane.b32.xlu0 %v1783, 17
        %v2027 = vpop.permute.xlu0 %2026
        %2028 = vrot.lane.b32.xlu0 %v1789, 17
        %v2029 = vpop.permute.xlu0 %2028
        %2030 = vrot.lane.b32.xlu0 %v1795, 17
        %v2031 = vpop.permute.xlu0 %2030
        %2032 = vrot.lane.b32.xlu0 %v1779, 17
        %v2033 = vpop.permute.xlu0 %2032
        %2034 = vrot.lane.b32.xlu0 %v1785, 17
        %v2035 = vpop.permute.xlu0 %2034
        %2036 = vrot.lane.b32.xlu0 %v1791, 17
        %v2037 = vpop.permute.xlu0 %2036
        %2038 = vrot.lane.b32.xlu0 %v1797, 17
        %v2039 = vpop.permute.xlu0 %2038
        %2040 = vrot.lane.b32.xlu0 %v1866, 17
        %v2041 = vpop.permute.xlu0 %2040
        %2042 = vrot.lane.b32.xlu0 %v1872, 17
        %v2043 = vpop.permute.xlu0 %2042
        %2044 = vrot.lane.b32.xlu0 %v1878, 17
        %v2045 = vpop.permute.xlu0 %2044
        %2046 = vrot.lane.b32.xlu0 %v1884, 17
        %v2047 = vpop.permute.xlu0 %2046
        %2048 = vrot.lane.b32.xlu0 %v1868, 17
        %v2049 = vpop.permute.xlu0 %2048
        %2050 = vrot.lane.b32.xlu0 %v1874, 17
        %v2051 = vpop.permute.xlu0 %2050
        %2052 = vrot.lane.b32.xlu0 %v1880, 17
        %v2053 = vpop.permute.xlu0 %2052
        %2054 = vrot.lane.b32.xlu0 %v1886, 17
        %v2055 = vpop.permute.xlu0 %2054
        %v2056 = vsel %vm198, %v2041, %v2049
        %v2057 = vsel %vm198, %v2043, %v2051
        %v2058 = vsel %vm198, %v2045, %v2053
        %v2059 = vsel %vm198, %v2047, %v2055
        %v2060 = vsel %vm198, %v2033, %v2041
        %v2061 = vsel %vm198, %v2035, %v2043
        %v2062 = vsel %vm198, %v2037, %v2045
        %v2063 = vsel %vm198, %v2039, %v2047
        %v2064 = vsel %vm198, %v2025, %v2033
        %v2065 = vsel %vm198, %v2027, %v2035
        %v2066 = vsel %vm198, %v2029, %v2037
        %v2067 = vsel %vm198, %v2031, %v2039
        %v2068 = vsel %vm198, %v2017, %v2025
        %v2069 = vsel %vm198, %v2019, %v2027
        %v2070 = vsel %vm198, %v2021, %v2029
        %v2071 = vsel %vm198, %v2023, %v2031
        %v2072 = vsel %vm198, %v2009, %v2017
        %v2073 = vsel %vm198, %v2011, %v2019
        %v2074 = vsel %vm198, %v2013, %v2021
        %v2075 = vsel %vm198, %v2015, %v2023
        %v2076 = vsel %vm198, %v2001, %v2009
        %v2077 = vsel %vm198, %v2003, %v2011
        %v2078 = vsel %vm198, %v2005, %v2013
        %v2079 = vsel %vm198, %v2007, %v2015
        %v2080 = vsel %vm198, %v1993, %v2001
        %v2081 = vsel %vm198, %v1995, %v2003
        %v2082 = vsel %vm198, %v1997, %v2005
        %v2083 = vsel %vm198, %v1999, %v2007
        %v2084 = vsel %vm198, %v2049, %v1993
        %v2085 = vsel %vm198, %v2051, %v1995
        %v2086 = vsel %vm198, %v2053, %v1997
        %v2087 = vsel %vm198, %v2055, %v1999
        %v2088 = vld [vmem:[%s1] ss:$8 sm:$0xf]
        %v2089 = vld [vmem:[%s1] ss:$8 sm:$0xf0]
        %v2090 = vor.u32 %v2088, %v2089
        %v2092 = vlaneseq
        %v2093 = vshrl.u32 %v2092, 7
        %v2094 = vsub.s32 0, %v2093
        %v2095 = vrot.slane %v2090, %v2094
        %v2096 = vlaneseq
        %v2097 = vshrl.u32 %v2096, 7
        %v2098 = vsub.s32 1, %v2097
        %v2099 = vrot.slane %v2090, %v2098
        %v2100 = vlaneseq
        %v2101 = vshrl.u32 %v2100, 7
        %v2102 = vsub.s32 2, %v2101
        %v2103 = vrot.slane %v2090, %v2102
        %v2104 = vlaneseq
        %v2105 = vshrl.u32 %v2104, 7
        %v2106 = vsub.s32 3, %v2105
        %v2107 = vrot.slane %v2090, %v2106
        %v2108 = vlaneseq
        %v2109 = vshrl.u32 %v2108, 7
        %v2110 = vsub.s32 4, %v2109
        %v2111 = vrot.slane %v2090, %v2110
        %v2112 = vlaneseq
        %v2113 = vshrl.u32 %v2112, 7
        %v2114 = vsub.s32 5, %v2113
        %v2115 = vrot.slane %v2090, %v2114
        %v2116 = vlaneseq
        %v2117 = vshrl.u32 %v2116, 7
        %v2118 = vsub.s32 6, %v2117
        %v2119 = vrot.slane %v2090, %v2118
        %v2120 = vlaneseq
        %v2121 = vshrl.u32 %v2120, 7
        %v2122 = vsub.s32 7, %v2121
        %v2123 = vrot.slane %v2090, %v2122
        %v2132 = vmul.f32 %v2084, %v2095
        %v2133 = vmul.f32 %v2080, %v2099
        %v2134 = vmul.f32 %v2076, %v2103
        %v2135 = vmul.f32 %v2072, %v2107
        %v2136 = vmul.f32 %v2068, %v2111
        %v2137 = vmul.f32 %v2064, %v2115
        %v2138 = vmul.f32 %v2060, %v2119
        %v2139 = vmul.f32 %v2056, %v2123
        %v2140 = vmul.f32 %v2085, %v2095
        %v2141 = vmul.f32 %v2081, %v2099
        %v2142 = vmul.f32 %v2077, %v2103
        %v2143 = vmul.f32 %v2073, %v2107
        %v2144 = vmul.f32 %v2069, %v2111
        %v2145 = vmul.f32 %v2065, %v2115
        %v2146 = vmul.f32 %v2061, %v2119
        %v2147 = vmul.f32 %v2057, %v2123
        %v2148 = vmul.f32 %v2086, %v2095
        %v2149 = vmul.f32 %v2082, %v2099
        %v2150 = vmul.f32 %v2078, %v2103
        %v2151 = vmul.f32 %v2074, %v2107
        %v2152 = vmul.f32 %v2070, %v2111
        %v2153 = vmul.f32 %v2066, %v2115
        %v2154 = vmul.f32 %v2062, %v2119
        %v2155 = vmul.f32 %v2058, %v2123
        %v2156 = vmul.f32 %v2087, %v2095
        %v2157 = vmul.f32 %v2083, %v2099
        %v2158 = vmul.f32 %v2079, %v2103
        %v2159 = vmul.f32 %v2075, %v2107
        %v2160 = vmul.f32 %v2071, %v2111
        %v2161 = vmul.f32 %v2067, %v2115
        %v2162 = vmul.f32 %v2063, %v2119
        %v2163 = vmul.f32 %v2059, %v2123
        %2164 = vset.pattern.permute.xlu0 0
        %2165 = vperm.xlu0 %2164, %v1888
        %v2166 = vpop.permute.xlu0 %2165
        %2168 = vset.pattern.permute.xlu0 0
        %2169 = vperm.xlu0 %2168, %v1889
        %v2170 = vpop.permute.xlu0 %2169
        %2172 = vset.pattern.permute.xlu0 0
        %2173 = vperm.xlu0 %2172, %v1890
        %v2174 = vpop.permute.xlu0 %2173
        %2176 = vset.pattern.permute.xlu0 0
        %2177 = vperm.xlu0 %2176, %v1891
        %v2178 = vpop.permute.xlu0 %2177
        %v2180 = vmul.f32 %v2166, %v2132
        %v2181 = vmul.f32 %v2166, %v2133
        %v2182 = vmul.f32 %v2166, %v2134
        %v2183 = vmul.f32 %v2166, %v2135
        %v2184 = vmul.f32 %v2166, %v2136
        %v2185 = vmul.f32 %v2166, %v2137
        %v2186 = vmul.f32 %v2166, %v2138
        %v2187 = vmul.f32 %v2166, %v2139
        %v2188 = vmul.f32 %v2170, %v2140
        %v2189 = vmul.f32 %v2170, %v2141
        %v2190 = vmul.f32 %v2170, %v2142
        %v2191 = vmul.f32 %v2170, %v2143
        %v2192 = vmul.f32 %v2170, %v2144
        %v2193 = vmul.f32 %v2170, %v2145
        %v2194 = vmul.f32 %v2170, %v2146
        %v2195 = vmul.f32 %v2170, %v2147
        %v2196 = vmul.f32 %v2174, %v2148
        %v2197 = vmul.f32 %v2174, %v2149
        %v2198 = vmul.f32 %v2174, %v2150
        %v2199 = vmul.f32 %v2174, %v2151
        %v2200 = vmul.f32 %v2174, %v2152
        %v2201 = vmul.f32 %v2174, %v2153
        %v2202 = vmul.f32 %v2174, %v2154
        %v2203 = vmul.f32 %v2174, %v2155
        %v2204 = vmul.f32 %v2178, %v2156
        %v2205 = vmul.f32 %v2178, %v2157
        %v2206 = vmul.f32 %v2178, %v2158
        %v2207 = vmul.f32 %v2178, %v2159
        %v2208 = vmul.f32 %v2178, %v2160
        %v2209 = vmul.f32 %v2178, %v2161
        %v2210 = vmul.f32 %v2178, %v2162
        %v2211 = vmul.f32 %v2178, %v2163
        %v2212 = vadd.f32 %v1960, %v2180
        %v2213 = vadd.f32 %v1961, %v2181
        %v2214 = vadd.f32 %v1962, %v2182
        %v2215 = vadd.f32 %v1963, %v2183
        %v2216 = vadd.f32 %v1964, %v2184
        %v2217 = vadd.f32 %v1965, %v2185
        %v2218 = vadd.f32 %v1966, %v2186
        %v2219 = vadd.f32 %v1967, %v2187
        %v2220 = vadd.f32 %v1968, %v2188
        %v2221 = vadd.f32 %v1969, %v2189
        %v2222 = vadd.f32 %v1970, %v2190
        %v2223 = vadd.f32 %v1971, %v2191
        %v2224 = vadd.f32 %v1972, %v2192
        %v2225 = vadd.f32 %v1973, %v2193
        %v2226 = vadd.f32 %v1974, %v2194
        %v2227 = vadd.f32 %v1975, %v2195
        %v2228 = vadd.f32 %v1976, %v2196
        %v2229 = vadd.f32 %v1977, %v2197
        %v2230 = vadd.f32 %v1978, %v2198
        %v2231 = vadd.f32 %v1979, %v2199
        %v2232 = vadd.f32 %v1980, %v2200
        %v2233 = vadd.f32 %v1981, %v2201
        %v2234 = vadd.f32 %v1982, %v2202
        %v2235 = vadd.f32 %v1983, %v2203
        %v2236 = vadd.f32 %v1984, %v2204
        %v2237 = vadd.f32 %v1985, %v2205
        %v2238 = vadd.f32 %v1986, %v2206
        %v2239 = vadd.f32 %v1987, %v2207
        %v2240 = vadd.f32 %v1988, %v2208
        %v2241 = vadd.f32 %v1989, %v2209
        %v2242 = vadd.f32 %v1990, %v2210
        %v2243 = vadd.f32 %v1991, %v2211
        %2244 = vrot.lane.b32.xlu0 %v1599, 16
        %v2245 = vpop.permute.xlu0 %2244
        %2246 = vrot.lane.b32.xlu0 %v1605, 16
        %v2247 = vpop.permute.xlu0 %2246
        %2248 = vrot.lane.b32.xlu0 %v1611, 16
        %v2249 = vpop.permute.xlu0 %2248
        %2250 = vrot.lane.b32.xlu0 %v1617, 16
        %v2251 = vpop.permute.xlu0 %2250
        %2252 = vrot.lane.b32.xlu0 %v1601, 16
        %v2253 = vpop.permute.xlu0 %2252
        %2254 = vrot.lane.b32.xlu0 %v1607, 16
        %v2255 = vpop.permute.xlu0 %2254
        %2256 = vrot.lane.b32.xlu0 %v1613, 16
        %v2257 = vpop.permute.xlu0 %2256
        %2258 = vrot.lane.b32.xlu0 %v1619, 16
        %v2259 = vpop.permute.xlu0 %2258
        %2260 = vrot.lane.b32.xlu0 %v1688, 16
        %v2261 = vpop.permute.xlu0 %2260
        %2262 = vrot.lane.b32.xlu0 %v1694, 16
        %v2263 = vpop.permute.xlu0 %2262
        %2264 = vrot.lane.b32.xlu0 %v1700, 16
        %v2265 = vpop.permute.xlu0 %2264
        %2266 = vrot.lane.b32.xlu0 %v1706, 16
        %v2267 = vpop.permute.xlu0 %2266
        %2268 = vrot.lane.b32.xlu0 %v1690, 16
        %v2269 = vpop.permute.xlu0 %2268
        %2270 = vrot.lane.b32.xlu0 %v1696, 16
        %v2271 = vpop.permute.xlu0 %2270
        %2272 = vrot.lane.b32.xlu0 %v1702, 16
        %v2273 = vpop.permute.xlu0 %2272
        %2274 = vrot.lane.b32.xlu0 %v1708, 16
        %v2275 = vpop.permute.xlu0 %2274
        %2276 = vrot.lane.b32.xlu0 %v1777, 16
        %v2277 = vpop.permute.xlu0 %2276
        %2278 = vrot.lane.b32.xlu0 %v1783, 16
        %v2279 = vpop.permute.xlu0 %2278
        %2280 = vrot.lane.b32.xlu0 %v1789, 16
        %v2281 = vpop.permute.xlu0 %2280
        %2282 = vrot.lane.b32.xlu0 %v1795, 16
        %v2283 = vpop.permute.xlu0 %2282
        %2284 = vrot.lane.b32.xlu0 %v1779, 16
        %v2285 = vpop.permute.xlu0 %2284
        %2286 = vrot.lane.b32.xlu0 %v1785, 16
        %v2287 = vpop.permute.xlu0 %2286
        %2288 = vrot.lane.b32.xlu0 %v1791, 16
        %v2289 = vpop.permute.xlu0 %2288
        %2290 = vrot.lane.b32.xlu0 %v1797, 16
        %v2291 = vpop.permute.xlu0 %2290
        %2292 = vrot.lane.b32.xlu0 %v1866, 16
        %v2293 = vpop.permute.xlu0 %2292
        %2294 = vrot.lane.b32.xlu0 %v1872, 16
        %v2295 = vpop.permute.xlu0 %2294
        %2296 = vrot.lane.b32.xlu0 %v1878, 16
        %v2297 = vpop.permute.xlu0 %2296
        %2298 = vrot.lane.b32.xlu0 %v1884, 16
        %v2299 = vpop.permute.xlu0 %2298
        %2300 = vrot.lane.b32.xlu0 %v1868, 16
        %v2301 = vpop.permute.xlu0 %2300
        %2302 = vrot.lane.b32.xlu0 %v1874, 16
        %v2303 = vpop.permute.xlu0 %2302
        %2304 = vrot.lane.b32.xlu0 %v1880, 16
        %v2305 = vpop.permute.xlu0 %2304
        %2306 = vrot.lane.b32.xlu0 %v1886, 16
        %v2307 = vpop.permute.xlu0 %2306
        %v2308 = vsel %vm283, %v2293, %v2301
        %v2309 = vsel %vm283, %v2295, %v2303
        %v2310 = vsel %vm283, %v2297, %v2305
        %v2311 = vsel %vm283, %v2299, %v2307
        %v2312 = vsel %vm283, %v2285, %v2293
        %v2313 = vsel %vm283, %v2287, %v2295
        %v2314 = vsel %vm283, %v2289, %v2297
        %v2315 = vsel %vm283, %v2291, %v2299
        %v2316 = vsel %vm283, %v2277, %v2285
        %v2317 = vsel %vm283, %v2279, %v2287
        %v2318 = vsel %vm283, %v2281, %v2289
        %v2319 = vsel %vm283, %v2283, %v2291
        %v2320 = vsel %vm283, %v2269, %v2277
        %v2321 = vsel %vm283, %v2271, %v2279
        %v2322 = vsel %vm283, %v2273, %v2281
        %v2323 = vsel %vm283, %v2275, %v2283
        %v2324 = vsel %vm283, %v2261, %v2269
        %v2325 = vsel %vm283, %v2263, %v2271
        %v2326 = vsel %vm283, %v2265, %v2273
        %v2327 = vsel %vm283, %v2267, %v2275
        %v2328 = vsel %vm283, %v2253, %v2261
        %v2329 = vsel %vm283, %v2255, %v2263
        %v2330 = vsel %vm283, %v2257, %v2265
        %v2331 = vsel %vm283, %v2259, %v2267
        %v2332 = vsel %vm283, %v2245, %v2253
        %v2333 = vsel %vm283, %v2247, %v2255
        %v2334 = vsel %vm283, %v2249, %v2257
        %v2335 = vsel %vm283, %v2251, %v2259
        %v2336 = vsel %vm283, %v2301, %v2245
        %v2337 = vsel %vm283, %v2303, %v2247
        %v2338 = vsel %vm283, %v2305, %v2249
        %v2339 = vsel %vm283, %v2307, %v2251
        %v2340 = vld [vmem:[%s292] ss:$8 sm:$0xf]
        %v2341 = vld [vmem:[%s292] ss:$8 sm:$0xf0]
        %v2342 = vor.u32 %v2340, %v2341
        %v2344 = vlaneseq
        %v2345 = vshrl.u32 %v2344, 7
        %v2346 = vsub.s32 0, %v2345
        %v2347 = vrot.slane %v2342, %v2346
        %v2348 = vlaneseq
        %v2349 = vshrl.u32 %v2348, 7
        %v2350 = vsub.s32 1, %v2349
        %v2351 = vrot.slane %v2342, %v2350
        %v2352 = vlaneseq
        %v2353 = vshrl.u32 %v2352, 7
        %v2354 = vsub.s32 2, %v2353
        %v2355 = vrot.slane %v2342, %v2354
        %v2356 = vlaneseq
        %v2357 = vshrl.u32 %v2356, 7
        %v2358 = vsub.s32 3, %v2357
        %v2359 = vrot.slane %v2342, %v2358
        %v2360 = vlaneseq
        %v2361 = vshrl.u32 %v2360, 7
        %v2362 = vsub.s32 4, %v2361
        %v2363 = vrot.slane %v2342, %v2362
        %v2364 = vlaneseq
        %v2365 = vshrl.u32 %v2364, 7
        %v2366 = vsub.s32 5, %v2365
        %v2367 = vrot.slane %v2342, %v2366
        %v2368 = vlaneseq
        %v2369 = vshrl.u32 %v2368, 7
        %v2370 = vsub.s32 6, %v2369
        %v2371 = vrot.slane %v2342, %v2370
        %v2372 = vlaneseq
        %v2373 = vshrl.u32 %v2372, 7
        %v2374 = vsub.s32 7, %v2373
        %v2375 = vrot.slane %v2342, %v2374
        %v2384 = vmul.f32 %v2336, %v2347
        %v2385 = vmul.f32 %v2332, %v2351
        %v2386 = vmul.f32 %v2328, %v2355
        %v2387 = vmul.f32 %v2324, %v2359
        %v2388 = vmul.f32 %v2320, %v2363
        %v2389 = vmul.f32 %v2316, %v2367
        %v2390 = vmul.f32 %v2312, %v2371
        %v2391 = vmul.f32 %v2308, %v2375
        %v2392 = vmul.f32 %v2337, %v2347
        %v2393 = vmul.f32 %v2333, %v2351
        %v2394 = vmul.f32 %v2329, %v2355
        %v2395 = vmul.f32 %v2325, %v2359
        %v2396 = vmul.f32 %v2321, %v2363
        %v2397 = vmul.f32 %v2317, %v2367
        %v2398 = vmul.f32 %v2313, %v2371
        %v2399 = vmul.f32 %v2309, %v2375
        %v2400 = vmul.f32 %v2338, %v2347
        %v2401 = vmul.f32 %v2334, %v2351
        %v2402 = vmul.f32 %v2330, %v2355
        %v2403 = vmul.f32 %v2326, %v2359
        %v2404 = vmul.f32 %v2322, %v2363
        %v2405 = vmul.f32 %v2318, %v2367
        %v2406 = vmul.f32 %v2314, %v2371
        %v2407 = vmul.f32 %v2310, %v2375
        %v2408 = vmul.f32 %v2339, %v2347
        %v2409 = vmul.f32 %v2335, %v2351
        %v2410 = vmul.f32 %v2331, %v2355
        %v2411 = vmul.f32 %v2327, %v2359
        %v2412 = vmul.f32 %v2323, %v2363
        %v2413 = vmul.f32 %v2319, %v2367
        %v2414 = vmul.f32 %v2315, %v2371
        %v2415 = vmul.f32 %v2311, %v2375
        %2416 = vset.pattern.permute.xlu0 1
        %2417 = vperm.xlu0 %2416, %v1888
        %v2418 = vpop.permute.xlu0 %2417
        %2420 = vset.pattern.permute.xlu0 1
        %2421 = vperm.xlu0 %2420, %v1889
        %v2422 = vpop.permute.xlu0 %2421
        %2424 = vset.pattern.permute.xlu0 1
        %2425 = vperm.xlu0 %2424, %v1890
        %v2426 = vpop.permute.xlu0 %2425
        %2428 = vset.pattern.permute.xlu0 1
        %2429 = vperm.xlu0 %2428, %v1891
        %v2430 = vpop.permute.xlu0 %2429
        %v2432 = vmul.f32 %v2418, %v2384
        %v2433 = vmul.f32 %v2418, %v2385
        %v2434 = vmul.f32 %v2418, %v2386
        %v2435 = vmul.f32 %v2418, %v2387
        %v2436 = vmul.f32 %v2418, %v2388
        %v2437 = vmul.f32 %v2418, %v2389
        %v2438 = vmul.f32 %v2418, %v2390
        %v2439 = vmul.f32 %v2418, %v2391
        %v2440 = vmul.f32 %v2422, %v2392
        %v2441 = vmul.f32 %v2422, %v2393
        %v2442 = vmul.f32 %v2422, %v2394
        %v2443 = vmul.f32 %v2422, %v2395
        %v2444 = vmul.f32 %v2422, %v2396
        %v2445 = vmul.f32 %v2422, %v2397
        %v2446 = vmul.f32 %v2422, %v2398
        %v2447 = vmul.f32 %v2422, %v2399
        %v2448 = vmul.f32 %v2426, %v2400
        %v2449 = vmul.f32 %v2426, %v2401
        %v2450 = vmul.f32 %v2426, %v2402
        %v2451 = vmul.f32 %v2426, %v2403
        %v2452 = vmul.f32 %v2426, %v2404
        %v2453 = vmul.f32 %v2426, %v2405
        %v2454 = vmul.f32 %v2426, %v2406
        %v2455 = vmul.f32 %v2426, %v2407
        %v2456 = vmul.f32 %v2430, %v2408
        %v2457 = vmul.f32 %v2430, %v2409
        %v2458 = vmul.f32 %v2430, %v2410
        %v2459 = vmul.f32 %v2430, %v2411
        %v2460 = vmul.f32 %v2430, %v2412
        %v2461 = vmul.f32 %v2430, %v2413
        %v2462 = vmul.f32 %v2430, %v2414
        %v2463 = vmul.f32 %v2430, %v2415
        %v2464 = vadd.f32 %v2212, %v2432
        %v2465 = vadd.f32 %v2213, %v2433
        %v2466 = vadd.f32 %v2214, %v2434
        %v2467 = vadd.f32 %v2215, %v2435
        %v2468 = vadd.f32 %v2216, %v2436
        %v2469 = vadd.f32 %v2217, %v2437
        %v2470 = vadd.f32 %v2218, %v2438
        %v2471 = vadd.f32 %v2219, %v2439
        %v2472 = vadd.f32 %v2220, %v2440
        %v2473 = vadd.f32 %v2221, %v2441
        %v2474 = vadd.f32 %v2222, %v2442
        %v2475 = vadd.f32 %v2223, %v2443
        %v2476 = vadd.f32 %v2224, %v2444
        %v2477 = vadd.f32 %v2225, %v2445
        %v2478 = vadd.f32 %v2226, %v2446
        %v2479 = vadd.f32 %v2227, %v2447
        %v2480 = vadd.f32 %v2228, %v2448
        %v2481 = vadd.f32 %v2229, %v2449
        %v2482 = vadd.f32 %v2230, %v2450
        %v2483 = vadd.f32 %v2231, %v2451
        %v2484 = vadd.f32 %v2232, %v2452
        %v2485 = vadd.f32 %v2233, %v2453
        %v2486 = vadd.f32 %v2234, %v2454
        %v2487 = vadd.f32 %v2235, %v2455
        %v2488 = vadd.f32 %v2236, %v2456
        %v2489 = vadd.f32 %v2237, %v2457
        %v2490 = vadd.f32 %v2238, %v2458
        %v2491 = vadd.f32 %v2239, %v2459
        %v2492 = vadd.f32 %v2240, %v2460
        %v2493 = vadd.f32 %v2241, %v2461
        %v2494 = vadd.f32 %v2242, %v2462
        %v2495 = vadd.f32 %v2243, %v2463
        %2496 = vrot.lane.b32.xlu0 %v1599, 15
        %v2497 = vpop.permute.xlu0 %2496
        %2498 = vrot.lane.b32.xlu0 %v1605, 15
        %v2499 = vpop.permute.xlu0 %2498
        %2500 = vrot.lane.b32.xlu0 %v1611, 15
        %v2501 = vpop.permute.xlu0 %2500
        %2502 = vrot.lane.b32.xlu0 %v1617, 15
        %v2503 = vpop.permute.xlu0 %2502
        %2504 = vrot.lane.b32.xlu0 %v1601, 15
        %v2505 = vpop.permute.xlu0 %2504
        %2506 = vrot.lane.b32.xlu0 %v1607, 15
        %v2507 = vpop.permute.xlu0 %2506
        %2508 = vrot.lane.b32.xlu0 %v1613, 15
        %v2509 = vpop.permute.xlu0 %2508
        %2510 = vrot.lane.b32.xlu0 %v1619, 15
        %v2511 = vpop.permute.xlu0 %2510
        %2512 = vrot.lane.b32.xlu0 %v1688, 15
        %v2513 = vpop.permute.xlu0 %2512
        %2514 = vrot.lane.b32.xlu0 %v1694, 15
        %v2515 = vpop.permute.xlu0 %2514
        %2516 = vrot.lane.b32.xlu0 %v1700, 15
        %v2517 = vpop.permute.xlu0 %2516
        %2518 = vrot.lane.b32.xlu0 %v1706, 15
        %v2519 = vpop.permute.xlu0 %2518
        %2520 = vrot.lane.b32.xlu0 %v1690, 15
        %v2521 = vpop.permute.xlu0 %2520
        %2522 = vrot.lane.b32.xlu0 %v1696, 15
        %v2523 = vpop.permute.xlu0 %2522
        %2524 = vrot.lane.b32.xlu0 %v1702, 15
        %v2525 = vpop.permute.xlu0 %2524
        %2526 = vrot.lane.b32.xlu0 %v1708, 15
        %v2527 = vpop.permute.xlu0 %2526
        %2528 = vrot.lane.b32.xlu0 %v1777, 15
        %v2529 = vpop.permute.xlu0 %2528
        %2530 = vrot.lane.b32.xlu0 %v1783, 15
        %v2531 = vpop.permute.xlu0 %2530
        %2532 = vrot.lane.b32.xlu0 %v1789, 15
        %v2533 = vpop.permute.xlu0 %2532
        %2534 = vrot.lane.b32.xlu0 %v1795, 15
        %v2535 = vpop.permute.xlu0 %2534
        %2536 = vrot.lane.b32.xlu0 %v1779, 15
        %v2537 = vpop.permute.xlu0 %2536
        %2538 = vrot.lane.b32.xlu0 %v1785, 15
        %v2539 = vpop.permute.xlu0 %2538
        %2540 = vrot.lane.b32.xlu0 %v1791, 15
        %v2541 = vpop.permute.xlu0 %2540
        %2542 = vrot.lane.b32.xlu0 %v1797, 15
        %v2543 = vpop.permute.xlu0 %2542
        %2544 = vrot.lane.b32.xlu0 %v1866, 15
        %v2545 = vpop.permute.xlu0 %2544
        %2546 = vrot.lane.b32.xlu0 %v1872, 15
        %v2547 = vpop.permute.xlu0 %2546
        %2548 = vrot.lane.b32.xlu0 %v1878, 15
        %v2549 = vpop.permute.xlu0 %2548
        %2550 = vrot.lane.b32.xlu0 %v1884, 15
        %v2551 = vpop.permute.xlu0 %2550
        %2552 = vrot.lane.b32.xlu0 %v1868, 15
        %v2553 = vpop.permute.xlu0 %2552
        %2554 = vrot.lane.b32.xlu0 %v1874, 15
        %v2555 = vpop.permute.xlu0 %2554
        %2556 = vrot.lane.b32.xlu0 %v1880, 15
        %v2557 = vpop.permute.xlu0 %2556
        %2558 = vrot.lane.b32.xlu0 %v1886, 15
        %v2559 = vpop.permute.xlu0 %2558
        %v2560 = vsel %vm369, %v2545, %v2553
        %v2561 = vsel %vm369, %v2547, %v2555
        %v2562 = vsel %vm369, %v2549, %v2557
        %v2563 = vsel %vm369, %v2551, %v2559
        %v2564 = vsel %vm369, %v2537, %v2545
        %v2565 = vsel %vm369, %v2539, %v2547
        %v2566 = vsel %vm369, %v2541, %v2549
        %v2567 = vsel %vm369, %v2543, %v2551
        %v2568 = vsel %vm369, %v2529, %v2537
        %v2569 = vsel %vm369, %v2531, %v2539
        %v2570 = vsel %vm369, %v2533, %v2541
        %v2571 = vsel %vm369, %v2535, %v2543
        %v2572 = vsel %vm369, %v2521, %v2529
        %v2573 = vsel %vm369, %v2523, %v2531
        %v2574 = vsel %vm369, %v2525, %v2533
        %v2575 = vsel %vm369, %v2527, %v2535
        %v2576 = vsel %vm369, %v2513, %v2521
        %v2577 = vsel %vm369, %v2515, %v2523
        %v2578 = vsel %vm369, %v2517, %v2525
        %v2579 = vsel %vm369, %v2519, %v2527
        %v2580 = vsel %vm369, %v2505, %v2513
        %v2581 = vsel %vm369, %v2507, %v2515
        %v2582 = vsel %vm369, %v2509, %v2517
        %v2583 = vsel %vm369, %v2511, %v2519
        %v2584 = vsel %vm369, %v2497, %v2505
        %v2585 = vsel %vm369, %v2499, %v2507
        %v2586 = vsel %vm369, %v2501, %v2509
        %v2587 = vsel %vm369, %v2503, %v2511
        %v2588 = vsel %vm369, %v2553, %v2497
        %v2589 = vsel %vm369, %v2555, %v2499
        %v2590 = vsel %vm369, %v2557, %v2501
        %v2591 = vsel %vm369, %v2559, %v2503
        %v2592 = vld [vmem:[%s378] ss:$8 sm:$0xf]
        %v2593 = vld [vmem:[%s378] ss:$8 sm:$0xf0]
        %v2594 = vor.u32 %v2592, %v2593
        %v2596 = vlaneseq
        %v2597 = vshrl.u32 %v2596, 7
        %v2598 = vsub.s32 0, %v2597
        %v2599 = vrot.slane %v2594, %v2598
        %v2600 = vlaneseq
        %v2601 = vshrl.u32 %v2600, 7
        %v2602 = vsub.s32 1, %v2601
        %v2603 = vrot.slane %v2594, %v2602
        %v2604 = vlaneseq
        %v2605 = vshrl.u32 %v2604, 7
        %v2606 = vsub.s32 2, %v2605
        %v2607 = vrot.slane %v2594, %v2606
        %v2608 = vlaneseq
        %v2609 = vshrl.u32 %v2608, 7
        %v2610 = vsub.s32 3, %v2609
        %v2611 = vrot.slane %v2594, %v2610
        %v2612 = vlaneseq
        %v2613 = vshrl.u32 %v2612, 7
        %v2614 = vsub.s32 4, %v2613
        %v2615 = vrot.slane %v2594, %v2614
        %v2616 = vlaneseq
        %v2617 = vshrl.u32 %v2616, 7
        %v2618 = vsub.s32 5, %v2617
        %v2619 = vrot.slane %v2594, %v2618
        %v2620 = vlaneseq
        %v2621 = vshrl.u32 %v2620, 7
        %v2622 = vsub.s32 6, %v2621
        %v2623 = vrot.slane %v2594, %v2622
        %v2624 = vlaneseq
        %v2625 = vshrl.u32 %v2624, 7
        %v2626 = vsub.s32 7, %v2625
        %v2627 = vrot.slane %v2594, %v2626
        %v2636 = vmul.f32 %v2588, %v2599
        %v2637 = vmul.f32 %v2584, %v2603
        %v2638 = vmul.f32 %v2580, %v2607
        %v2639 = vmul.f32 %v2576, %v2611
        %v2640 = vmul.f32 %v2572, %v2615
        %v2641 = vmul.f32 %v2568, %v2619
        %v2642 = vmul.f32 %v2564, %v2623
        %v2643 = vmul.f32 %v2560, %v2627
        %v2644 = vmul.f32 %v2589, %v2599
        %v2645 = vmul.f32 %v2585, %v2603
        %v2646 = vmul.f32 %v2581, %v2607
        %v2647 = vmul.f32 %v2577, %v2611
        %v2648 = vmul.f32 %v2573, %v2615
        %v2649 = vmul.f32 %v2569, %v2619
        %v2650 = vmul.f32 %v2565, %v2623
        %v2651 = vmul.f32 %v2561, %v2627
        %v2652 = vmul.f32 %v2590, %v2599
        %v2653 = vmul.f32 %v2586, %v2603
        %v2654 = vmul.f32 %v2582, %v2607
        %v2655 = vmul.f32 %v2578, %v2611
        %v2656 = vmul.f32 %v2574, %v2615
        %v2657 = vmul.f32 %v2570, %v2619
        %v2658 = vmul.f32 %v2566, %v2623
        %v2659 = vmul.f32 %v2562, %v2627
        %v2660 = vmul.f32 %v2591, %v2599
        %v2661 = vmul.f32 %v2587, %v2603
        %v2662 = vmul.f32 %v2583, %v2607
        %v2663 = vmul.f32 %v2579, %v2611
        %v2664 = vmul.f32 %v2575, %v2615
        %v2665 = vmul.f32 %v2571, %v2619
        %v2666 = vmul.f32 %v2567, %v2623
        %v2667 = vmul.f32 %v2563, %v2627
        %2668 = vset.pattern.permute.xlu0 2
        %2669 = vperm.xlu0 %2668, %v1888
        %v2670 = vpop.permute.xlu0 %2669
        %2672 = vset.pattern.permute.xlu0 2
        %2673 = vperm.xlu0 %2672, %v1889
        %v2674 = vpop.permute.xlu0 %2673
        %2676 = vset.pattern.permute.xlu0 2
        %2677 = vperm.xlu0 %2676, %v1890
        %v2678 = vpop.permute.xlu0 %2677
        %2680 = vset.pattern.permute.xlu0 2
        %2681 = vperm.xlu0 %2680, %v1891
        %v2682 = vpop.permute.xlu0 %2681
        %v2684 = vmul.f32 %v2670, %v2636
        %v2685 = vmul.f32 %v2670, %v2637
        %v2686 = vmul.f32 %v2670, %v2638
        %v2687 = vmul.f32 %v2670, %v2639
        %v2688 = vmul.f32 %v2670, %v2640
        %v2689 = vmul.f32 %v2670, %v2641
        %v2690 = vmul.f32 %v2670, %v2642
        %v2691 = vmul.f32 %v2670, %v2643
        %v2692 = vmul.f32 %v2674, %v2644
        %v2693 = vmul.f32 %v2674, %v2645
        %v2694 = vmul.f32 %v2674, %v2646
        %v2695 = vmul.f32 %v2674, %v2647
        %v2696 = vmul.f32 %v2674, %v2648
        %v2697 = vmul.f32 %v2674, %v2649
        %v2698 = vmul.f32 %v2674, %v2650
        %v2699 = vmul.f32 %v2674, %v2651
        %v2700 = vmul.f32 %v2678, %v2652
        %v2701 = vmul.f32 %v2678, %v2653
        %v2702 = vmul.f32 %v2678, %v2654
        %v2703 = vmul.f32 %v2678, %v2655
        %v2704 = vmul.f32 %v2678, %v2656
        %v2705 = vmul.f32 %v2678, %v2657
        %v2706 = vmul.f32 %v2678, %v2658
        %v2707 = vmul.f32 %v2678, %v2659
        %v2708 = vmul.f32 %v2682, %v2660
        %v2709 = vmul.f32 %v2682, %v2661
        %v2710 = vmul.f32 %v2682, %v2662
        %v2711 = vmul.f32 %v2682, %v2663
        %v2712 = vmul.f32 %v2682, %v2664
        %v2713 = vmul.f32 %v2682, %v2665
        %v2714 = vmul.f32 %v2682, %v2666
        %v2715 = vmul.f32 %v2682, %v2667
        %v2716 = vadd.f32 %v2464, %v2684
        %v2717 = vadd.f32 %v2465, %v2685
        %v2718 = vadd.f32 %v2466, %v2686
        %v2719 = vadd.f32 %v2467, %v2687
        %v2720 = vadd.f32 %v2468, %v2688
        %v2721 = vadd.f32 %v2469, %v2689
        %v2722 = vadd.f32 %v2470, %v2690
        %v2723 = vadd.f32 %v2471, %v2691
        %v2724 = vadd.f32 %v2472, %v2692
        %v2725 = vadd.f32 %v2473, %v2693
        %v2726 = vadd.f32 %v2474, %v2694
        %v2727 = vadd.f32 %v2475, %v2695
        %v2728 = vadd.f32 %v2476, %v2696
        %v2729 = vadd.f32 %v2477, %v2697
        %v2730 = vadd.f32 %v2478, %v2698
        %v2731 = vadd.f32 %v2479, %v2699
        %v2732 = vadd.f32 %v2480, %v2700
        %v2733 = vadd.f32 %v2481, %v2701
        %v2734 = vadd.f32 %v2482, %v2702
        %v2735 = vadd.f32 %v2483, %v2703
        %v2736 = vadd.f32 %v2484, %v2704
        %v2737 = vadd.f32 %v2485, %v2705
        %v2738 = vadd.f32 %v2486, %v2706
        %v2739 = vadd.f32 %v2487, %v2707
        %v2740 = vadd.f32 %v2488, %v2708
        %v2741 = vadd.f32 %v2489, %v2709
        %v2742 = vadd.f32 %v2490, %v2710
        %v2743 = vadd.f32 %v2491, %v2711
        %v2744 = vadd.f32 %v2492, %v2712
        %v2745 = vadd.f32 %v2493, %v2713
        %v2746 = vadd.f32 %v2494, %v2714
        %v2747 = vadd.f32 %v2495, %v2715
        %2748 = vrot.lane.b32.xlu0 %v1599, 1
        %v2749 = vpop.permute.xlu0 %2748
        %2750 = vrot.lane.b32.xlu0 %v1605, 1
        %v2751 = vpop.permute.xlu0 %2750
        %2752 = vrot.lane.b32.xlu0 %v1611, 1
        %v2753 = vpop.permute.xlu0 %2752
        %2754 = vrot.lane.b32.xlu0 %v1617, 1
        %v2755 = vpop.permute.xlu0 %2754
        %2756 = vrot.lane.b32.xlu0 %v1601, 1
        %v2757 = vpop.permute.xlu0 %2756
        %2758 = vrot.lane.b32.xlu0 %v1607, 1
        %v2759 = vpop.permute.xlu0 %2758
        %2760 = vrot.lane.b32.xlu0 %v1613, 1
        %v2761 = vpop.permute.xlu0 %2760
        %2762 = vrot.lane.b32.xlu0 %v1619, 1
        %v2763 = vpop.permute.xlu0 %2762
        %2764 = vrot.lane.b32.xlu0 %v1688, 1
        %v2765 = vpop.permute.xlu0 %2764
        %2766 = vrot.lane.b32.xlu0 %v1694, 1
        %v2767 = vpop.permute.xlu0 %2766
        %2768 = vrot.lane.b32.xlu0 %v1700, 1
        %v2769 = vpop.permute.xlu0 %2768
        %2770 = vrot.lane.b32.xlu0 %v1706, 1
        %v2771 = vpop.permute.xlu0 %2770
        %2772 = vrot.lane.b32.xlu0 %v1690, 1
        %v2773 = vpop.permute.xlu0 %2772
        %2774 = vrot.lane.b32.xlu0 %v1696, 1
        %v2775 = vpop.permute.xlu0 %2774
        %2776 = vrot.lane.b32.xlu0 %v1702, 1
        %v2777 = vpop.permute.xlu0 %2776
        %2778 = vrot.lane.b32.xlu0 %v1708, 1
        %v2779 = vpop.permute.xlu0 %2778
        %2780 = vrot.lane.b32.xlu0 %v1777, 1
        %v2781 = vpop.permute.xlu0 %2780
        %2782 = vrot.lane.b32.xlu0 %v1783, 1
        %v2783 = vpop.permute.xlu0 %2782
        %2784 = vrot.lane.b32.xlu0 %v1789, 1
        %v2785 = vpop.permute.xlu0 %2784
        %2786 = vrot.lane.b32.xlu0 %v1795, 1
        %v2787 = vpop.permute.xlu0 %2786
        %2788 = vrot.lane.b32.xlu0 %v1779, 1
        %v2789 = vpop.permute.xlu0 %2788
        %2790 = vrot.lane.b32.xlu0 %v1785, 1
        %v2791 = vpop.permute.xlu0 %2790
        %2792 = vrot.lane.b32.xlu0 %v1791, 1
        %v2793 = vpop.permute.xlu0 %2792
        %2794 = vrot.lane.b32.xlu0 %v1797, 1
        %v2795 = vpop.permute.xlu0 %2794
        %2796 = vrot.lane.b32.xlu0 %v1866, 1
        %v2797 = vpop.permute.xlu0 %2796
        %2798 = vrot.lane.b32.xlu0 %v1872, 1
        %v2799 = vpop.permute.xlu0 %2798
        %2800 = vrot.lane.b32.xlu0 %v1878, 1
        %v2801 = vpop.permute.xlu0 %2800
        %2802 = vrot.lane.b32.xlu0 %v1884, 1
        %v2803 = vpop.permute.xlu0 %2802
        %2804 = vrot.lane.b32.xlu0 %v1868, 1
        %v2805 = vpop.permute.xlu0 %2804
        %2806 = vrot.lane.b32.xlu0 %v1874, 1
        %v2807 = vpop.permute.xlu0 %2806
        %2808 = vrot.lane.b32.xlu0 %v1880, 1
        %v2809 = vpop.permute.xlu0 %2808
        %2810 = vrot.lane.b32.xlu0 %v1886, 1
        %v2811 = vpop.permute.xlu0 %2810
        %v2812 = vsel %vm455, %v2797, %v2805
        %v2813 = vsel %vm455, %v2799, %v2807
        %v2814 = vsel %vm455, %v2801, %v2809
        %v2815 = vsel %vm455, %v2803, %v2811
        %v2816 = vsel %vm455, %v2789, %v2797
        %v2817 = vsel %vm455, %v2791, %v2799
        %v2818 = vsel %vm455, %v2793, %v2801
        %v2819 = vsel %vm455, %v2795, %v2803
        %v2820 = vsel %vm455, %v2781, %v2789
        %v2821 = vsel %vm455, %v2783, %v2791
        %v2822 = vsel %vm455, %v2785, %v2793
        %v2823 = vsel %vm455, %v2787, %v2795
        %v2824 = vsel %vm455, %v2773, %v2781
        %v2825 = vsel %vm455, %v2775, %v2783
        %v2826 = vsel %vm455, %v2777, %v2785
        %v2827 = vsel %vm455, %v2779, %v2787
        %v2828 = vsel %vm455, %v2765, %v2773
        %v2829 = vsel %vm455, %v2767, %v2775
        %v2830 = vsel %vm455, %v2769, %v2777
        %v2831 = vsel %vm455, %v2771, %v2779
        %v2832 = vsel %vm455, %v2757, %v2765
        %v2833 = vsel %vm455, %v2759, %v2767
        %v2834 = vsel %vm455, %v2761, %v2769
        %v2835 = vsel %vm455, %v2763, %v2771
        %v2836 = vsel %vm455, %v2749, %v2757
        %v2837 = vsel %vm455, %v2751, %v2759
        %v2838 = vsel %vm455, %v2753, %v2761
        %v2839 = vsel %vm455, %v2755, %v2763
        %v2840 = vsel %vm455, %v2805, %v2749
        %v2841 = vsel %vm455, %v2807, %v2751
        %v2842 = vsel %vm455, %v2809, %v2753
        %v2843 = vsel %vm455, %v2811, %v2755
        %v2844 = vld [vmem:[%s464] ss:$8 sm:$0xf]
        %v2845 = vld [vmem:[%s464] ss:$8 sm:$0xf0]
        %v2846 = vor.u32 %v2844, %v2845
        %v2848 = vlaneseq
        %v2849 = vshrl.u32 %v2848, 7
        %v2850 = vsub.s32 0, %v2849
        %v2851 = vrot.slane %v2846, %v2850
        %v2852 = vlaneseq
        %v2853 = vshrl.u32 %v2852, 7
        %v2854 = vsub.s32 1, %v2853
        %v2855 = vrot.slane %v2846, %v2854
        %v2856 = vlaneseq
        %v2857 = vshrl.u32 %v2856, 7
        %v2858 = vsub.s32 2, %v2857
        %v2859 = vrot.slane %v2846, %v2858
        %v2860 = vlaneseq
        %v2861 = vshrl.u32 %v2860, 7
        %v2862 = vsub.s32 3, %v2861
        %v2863 = vrot.slane %v2846, %v2862
        %v2864 = vlaneseq
        %v2865 = vshrl.u32 %v2864, 7
        %v2866 = vsub.s32 4, %v2865
        %v2867 = vrot.slane %v2846, %v2866
        %v2868 = vlaneseq
        %v2869 = vshrl.u32 %v2868, 7
        %v2870 = vsub.s32 5, %v2869
        %v2871 = vrot.slane %v2846, %v2870
        %v2872 = vlaneseq
        %v2873 = vshrl.u32 %v2872, 7
        %v2874 = vsub.s32 6, %v2873
        %v2875 = vrot.slane %v2846, %v2874
        %v2876 = vlaneseq
        %v2877 = vshrl.u32 %v2876, 7
        %v2878 = vsub.s32 7, %v2877
        %v2879 = vrot.slane %v2846, %v2878
        %v2888 = vmul.f32 %v2840, %v2851
        %v2889 = vmul.f32 %v2836, %v2855
        %v2890 = vmul.f32 %v2832, %v2859
        %v2891 = vmul.f32 %v2828, %v2863
        %v2892 = vmul.f32 %v2824, %v2867
        %v2893 = vmul.f32 %v2820, %v2871
        %v2894 = vmul.f32 %v2816, %v2875
        %v2895 = vmul.f32 %v2812, %v2879
        %v2896 = vmul.f32 %v2841, %v2851
        %v2897 = vmul.f32 %v2837, %v2855
        %v2898 = vmul.f32 %v2833, %v2859
        %v2899 = vmul.f32 %v2829, %v2863
        %v2900 = vmul.f32 %v2825, %v2867
        %v2901 = vmul.f32 %v2821, %v2871
        %v2902 = vmul.f32 %v2817, %v2875
        %v2903 = vmul.f32 %v2813, %v2879
        %v2904 = vmul.f32 %v2842, %v2851
        %v2905 = vmul.f32 %v2838, %v2855
        %v2906 = vmul.f32 %v2834, %v2859
        %v2907 = vmul.f32 %v2830, %v2863
        %v2908 = vmul.f32 %v2826, %v2867
        %v2909 = vmul.f32 %v2822, %v2871
        %v2910 = vmul.f32 %v2818, %v2875
        %v2911 = vmul.f32 %v2814, %v2879
        %v2912 = vmul.f32 %v2843, %v2851
        %v2913 = vmul.f32 %v2839, %v2855
        %v2914 = vmul.f32 %v2835, %v2859
        %v2915 = vmul.f32 %v2831, %v2863
        %v2916 = vmul.f32 %v2827, %v2867
        %v2917 = vmul.f32 %v2823, %v2871
        %v2918 = vmul.f32 %v2819, %v2875
        %v2919 = vmul.f32 %v2815, %v2879
        %2920 = vset.pattern.permute.xlu0 3
        %2921 = vperm.xlu0 %2920, %v1888
        %v2922 = vpop.permute.xlu0 %2921
        %2924 = vset.pattern.permute.xlu0 3
        %2925 = vperm.xlu0 %2924, %v1889
        %v2926 = vpop.permute.xlu0 %2925
        %2928 = vset.pattern.permute.xlu0 3
        %2929 = vperm.xlu0 %2928, %v1890
        %v2930 = vpop.permute.xlu0 %2929
        %2932 = vset.pattern.permute.xlu0 3
        %2933 = vperm.xlu0 %2932, %v1891
        %v2934 = vpop.permute.xlu0 %2933
        %v2936 = vmul.f32 %v2922, %v2888
        %v2937 = vmul.f32 %v2922, %v2889
        %v2938 = vmul.f32 %v2922, %v2890
        %v2939 = vmul.f32 %v2922, %v2891
        %v2940 = vmul.f32 %v2922, %v2892
        %v2941 = vmul.f32 %v2922, %v2893
        %v2942 = vmul.f32 %v2922, %v2894
        %v2943 = vmul.f32 %v2922, %v2895
        %v2944 = vmul.f32 %v2926, %v2896
        %v2945 = vmul.f32 %v2926, %v2897
        %v2946 = vmul.f32 %v2926, %v2898
        %v2947 = vmul.f32 %v2926, %v2899
        %v2948 = vmul.f32 %v2926, %v2900
        %v2949 = vmul.f32 %v2926, %v2901
        %v2950 = vmul.f32 %v2926, %v2902
        %v2951 = vmul.f32 %v2926, %v2903
        %v2952 = vmul.f32 %v2930, %v2904
        %v2953 = vmul.f32 %v2930, %v2905
        %v2954 = vmul.f32 %v2930, %v2906
        %v2955 = vmul.f32 %v2930, %v2907
        %v2956 = vmul.f32 %v2930, %v2908
        %v2957 = vmul.f32 %v2930, %v2909
        %v2958 = vmul.f32 %v2930, %v2910
        %v2959 = vmul.f32 %v2930, %v2911
        %v2960 = vmul.f32 %v2934, %v2912
        %v2961 = vmul.f32 %v2934, %v2913
        %v2962 = vmul.f32 %v2934, %v2914
        %v2963 = vmul.f32 %v2934, %v2915
        %v2964 = vmul.f32 %v2934, %v2916
        %v2965 = vmul.f32 %v2934, %v2917
        %v2966 = vmul.f32 %v2934, %v2918
        %v2967 = vmul.f32 %v2934, %v2919
        %v2968 = vadd.f32 %v2716, %v2936
        %v2969 = vadd.f32 %v2717, %v2937
        %v2970 = vadd.f32 %v2718, %v2938
        %v2971 = vadd.f32 %v2719, %v2939
        %v2972 = vadd.f32 %v2720, %v2940
        %v2973 = vadd.f32 %v2721, %v2941
        %v2974 = vadd.f32 %v2722, %v2942
        %v2975 = vadd.f32 %v2723, %v2943
        %v2976 = vadd.f32 %v2724, %v2944
        %v2977 = vadd.f32 %v2725, %v2945
        %v2978 = vadd.f32 %v2726, %v2946
        %v2979 = vadd.f32 %v2727, %v2947
        %v2980 = vadd.f32 %v2728, %v2948
        %v2981 = vadd.f32 %v2729, %v2949
        %v2982 = vadd.f32 %v2730, %v2950
        %v2983 = vadd.f32 %v2731, %v2951
        %v2984 = vadd.f32 %v2732, %v2952
        %v2985 = vadd.f32 %v2733, %v2953
        %v2986 = vadd.f32 %v2734, %v2954
        %v2987 = vadd.f32 %v2735, %v2955
        %v2988 = vadd.f32 %v2736, %v2956
        %v2989 = vadd.f32 %v2737, %v2957
        %v2990 = vadd.f32 %v2738, %v2958
        %v2991 = vadd.f32 %v2739, %v2959
        %v2992 = vadd.f32 %v2740, %v2960
        %v2993 = vadd.f32 %v2741, %v2961
        %v2994 = vadd.f32 %v2742, %v2962
        %v2995 = vadd.f32 %v2743, %v2963
        %v2996 = vadd.f32 %v2744, %v2964
        %v2997 = vadd.f32 %v2745, %v2965
        %v2998 = vadd.f32 %v2746, %v2966
        %v2999 = vadd.f32 %v2747, %v2967
        %3000 = vrot.lane.b32.xlu0 %v1599, 127
        %v3001 = vpop.permute.xlu0 %3000
        %3002 = vrot.lane.b32.xlu0 %v1605, 127
        %v3003 = vpop.permute.xlu0 %3002
        %3004 = vrot.lane.b32.xlu0 %v1611, 127
        %v3005 = vpop.permute.xlu0 %3004
        %3006 = vrot.lane.b32.xlu0 %v1617, 127
        %v3007 = vpop.permute.xlu0 %3006
        %3008 = vrot.lane.b32.xlu0 %v1601, 127
        %v3009 = vpop.permute.xlu0 %3008
        %3010 = vrot.lane.b32.xlu0 %v1607, 127
        %v3011 = vpop.permute.xlu0 %3010
        %3012 = vrot.lane.b32.xlu0 %v1613, 127
        %v3013 = vpop.permute.xlu0 %3012
        %3014 = vrot.lane.b32.xlu0 %v1619, 127
        %v3015 = vpop.permute.xlu0 %3014
        %3016 = vrot.lane.b32.xlu0 %v1688, 127
        %v3017 = vpop.permute.xlu0 %3016
        %3018 = vrot.lane.b32.xlu0 %v1694, 127
        %v3019 = vpop.permute.xlu0 %3018
        %3020 = vrot.lane.b32.xlu0 %v1700, 127
        %v3021 = vpop.permute.xlu0 %3020
        %3022 = vrot.lane.b32.xlu0 %v1706, 127
        %v3023 = vpop.permute.xlu0 %3022
        %3024 = vrot.lane.b32.xlu0 %v1690, 127
        %v3025 = vpop.permute.xlu0 %3024
        %3026 = vrot.lane.b32.xlu0 %v1696, 127
        %v3027 = vpop.permute.xlu0 %3026
        %3028 = vrot.lane.b32.xlu0 %v1702, 127
        %v3029 = vpop.permute.xlu0 %3028
        %3030 = vrot.lane.b32.xlu0 %v1708, 127
        %v3031 = vpop.permute.xlu0 %3030
        %3032 = vrot.lane.b32.xlu0 %v1777, 127
        %v3033 = vpop.permute.xlu0 %3032
        %3034 = vrot.lane.b32.xlu0 %v1783, 127
        %v3035 = vpop.permute.xlu0 %3034
        %3036 = vrot.lane.b32.xlu0 %v1789, 127
        %v3037 = vpop.permute.xlu0 %3036
        %3038 = vrot.lane.b32.xlu0 %v1795, 127
        %v3039 = vpop.permute.xlu0 %3038
        %3040 = vrot.lane.b32.xlu0 %v1779, 127
        %v3041 = vpop.permute.xlu0 %3040
        %3042 = vrot.lane.b32.xlu0 %v1785, 127
        %v3043 = vpop.permute.xlu0 %3042
        %3044 = vrot.lane.b32.xlu0 %v1791, 127
        %v3045 = vpop.permute.xlu0 %3044
        %3046 = vrot.lane.b32.xlu0 %v1797, 127
        %v3047 = vpop.permute.xlu0 %3046
        %3048 = vrot.lane.b32.xlu0 %v1866, 127
        %v3049 = vpop.permute.xlu0 %3048
        %3050 = vrot.lane.b32.xlu0 %v1872, 127
        %v3051 = vpop.permute.xlu0 %3050
        %3052 = vrot.lane.b32.xlu0 %v1878, 127
        %v3053 = vpop.permute.xlu0 %3052
        %3054 = vrot.lane.b32.xlu0 %v1884, 127
        %v3055 = vpop.permute.xlu0 %3054
        %3056 = vrot.lane.b32.xlu0 %v1868, 127
        %v3057 = vpop.permute.xlu0 %3056
        %3058 = vrot.lane.b32.xlu0 %v1874, 127
        %v3059 = vpop.permute.xlu0 %3058
        %3060 = vrot.lane.b32.xlu0 %v1880, 127
        %v3061 = vpop.permute.xlu0 %3060
        %3062 = vrot.lane.b32.xlu0 %v1886, 127
        %v3063 = vpop.permute.xlu0 %3062
        %v3064 = vsel %vm549, %v3049, %v3057
        %v3065 = vsel %vm549, %v3051, %v3059
        %v3066 = vsel %vm549, %v3053, %v3061
        %v3067 = vsel %vm549, %v3055, %v3063
        %v3068 = vsel %vm549, %v3041, %v3049
        %v3069 = vsel %vm549, %v3043, %v3051
        %v3070 = vsel %vm549, %v3045, %v3053
        %v3071 = vsel %vm549, %v3047, %v3055
        %v3072 = vsel %vm549, %v3033, %v3041
        %v3073 = vsel %vm549, %v3035, %v3043
        %v3074 = vsel %vm549, %v3037, %v3045
        %v3075 = vsel %vm549, %v3039, %v3047
        %v3076 = vsel %vm549, %v3025, %v3033
        %v3077 = vsel %vm549, %v3027, %v3035
        %v3078 = vsel %vm549, %v3029, %v3037
        %v3079 = vsel %vm549, %v3031, %v3039
        %v3080 = vsel %vm549, %v3017, %v3025
        %v3081 = vsel %vm549, %v3019, %v3027
        %v3082 = vsel %vm549, %v3021, %v3029
        %v3083 = vsel %vm549, %v3023, %v3031
        %v3084 = vsel %vm549, %v3009, %v3017
        %v3085 = vsel %vm549, %v3011, %v3019
        %v3086 = vsel %vm549, %v3013, %v3021
        %v3087 = vsel %vm549, %v3015, %v3023
        %v3088 = vsel %vm549, %v3001, %v3009
        %v3089 = vsel %vm549, %v3003, %v3011
        %v3090 = vsel %vm549, %v3005, %v3013
        %v3091 = vsel %vm549, %v3007, %v3015
        %v3092 = vsel %vm549, %v3057, %v3001
        %v3093 = vsel %vm549, %v3059, %v3003
        %v3094 = vsel %vm549, %v3061, %v3005
        %v3095 = vsel %vm549, %v3063, %v3007
        %v3096 = vld [vmem:[%s558] ss:$8 sm:$0xf]
        %v3097 = vld [vmem:[%s558] ss:$8 sm:$0xf0]
        %v3098 = vor.u32 %v3096, %v3097
        %v3100 = vlaneseq
        %v3101 = vshrl.u32 %v3100, 7
        %v3102 = vsub.s32 0, %v3101
        %v3103 = vrot.slane %v3098, %v3102
        %v3104 = vlaneseq
        %v3105 = vshrl.u32 %v3104, 7
        %v3106 = vsub.s32 1, %v3105
        %v3107 = vrot.slane %v3098, %v3106
        %v3108 = vlaneseq
        %v3109 = vshrl.u32 %v3108, 7
        %v3110 = vsub.s32 2, %v3109
        %v3111 = vrot.slane %v3098, %v3110
        %v3112 = vlaneseq
        %v3113 = vshrl.u32 %v3112, 7
        %v3114 = vsub.s32 3, %v3113
        %v3115 = vrot.slane %v3098, %v3114
        %v3116 = vlaneseq
        %v3117 = vshrl.u32 %v3116, 7
        %v3118 = vsub.s32 4, %v3117
        %v3119 = vrot.slane %v3098, %v3118
        %v3120 = vlaneseq
        %v3121 = vshrl.u32 %v3120, 7
        %v3122 = vsub.s32 5, %v3121
        %v3123 = vrot.slane %v3098, %v3122
        %v3124 = vlaneseq
        %v3125 = vshrl.u32 %v3124, 7
        %v3126 = vsub.s32 6, %v3125
        %v3127 = vrot.slane %v3098, %v3126
        %v3128 = vlaneseq
        %v3129 = vshrl.u32 %v3128, 7
        %v3130 = vsub.s32 7, %v3129
        %v3131 = vrot.slane %v3098, %v3130
        %v3140 = vmul.f32 %v3088, %v3103
        %v3141 = vmul.f32 %v3084, %v3107
        %v3142 = vmul.f32 %v3080, %v3111
        %v3143 = vmul.f32 %v3076, %v3115
        %v3144 = vmul.f32 %v3072, %v3119
        %v3145 = vmul.f32 %v3068, %v3123
        %v3146 = vmul.f32 %v3064, %v3127
        %v3147 = vmul.f32 %v3092, %v3131
        %v3148 = vmul.f32 %v3089, %v3103
        %v3149 = vmul.f32 %v3085, %v3107
        %v3150 = vmul.f32 %v3081, %v3111
        %v3151 = vmul.f32 %v3077, %v3115
        %v3152 = vmul.f32 %v3073, %v3119
        %v3153 = vmul.f32 %v3069, %v3123
        %v3154 = vmul.f32 %v3065, %v3127
        %v3155 = vmul.f32 %v3093, %v3131
        %v3156 = vmul.f32 %v3090, %v3103
        %v3157 = vmul.f32 %v3086, %v3107
        %v3158 = vmul.f32 %v3082, %v3111
        %v3159 = vmul.f32 %v3078, %v3115
        %v3160 = vmul.f32 %v3074, %v3119
        %v3161 = vmul.f32 %v3070, %v3123
        %v3162 = vmul.f32 %v3066, %v3127
        %v3163 = vmul.f32 %v3094, %v3131
        %v3164 = vmul.f32 %v3091, %v3103
        %v3165 = vmul.f32 %v3087, %v3107
        %v3166 = vmul.f32 %v3083, %v3111
        %v3167 = vmul.f32 %v3079, %v3115
        %v3168 = vmul.f32 %v3075, %v3119
        %v3169 = vmul.f32 %v3071, %v3123
        %v3170 = vmul.f32 %v3067, %v3127
        %v3171 = vmul.f32 %v3095, %v3131
        %3172 = vset.pattern.permute.xlu0 5
        %3173 = vperm.xlu0 %3172, %v1888
        %v3174 = vpop.permute.xlu0 %3173
        %3176 = vset.pattern.permute.xlu0 5
        %3177 = vperm.xlu0 %3176, %v1889
        %v3178 = vpop.permute.xlu0 %3177
        %3180 = vset.pattern.permute.xlu0 5
        %3181 = vperm.xlu0 %3180, %v1890
        %v3182 = vpop.permute.xlu0 %3181
        %3184 = vset.pattern.permute.xlu0 5
        %3185 = vperm.xlu0 %3184, %v1891
        %v3186 = vpop.permute.xlu0 %3185
        %v3188 = vmul.f32 %v3174, %v3140
        %v3189 = vmul.f32 %v3174, %v3141
        %v3190 = vmul.f32 %v3174, %v3142
        %v3191 = vmul.f32 %v3174, %v3143
        %v3192 = vmul.f32 %v3174, %v3144
        %v3193 = vmul.f32 %v3174, %v3145
        %v3194 = vmul.f32 %v3174, %v3146
        %v3195 = vmul.f32 %v3174, %v3147
        %v3196 = vmul.f32 %v3178, %v3148
        %v3197 = vmul.f32 %v3178, %v3149
        %v3198 = vmul.f32 %v3178, %v3150
        %v3199 = vmul.f32 %v3178, %v3151
        %v3200 = vmul.f32 %v3178, %v3152
        %v3201 = vmul.f32 %v3178, %v3153
        %v3202 = vmul.f32 %v3178, %v3154
        %v3203 = vmul.f32 %v3178, %v3155
        %v3204 = vmul.f32 %v3182, %v3156
        %v3205 = vmul.f32 %v3182, %v3157
        %v3206 = vmul.f32 %v3182, %v3158
        %v3207 = vmul.f32 %v3182, %v3159
        %v3208 = vmul.f32 %v3182, %v3160
        %v3209 = vmul.f32 %v3182, %v3161
        %v3210 = vmul.f32 %v3182, %v3162
        %v3211 = vmul.f32 %v3182, %v3163
        %v3212 = vmul.f32 %v3186, %v3164
        %v3213 = vmul.f32 %v3186, %v3165
        %v3214 = vmul.f32 %v3186, %v3166
        %v3215 = vmul.f32 %v3186, %v3167
        %v3216 = vmul.f32 %v3186, %v3168
        %v3217 = vmul.f32 %v3186, %v3169
        %v3218 = vmul.f32 %v3186, %v3170
        %v3219 = vmul.f32 %v3186, %v3171
        %v3220 = vadd.f32 %v2968, %v3188
        %v3221 = vadd.f32 %v2969, %v3189
        %v3222 = vadd.f32 %v2970, %v3190
        %v3223 = vadd.f32 %v2971, %v3191
        %v3224 = vadd.f32 %v2972, %v3192
        %v3225 = vadd.f32 %v2973, %v3193
        %v3226 = vadd.f32 %v2974, %v3194
        %v3227 = vadd.f32 %v2975, %v3195
        %v3228 = vadd.f32 %v2976, %v3196
        %v3229 = vadd.f32 %v2977, %v3197
        %v3230 = vadd.f32 %v2978, %v3198
        %v3231 = vadd.f32 %v2979, %v3199
        %v3232 = vadd.f32 %v2980, %v3200
        %v3233 = vadd.f32 %v2981, %v3201
        %v3234 = vadd.f32 %v2982, %v3202
        %v3235 = vadd.f32 %v2983, %v3203
        %v3236 = vadd.f32 %v2984, %v3204
        %v3237 = vadd.f32 %v2985, %v3205
        %v3238 = vadd.f32 %v2986, %v3206
        %v3239 = vadd.f32 %v2987, %v3207
        %v3240 = vadd.f32 %v2988, %v3208
        %v3241 = vadd.f32 %v2989, %v3209
        %v3242 = vadd.f32 %v2990, %v3210
        %v3243 = vadd.f32 %v2991, %v3211
        %v3244 = vadd.f32 %v2992, %v3212
        %v3245 = vadd.f32 %v2993, %v3213
        %v3246 = vadd.f32 %v2994, %v3214
        %v3247 = vadd.f32 %v2995, %v3215
        %v3248 = vadd.f32 %v2996, %v3216
        %v3249 = vadd.f32 %v2997, %v3217
        %v3250 = vadd.f32 %v2998, %v3218
        %v3251 = vadd.f32 %v2999, %v3219
        %3252 = vrot.lane.b32.xlu0 %v1599, 113
        %v3253 = vpop.permute.xlu0 %3252
        %3254 = vrot.lane.b32.xlu0 %v1605, 113
        %v3255 = vpop.permute.xlu0 %3254
        %3256 = vrot.lane.b32.xlu0 %v1611, 113
        %v3257 = vpop.permute.xlu0 %3256
        %3258 = vrot.lane.b32.xlu0 %v1617, 113
        %v3259 = vpop.permute.xlu0 %3258
        %3260 = vrot.lane.b32.xlu0 %v1601, 113
        %v3261 = vpop.permute.xlu0 %3260
        %3262 = vrot.lane.b32.xlu0 %v1607, 113
        %v3263 = vpop.permute.xlu0 %3262
        %3264 = vrot.lane.b32.xlu0 %v1613, 113
        %v3265 = vpop.permute.xlu0 %3264
        %3266 = vrot.lane.b32.xlu0 %v1619, 113
        %v3267 = vpop.permute.xlu0 %3266
        %3268 = vrot.lane.b32.xlu0 %v1688, 113
        %v3269 = vpop.permute.xlu0 %3268
        %3270 = vrot.lane.b32.xlu0 %v1694, 113
        %v3271 = vpop.permute.xlu0 %3270
        %3272 = vrot.lane.b32.xlu0 %v1700, 113
        %v3273 = vpop.permute.xlu0 %3272
        %3274 = vrot.lane.b32.xlu0 %v1706, 113
        %v3275 = vpop.permute.xlu0 %3274
        %3276 = vrot.lane.b32.xlu0 %v1690, 113
        %v3277 = vpop.permute.xlu0 %3276
        %3278 = vrot.lane.b32.xlu0 %v1696, 113
        %v3279 = vpop.permute.xlu0 %3278
        %3280 = vrot.lane.b32.xlu0 %v1702, 113
        %v3281 = vpop.permute.xlu0 %3280
        %3282 = vrot.lane.b32.xlu0 %v1708, 113
        %v3283 = vpop.permute.xlu0 %3282
        %3284 = vrot.lane.b32.xlu0 %v1777, 113
        %v3285 = vpop.permute.xlu0 %3284
        %3286 = vrot.lane.b32.xlu0 %v1783, 113
        %v3287 = vpop.permute.xlu0 %3286
        %3288 = vrot.lane.b32.xlu0 %v1789, 113
        %v3289 = vpop.permute.xlu0 %3288
        %3290 = vrot.lane.b32.xlu0 %v1795, 113
        %v3291 = vpop.permute.xlu0 %3290
        %3292 = vrot.lane.b32.xlu0 %v1779, 113
        %v3293 = vpop.permute.xlu0 %3292
        %3294 = vrot.lane.b32.xlu0 %v1785, 113
        %v3295 = vpop.permute.xlu0 %3294
        %3296 = vrot.lane.b32.xlu0 %v1791, 113
        %v3297 = vpop.permute.xlu0 %3296
        %3298 = vrot.lane.b32.xlu0 %v1797, 113
        %v3299 = vpop.permute.xlu0 %3298
        %3300 = vrot.lane.b32.xlu0 %v1866, 113
        %v3301 = vpop.permute.xlu0 %3300
        %3302 = vrot.lane.b32.xlu0 %v1872, 113
        %v3303 = vpop.permute.xlu0 %3302
        %3304 = vrot.lane.b32.xlu0 %v1878, 113
        %v3305 = vpop.permute.xlu0 %3304
        %3306 = vrot.lane.b32.xlu0 %v1884, 113
        %v3307 = vpop.permute.xlu0 %3306
        %3308 = vrot.lane.b32.xlu0 %v1868, 113
        %v3309 = vpop.permute.xlu0 %3308
        %3310 = vrot.lane.b32.xlu0 %v1874, 113
        %v3311 = vpop.permute.xlu0 %3310
        %3312 = vrot.lane.b32.xlu0 %v1880, 113
        %v3313 = vpop.permute.xlu0 %3312
        %3314 = vrot.lane.b32.xlu0 %v1886, 113
        %v3315 = vpop.permute.xlu0 %3314
        %v3316 = vsel %vm635, %v3301, %v3309
        %v3317 = vsel %vm635, %v3303, %v3311
        %v3318 = vsel %vm635, %v3305, %v3313
        %v3319 = vsel %vm635, %v3307, %v3315
        %v3320 = vsel %vm635, %v3293, %v3301
        %v3321 = vsel %vm635, %v3295, %v3303
        %v3322 = vsel %vm635, %v3297, %v3305
        %v3323 = vsel %vm635, %v3299, %v3307
        %v3324 = vsel %vm635, %v3285, %v3293
        %v3325 = vsel %vm635, %v3287, %v3295
        %v3326 = vsel %vm635, %v3289, %v3297
        %v3327 = vsel %vm635, %v3291, %v3299
        %v3328 = vsel %vm635, %v3277, %v3285
        %v3329 = vsel %vm635, %v3279, %v3287
        %v3330 = vsel %vm635, %v3281, %v3289
        %v3331 = vsel %vm635, %v3283, %v3291
        %v3332 = vsel %vm635, %v3269, %v3277
        %v3333 = vsel %vm635, %v3271, %v3279
        %v3334 = vsel %vm635, %v3273, %v3281
        %v3335 = vsel %vm635, %v3275, %v3283
        %v3336 = vsel %vm635, %v3261, %v3269
        %v3337 = vsel %vm635, %v3263, %v3271
        %v3338 = vsel %vm635, %v3265, %v3273
        %v3339 = vsel %vm635, %v3267, %v3275
        %v3340 = vsel %vm635, %v3253, %v3261
        %v3341 = vsel %vm635, %v3255, %v3263
        %v3342 = vsel %vm635, %v3257, %v3265
        %v3343 = vsel %vm635, %v3259, %v3267
        %v3344 = vsel %vm635, %v3309, %v3253
        %v3345 = vsel %vm635, %v3311, %v3255
        %v3346 = vsel %vm635, %v3313, %v3257
        %v3347 = vsel %vm635, %v3315, %v3259
        %v3348 = vld [vmem:[%s644] ss:$8 sm:$0xf]
        %v3349 = vld [vmem:[%s644] ss:$8 sm:$0xf0]
        %v3350 = vor.u32 %v3348, %v3349
        %v3352 = vlaneseq
        %v3353 = vshrl.u32 %v3352, 7
        %v3354 = vsub.s32 0, %v3353
        %v3355 = vrot.slane %v3350, %v3354
        %v3356 = vlaneseq
        %v3357 = vshrl.u32 %v3356, 7
        %v3358 = vsub.s32 1, %v3357
        %v3359 = vrot.slane %v3350, %v3358
        %v3360 = vlaneseq
        %v3361 = vshrl.u32 %v3360, 7
        %v3362 = vsub.s32 2, %v3361
        %v3363 = vrot.slane %v3350, %v3362
        %v3364 = vlaneseq
        %v3365 = vshrl.u32 %v3364, 7
        %v3366 = vsub.s32 3, %v3365
        %v3367 = vrot.slane %v3350, %v3366
        %v3368 = vlaneseq
        %v3369 = vshrl.u32 %v3368, 7
        %v3370 = vsub.s32 4, %v3369
        %v3371 = vrot.slane %v3350, %v3370
        %v3372 = vlaneseq
        %v3373 = vshrl.u32 %v3372, 7
        %v3374 = vsub.s32 5, %v3373
        %v3375 = vrot.slane %v3350, %v3374
        %v3376 = vlaneseq
        %v3377 = vshrl.u32 %v3376, 7
        %v3378 = vsub.s32 6, %v3377
        %v3379 = vrot.slane %v3350, %v3378
        %v3380 = vlaneseq
        %v3381 = vshrl.u32 %v3380, 7
        %v3382 = vsub.s32 7, %v3381
        %v3383 = vrot.slane %v3350, %v3382
        %v3392 = vmul.f32 %v3340, %v3355
        %v3393 = vmul.f32 %v3336, %v3359
        %v3394 = vmul.f32 %v3332, %v3363
        %v3395 = vmul.f32 %v3328, %v3367
        %v3396 = vmul.f32 %v3324, %v3371
        %v3397 = vmul.f32 %v3320, %v3375
        %v3398 = vmul.f32 %v3316, %v3379
        %v3399 = vmul.f32 %v3344, %v3383
        %v3400 = vmul.f32 %v3341, %v3355
        %v3401 = vmul.f32 %v3337, %v3359
        %v3402 = vmul.f32 %v3333, %v3363
        %v3403 = vmul.f32 %v3329, %v3367
        %v3404 = vmul.f32 %v3325, %v3371
        %v3405 = vmul.f32 %v3321, %v3375
        %v3406 = vmul.f32 %v3317, %v3379
        %v3407 = vmul.f32 %v3345, %v3383
        %v3408 = vmul.f32 %v3342, %v3355
        %v3409 = vmul.f32 %v3338, %v3359
        %v3410 = vmul.f32 %v3334, %v3363
        %v3411 = vmul.f32 %v3330, %v3367
        %v3412 = vmul.f32 %v3326, %v3371
        %v3413 = vmul.f32 %v3322, %v3375
        %v3414 = vmul.f32 %v3318, %v3379
        %v3415 = vmul.f32 %v3346, %v3383
        %v3416 = vmul.f32 %v3343, %v3355
        %v3417 = vmul.f32 %v3339, %v3359
        %v3418 = vmul.f32 %v3335, %v3363
        %v3419 = vmul.f32 %v3331, %v3367
        %v3420 = vmul.f32 %v3327, %v3371
        %v3421 = vmul.f32 %v3323, %v3375
        %v3422 = vmul.f32 %v3319, %v3379
        %v3423 = vmul.f32 %v3347, %v3383
        %3424 = vset.pattern.permute.xlu0 6
        %3425 = vperm.xlu0 %3424, %v1888
        %v3426 = vpop.permute.xlu0 %3425
        %3428 = vset.pattern.permute.xlu0 6
        %3429 = vperm.xlu0 %3428, %v1889
        %v3430 = vpop.permute.xlu0 %3429
        %3432 = vset.pattern.permute.xlu0 6
        %3433 = vperm.xlu0 %3432, %v1890
        %v3434 = vpop.permute.xlu0 %3433
        %3436 = vset.pattern.permute.xlu0 6
        %3437 = vperm.xlu0 %3436, %v1891
        %v3438 = vpop.permute.xlu0 %3437
        %v3440 = vmul.f32 %v3426, %v3392
        %v3441 = vmul.f32 %v3426, %v3393
        %v3442 = vmul.f32 %v3426, %v3394
        %v3443 = vmul.f32 %v3426, %v3395
        %v3444 = vmul.f32 %v3426, %v3396
        %v3445 = vmul.f32 %v3426, %v3397
        %v3446 = vmul.f32 %v3426, %v3398
        %v3447 = vmul.f32 %v3426, %v3399
        %v3448 = vmul.f32 %v3430, %v3400
        %v3449 = vmul.f32 %v3430, %v3401
        %v3450 = vmul.f32 %v3430, %v3402
        %v3451 = vmul.f32 %v3430, %v3403
        %v3452 = vmul.f32 %v3430, %v3404
        %v3453 = vmul.f32 %v3430, %v3405
        %v3454 = vmul.f32 %v3430, %v3406
        %v3455 = vmul.f32 %v3430, %v3407
        %v3456 = vmul.f32 %v3434, %v3408
        %v3457 = vmul.f32 %v3434, %v3409
        %v3458 = vmul.f32 %v3434, %v3410
        %v3459 = vmul.f32 %v3434, %v3411
        %v3460 = vmul.f32 %v3434, %v3412
        %v3461 = vmul.f32 %v3434, %v3413
        %v3462 = vmul.f32 %v3434, %v3414
        %v3463 = vmul.f32 %v3434, %v3415
        %v3464 = vmul.f32 %v3438, %v3416
        %v3465 = vmul.f32 %v3438, %v3417
        %v3466 = vmul.f32 %v3438, %v3418
        %v3467 = vmul.f32 %v3438, %v3419
        %v3468 = vmul.f32 %v3438, %v3420
        %v3469 = vmul.f32 %v3438, %v3421
        %v3470 = vmul.f32 %v3438, %v3422
        %v3471 = vmul.f32 %v3438, %v3423
        %v3472 = vadd.f32 %v3220, %v3440
        %v3473 = vadd.f32 %v3221, %v3441
        %v3474 = vadd.f32 %v3222, %v3442
        %v3475 = vadd.f32 %v3223, %v3443
        %v3476 = vadd.f32 %v3224, %v3444
        %v3477 = vadd.f32 %v3225, %v3445
        %v3478 = vadd.f32 %v3226, %v3446
        %v3479 = vadd.f32 %v3227, %v3447
        %v3480 = vadd.f32 %v3228, %v3448
        %v3481 = vadd.f32 %v3229, %v3449
        %v3482 = vadd.f32 %v3230, %v3450
        %v3483 = vadd.f32 %v3231, %v3451
        %v3484 = vadd.f32 %v3232, %v3452
        %v3485 = vadd.f32 %v3233, %v3453
        %v3486 = vadd.f32 %v3234, %v3454
        %v3487 = vadd.f32 %v3235, %v3455
        %v3488 = vadd.f32 %v3236, %v3456
        %v3489 = vadd.f32 %v3237, %v3457
        %v3490 = vadd.f32 %v3238, %v3458
        %v3491 = vadd.f32 %v3239, %v3459
        %v3492 = vadd.f32 %v3240, %v3460
        %v3493 = vadd.f32 %v3241, %v3461
        %v3494 = vadd.f32 %v3242, %v3462
        %v3495 = vadd.f32 %v3243, %v3463
        %v3496 = vadd.f32 %v3244, %v3464
        %v3497 = vadd.f32 %v3245, %v3465
        %v3498 = vadd.f32 %v3246, %v3466
        %v3499 = vadd.f32 %v3247, %v3467
        %v3500 = vadd.f32 %v3248, %v3468
        %v3501 = vadd.f32 %v3249, %v3469
        %v3502 = vadd.f32 %v3250, %v3470
        %v3503 = vadd.f32 %v3251, %v3471
        %3504 = vrot.lane.b32.xlu0 %v1599, 112
        %v3505 = vpop.permute.xlu0 %3504
        %3506 = vrot.lane.b32.xlu0 %v1605, 112
        %v3507 = vpop.permute.xlu0 %3506
        %3508 = vrot.lane.b32.xlu0 %v1611, 112
        %v3509 = vpop.permute.xlu0 %3508
        %3510 = vrot.lane.b32.xlu0 %v1617, 112
        %v3511 = vpop.permute.xlu0 %3510
        %3512 = vrot.lane.b32.xlu0 %v1601, 112
        %v3513 = vpop.permute.xlu0 %3512
        %3514 = vrot.lane.b32.xlu0 %v1607, 112
        %v3515 = vpop.permute.xlu0 %3514
        %3516 = vrot.lane.b32.xlu0 %v1613, 112
        %v3517 = vpop.permute.xlu0 %3516
        %3518 = vrot.lane.b32.xlu0 %v1619, 112
        %v3519 = vpop.permute.xlu0 %3518
        %3520 = vrot.lane.b32.xlu0 %v1688, 112
        %v3521 = vpop.permute.xlu0 %3520
        %3522 = vrot.lane.b32.xlu0 %v1694, 112
        %v3523 = vpop.permute.xlu0 %3522
        %3524 = vrot.lane.b32.xlu0 %v1700, 112
        %v3525 = vpop.permute.xlu0 %3524
        %3526 = vrot.lane.b32.xlu0 %v1706, 112
        %v3527 = vpop.permute.xlu0 %3526
        %3528 = vrot.lane.b32.xlu0 %v1690, 112
        %v3529 = vpop.permute.xlu0 %3528
        %3530 = vrot.lane.b32.xlu0 %v1696, 112
        %v3531 = vpop.permute.xlu0 %3530
        %3532 = vrot.lane.b32.xlu0 %v1702, 112
        %v3533 = vpop.permute.xlu0 %3532
        %3534 = vrot.lane.b32.xlu0 %v1708, 112
        %v3535 = vpop.permute.xlu0 %3534
        %3536 = vrot.lane.b32.xlu0 %v1777, 112
        %v3537 = vpop.permute.xlu0 %3536
        %3538 = vrot.lane.b32.xlu0 %v1783, 112
        %v3539 = vpop.permute.xlu0 %3538
        %3540 = vrot.lane.b32.xlu0 %v1789, 112
        %v3541 = vpop.permute.xlu0 %3540
        %3542 = vrot.lane.b32.xlu0 %v1795, 112
        %v3543 = vpop.permute.xlu0 %3542
        %3544 = vrot.lane.b32.xlu0 %v1779, 112
        %v3545 = vpop.permute.xlu0 %3544
        %3546 = vrot.lane.b32.xlu0 %v1785, 112
        %v3547 = vpop.permute.xlu0 %3546
        %3548 = vrot.lane.b32.xlu0 %v1791, 112
        %v3549 = vpop.permute.xlu0 %3548
        %3550 = vrot.lane.b32.xlu0 %v1797, 112
        %v3551 = vpop.permute.xlu0 %3550
        %3552 = vrot.lane.b32.xlu0 %v1866, 112
        %v3553 = vpop.permute.xlu0 %3552
        %3554 = vrot.lane.b32.xlu0 %v1872, 112
        %v3555 = vpop.permute.xlu0 %3554
        %3556 = vrot.lane.b32.xlu0 %v1878, 112
        %v3557 = vpop.permute.xlu0 %3556
        %3558 = vrot.lane.b32.xlu0 %v1884, 112
        %v3559 = vpop.permute.xlu0 %3558
        %3560 = vrot.lane.b32.xlu0 %v1868, 112
        %v3561 = vpop.permute.xlu0 %3560
        %3562 = vrot.lane.b32.xlu0 %v1874, 112
        %v3563 = vpop.permute.xlu0 %3562
        %3564 = vrot.lane.b32.xlu0 %v1880, 112
        %v3565 = vpop.permute.xlu0 %3564
        %3566 = vrot.lane.b32.xlu0 %v1886, 112
        %v3567 = vpop.permute.xlu0 %3566
        %v3568 = vsel %vm721, %v3553, %v3561
        %v3569 = vsel %vm721, %v3555, %v3563
        %v3570 = vsel %vm721, %v3557, %v3565
        %v3571 = vsel %vm721, %v3559, %v3567
        %v3572 = vsel %vm721, %v3545, %v3553
        %v3573 = vsel %vm721, %v3547, %v3555
        %v3574 = vsel %vm721, %v3549, %v3557
        %v3575 = vsel %vm721, %v3551, %v3559
        %v3576 = vsel %vm721, %v3537, %v3545
        %v3577 = vsel %vm721, %v3539, %v3547
        %v3578 = vsel %vm721, %v3541, %v3549
        %v3579 = vsel %vm721, %v3543, %v3551
        %v3580 = vsel %vm721, %v3529, %v3537
        %v3581 = vsel %vm721, %v3531, %v3539
        %v3582 = vsel %vm721, %v3533, %v3541
        %v3583 = vsel %vm721, %v3535, %v3543
        %v3584 = vsel %vm721, %v3521, %v3529
        %v3585 = vsel %vm721, %v3523, %v3531
        %v3586 = vsel %vm721, %v3525, %v3533
        %v3587 = vsel %vm721, %v3527, %v3535
        %v3588 = vsel %vm721, %v3513, %v3521
        %v3589 = vsel %vm721, %v3515, %v3523
        %v3590 = vsel %vm721, %v3517, %v3525
        %v3591 = vsel %vm721, %v3519, %v3527
        %v3592 = vsel %vm721, %v3505, %v3513
        %v3593 = vsel %vm721, %v3507, %v3515
        %v3594 = vsel %vm721, %v3509, %v3517
        %v3595 = vsel %vm721, %v3511, %v3519
        %v3596 = vsel %vm721, %v3561, %v3505
        %v3597 = vsel %vm721, %v3563, %v3507
        %v3598 = vsel %vm721, %v3565, %v3509
        %v3599 = vsel %vm721, %v3567, %v3511
        %v3600 = vld [vmem:[%s730] ss:$8 sm:$0xf]
        %v3601 = vld [vmem:[%s730] ss:$8 sm:$0xf0]
        %v3602 = vor.u32 %v3600, %v3601
        %v3604 = vlaneseq
        %v3605 = vshrl.u32 %v3604, 7
        %v3606 = vsub.s32 0, %v3605
        %v3607 = vrot.slane %v3602, %v3606
        %v3608 = vlaneseq
        %v3609 = vshrl.u32 %v3608, 7
        %v3610 = vsub.s32 1, %v3609
        %v3611 = vrot.slane %v3602, %v3610
        %v3612 = vlaneseq
        %v3613 = vshrl.u32 %v3612, 7
        %v3614 = vsub.s32 2, %v3613
        %v3615 = vrot.slane %v3602, %v3614
        %v3616 = vlaneseq
        %v3617 = vshrl.u32 %v3616, 7
        %v3618 = vsub.s32 3, %v3617
        %v3619 = vrot.slane %v3602, %v3618
        %v3620 = vlaneseq
        %v3621 = vshrl.u32 %v3620, 7
        %v3622 = vsub.s32 4, %v3621
        %v3623 = vrot.slane %v3602, %v3622
        %v3624 = vlaneseq
        %v3625 = vshrl.u32 %v3624, 7
        %v3626 = vsub.s32 5, %v3625
        %v3627 = vrot.slane %v3602, %v3626
        %v3628 = vlaneseq
        %v3629 = vshrl.u32 %v3628, 7
        %v3630 = vsub.s32 6, %v3629
        %v3631 = vrot.slane %v3602, %v3630
        %v3632 = vlaneseq
        %v3633 = vshrl.u32 %v3632, 7
        %v3634 = vsub.s32 7, %v3633
        %v3635 = vrot.slane %v3602, %v3634
        %v3644 = vmul.f32 %v3592, %v3607
        %v3645 = vmul.f32 %v3588, %v3611
        %v3646 = vmul.f32 %v3584, %v3615
        %v3647 = vmul.f32 %v3580, %v3619
        %v3648 = vmul.f32 %v3576, %v3623
        %v3649 = vmul.f32 %v3572, %v3627
        %v3650 = vmul.f32 %v3568, %v3631
        %v3651 = vmul.f32 %v3596, %v3635
        %v3652 = vmul.f32 %v3593, %v3607
        %v3653 = vmul.f32 %v3589, %v3611
        %v3654 = vmul.f32 %v3585, %v3615
        %v3655 = vmul.f32 %v3581, %v3619
        %v3656 = vmul.f32 %v3577, %v3623
        %v3657 = vmul.f32 %v3573, %v3627
        %v3658 = vmul.f32 %v3569, %v3631
        %v3659 = vmul.f32 %v3597, %v3635
        %v3660 = vmul.f32 %v3594, %v3607
        %v3661 = vmul.f32 %v3590, %v3611
        %v3662 = vmul.f32 %v3586, %v3615
        %v3663 = vmul.f32 %v3582, %v3619
        %v3664 = vmul.f32 %v3578, %v3623
        %v3665 = vmul.f32 %v3574, %v3627
        %v3666 = vmul.f32 %v3570, %v3631
        %v3667 = vmul.f32 %v3598, %v3635
        %v3668 = vmul.f32 %v3595, %v3607
        %v3669 = vmul.f32 %v3591, %v3611
        %v3670 = vmul.f32 %v3587, %v3615
        %v3671 = vmul.f32 %v3583, %v3619
        %v3672 = vmul.f32 %v3579, %v3623
        %v3673 = vmul.f32 %v3575, %v3627
        %v3674 = vmul.f32 %v3571, %v3631
        %v3675 = vmul.f32 %v3599, %v3635
        %3676 = vset.pattern.permute.xlu0 7
        %3677 = vperm.xlu0 %3676, %v1888
        %v3678 = vpop.permute.xlu0 %3677
        %3680 = vset.pattern.permute.xlu0 7
        %3681 = vperm.xlu0 %3680, %v1889
        %v3682 = vpop.permute.xlu0 %3681
        %3684 = vset.pattern.permute.xlu0 7
        %3685 = vperm.xlu0 %3684, %v1890
        %v3686 = vpop.permute.xlu0 %3685
        %3688 = vset.pattern.permute.xlu0 7
        %3689 = vperm.xlu0 %3688, %v1891
        %v3690 = vpop.permute.xlu0 %3689
        %v3692 = vmul.f32 %v3678, %v3644
        %v3693 = vmul.f32 %v3678, %v3645
        %v3694 = vmul.f32 %v3678, %v3646
        %v3695 = vmul.f32 %v3678, %v3647
        %v3696 = vmul.f32 %v3678, %v3648
        %v3697 = vmul.f32 %v3678, %v3649
        %v3698 = vmul.f32 %v3678, %v3650
        %v3699 = vmul.f32 %v3678, %v3651
        %v3700 = vmul.f32 %v3682, %v3652
        %v3701 = vmul.f32 %v3682, %v3653
        %v3702 = vmul.f32 %v3682, %v3654
        %v3703 = vmul.f32 %v3682, %v3655
        %v3704 = vmul.f32 %v3682, %v3656
        %v3705 = vmul.f32 %v3682, %v3657
        %v3706 = vmul.f32 %v3682, %v3658
        %v3707 = vmul.f32 %v3682, %v3659
        %v3708 = vmul.f32 %v3686, %v3660
        %v3709 = vmul.f32 %v3686, %v3661
        %v3710 = vmul.f32 %v3686, %v3662
        %v3711 = vmul.f32 %v3686, %v3663
        %v3712 = vmul.f32 %v3686, %v3664
        %v3713 = vmul.f32 %v3686, %v3665
        %v3714 = vmul.f32 %v3686, %v3666
        %v3715 = vmul.f32 %v3686, %v3667
        %v3716 = vmul.f32 %v3690, %v3668
        %v3717 = vmul.f32 %v3690, %v3669
        %v3718 = vmul.f32 %v3690, %v3670
        %v3719 = vmul.f32 %v3690, %v3671
        %v3720 = vmul.f32 %v3690, %v3672
        %v3721 = vmul.f32 %v3690, %v3673
        %v3722 = vmul.f32 %v3690, %v3674
        %v3723 = vmul.f32 %v3690, %v3675
        %v3724 = vadd.f32 %v3472, %v3692
        %v3725 = vadd.f32 %v3473, %v3693
        %v3726 = vadd.f32 %v3474, %v3694
        %v3727 = vadd.f32 %v3475, %v3695
        %v3728 = vadd.f32 %v3476, %v3696
        %v3729 = vadd.f32 %v3477, %v3697
        %v3730 = vadd.f32 %v3478, %v3698
        %v3731 = vadd.f32 %v3479, %v3699
        %v3732 = vadd.f32 %v3480, %v3700
        %v3733 = vadd.f32 %v3481, %v3701
        %v3734 = vadd.f32 %v3482, %v3702
        %v3735 = vadd.f32 %v3483, %v3703
        %v3736 = vadd.f32 %v3484, %v3704
        %v3737 = vadd.f32 %v3485, %v3705
        %v3738 = vadd.f32 %v3486, %v3706
        %v3739 = vadd.f32 %v3487, %v3707
        %v3740 = vadd.f32 %v3488, %v3708
        %v3741 = vadd.f32 %v3489, %v3709
        %v3742 = vadd.f32 %v3490, %v3710
        %v3743 = vadd.f32 %v3491, %v3711
        %v3744 = vadd.f32 %v3492, %v3712
        %v3745 = vadd.f32 %v3493, %v3713
        %v3746 = vadd.f32 %v3494, %v3714
        %v3747 = vadd.f32 %v3495, %v3715
        %v3748 = vadd.f32 %v3496, %v3716
        %v3749 = vadd.f32 %v3497, %v3717
        %v3750 = vadd.f32 %v3498, %v3718
        %v3751 = vadd.f32 %v3499, %v3719
        %v3752 = vadd.f32 %v3500, %v3720
        %v3753 = vadd.f32 %v3501, %v3721
        %v3754 = vadd.f32 %v3502, %v3722
        %v3755 = vadd.f32 %v3503, %v3723
        %3756 = vrot.lane.b32.xlu0 %v1599, 111
        %v3757 = vpop.permute.xlu0 %3756
        %3758 = vrot.lane.b32.xlu0 %v1605, 111
        %v3759 = vpop.permute.xlu0 %3758
        %3760 = vrot.lane.b32.xlu0 %v1611, 111
        %v3761 = vpop.permute.xlu0 %3760
        %3762 = vrot.lane.b32.xlu0 %v1617, 111
        %v3763 = vpop.permute.xlu0 %3762
        %3764 = vrot.lane.b32.xlu0 %v1601, 111
        %v3765 = vpop.permute.xlu0 %3764
        %3766 = vrot.lane.b32.xlu0 %v1607, 111
        %v3767 = vpop.permute.xlu0 %3766
        %3768 = vrot.lane.b32.xlu0 %v1613, 111
        %v3769 = vpop.permute.xlu0 %3768
        %3770 = vrot.lane.b32.xlu0 %v1619, 111
        %v3771 = vpop.permute.xlu0 %3770
        %3772 = vrot.lane.b32.xlu0 %v1688, 111
        %v3773 = vpop.permute.xlu0 %3772
        %3774 = vrot.lane.b32.xlu0 %v1694, 111
        %v3775 = vpop.permute.xlu0 %3774
        %3776 = vrot.lane.b32.xlu0 %v1700, 111
        %v3777 = vpop.permute.xlu0 %3776
        %3778 = vrot.lane.b32.xlu0 %v1706, 111
        %v3779 = vpop.permute.xlu0 %3778
        %3780 = vrot.lane.b32.xlu0 %v1690, 111
        %v3781 = vpop.permute.xlu0 %3780
        %3782 = vrot.lane.b32.xlu0 %v1696, 111
        %v3783 = vpop.permute.xlu0 %3782
        %3784 = vrot.lane.b32.xlu0 %v1702, 111
        %v3785 = vpop.permute.xlu0 %3784
        %3786 = vrot.lane.b32.xlu0 %v1708, 111
        %v3787 = vpop.permute.xlu0 %3786
        %3788 = vrot.lane.b32.xlu0 %v1777, 111
        %v3789 = vpop.permute.xlu0 %3788
        %3790 = vrot.lane.b32.xlu0 %v1783, 111
        %v3791 = vpop.permute.xlu0 %3790
        %3792 = vrot.lane.b32.xlu0 %v1789, 111
        %v3793 = vpop.permute.xlu0 %3792
        %3794 = vrot.lane.b32.xlu0 %v1795, 111
        %v3795 = vpop.permute.xlu0 %3794
        %3796 = vrot.lane.b32.xlu0 %v1779, 111
        %v3797 = vpop.permute.xlu0 %3796
        %3798 = vrot.lane.b32.xlu0 %v1785, 111
        %v3799 = vpop.permute.xlu0 %3798
        %3800 = vrot.lane.b32.xlu0 %v1791, 111
        %v3801 = vpop.permute.xlu0 %3800
        %3802 = vrot.lane.b32.xlu0 %v1797, 111
        %v3803 = vpop.permute.xlu0 %3802
        %3804 = vrot.lane.b32.xlu0 %v1866, 111
        %v3805 = vpop.permute.xlu0 %3804
        %3806 = vrot.lane.b32.xlu0 %v1872, 111
        %v3807 = vpop.permute.xlu0 %3806
        %3808 = vrot.lane.b32.xlu0 %v1878, 111
        %v3809 = vpop.permute.xlu0 %3808
        %3810 = vrot.lane.b32.xlu0 %v1884, 111
        %v3811 = vpop.permute.xlu0 %3810
        %3812 = vrot.lane.b32.xlu0 %v1868, 111
        %v3813 = vpop.permute.xlu0 %3812
        %3814 = vrot.lane.b32.xlu0 %v1874, 111
        %v3815 = vpop.permute.xlu0 %3814
        %3816 = vrot.lane.b32.xlu0 %v1880, 111
        %v3817 = vpop.permute.xlu0 %3816
        %3818 = vrot.lane.b32.xlu0 %v1886, 111
        %v3819 = vpop.permute.xlu0 %3818
        %v3820 = vsel %vm807, %v3805, %v3813
        %v3821 = vsel %vm807, %v3807, %v3815
        %v3822 = vsel %vm807, %v3809, %v3817
        %v3823 = vsel %vm807, %v3811, %v3819
        %v3824 = vsel %vm807, %v3797, %v3805
        %v3825 = vsel %vm807, %v3799, %v3807
        %v3826 = vsel %vm807, %v3801, %v3809
        %v3827 = vsel %vm807, %v3803, %v3811
        %v3828 = vsel %vm807, %v3789, %v3797
        %v3829 = vsel %vm807, %v3791, %v3799
        %v3830 = vsel %vm807, %v3793, %v3801
        %v3831 = vsel %vm807, %v3795, %v3803
        %v3832 = vsel %vm807, %v3781, %v3789
        %v3833 = vsel %vm807, %v3783, %v3791
        %v3834 = vsel %vm807, %v3785, %v3793
        %v3835 = vsel %vm807, %v3787, %v3795
        %v3836 = vsel %vm807, %v3773, %v3781
        %v3837 = vsel %vm807, %v3775, %v3783
        %v3838 = vsel %vm807, %v3777, %v3785
        %v3839 = vsel %vm807, %v3779, %v3787
        %v3840 = vsel %vm807, %v3765, %v3773
        %v3841 = vsel %vm807, %v3767, %v3775
        %v3842 = vsel %vm807, %v3769, %v3777
        %v3843 = vsel %vm807, %v3771, %v3779
        %v3844 = vsel %vm807, %v3757, %v3765
        %v3845 = vsel %vm807, %v3759, %v3767
        %v3846 = vsel %vm807, %v3761, %v3769
        %v3847 = vsel %vm807, %v3763, %v3771
        %v3848 = vsel %vm807, %v3813, %v3757
        %v3849 = vsel %vm807, %v3815, %v3759
        %v3850 = vsel %vm807, %v3817, %v3761
        %v3851 = vsel %vm807, %v3819, %v3763
        %v3852 = vld [vmem:[%s816] ss:$8 sm:$0xf]
        %v3853 = vld [vmem:[%s816] ss:$8 sm:$0xf0]
        %v3854 = vor.u32 %v3852, %v3853
        %v3856 = vlaneseq
        %v3857 = vshrl.u32 %v3856, 7
        %v3858 = vsub.s32 0, %v3857
        %v3859 = vrot.slane %v3854, %v3858
        %v3860 = vlaneseq
        %v3861 = vshrl.u32 %v3860, 7
        %v3862 = vsub.s32 1, %v3861
        %v3863 = vrot.slane %v3854, %v3862
        %v3864 = vlaneseq
        %v3865 = vshrl.u32 %v3864, 7
        %v3866 = vsub.s32 2, %v3865
        %v3867 = vrot.slane %v3854, %v3866
        %v3868 = vlaneseq
        %v3869 = vshrl.u32 %v3868, 7
        %v3870 = vsub.s32 3, %v3869
        %v3871 = vrot.slane %v3854, %v3870
        %v3872 = vlaneseq
        %v3873 = vshrl.u32 %v3872, 7
        %v3874 = vsub.s32 4, %v3873
        %v3875 = vrot.slane %v3854, %v3874
        %v3876 = vlaneseq
        %v3877 = vshrl.u32 %v3876, 7
        %v3878 = vsub.s32 5, %v3877
        %v3879 = vrot.slane %v3854, %v3878
        %v3880 = vlaneseq
        %v3881 = vshrl.u32 %v3880, 7
        %v3882 = vsub.s32 6, %v3881
        %v3883 = vrot.slane %v3854, %v3882
        %v3884 = vlaneseq
        %v3885 = vshrl.u32 %v3884, 7
        %v3886 = vsub.s32 7, %v3885
        %v3887 = vrot.slane %v3854, %v3886
        %v3896 = vmul.f32 %v3844, %v3859
        %v3897 = vmul.f32 %v3840, %v3863
        %v3898 = vmul.f32 %v3836, %v3867
        %v3899 = vmul.f32 %v3832, %v3871
        %v3900 = vmul.f32 %v3828, %v3875
        %v3901 = vmul.f32 %v3824, %v3879
        %v3902 = vmul.f32 %v3820, %v3883
        %v3903 = vmul.f32 %v3848, %v3887
        %v3904 = vmul.f32 %v3845, %v3859
        %v3905 = vmul.f32 %v3841, %v3863
        %v3906 = vmul.f32 %v3837, %v3867
        %v3907 = vmul.f32 %v3833, %v3871
        %v3908 = vmul.f32 %v3829, %v3875
        %v3909 = vmul.f32 %v3825, %v3879
        %v3910 = vmul.f32 %v3821, %v3883
        %v3911 = vmul.f32 %v3849, %v3887
        %v3912 = vmul.f32 %v3846, %v3859
        %v3913 = vmul.f32 %v3842, %v3863
        %v3914 = vmul.f32 %v3838, %v3867
        %v3915 = vmul.f32 %v3834, %v3871
        %v3916 = vmul.f32 %v3830, %v3875
        %v3917 = vmul.f32 %v3826, %v3879
        %v3918 = vmul.f32 %v3822, %v3883
        %v3919 = vmul.f32 %v3850, %v3887
        %v3920 = vmul.f32 %v3847, %v3859
        %v3921 = vmul.f32 %v3843, %v3863
        %v3922 = vmul.f32 %v3839, %v3867
        %v3923 = vmul.f32 %v3835, %v3871
        %v3924 = vmul.f32 %v3831, %v3875
        %v3925 = vmul.f32 %v3827, %v3879
        %v3926 = vmul.f32 %v3823, %v3883
        %v3927 = vmul.f32 %v3851, %v3887
        %3928 = vset.pattern.permute.xlu0 8
        %3929 = vperm.xlu0 %3928, %v1888
        %v3930 = vpop.permute.xlu0 %3929
        %3932 = vset.pattern.permute.xlu0 8
        %3933 = vperm.xlu0 %3932, %v1889
        %v3934 = vpop.permute.xlu0 %3933
        %3936 = vset.pattern.permute.xlu0 8
        %3937 = vperm.xlu0 %3936, %v1890
        %v3938 = vpop.permute.xlu0 %3937
        %3940 = vset.pattern.permute.xlu0 8
        %3941 = vperm.xlu0 %3940, %v1891
        %v3942 = vpop.permute.xlu0 %3941
        %v3944 = vmul.f32 %v3930, %v3896
        %v3945 = vmul.f32 %v3930, %v3897
        %v3946 = vmul.f32 %v3930, %v3898
        %v3947 = vmul.f32 %v3930, %v3899
        %v3948 = vmul.f32 %v3930, %v3900
        %v3949 = vmul.f32 %v3930, %v3901
        %v3950 = vmul.f32 %v3930, %v3902
        %v3951 = vmul.f32 %v3930, %v3903
        %v3952 = vmul.f32 %v3934, %v3904
        %v3953 = vmul.f32 %v3934, %v3905
        %v3954 = vmul.f32 %v3934, %v3906
        %v3955 = vmul.f32 %v3934, %v3907
        %v3956 = vmul.f32 %v3934, %v3908
        %v3957 = vmul.f32 %v3934, %v3909
        %v3958 = vmul.f32 %v3934, %v3910
        %v3959 = vmul.f32 %v3934, %v3911
        %v3960 = vmul.f32 %v3938, %v3912
        %v3961 = vmul.f32 %v3938, %v3913
        %v3962 = vmul.f32 %v3938, %v3914
        %v3963 = vmul.f32 %v3938, %v3915
        %v3964 = vmul.f32 %v3938, %v3916
        %v3965 = vmul.f32 %v3938, %v3917
        %v3966 = vmul.f32 %v3938, %v3918
        %v3967 = vmul.f32 %v3938, %v3919
        %v3968 = vmul.f32 %v3942, %v3920
        %v3969 = vmul.f32 %v3942, %v3921
        %v3970 = vmul.f32 %v3942, %v3922
        %v3971 = vmul.f32 %v3942, %v3923
        %v3972 = vmul.f32 %v3942, %v3924
        %v3973 = vmul.f32 %v3942, %v3925
        %v3974 = vmul.f32 %v3942, %v3926
        %v3975 = vmul.f32 %v3942, %v3927
        %v3976 = vadd.f32 %v3724, %v3944
        %v3977 = vadd.f32 %v3725, %v3945
        %v3978 = vadd.f32 %v3726, %v3946
        %v3979 = vadd.f32 %v3727, %v3947
        %v3980 = vadd.f32 %v3728, %v3948
        %v3981 = vadd.f32 %v3729, %v3949
        %v3982 = vadd.f32 %v3730, %v3950
        %v3983 = vadd.f32 %v3731, %v3951
        %v3984 = vadd.f32 %v3732, %v3952
        %v3985 = vadd.f32 %v3733, %v3953
        %v3986 = vadd.f32 %v3734, %v3954
        %v3987 = vadd.f32 %v3735, %v3955
        %v3988 = vadd.f32 %v3736, %v3956
        %v3989 = vadd.f32 %v3737, %v3957
        %v3990 = vadd.f32 %v3738, %v3958
        %v3991 = vadd.f32 %v3739, %v3959
        %v3992 = vadd.f32 %v3740, %v3960
        %v3993 = vadd.f32 %v3741, %v3961
        %v3994 = vadd.f32 %v3742, %v3962
        %v3995 = vadd.f32 %v3743, %v3963
        %v3996 = vadd.f32 %v3744, %v3964
        %v3997 = vadd.f32 %v3745, %v3965
        %v3998 = vadd.f32 %v3746, %v3966
        %v3999 = vadd.f32 %v3747, %v3967
        %v4000 = vadd.f32 %v3748, %v3968
        %v4001 = vadd.f32 %v3749, %v3969
        %v4002 = vadd.f32 %v3750, %v3970
        %v4003 = vadd.f32 %v3751, %v3971
        %v4004 = vadd.f32 %v3752, %v3972
        %v4005 = vadd.f32 %v3753, %v3973
        %v4006 = vadd.f32 %v3754, %v3974
        %v4007 = vadd.f32 %v3755, %v3975
        %v4008 = vmul.f32 %v3976, %v3992
        %v4009 = vmul.f32 %v3977, %v3993
        %v4010 = vmul.f32 %v3978, %v3994
        %v4011 = vmul.f32 %v3979, %v3995
        %v4012 = vmul.f32 %v3980, %v3996
        %v4013 = vmul.f32 %v3981, %v3997
        %v4014 = vmul.f32 %v3982, %v3998
        %v4015 = vmul.f32 %v3983, %v3999
        %v4016 = vmul.f32 %v3984, %v4000
        %v4017 = vmul.f32 %v3985, %v4001
        %v4018 = vmul.f32 %v3986, %v4002
        %v4019 = vmul.f32 %v3987, %v4003
        %v4020 = vmul.f32 %v3988, %v4004
        %v4021 = vmul.f32 %v3989, %v4005
        %v4022 = vmul.f32 %v3990, %v4006
        %v4023 = vmul.f32 %v3991, %v4007
        %v4024 = vld [vmem:[%s1 + $0x40] sm:$0x1e]
        %v4025 = vld [vmem:[%s1 + $0x48] sm:$0x1e]
        %v4026 = vld [vmem:[%s1 + $0x50] sm:$0x1e]
        %v4027 = vld [vmem:[%s1 + $0x58] sm:$0x1e]
        %v4028 = vld [vmem:[%s1 + $0x60] sm:$0x1e]
        %v4029 = vld [vmem:[%s1 + $0x68] sm:$0x1e]
        %v4030 = vld [vmem:[%s1 + $0x70] sm:$0x1e]
        %v4031 = vld [vmem:[%s1 + $0x78] sm:$0x1e]
        %v4040 = vrot.slane %v4024, 1
        %v4041 = vrot.slane %v4025, 1
        %v4042 = vrot.slane %v4026, 1
        %v4043 = vrot.slane %v4027, 1
        %v4044 = vrot.slane %v4028, 1
        %v4045 = vrot.slane %v4029, 1
        %v4046 = vrot.slane %v4030, 1
        %v4047 = vrot.slane %v4031, 1
        %4056 = vmatprep.subr.mxu0 %v4041
        %4057 = vmatpush1.xpose.msra.mxu0 %v4040
        %4058 = vmatprep.subr.mxu0 0.0
        %4059 = vmatpush1.xpose.msra.mxu0 0.0
        %4060 = vmatprep.subr.mxu0 0.0
        %4061 = vmatpush1.xpose.msra.mxu0 0.0
        %4062 = vmatprep.subr.mxu0 0.0
        %4063 = vmatpush1.xpose.msra.mxu0 0.0
        %4064 = vmatprep.subr.mxu0 0.0
        %4065 = vmatpush1.xpose.msra.mxu0 0.0
        %4066 = vmatprep.subr.mxu0 0.0
        %4067 = vmatpush1.xpose.msra.mxu0 0.0
        %4068 = vmatprep.subr.mxu0 0.0
        %4069 = vmatpush1.xpose.msra.mxu0 0.0
        %4070 = vmatprep.subr.mxu0 0.0
        %4071 = vmatpush1.xpose.msra.mxu0 0.0
        %4072 = vmatprep.subr.mxu0 0.0
        %4073 = vmatpush1.xpose.msra.mxu0 0.0
        %4074 = vmatprep.subr.mxu0 0.0
        %4075 = vmatpush1.xpose.msra.mxu0 0.0
        %4076 = vmatprep.subr.mxu0 0.0
        %4077 = vmatpush1.xpose.msra.mxu0 0.0
        %4078 = vmatprep.subr.mxu0 0.0
        %4079 = vmatpush1.xpose.msra.mxu0 0.0
        %4080 = vmatprep.subr.mxu0 0.0
        %4081 = vmatpush1.xpose.msra.mxu0 0.0
        %4082 = vmatprep.subr.mxu0 0.0
        %4083 = vmatpush1.xpose.msra.mxu0 0.0
        %4084 = vmatprep.subr.mxu0 0.0
        %4085 = vmatpush1.xpose.msra.mxu0 0.0
        %4086 = vmatprep.subr.mxu0 0.0
        %4087 = vmatpush1.xpose.msra.mxu0 0.0
        %4088 = vmatprep.subr.mxu0 0.0
        %4089 = vmatpush1.xpose.msra.mxu0 0.0
        %4090 = vmatprep.subr.mxu0 0.0
        %4091 = vmatpush1.xpose.msra.mxu0 0.0
        %4092 = vmatprep.subr.mxu0 0.0
        %4093 = vmatpush1.xpose.msra.mxu0 0.0
        %4094 = vmatprep.subr.mxu0 0.0
        %4095 = vmatpush1.xpose.msra.mxu0 0.0
        %4096 = vmatprep.subr.mxu0 0.0
        %4097 = vmatpush1.xpose.msra.mxu0 0.0
        %4098 = vmatprep.subr.mxu0 0.0
        %4099 = vmatpush1.xpose.msra.mxu0 0.0
        %4100 = vmatprep.subr.mxu0 0.0
        %4101 = vmatpush1.xpose.msra.mxu0 0.0
        %4102 = vmatprep.subr.mxu0 0.0
        %4103 = vmatpush1.xpose.msra.mxu0 0.0
        %4104 = vmatprep.subr.mxu0 0.0
        %4105 = vmatpush1.xpose.msra.mxu0 0.0
        %4106 = vmatprep.subr.mxu0 0.0
        %4107 = vmatpush1.xpose.msra.mxu0 0.0
        %4108 = vmatprep.subr.mxu0 0.0
        %4109 = vmatpush1.xpose.msra.mxu0 0.0
        %4110 = vmatprep.subr.mxu0 0.0
        %4111 = vmatpush1.xpose.msra.mxu0 0.0
        %4112 = vmatprep.subr.mxu0 0.0
        %4113 = vmatpush1.xpose.msra.mxu0 0.0
        %4114 = vmatprep.subr.mxu0 0.0
        %4115 = vmatpush1.xpose.msra.mxu0 0.0
        %4116 = vmatprep.subr.mxu0 0.0
        %4117 = vmatpush1.xpose.msra.mxu0 0.0
        %4118 = vmatprep.subr.mxu0 0.0
        %4119 = vmatpush1.xpose.msra.mxu0 0.0
        %4120 = vmatprep.mubr.f32.mxu0 %v4009
        %4121 = vmatmul.mubr.f32.gmra.mrb[0].mxu0 %v4008
        %v4122 = vpop.f32.mrb[0].mxu0
        %v4123 = vadd.f32 0.0, %v4122
        %v4124 = vpop.f32.mrb[0].mxu0
        %4125 = vmatprep.mubr.f32.mxu0 %v4017
        %4126 = vmatmul.mubr.f32.gmra.mrb[0].mxu0 %v4016
        %v4127 = vpop.f32.mrb[0].mxu0
        %v4128 = vadd.f32 0.0, %v4127
        %v4129 = vpop.f32.mrb[0].mxu0
        %4130 = vdwg.mxu0
        %4131 = vmatprep.subr.mxu0 %v4043
        %4132 = vmatpush1.xpose.msra.mxu0 %v4042
        %4133 = vmatprep.subr.mxu0 0.0
        %4134 = vmatpush1.xpose.msra.mxu0 0.0
        %4135 = vmatprep.subr.mxu0 0.0
        %4136 = vmatpush1.xpose.msra.mxu0 0.0
        %4137 = vmatprep.subr.mxu0 0.0
        %4138 = vmatpush1.xpose.msra.mxu0 0.0
        %4139 = vmatprep.subr.mxu0 0.0
        %4140 = vmatpush1.xpose.msra.mxu0 0.0
        %4141 = vmatprep.subr.mxu0 0.0
        %4142 = vmatpush1.xpose.msra.mxu0 0.0
        %4143 = vmatprep.subr.mxu0 0.0
        %4144 = vmatpush1.xpose.msra.mxu0 0.0
        %4145 = vmatprep.subr.mxu0 0.0
        %4146 = vmatpush1.xpose.msra.mxu0 0.0
        %4147 = vmatprep.subr.mxu0 0.0
        %4148 = vmatpush1.xpose.msra.mxu0 0.0
        %4149 = vmatprep.subr.mxu0 0.0
        %4150 = vmatpush1.xpose.msra.mxu0 0.0
        %4151 = vmatprep.subr.mxu0 0.0
        %4152 = vmatpush1.xpose.msra.mxu0 0.0
        %4153 = vmatprep.subr.mxu0 0.0
        %4154 = vmatpush1.xpose.msra.mxu0 0.0
        %4155 = vmatprep.subr.mxu0 0.0
        %4156 = vmatpush1.xpose.msra.mxu0 0.0
        %4157 = vmatprep.subr.mxu0 0.0
        %4158 = vmatpush1.xpose.msra.mxu0 0.0
        %4159 = vmatprep.subr.mxu0 0.0
        %4160 = vmatpush1.xpose.msra.mxu0 0.0
        %4161 = vmatprep.subr.mxu0 0.0
        %4162 = vmatpush1.xpose.msra.mxu0 0.0
        %4163 = vmatprep.subr.mxu0 0.0
        %4164 = vmatpush1.xpose.msra.mxu0 0.0
        %4165 = vmatprep.subr.mxu0 0.0
        %4166 = vmatpush1.xpose.msra.mxu0 0.0
        %4167 = vmatprep.subr.mxu0 0.0
        %4168 = vmatpush1.xpose.msra.mxu0 0.0
        %4169 = vmatprep.subr.mxu0 0.0
        %4170 = vmatpush1.xpose.msra.mxu0 0.0
        %4171 = vmatprep.subr.mxu0 0.0
        %4172 = vmatpush1.xpose.msra.mxu0 0.0
        %4173 = vmatprep.subr.mxu0 0.0
        %4174 = vmatpush1.xpose.msra.mxu0 0.0
        %4175 = vmatprep.subr.mxu0 0.0
        %4176 = vmatpush1.xpose.msra.mxu0 0.0
        %4177 = vmatprep.subr.mxu0 0.0
        %4178 = vmatpush1.xpose.msra.mxu0 0.0
        %4179 = vmatprep.subr.mxu0 0.0
        %4180 = vmatpush1.xpose.msra.mxu0 0.0
        %4181 = vmatprep.subr.mxu0 0.0
        %4182 = vmatpush1.xpose.msra.mxu0 0.0
        %4183 = vmatprep.subr.mxu0 0.0
        %4184 = vmatpush1.xpose.msra.mxu0 0.0
        %4185 = vmatprep.subr.mxu0 0.0
        %4186 = vmatpush1.xpose.msra.mxu0 0.0
        %4187 = vmatprep.subr.mxu0 0.0
        %4188 = vmatpush1.xpose.msra.mxu0 0.0
        %4189 = vmatprep.subr.mxu0 0.0
        %4190 = vmatpush1.xpose.msra.mxu0 0.0
        %4191 = vmatprep.subr.mxu0 0.0
        %4192 = vmatpush1.xpose.msra.mxu0 0.0
        %4193 = vmatprep.subr.mxu0 0.0
        %4194 = vmatpush1.xpose.msra.mxu0 0.0
        %4195 = vmatprep.mubr.f32.mxu0 %v4011
        %4196 = vmatmul.mubr.f32.gmra.mrb[0].mxu0 %v4010
        %v4197 = vpop.f32.mrb[0].mxu0
        %v4198 = vadd.f32 %v4123, %v4197
        %v4199 = vpop.f32.mrb[0].mxu0
        %4200 = vmatprep.mubr.f32.mxu0 %v4019
        %4201 = vmatmul.mubr.f32.gmra.mrb[0].mxu0 %v4018
        %v4202 = vpop.f32.mrb[0].mxu0
        %v4203 = vadd.f32 %v4128, %v4202
        %v4204 = vpop.f32.mrb[0].mxu0
        %4205 = vdwg.mxu0
        %4206 = vmatprep.subr.mxu0 %v4045
        %4207 = vmatpush1.xpose.msra.mxu0 %v4044
        %4208 = vmatprep.subr.mxu0 0.0
        %4209 = vmatpush1.xpose.msra.mxu0 0.0
        %4210 = vmatprep.subr.mxu0 0.0
        %4211 = vmatpush1.xpose.msra.mxu0 0.0
        %4212 = vmatprep.subr.mxu0 0.0
        %4213 = vmatpush1.xpose.msra.mxu0 0.0
        %4214 = vmatprep.subr.mxu0 0.0
        %4215 = vmatpush1.xpose.msra.mxu0 0.0
        %4216 = vmatprep.subr.mxu0 0.0
        %4217 = vmatpush1.xpose.msra.mxu0 0.0
        %4218 = vmatprep.subr.mxu0 0.0
        %4219 = vmatpush1.xpose.msra.mxu0 0.0
        %4220 = vmatprep.subr.mxu0 0.0
        %4221 = vmatpush1.xpose.msra.mxu0 0.0
        %4222 = vmatprep.subr.mxu0 0.0
        %4223 = vmatpush1.xpose.msra.mxu0 0.0
        %4224 = vmatprep.subr.mxu0 0.0
        %4225 = vmatpush1.xpose.msra.mxu0 0.0
        %4226 = vmatprep.subr.mxu0 0.0
        %4227 = vmatpush1.xpose.msra.mxu0 0.0
        %4228 = vmatprep.subr.mxu0 0.0
        %4229 = vmatpush1.xpose.msra.mxu0 0.0
        %4230 = vmatprep.subr.mxu0 0.0
        %4231 = vmatpush1.xpose.msra.mxu0 0.0
        %4232 = vmatprep.subr.mxu0 0.0
        %4233 = vmatpush1.xpose.msra.mxu0 0.0
        %4234 = vmatprep.subr.mxu0 0.0
        %4235 = vmatpush1.xpose.msra.mxu0 0.0
        %4236 = vmatprep.subr.mxu0 0.0
        %4237 = vmatpush1.xpose.msra.mxu0 0.0
        %4238 = vmatprep.subr.mxu0 0.0
        %4239 = vmatpush1.xpose.msra.mxu0 0.0
        %4240 = vmatprep.subr.mxu0 0.0
        %4241 = vmatpush1.xpose.msra.mxu0 0.0
        %4242 = vmatprep.subr.mxu0 0.0
        %4243 = vmatpush1.xpose.msra.mxu0 0.0
        %4244 = vmatprep.subr.mxu0 0.0
        %4245 = vmatpush1.xpose.msra.mxu0 0.0
        %4246 = vmatprep.subr.mxu0 0.0
        %4247 = vmatpush1.xpose.msra.mxu0 0.0
        %4248 = vmatprep.subr.mxu0 0.0
        %4249 = vmatpush1.xpose.msra.mxu0 0.0
        %4250 = vmatprep.subr.mxu0 0.0
        %4251 = vmatpush1.xpose.msra.mxu0 0.0
        %4252 = vmatprep.subr.mxu0 0.0
        %4253 = vmatpush1.xpose.msra.mxu0 0.0
        %4254 = vmatprep.subr.mxu0 0.0
        %4255 = vmatpush1.xpose.msra.mxu0 0.0
        %4256 = vmatprep.subr.mxu0 0.0
        %4257 = vmatpush1.xpose.msra.mxu0 0.0
        %4258 = vmatprep.subr.mxu0 0.0
        %4259 = vmatpush1.xpose.msra.mxu0 0.0
        %4260 = vmatprep.subr.mxu0 0.0
        %4261 = vmatpush1.xpose.msra.mxu0 0.0
        %4262 = vmatprep.subr.mxu0 0.0
        %4263 = vmatpush1.xpose.msra.mxu0 0.0
        %4264 = vmatprep.subr.mxu0 0.0
        %4265 = vmatpush1.xpose.msra.mxu0 0.0
        %4266 = vmatprep.subr.mxu0 0.0
        %4267 = vmatpush1.xpose.msra.mxu0 0.0
        %4268 = vmatprep.subr.mxu0 0.0
        %4269 = vmatpush1.xpose.msra.mxu0 0.0
        %4270 = vmatprep.mubr.f32.mxu0 %v4013
        %4271 = vmatmul.mubr.f32.gmra.mrb[0].mxu0 %v4012
        %v4272 = vpop.f32.mrb[0].mxu0
        %v4273 = vadd.f32 %v4198, %v4272
        %v4274 = vpop.f32.mrb[0].mxu0
        %4275 = vmatprep.mubr.f32.mxu0 %v4021
        %4276 = vmatmul.mubr.f32.gmra.mrb[0].mxu0 %v4020
        %v4277 = vpop.f32.mrb[0].mxu0
        %v4278 = vadd.f32 %v4203, %v4277
        %v4279 = vpop.f32.mrb[0].mxu0
        %4280 = vdwg.mxu0
        %4281 = vmatprep.subr.mxu0 %v4047
        %4282 = vmatpush1.xpose.msra.mxu0 %v4046
        %4283 = vmatprep.subr.mxu0 0.0
        %4284 = vmatpush1.xpose.msra.mxu0 0.0
        %4285 = vmatprep.subr.mxu0 0.0
        %4286 = vmatpush1.xpose.msra.mxu0 0.0
        %4287 = vmatprep.subr.mxu0 0.0
        %4288 = vmatpush1.xpose.msra.mxu0 0.0
        %4289 = vmatprep.subr.mxu0 0.0
        %4290 = vmatpush1.xpose.msra.mxu0 0.0
        %4291 = vmatprep.subr.mxu0 0.0
        %4292 = vmatpush1.xpose.msra.mxu0 0.0
        %4293 = vmatprep.subr.mxu0 0.0
        %4294 = vmatpush1.xpose.msra.mxu0 0.0
        %4295 = vmatprep.subr.mxu0 0.0
        %4296 = vmatpush1.xpose.msra.mxu0 0.0
        %4297 = vmatprep.subr.mxu0 0.0
        %4298 = vmatpush1.xpose.msra.mxu0 0.0
        %4299 = vmatprep.subr.mxu0 0.0
        %4300 = vmatpush1.xpose.msra.mxu0 0.0
        %4301 = vmatprep.subr.mxu0 0.0
        %4302 = vmatpush1.xpose.msra.mxu0 0.0
        %4303 = vmatprep.subr.mxu0 0.0
        %4304 = vmatpush1.xpose.msra.mxu0 0.0
        %4305 = vmatprep.subr.mxu0 0.0
        %4306 = vmatpush1.xpose.msra.mxu0 0.0
        %4307 = vmatprep.subr.mxu0 0.0
        %4308 = vmatpush1.xpose.msra.mxu0 0.0
        %4309 = vmatprep.subr.mxu0 0.0
        %4310 = vmatpush1.xpose.msra.mxu0 0.0
        %4311 = vmatprep.subr.mxu0 0.0
        %4312 = vmatpush1.xpose.msra.mxu0 0.0
        %4313 = vmatprep.subr.mxu0 0.0
        %4314 = vmatpush1.xpose.msra.mxu0 0.0
        %4315 = vmatprep.subr.mxu0 0.0
        %4316 = vmatpush1.xpose.msra.mxu0 0.0
        %4317 = vmatprep.subr.mxu0 0.0
        %4318 = vmatpush1.xpose.msra.mxu0 0.0
        %4319 = vmatprep.subr.mxu0 0.0
        %4320 = vmatpush1.xpose.msra.mxu0 0.0
        %4321 = vmatprep.subr.mxu0 0.0
        %4322 = vmatpush1.xpose.msra.mxu0 0.0
        %4323 = vmatprep.subr.mxu0 0.0
        %4324 = vmatpush1.xpose.msra.mxu0 0.0
        %4325 = vmatprep.subr.mxu0 0.0
        %4326 = vmatpush1.xpose.msra.mxu0 0.0
        %4327 = vmatprep.subr.mxu0 0.0
        %4328 = vmatpush1.xpose.msra.mxu0 0.0
        %4329 = vmatprep.subr.mxu0 0.0
        %4330 = vmatpush1.xpose.msra.mxu0 0.0
        %4331 = vmatprep.subr.mxu0 0.0
        %4332 = vmatpush1.xpose.msra.mxu0 0.0
        %4333 = vmatprep.subr.mxu0 0.0
        %4334 = vmatpush1.xpose.msra.mxu0 0.0
        %4335 = vmatprep.subr.mxu0 0.0
        %4336 = vmatpush1.xpose.msra.mxu0 0.0
        %4337 = vmatprep.subr.mxu0 0.0
        %4338 = vmatpush1.xpose.msra.mxu0 0.0
        %4339 = vmatprep.subr.mxu0 0.0
        %4340 = vmatpush1.xpose.msra.mxu0 0.0
        %4341 = vmatprep.subr.mxu0 0.0
        %4342 = vmatpush1.xpose.msra.mxu0 0.0
        %4343 = vmatprep.subr.mxu0 0.0
        %4344 = vmatpush1.xpose.msra.mxu0 0.0
        %4345 = vmatprep.mubr.f32.mxu0 %v4015
        %4346 = vmatmul.mubr.f32.gmra.mrb[0].mxu0 %v4014
        %v4347 = vpop.f32.mrb[0].mxu0
        %v4348 = vadd.f32 %v4273, %v4347
        %v4349 = vpop.f32.mrb[0].mxu0
        %4350 = vmatprep.mubr.f32.mxu0 %v4023
        %4351 = vmatmul.mubr.f32.gmra.mrb[0].mxu0 %v4022
        %v4352 = vpop.f32.mrb[0].mxu0
        %v4353 = vadd.f32 %v4278, %v4352
        %v4354 = vpop.f32.mrb[0].mxu0
        %4355 = vdwg.mxu0
        %v4356 = vmul.f32 %v4348, 0.00390625
        %v4357 = vmul.f32 %v4353, 0.00390625
        %v4358 = vld [vmem:[%s2 + $0xa0] sm:$0xff]
        %v4359 = vld [vmem:[%s2 + $0xb0] sm:$0xff]
        %4361 = vset.pattern.permute.xlu0 16
        %4362 = vperm.xlu0 %4361, %v4358
        %v4363 = vpop.permute.xlu0 %4362
        %4366 = vset.pattern.permute.xlu0 16
        %4367 = vperm.xlu0 %4366, %v4359
        %v4368 = vpop.permute.xlu0 %4367
        %v4370 = vsel %vm1523, %v4358, 0
        %v4372 = vsel %vm1523, %v4359, 0
        %4374 = vmatprep.subr.mxu0 0.0
        %4375 = vmatpush1.msra.mxu0 %v4356
        %4376 = vmatprep.subr.mxu0 0.0
        %4377 = vmatpush1.msra.mxu0 %v4357
        %4378 = vmatprep.subr.mxu0 0.0
        %4379 = vmatpush1.msra.mxu0 0.0
        %4380 = vmatprep.subr.mxu0 0.0
        %4381 = vmatpush1.msra.mxu0 0.0
        %4382 = vmatprep.subr.mxu0 0.0
        %4383 = vmatpush1.msra.mxu0 0.0
        %4384 = vmatprep.subr.mxu0 0.0
        %4385 = vmatpush1.msra.mxu0 0.0
        %4386 = vmatprep.subr.mxu0 0.0
        %4387 = vmatpush1.msra.mxu0 0.0
        %4388 = vmatprep.subr.mxu0 0.0
        %4389 = vmatpush1.msra.mxu0 0.0
        %4390 = vmatprep.subr.mxu0 0.0
        %4391 = vmatpush1.msra.mxu0 0.0
        %4392 = vmatprep.subr.mxu0 0.0
        %4393 = vmatpush1.msra.mxu0 0.0
        %4394 = vmatprep.subr.mxu0 0.0
        %4395 = vmatpush1.msra.mxu0 0.0
        %4396 = vmatprep.subr.mxu0 0.0
        %4397 = vmatpush1.msra.mxu0 0.0
        %4398 = vmatprep.subr.mxu0 0.0
        %4399 = vmatpush1.msra.mxu0 0.0
        %4400 = vmatprep.subr.mxu0 0.0
        %4401 = vmatpush1.msra.mxu0 0.0
        %4402 = vmatprep.subr.mxu0 0.0
        %4403 = vmatpush1.msra.mxu0 0.0
        %4404 = vmatprep.subr.mxu0 0.0
        %4405 = vmatpush1.msra.mxu0 0.0
        %4406 = vmatprep.subr.mxu0 0.0
        %4407 = vmatpush1.msra.mxu0 0.0
        %4408 = vmatprep.subr.mxu0 0.0
        %4409 = vmatpush1.msra.mxu0 0.0
        %4410 = vmatprep.subr.mxu0 0.0
        %4411 = vmatpush1.msra.mxu0 0.0
        %4412 = vmatprep.subr.mxu0 0.0
        %4413 = vmatpush1.msra.mxu0 0.0
        %4414 = vmatprep.subr.mxu0 0.0
        %4415 = vmatpush1.msra.mxu0 0.0
        %4416 = vmatprep.subr.mxu0 0.0
        %4417 = vmatpush1.msra.mxu0 0.0
        %4418 = vmatprep.subr.mxu0 0.0
        %4419 = vmatpush1.msra.mxu0 0.0
        %4420 = vmatprep.subr.mxu0 0.0
        %4421 = vmatpush1.msra.mxu0 0.0
        %4422 = vmatprep.subr.mxu0 0.0
        %4423 = vmatpush1.msra.mxu0 0.0
        %4424 = vmatprep.subr.mxu0 0.0
        %4425 = vmatpush1.msra.mxu0 0.0
        %4426 = vmatprep.subr.mxu0 0.0
        %4427 = vmatpush1.msra.mxu0 0.0
        %4428 = vmatprep.subr.mxu0 0.0
        %4429 = vmatpush1.msra.mxu0 0.0
        %4430 = vmatprep.subr.mxu0 0.0
        %4431 = vmatpush1.msra.mxu0 0.0
        %4432 = vmatprep.subr.mxu0 0.0
        %4433 = vmatpush1.msra.mxu0 0.0
        %4434 = vmatprep.subr.mxu0 0.0
        %4435 = vmatpush1.msra.mxu0 0.0
        %4436 = vmatprep.subr.mxu0 0.0
        %4437 = vmatpush1.msra.mxu0 0.0
        %4438 = vmatprep.mubr.f32.mxu0 0.0
        %4439 = vmatmul.mubr.f32.gmra.mrb[0].mxu0 %v4370
        %v4440 = vpop.f32.mrb[0].mxu0
        %v4441 = vadd.f32 %v4363, %v4440
        %v4442 = vpop.f32.mrb[0].mxu0
        %4443 = vmatprep.mubr.f32.mxu0 0.0
        %4444 = vmatmul.mubr.f32.gmra.mrb[0].mxu0 %v4372
        %v4445 = vpop.f32.mrb[0].mxu0
        %v4446 = vadd.f32 %v4368, %v4445
        %v4447 = vpop.f32.mrb[0].mxu0
        %4448 = vdwg.mxu0
        %vm4449 = vcmask 31744
        %v4451 = vsel %vm4449, %v4441, 0
        %v4454 = vsel %vm4449, %v4446, 0
        %vm4456 = vcmask 1043456
        %v4457 = vsel %vm4456, %v4040, 0
        %v4459 = vsel %vm4456, %v4041, 0
        %v4461 = vsel %vm4456, %v4042, 0
        %v4463 = vsel %vm4456, %v4043, 0
        %v4465 = vsel %vm4456, %v4044, 0
        %v4467 = vsel %vm4456, %v4045, 0
        %v4469 = vsel %vm4456, %v4046, 0
        %v4471 = vsel %vm4456, %v4047, 0
        %4473 = vmatprep.subr.mxu0 %v4459
        %4474 = vmatpush1.msra.mxu0 %v4457
        %4475 = vmatprep.subr.mxu0 0.0
        %4476 = vmatpush1.msra.mxu0 0.0
        %4477 = vmatprep.subr.mxu0 0.0
        %4478 = vmatpush1.msra.mxu0 0.0
        %4479 = vmatprep.subr.mxu0 0.0
        %4480 = vmatpush1.msra.mxu0 0.0
        %4481 = vmatprep.subr.mxu0 0.0
        %4482 = vmatpush1.msra.mxu0 0.0
        %4483 = vmatprep.subr.mxu0 0.0
        %4484 = vmatpush1.msra.mxu0 0.0
        %4485 = vmatprep.subr.mxu0 0.0
        %4486 = vmatpush1.msra.mxu0 0.0
        %4487 = vmatprep.subr.mxu0 0.0
        %4488 = vmatpush1.msra.mxu0 0.0
        %4489 = vmatprep.subr.mxu0 0.0
        %4490 = vmatpush1.msra.mxu0 0.0
        %4491 = vmatprep.subr.mxu0 0.0
        %4492 = vmatpush1.msra.mxu0 0.0
        %4493 = vmatprep.subr.mxu0 0.0
        %4494 = vmatpush1.msra.mxu0 0.0
        %4495 = vmatprep.subr.mxu0 0.0
        %4496 = vmatpush1.msra.mxu0 0.0
        %4497 = vmatprep.subr.mxu0 0.0
        %4498 = vmatpush1.msra.mxu0 0.0
        %4499 = vmatprep.subr.mxu0 0.0
        %4500 = vmatpush1.msra.mxu0 0.0
        %4501 = vmatprep.subr.mxu0 0.0
        %4502 = vmatpush1.msra.mxu0 0.0
        %4503 = vmatprep.subr.mxu0 0.0
        %4504 = vmatpush1.msra.mxu0 0.0
        %4505 = vmatprep.subr.mxu0 0.0
        %4506 = vmatpush1.msra.mxu0 0.0
        %4507 = vmatprep.subr.mxu0 0.0
        %4508 = vmatpush1.msra.mxu0 0.0
        %4509 = vmatprep.subr.mxu0 0.0
        %4510 = vmatpush1.msra.mxu0 0.0
        %4511 = vmatprep.subr.mxu0 0.0
        %4512 = vmatpush1.msra.mxu0 0.0
        %4513 = vmatprep.subr.mxu0 0.0
        %4514 = vmatpush1.msra.mxu0 0.0
        %4515 = vmatprep.subr.mxu0 0.0
        %4516 = vmatpush1.msra.mxu0 0.0
        %4517 = vmatprep.subr.mxu0 0.0
        %4518 = vmatpush1.msra.mxu0 0.0
        %4519 = vmatprep.subr.mxu0 0.0
        %4520 = vmatpush1.msra.mxu0 0.0
        %4521 = vmatprep.subr.mxu0 0.0
        %4522 = vmatpush1.msra.mxu0 0.0
        %4523 = vmatprep.subr.mxu0 0.0
        %4524 = vmatpush1.msra.mxu0 0.0
        %4525 = vmatprep.subr.mxu0 0.0
        %4526 = vmatpush1.msra.mxu0 0.0
        %4527 = vmatprep.subr.mxu0 0.0
        %4528 = vmatpush1.msra.mxu0 0.0
        %4529 = vmatprep.subr.mxu0 0.0
        %4530 = vmatpush1.msra.mxu0 0.0
        %4531 = vmatprep.subr.mxu0 0.0
        %4532 = vmatpush1.msra.mxu0 0.0
        %4533 = vmatprep.subr.mxu0 0.0
        %4534 = vmatpush1.msra.mxu0 0.0
        %4535 = vmatprep.subr.mxu0 0.0
        %4536 = vmatpush1.msra.mxu0 0.0
        %4537 = vmatprep.mubr.f32.mxu0 0.0
        %4538 = vmatmul.mubr.f32.gmra.mrb[0].mxu0 %v4451
        %v4539 = vpop.f32.mrb[0].mxu0
        %v4540 = vadd.f32 0.0, %v4539
        %v4541 = vpop.f32.mrb[0].mxu0
        %v4542 = vadd.f32 0.0, %v4541
        %4543 = vmatprep.mubr.f32.mxu0 0.0
        %4544 = vmatmul.mubr.f32.gmra.mrb[0].mxu0 %v4454
        %v4545 = vpop.f32.mrb[0].mxu0
        %v4546 = vadd.f32 0.0, %v4545
        %v4547 = vpop.f32.mrb[0].mxu0
        %v4548 = vadd.f32 0.0, %v4547
        %4549 = vdwg.mxu0
        %4550 = vmatprep.subr.mxu0 %v4463
        %4551 = vmatpush1.msra.mxu0 %v4461
        %4552 = vmatprep.subr.mxu0 0.0
        %4553 = vmatpush1.msra.mxu0 0.0
        %4554 = vmatprep.subr.mxu0 0.0
        %4555 = vmatpush1.msra.mxu0 0.0
        %4556 = vmatprep.subr.mxu0 0.0
        %4557 = vmatpush1.msra.mxu0 0.0
        %4558 = vmatprep.subr.mxu0 0.0
        %4559 = vmatpush1.msra.mxu0 0.0
        %4560 = vmatprep.subr.mxu0 0.0
        %4561 = vmatpush1.msra.mxu0 0.0
        %4562 = vmatprep.subr.mxu0 0.0
        %4563 = vmatpush1.msra.mxu0 0.0
        %4564 = vmatprep.subr.mxu0 0.0
        %4565 = vmatpush1.msra.mxu0 0.0
        %4566 = vmatprep.subr.mxu0 0.0
        %4567 = vmatpush1.msra.mxu0 0.0
        %4568 = vmatprep.subr.mxu0 0.0
        %4569 = vmatpush1.msra.mxu0 0.0
        %4570 = vmatprep.subr.mxu0 0.0
        %4571 = vmatpush1.msra.mxu0 0.0
        %4572 = vmatprep.subr.mxu0 0.0
        %4573 = vmatpush1.msra.mxu0 0.0
        %4574 = vmatprep.subr.mxu0 0.0
        %4575 = vmatpush1.msra.mxu0 0.0
        %4576 = vmatprep.subr.mxu0 0.0
        %4577 = vmatpush1.msra.mxu0 0.0
        %4578 = vmatprep.subr.mxu0 0.0
        %4579 = vmatpush1.msra.mxu0 0.0
        %4580 = vmatprep.subr.mxu0 0.0
        %4581 = vmatpush1.msra.mxu0 0.0
        %4582 = vmatprep.subr.mxu0 0.0
        %4583 = vmatpush1.msra.mxu0 0.0
        %4584 = vmatprep.subr.mxu0 0.0
        %4585 = vmatpush1.msra.mxu0 0.0
        %4586 = vmatprep.subr.mxu0 0.0
        %4587 = vmatpush1.msra.mxu0 0.0
        %4588 = vmatprep.subr.mxu0 0.0
        %4589 = vmatpush1.msra.mxu0 0.0
        %4590 = vmatprep.subr.mxu0 0.0
        %4591 = vmatpush1.msra.mxu0 0.0
        %4592 = vmatprep.subr.mxu0 0.0
        %4593 = vmatpush1.msra.mxu0 0.0
        %4594 = vmatprep.subr.mxu0 0.0
        %4595 = vmatpush1.msra.mxu0 0.0
        %4596 = vmatprep.subr.mxu0 0.0
        %4597 = vmatpush1.msra.mxu0 0.0
        %4598 = vmatprep.subr.mxu0 0.0
        %4599 = vmatpush1.msra.mxu0 0.0
        %4600 = vmatprep.subr.mxu0 0.0
        %4601 = vmatpush1.msra.mxu0 0.0
        %4602 = vmatprep.subr.mxu0 0.0
        %4603 = vmatpush1.msra.mxu0 0.0
        %4604 = vmatprep.subr.mxu0 0.0
        %4605 = vmatpush1.msra.mxu0 0.0
        %4606 = vmatprep.subr.mxu0 0.0
        %4607 = vmatpush1.msra.mxu0 0.0
        %4608 = vmatprep.subr.mxu0 0.0
        %4609 = vmatpush1.msra.mxu0 0.0
        %4610 = vmatprep.subr.mxu0 0.0
        %4611 = vmatpush1.msra.mxu0 0.0
        %4612 = vmatprep.subr.mxu0 0.0
        %4613 = vmatpush1.msra.mxu0 0.0
        %4614 = vmatprep.mubr.f32.mxu0 0.0
        %4615 = vmatmul.mubr.f32.gmra.mrb[0].mxu0 %v4451
        %v4616 = vpop.f32.mrb[0].mxu0
        %v4617 = vadd.f32 0.0, %v4616
        %v4618 = vpop.f32.mrb[0].mxu0
        %v4619 = vadd.f32 0.0, %v4618
        %4620 = vmatprep.mubr.f32.mxu0 0.0
        %4621 = vmatmul.mubr.f32.gmra.mrb[0].mxu0 %v4454
        %v4622 = vpop.f32.mrb[0].mxu0
        %v4623 = vadd.f32 0.0, %v4622
        %v4624 = vpop.f32.mrb[0].mxu0
        %v4625 = vadd.f32 0.0, %v4624
        %4626 = vdwg.mxu0
        %4627 = vmatprep.subr.mxu0 %v4467
        %4628 = vmatpush1.msra.mxu0 %v4465
        %4629 = vmatprep.subr.mxu0 0.0
        %4630 = vmatpush1.msra.mxu0 0.0
        %4631 = vmatprep.subr.mxu0 0.0
        %4632 = vmatpush1.msra.mxu0 0.0
        %4633 = vmatprep.subr.mxu0 0.0
        %4634 = vmatpush1.msra.mxu0 0.0
        %4635 = vmatprep.subr.mxu0 0.0
        %4636 = vmatpush1.msra.mxu0 0.0
        %4637 = vmatprep.subr.mxu0 0.0
        %4638 = vmatpush1.msra.mxu0 0.0
        %4639 = vmatprep.subr.mxu0 0.0
        %4640 = vmatpush1.msra.mxu0 0.0
        %4641 = vmatprep.subr.mxu0 0.0
        %4642 = vmatpush1.msra.mxu0 0.0
        %4643 = vmatprep.subr.mxu0 0.0
        %4644 = vmatpush1.msra.mxu0 0.0
        %4645 = vmatprep.subr.mxu0 0.0
        %4646 = vmatpush1.msra.mxu0 0.0
        %4647 = vmatprep.subr.mxu0 0.0
        %4648 = vmatpush1.msra.mxu0 0.0
        %4649 = vmatprep.subr.mxu0 0.0
        %4650 = vmatpush1.msra.mxu0 0.0
        %4651 = vmatprep.subr.mxu0 0.0
        %4652 = vmatpush1.msra.mxu0 0.0
        %4653 = vmatprep.subr.mxu0 0.0
        %4654 = vmatpush1.msra.mxu0 0.0
        %4655 = vmatprep.subr.mxu0 0.0
        %4656 = vmatpush1.msra.mxu0 0.0
        %4657 = vmatprep.subr.mxu0 0.0
        %4658 = vmatpush1.msra.mxu0 0.0
        %4659 = vmatprep.subr.mxu0 0.0
        %4660 = vmatpush1.msra.mxu0 0.0
        %4661 = vmatprep.subr.mxu0 0.0
        %4662 = vmatpush1.msra.mxu0 0.0
        %4663 = vmatprep.subr.mxu0 0.0
        %4664 = vmatpush1.msra.mxu0 0.0
        %4665 = vmatprep.subr.mxu0 0.0
        %4666 = vmatpush1.msra.mxu0 0.0
        %4667 = vmatprep.subr.mxu0 0.0
        %4668 = vmatpush1.msra.mxu0 0.0
        %4669 = vmatprep.subr.mxu0 0.0
        %4670 = vmatpush1.msra.mxu0 0.0
        %4671 = vmatprep.subr.mxu0 0.0
        %4672 = vmatpush1.msra.mxu0 0.0
        %4673 = vmatprep.subr.mxu0 0.0
        %4674 = vmatpush1.msra.mxu0 0.0
        %4675 = vmatprep.subr.mxu0 0.0
        %4676 = vmatpush1.msra.mxu0 0.0
        %4677 = vmatprep.subr.mxu0 0.0
        %4678 = vmatpush1.msra.mxu0 0.0
        %4679 = vmatprep.subr.mxu0 0.0
        %4680 = vmatpush1.msra.mxu0 0.0
        %4681 = vmatprep.subr.mxu0 0.0
        %4682 = vmatpush1.msra.mxu0 0.0
        %4683 = vmatprep.subr.mxu0 0.0
        %4684 = vmatpush1.msra.mxu0 0.0
        %4685 = vmatprep.subr.mxu0 0.0
        %4686 = vmatpush1.msra.mxu0 0.0
        %4687 = vmatprep.subr.mxu0 0.0
        %4688 = vmatpush1.msra.mxu0 0.0
        %4689 = vmatprep.subr.mxu0 0.0
        %4690 = vmatpush1.msra.mxu0 0.0
        %4691 = vmatprep.mubr.f32.mxu0 0.0
        %4692 = vmatmul.mubr.f32.gmra.mrb[0].mxu0 %v4451
        %v4693 = vpop.f32.mrb[0].mxu0
        %v4694 = vadd.f32 0.0, %v4693
        %v4695 = vpop.f32.mrb[0].mxu0
        %v4696 = vadd.f32 0.0, %v4695
        %4697 = vmatprep.mubr.f32.mxu0 0.0
        %4698 = vmatmul.mubr.f32.gmra.mrb[0].mxu0 %v4454
        %v4699 = vpop.f32.mrb[0].mxu0
        %v4700 = vadd.f32 0.0, %v4699
        %v4701 = vpop.f32.mrb[0].mxu0
        %v4702 = vadd.f32 0.0, %v4701
        %4703 = vdwg.mxu0
        %4704 = vmatprep.subr.mxu0 %v4471
        %4705 = vmatpush1.msra.mxu0 %v4469
        %4706 = vmatprep.subr.mxu0 0.0
        %4707 = vmatpush1.msra.mxu0 0.0
        %4708 = vmatprep.subr.mxu0 0.0
        %4709 = vmatpush1.msra.mxu0 0.0
        %4710 = vmatprep.subr.mxu0 0.0
        %4711 = vmatpush1.msra.mxu0 0.0
        %4712 = vmatprep.subr.mxu0 0.0
        %4713 = vmatpush1.msra.mxu0 0.0
        %4714 = vmatprep.subr.mxu0 0.0
        %4715 = vmatpush1.msra.mxu0 0.0
        %4716 = vmatprep.subr.mxu0 0.0
        %4717 = vmatpush1.msra.mxu0 0.0
        %4718 = vmatprep.subr.mxu0 0.0
        %4719 = vmatpush1.msra.mxu0 0.0
        %4720 = vmatprep.subr.mxu0 0.0
        %4721 = vmatpush1.msra.mxu0 0.0
        %4722 = vmatprep.subr.mxu0 0.0
        %4723 = vmatpush1.msra.mxu0 0.0
        %4724 = vmatprep.subr.mxu0 0.0
        %4725 = vmatpush1.msra.mxu0 0.0
        %4726 = vmatprep.subr.mxu0 0.0
        %4727 = vmatpush1.msra.mxu0 0.0
        %4728 = vmatprep.subr.mxu0 0.0
        %4729 = vmatpush1.msra.mxu0 0.0
        %4730 = vmatprep.subr.mxu0 0.0
        %4731 = vmatpush1.msra.mxu0 0.0
        %4732 = vmatprep.subr.mxu0 0.0
        %4733 = vmatpush1.msra.mxu0 0.0
        %4734 = vmatprep.subr.mxu0 0.0
        %4735 = vmatpush1.msra.mxu0 0.0
        %4736 = vmatprep.subr.mxu0 0.0
        %4737 = vmatpush1.msra.mxu0 0.0
        %4738 = vmatprep.subr.mxu0 0.0
        %4739 = vmatpush1.msra.mxu0 0.0
        %4740 = vmatprep.subr.mxu0 0.0
        %4741 = vmatpush1.msra.mxu0 0.0
        %4742 = vmatprep.subr.mxu0 0.0
        %4743 = vmatpush1.msra.mxu0 0.0
        %4744 = vmatprep.subr.mxu0 0.0
        %4745 = vmatpush1.msra.mxu0 0.0
        %4746 = vmatprep.subr.mxu0 0.0
        %4747 = vmatpush1.msra.mxu0 0.0
        %4748 = vmatprep.subr.mxu0 0.0
        %4749 = vmatpush1.msra.mxu0 0.0
        %4750 = vmatprep.subr.mxu0 0.0
        %4751 = vmatpush1.msra.mxu0 0.0
        %4752 = vmatprep.subr.mxu0 0.0
        %4753 = vmatpush1.msra.mxu0 0.0
        %4754 = vmatprep.subr.mxu0 0.0
        %4755 = vmatpush1.msra.mxu0 0.0
        %4756 = vmatprep.subr.mxu0 0.0
        %4757 = vmatpush1.msra.mxu0 0.0
        %4758 = vmatprep.subr.mxu0 0.0
        %4759 = vmatpush1.msra.mxu0 0.0
        %4760 = vmatprep.subr.mxu0 0.0
        %4761 = vmatpush1.msra.mxu0 0.0
        %4762 = vmatprep.subr.mxu0 0.0
        %4763 = vmatpush1.msra.mxu0 0.0
        %4764 = vmatprep.subr.mxu0 0.0
        %4765 = vmatpush1.msra.mxu0 0.0
        %4766 = vmatprep.subr.mxu0 0.0
        %4767 = vmatpush1.msra.mxu0 0.0
        %4768 = vmatprep.mubr.f32.mxu0 0.0
        %4769 = vmatmul.mubr.f32.gmra.mrb[0].mxu0 %v4451
        %v4770 = vpop.f32.mrb[0].mxu0
        %v4771 = vadd.f32 0.0, %v4770
        %v4772 = vpop.f32.mrb[0].mxu0
        %v4773 = vadd.f32 0.0, %v4772
        %4774 = vmatprep.mubr.f32.mxu0 0.0
        %4775 = vmatmul.mubr.f32.gmra.mrb[0].mxu0 %v4454
        %v4776 = vpop.f32.mrb[0].mxu0
        %v4777 = vadd.f32 0.0, %v4776
        %v4778 = vpop.f32.mrb[0].mxu0
        %v4779 = vadd.f32 0.0, %v4778
        %4780 = vdwg.mxu0
        %v4781 = vmul.f32 %v4008, %v4540
        %v4782 = vmul.f32 %v4009, %v4542
        %v4783 = vmul.f32 %v4010, %v4617
        %v4784 = vmul.f32 %v4011, %v4619
        %v4785 = vmul.f32 %v4012, %v4694
        %v4786 = vmul.f32 %v4013, %v4696
        %v4787 = vmul.f32 %v4014, %v4771
        %v4788 = vmul.f32 %v4015, %v4773
        %v4789 = vmul.f32 %v4016, %v4546
        %v4790 = vmul.f32 %v4017, %v4548
        %v4791 = vmul.f32 %v4018, %v4623
        %v4792 = vmul.f32 %v4019, %v4625
        %v4793 = vmul.f32 %v4020, %v4700
        %v4794 = vmul.f32 %v4021, %v4702
        %v4795 = vmul.f32 %v4022, %v4777
        %v4796 = vmul.f32 %v4023, %v4779
        %v4797 = vld [vmem:[%s2 + $0xc0] sm:$0xff]
        %v4798 = vld [vmem:[%s2 + $0xd0] sm:$0xff]
        %4800 = vset.pattern.permute.xlu0 16
        %4801 = vperm.xlu0 %4800, %v4797
        %v4802 = vpop.permute.xlu0 %4801
        %4805 = vset.pattern.permute.xlu0 16
        %4806 = vperm.xlu0 %4805, %v4798
        %v4807 = vpop.permute.xlu0 %4806
        %v4809 = vsel %vm1523, %v4797, 0
        %v4811 = vsel %vm1523, %v4798, 0
        %4813 = vmatprep.subr.mxu0 %v4782
        %4814 = vmatpush1.msra.mxu0 %v4781
        %4815 = vmatprep.subr.mxu0 %v4790
        %4816 = vmatpush1.msra.mxu0 %v4789
        %4817 = vmatprep.subr.mxu0 0.0
        %4818 = vmatpush1.msra.mxu0 0.0
        %4819 = vmatprep.subr.mxu0 0.0
        %4820 = vmatpush1.msra.mxu0 0.0
        %4821 = vmatprep.subr.mxu0 0.0
        %4822 = vmatpush1.msra.mxu0 0.0
        %4823 = vmatprep.subr.mxu0 0.0
        %4824 = vmatpush1.msra.mxu0 0.0
        %4825 = vmatprep.subr.mxu0 0.0
        %4826 = vmatpush1.msra.mxu0 0.0
        %4827 = vmatprep.subr.mxu0 0.0
        %4828 = vmatpush1.msra.mxu0 0.0
        %4829 = vmatprep.subr.mxu0 0.0
        %4830 = vmatpush1.msra.mxu0 0.0
        %4831 = vmatprep.subr.mxu0 0.0
        %4832 = vmatpush1.msra.mxu0 0.0
        %4833 = vmatprep.subr.mxu0 0.0
        %4834 = vmatpush1.msra.mxu0 0.0
        %4835 = vmatprep.subr.mxu0 0.0
        %4836 = vmatpush1.msra.mxu0 0.0
        %4837 = vmatprep.subr.mxu0 0.0
        %4838 = vmatpush1.msra.mxu0 0.0
        %4839 = vmatprep.subr.mxu0 0.0
        %4840 = vmatpush1.msra.mxu0 0.0
        %4841 = vmatprep.subr.mxu0 0.0
        %4842 = vmatpush1.msra.mxu0 0.0
        %4843 = vmatprep.subr.mxu0 0.0
        %4844 = vmatpush1.msra.mxu0 0.0
        %4845 = vmatprep.subr.mxu0 0.0
        %4846 = vmatpush1.msra.mxu0 0.0
        %4847 = vmatprep.subr.mxu0 0.0
        %4848 = vmatpush1.msra.mxu0 0.0
        %4849 = vmatprep.subr.mxu0 0.0
        %4850 = vmatpush1.msra.mxu0 0.0
        %4851 = vmatprep.subr.mxu0 0.0
        %4852 = vmatpush1.msra.mxu0 0.0
        %4853 = vmatprep.subr.mxu0 0.0
        %4854 = vmatpush1.msra.mxu0 0.0
        %4855 = vmatprep.subr.mxu0 0.0
        %4856 = vmatpush1.msra.mxu0 0.0
        %4857 = vmatprep.subr.mxu0 0.0
        %4858 = vmatpush1.msra.mxu0 0.0
        %4859 = vmatprep.subr.mxu0 0.0
        %4860 = vmatpush1.msra.mxu0 0.0
        %4861 = vmatprep.subr.mxu0 0.0
        %4862 = vmatpush1.msra.mxu0 0.0
        %4863 = vmatprep.subr.mxu0 0.0
        %4864 = vmatpush1.msra.mxu0 0.0
        %4865 = vmatprep.subr.mxu0 0.0
        %4866 = vmatpush1.msra.mxu0 0.0
        %4867 = vmatprep.subr.mxu0 0.0
        %4868 = vmatpush1.msra.mxu0 0.0
        %4869 = vmatprep.subr.mxu0 0.0
        %4870 = vmatpush1.msra.mxu0 0.0
        %4871 = vmatprep.subr.mxu0 0.0
        %4872 = vmatpush1.msra.mxu0 0.0
        %4873 = vmatprep.subr.mxu0 0.0
        %4874 = vmatpush1.msra.mxu0 0.0
        %4875 = vmatprep.subr.mxu0 0.0
        %4876 = vmatpush1.msra.mxu0 0.0
        %4877 = vmatprep.mubr.f32.mxu0 0.0
        %4878 = vmatmul.mubr.f32.gmra.mrb[0].mxu0 %v4809
        %v4879 = vpop.f32.mrb[0].mxu0
        %v4880 = vadd.f32 %v4802, %v4879
        %v4881 = vpop.f32.mrb[0].mxu0
        %v4882 = vadd.f32 %v4802, %v4881
        %4883 = vmatprep.mubr.f32.mxu0 0.0
        %4884 = vmatmul.mubr.f32.gmra.mrb[0].mxu0 %v4811
        %v4885 = vpop.f32.mrb[0].mxu0
        %v4886 = vadd.f32 %v4807, %v4885
        %v4887 = vpop.f32.mrb[0].mxu0
        %v4888 = vadd.f32 %v4807, %v4887
        %4889 = vdwg.mxu0
        %4890 = vmatprep.subr.mxu0 %v4784
        %4891 = vmatpush1.msra.mxu0 %v4783
        %4892 = vmatprep.subr.mxu0 %v4792
        %4893 = vmatpush1.msra.mxu0 %v4791
        %4894 = vmatprep.subr.mxu0 0.0
        %4895 = vmatpush1.msra.mxu0 0.0
        %4896 = vmatprep.subr.mxu0 0.0
        %4897 = vmatpush1.msra.mxu0 0.0
        %4898 = vmatprep.subr.mxu0 0.0
        %4899 = vmatpush1.msra.mxu0 0.0
        %4900 = vmatprep.subr.mxu0 0.0
        %4901 = vmatpush1.msra.mxu0 0.0
        %4902 = vmatprep.subr.mxu0 0.0
        %4903 = vmatpush1.msra.mxu0 0.0
        %4904 = vmatprep.subr.mxu0 0.0
        %4905 = vmatpush1.msra.mxu0 0.0
        %4906 = vmatprep.subr.mxu0 0.0
        %4907 = vmatpush1.msra.mxu0 0.0
        %4908 = vmatprep.subr.mxu0 0.0
        %4909 = vmatpush1.msra.mxu0 0.0
        %4910 = vmatprep.subr.mxu0 0.0
        %4911 = vmatpush1.msra.mxu0 0.0
        %4912 = vmatprep.subr.mxu0 0.0
        %4913 = vmatpush1.msra.mxu0 0.0
        %4914 = vmatprep.subr.mxu0 0.0
        %4915 = vmatpush1.msra.mxu0 0.0
        %4916 = vmatprep.subr.mxu0 0.0
        %4917 = vmatpush1.msra.mxu0 0.0
        %4918 = vmatprep.subr.mxu0 0.0
        %4919 = vmatpush1.msra.mxu0 0.0
        %4920 = vmatprep.subr.mxu0 0.0
        %4921 = vmatpush1.msra.mxu0 0.0
        %4922 = vmatprep.subr.mxu0 0.0
        %4923 = vmatpush1.msra.mxu0 0.0
        %4924 = vmatprep.subr.mxu0 0.0
        %4925 = vmatpush1.msra.mxu0 0.0
        %4926 = vmatprep.subr.mxu0 0.0
        %4927 = vmatpush1.msra.mxu0 0.0
        %4928 = vmatprep.subr.mxu0 0.0
        %4929 = vmatpush1.msra.mxu0 0.0
        %4930 = vmatprep.subr.mxu0 0.0
        %4931 = vmatpush1.msra.mxu0 0.0
        %4932 = vmatprep.subr.mxu0 0.0
        %4933 = vmatpush1.msra.mxu0 0.0
        %4934 = vmatprep.subr.mxu0 0.0
        %4935 = vmatpush1.msra.mxu0 0.0
        %4936 = vmatprep.subr.mxu0 0.0
        %4937 = vmatpush1.msra.mxu0 0.0
        %4938 = vmatprep.subr.mxu0 0.0
        %4939 = vmatpush1.msra.mxu0 0.0
        %4940 = vmatprep.subr.mxu0 0.0
        %4941 = vmatpush1.msra.mxu0 0.0
        %4942 = vmatprep.subr.mxu0 0.0
        %4943 = vmatpush1.msra.mxu0 0.0
        %4944 = vmatprep.subr.mxu0 0.0
        %4945 = vmatpush1.msra.mxu0 0.0
        %4946 = vmatprep.subr.mxu0 0.0
        %4947 = vmatpush1.msra.mxu0 0.0
        %4948 = vmatprep.subr.mxu0 0.0
        %4949 = vmatpush1.msra.mxu0 0.0
        %4950 = vmatprep.subr.mxu0 0.0
        %4951 = vmatpush1.msra.mxu0 0.0
        %4952 = vmatprep.subr.mxu0 0.0
        %4953 = vmatpush1.msra.mxu0 0.0
        %4954 = vmatprep.mubr.f32.mxu0 0.0
        %4955 = vmatmul.mubr.f32.gmra.mrb[0].mxu0 %v4809
        %v4956 = vpop.f32.mrb[0].mxu0
        %v4957 = vadd.f32 %v4802, %v4956
        %v4958 = vpop.f32.mrb[0].mxu0
        %v4959 = vadd.f32 %v4802, %v4958
        %4960 = vmatprep.mubr.f32.mxu0 0.0
        %4961 = vmatmul.mubr.f32.gmra.mrb[0].mxu0 %v4811
        %v4962 = vpop.f32.mrb[0].mxu0
        %v4963 = vadd.f32 %v4807, %v4962
        %v4964 = vpop.f32.mrb[0].mxu0
        %v4965 = vadd.f32 %v4807, %v4964
        %4966 = vdwg.mxu0
        %4967 = vmatprep.subr.mxu0 %v4786
        %4968 = vmatpush1.msra.mxu0 %v4785
        %4969 = vmatprep.subr.mxu0 %v4794
        %4970 = vmatpush1.msra.mxu0 %v4793
        %4971 = vmatprep.subr.mxu0 0.0
        %4972 = vmatpush1.msra.mxu0 0.0
        %4973 = vmatprep.subr.mxu0 0.0
        %4974 = vmatpush1.msra.mxu0 0.0
        %4975 = vmatprep.subr.mxu0 0.0
        %4976 = vmatpush1.msra.mxu0 0.0
        %4977 = vmatprep.subr.mxu0 0.0
        %4978 = vmatpush1.msra.mxu0 0.0
        %4979 = vmatprep.subr.mxu0 0.0
        %4980 = vmatpush1.msra.mxu0 0.0
        %4981 = vmatprep.subr.mxu0 0.0
        %4982 = vmatpush1.msra.mxu0 0.0
        %4983 = vmatprep.subr.mxu0 0.0
        %4984 = vmatpush1.msra.mxu0 0.0
        %4985 = vmatprep.subr.mxu0 0.0
        %4986 = vmatpush1.msra.mxu0 0.0
        %4987 = vmatprep.subr.mxu0 0.0
        %4988 = vmatpush1.msra.mxu0 0.0
        %4989 = vmatprep.subr.mxu0 0.0
        %4990 = vmatpush1.msra.mxu0 0.0
        %4991 = vmatprep.subr.mxu0 0.0
        %4992 = vmatpush1.msra.mxu0 0.0
        %4993 = vmatprep.subr.mxu0 0.0
        %4994 = vmatpush1.msra.mxu0 0.0
        %4995 = vmatprep.subr.mxu0 0.0
        %4996 = vmatpush1.msra.mxu0 0.0
        %4997 = vmatprep.subr.mxu0 0.0
        %4998 = vmatpush1.msra.mxu0 0.0
        %4999 = vmatprep.subr.mxu0 0.0
        %5000 = vmatpush1.msra.mxu0 0.0
        %5001 = vmatprep.subr.mxu0 0.0
        %5002 = vmatpush1.msra.mxu0 0.0
        %5003 = vmatprep.subr.mxu0 0.0
        %5004 = vmatpush1.msra.mxu0 0.0
        %5005 = vmatprep.subr.mxu0 0.0
        %5006 = vmatpush1.msra.mxu0 0.0
        %5007 = vmatprep.subr.mxu0 0.0
        %5008 = vmatpush1.msra.mxu0 0.0
        %5009 = vmatprep.subr.mxu0 0.0
        %5010 = vmatpush1.msra.mxu0 0.0
        %5011 = vmatprep.subr.mxu0 0.0
        %5012 = vmatpush1.msra.mxu0 0.0
        %5013 = vmatprep.subr.mxu0 0.0
        %5014 = vmatpush1.msra.mxu0 0.0
        %5015 = vmatprep.subr.mxu0 0.0
        %5016 = vmatpush1.msra.mxu0 0.0
        %5017 = vmatprep.subr.mxu0 0.0
        %5018 = vmatpush1.msra.mxu0 0.0
        %5019 = vmatprep.subr.mxu0 0.0
        %5020 = vmatpush1.msra.mxu0 0.0
        %5021 = vmatprep.subr.mxu0 0.0
        %5022 = vmatpush1.msra.mxu0 0.0
        %5023 = vmatprep.subr.mxu0 0.0
        %5024 = vmatpush1.msra.mxu0 0.0
        %5025 = vmatprep.subr.mxu0 0.0
        %5026 = vmatpush1.msra.mxu0 0.0
        %5027 = vmatprep.subr.mxu0 0.0
        %5028 = vmatpush1.msra.mxu0 0.0
        %5029 = vmatprep.subr.mxu0 0.0
        %5030 = vmatpush1.msra.mxu0 0.0
        %5031 = vmatprep.mubr.f32.mxu0 0.0
        %5032 = vmatmul.mubr.f32.gmra.mrb[0].mxu0 %v4809
        %v5033 = vpop.f32.mrb[0].mxu0
        %v5034 = vadd.f32 %v4802, %v5033
        %v5035 = vpop.f32.mrb[0].mxu0
        %v5036 = vadd.f32 %v4802, %v5035
        %5037 = vmatprep.mubr.f32.mxu0 0.0
        %5038 = vmatmul.mubr.f32.gmra.mrb[0].mxu0 %v4811
        %v5039 = vpop.f32.mrb[0].mxu0
        %v5040 = vadd.f32 %v4807, %v5039
        %v5041 = vpop.f32.mrb[0].mxu0
        %v5042 = vadd.f32 %v4807, %v5041
        %5043 = vdwg.mxu0
        %5044 = vmatprep.subr.mxu0 %v4788
        %5045 = vmatpush1.msra.mxu0 %v4787
        %5046 = vmatprep.subr.mxu0 %v4796
        %5047 = vmatpush1.msra.mxu0 %v4795
        %5048 = vmatprep.subr.mxu0 0.0
        %5049 = vmatpush1.msra.mxu0 0.0
        %5050 = vmatprep.subr.mxu0 0.0
        %5051 = vmatpush1.msra.mxu0 0.0
        %5052 = vmatprep.subr.mxu0 0.0
        %5053 = vmatpush1.msra.mxu0 0.0
        %5054 = vmatprep.subr.mxu0 0.0
        %5055 = vmatpush1.msra.mxu0 0.0
        %5056 = vmatprep.subr.mxu0 0.0
        %5057 = vmatpush1.msra.mxu0 0.0
        %5058 = vmatprep.subr.mxu0 0.0
        %5059 = vmatpush1.msra.mxu0 0.0
        %5060 = vmatprep.subr.mxu0 0.0
        %5061 = vmatpush1.msra.mxu0 0.0
        %5062 = vmatprep.subr.mxu0 0.0
        %5063 = vmatpush1.msra.mxu0 0.0
        %5064 = vmatprep.subr.mxu0 0.0
        %5065 = vmatpush1.msra.mxu0 0.0
        %5066 = vmatprep.subr.mxu0 0.0
        %5067 = vmatpush1.msra.mxu0 0.0
        %5068 = vmatprep.subr.mxu0 0.0
        %5069 = vmatpush1.msra.mxu0 0.0
        %5070 = vmatprep.subr.mxu0 0.0
        %5071 = vmatpush1.msra.mxu0 0.0
        %5072 = vmatprep.subr.mxu0 0.0
        %5073 = vmatpush1.msra.mxu0 0.0
        %5074 = vmatprep.subr.mxu0 0.0
        %5075 = vmatpush1.msra.mxu0 0.0
        %5076 = vmatprep.subr.mxu0 0.0
        %5077 = vmatpush1.msra.mxu0 0.0
        %5078 = vmatprep.subr.mxu0 0.0
        %5079 = vmatpush1.msra.mxu0 0.0
        %5080 = vmatprep.subr.mxu0 0.0
        %5081 = vmatpush1.msra.mxu0 0.0
        %5082 = vmatprep.subr.mxu0 0.0
        %5083 = vmatpush1.msra.mxu0 0.0
        %5084 = vmatprep.subr.mxu0 0.0
        %5085 = vmatpush1.msra.mxu0 0.0
        %5086 = vmatprep.subr.mxu0 0.0
        %5087 = vmatpush1.msra.mxu0 0.0
        %5088 = vmatprep.subr.mxu0 0.0
        %5089 = vmatpush1.msra.mxu0 0.0
        %5090 = vmatprep.subr.mxu0 0.0
        %5091 = vmatpush1.msra.mxu0 0.0
        %5092 = vmatprep.subr.mxu0 0.0
        %5093 = vmatpush1.msra.mxu0 0.0
        %5094 = vmatprep.subr.mxu0 0.0
        %5095 = vmatpush1.msra.mxu0 0.0
        %5096 = vmatprep.subr.mxu0 0.0
        %5097 = vmatpush1.msra.mxu0 0.0
        %5098 = vmatprep.subr.mxu0 0.0
        %5099 = vmatpush1.msra.mxu0 0.0
        %5100 = vmatprep.subr.mxu0 0.0
        %5101 = vmatpush1.msra.mxu0 0.0
        %5102 = vmatprep.subr.mxu0 0.0
        %5103 = vmatpush1.msra.mxu0 0.0
        %5104 = vmatprep.subr.mxu0 0.0
        %5105 = vmatpush1.msra.mxu0 0.0
        %5106 = vmatprep.subr.mxu0 0.0
        %5107 = vmatpush1.msra.mxu0 0.0
        %5108 = vmatprep.mubr.f32.mxu0 0.0
        %5109 = vmatmul.mubr.f32.gmra.mrb[0].mxu0 %v4809
        %v5110 = vpop.f32.mrb[0].mxu0
        %v5111 = vadd.f32 %v4802, %v5110
        %v5112 = vpop.f32.mrb[0].mxu0
        %v5113 = vadd.f32 %v4802, %v5112
        %5114 = vmatprep.mubr.f32.mxu0 0.0
        %5115 = vmatmul.mubr.f32.gmra.mrb[0].mxu0 %v4811
        %v5116 = vpop.f32.mrb[0].mxu0
        %v5117 = vadd.f32 %v4807, %v5116
        %v5118 = vpop.f32.mrb[0].mxu0
        %v5119 = vadd.f32 %v4807, %v5118
        %5120 = vdwg.mxu0
        %v5121 = vadd.f32 %v1065, %v4880
        %v5122 = vadd.f32 %v1067, %v4882
        %v5123 = vadd.f32 %v1142, %v4957
        %v5124 = vadd.f32 %v1144, %v4959
        %v5125 = vadd.f32 %v1219, %v5034
        %v5126 = vadd.f32 %v1221, %v5036
        %v5127 = vadd.f32 %v1296, %v5111
        %v5128 = vadd.f32 %v1298, %v5113
        %v5129 = vadd.f32 %v1071, %v4886
        %v5130 = vadd.f32 %v1073, %v4888
        %v5131 = vadd.f32 %v1148, %v4963
        %v5132 = vadd.f32 %v1150, %v4965
        %v5133 = vadd.f32 %v1225, %v5040
        %v5134 = vadd.f32 %v1227, %v5042
        %v5135 = vadd.f32 %v1302, %v5117
        %v5136 = vadd.f32 %v1304, %v5119
        %v5137 = vadd.f32 %v5121, %v5129
        %v5138 = vrot.slane %v5137, 4
        %v5139 = vadd.f32 %v5137, %v5138
        %v5140 = vrot.slane %v5139, 2
        %v5141 = vadd.f32 %v5139, %v5140
        %v5142 = vrot.slane %v5141, 1
        %v5143 = vadd.f32 %v5141, %v5142
        %v5144 = vadd.f32 %v5122, %v5130
        %v5145 = vrot.slane %v5144, 4
        %v5146 = vadd.f32 %v5144, %v5145
        %v5147 = vrot.slane %v5146, 2
        %v5148 = vadd.f32 %v5146, %v5147
        %v5149 = vrot.slane %v5148, 1
        %v5150 = vadd.f32 %v5148, %v5149
        %v5151 = vadd.f32 %v5123, %v5131
        %v5152 = vrot.slane %v5151, 4
        %v5153 = vadd.f32 %v5151, %v5152
        %v5154 = vrot.slane %v5153, 2
        %v5155 = vadd.f32 %v5153, %v5154
        %v5156 = vrot.slane %v5155, 1
        %v5157 = vadd.f32 %v5155, %v5156
        %v5158 = vadd.f32 %v5124, %v5132
        %v5159 = vrot.slane %v5158, 4
        %v5160 = vadd.f32 %v5158, %v5159
        %v5161 = vrot.slane %v5160, 2
        %v5162 = vadd.f32 %v5160, %v5161
        %v5163 = vrot.slane %v5162, 1
        %v5164 = vadd.f32 %v5162, %v5163
        %v5165 = vadd.f32 %v5125, %v5133
        %v5166 = vrot.slane %v5165, 4
        %v5167 = vadd.f32 %v5165, %v5166
        %v5168 = vrot.slane %v5167, 2
        %v5169 = vadd.f32 %v5167, %v5168
        %v5170 = vrot.slane %v5169, 1
        %v5171 = vadd.f32 %v5169, %v5170
        %v5172 = vadd.f32 %v5126, %v5134
        %v5173 = vrot.slane %v5172, 4
        %v5174 = vadd.f32 %v5172, %v5173
        %v5175 = vrot.slane %v5174, 2
        %v5176 = vadd.f32 %v5174, %v5175
        %v5177 = vrot.slane %v5176, 1
        %v5178 = vadd.f32 %v5176, %v5177
        %v5179 = vadd.f32 %v5127, %v5135
        %v5180 = vrot.slane %v5179, 4
        %v5181 = vadd.f32 %v5179, %v5180
        %v5182 = vrot.slane %v5181, 2
        %v5183 = vadd.f32 %v5181, %v5182
        %v5184 = vrot.slane %v5183, 1
        %v5185 = vadd.f32 %v5183, %v5184
        %v5186 = vadd.f32 %v5128, %v5136
        %v5187 = vrot.slane %v5186, 4
        %v5188 = vadd.f32 %v5186, %v5187
        %v5189 = vrot.slane %v5188, 2
        %v5190 = vadd.f32 %v5188, %v5189
        %v5191 = vrot.slane %v5190, 1
        %v5192 = vadd.f32 %v5190, %v5191
        %v5193 = vmul.f32 %v5143, %v1362
        %v5194 = vmul.f32 %v5150, %v1362
        %v5195 = vmul.f32 %v5157, %v1362
        %v5196 = vmul.f32 %v5164, %v1362
        %v5197 = vmul.f32 %v5171, %v1362
        %v5198 = vmul.f32 %v5178, %v1362
        %v5199 = vmul.f32 %v5185, %v1362
        %v5200 = vmul.f32 %v5192, %v1362
        %v5201 = vsub.f32 %v5121, %v5193
        %v5202 = vsub.f32 %v5122, %v5194
        %v5203 = vsub.f32 %v5123, %v5195
        %v5204 = vsub.f32 %v5124, %v5196
        %v5205 = vsub.f32 %v5125, %v5197
        %v5206 = vsub.f32 %v5126, %v5198
        %v5207 = vsub.f32 %v5127, %v5199
        %v5208 = vsub.f32 %v5128, %v5200
        %v5209 = vsub.f32 %v5129, %v5193
        %v5210 = vsub.f32 %v5130, %v5194
        %v5211 = vsub.f32 %v5131, %v5195
        %v5212 = vsub.f32 %v5132, %v5196
        %v5213 = vsub.f32 %v5133, %v5197
        %v5214 = vsub.f32 %v5134, %v5198
        %v5215 = vsub.f32 %v5135, %v5199
        %v5216 = vsub.f32 %v5136, %v5200
        %v5217 = vmul.f32 %v5201, %v5201
        %v5218 = vmul.f32 %v5202, %v5202
        %v5219 = vmul.f32 %v5203, %v5203
        %v5220 = vmul.f32 %v5204, %v5204
        %v5221 = vmul.f32 %v5205, %v5205
        %v5222 = vmul.f32 %v5206, %v5206
        %v5223 = vmul.f32 %v5207, %v5207
        %v5224 = vmul.f32 %v5208, %v5208
        %v5225 = vmul.f32 %v5209, %v5209
        %v5226 = vmul.f32 %v5210, %v5210
        %v5227 = vmul.f32 %v5211, %v5211
        %v5228 = vmul.f32 %v5212, %v5212
        %v5229 = vmul.f32 %v5213, %v5213
        %v5230 = vmul.f32 %v5214, %v5214
        %v5231 = vmul.f32 %v5215, %v5215
        %v5232 = vmul.f32 %v5216, %v5216
        %v5233 = vadd.f32 %v5217, %v5225
        %v5234 = vrot.slane %v5233, 4
        %v5235 = vadd.f32 %v5233, %v5234
        %v5236 = vrot.slane %v5235, 2
        %v5237 = vadd.f32 %v5235, %v5236
        %v5238 = vrot.slane %v5237, 1
        %v5239 = vadd.f32 %v5237, %v5238
        %v5240 = vadd.f32 %v5218, %v5226
        %v5241 = vrot.slane %v5240, 4
        %v5242 = vadd.f32 %v5240, %v5241
        %v5243 = vrot.slane %v5242, 2
        %v5244 = vadd.f32 %v5242, %v5243
        %v5245 = vrot.slane %v5244, 1
        %v5246 = vadd.f32 %v5244, %v5245
        %v5247 = vadd.f32 %v5219, %v5227
        %v5248 = vrot.slane %v5247, 4
        %v5249 = vadd.f32 %v5247, %v5248
        %v5250 = vrot.slane %v5249, 2
        %v5251 = vadd.f32 %v5249, %v5250
        %v5252 = vrot.slane %v5251, 1
        %v5253 = vadd.f32 %v5251, %v5252
        %v5254 = vadd.f32 %v5220, %v5228
        %v5255 = vrot.slane %v5254, 4
        %v5256 = vadd.f32 %v5254, %v5255
        %v5257 = vrot.slane %v5256, 2
        %v5258 = vadd.f32 %v5256, %v5257
        %v5259 = vrot.slane %v5258, 1
        %v5260 = vadd.f32 %v5258, %v5259
        %v5261 = vadd.f32 %v5221, %v5229
        %v5262 = vrot.slane %v5261, 4
        %v5263 = vadd.f32 %v5261, %v5262
        %v5264 = vrot.slane %v5263, 2
        %v5265 = vadd.f32 %v5263, %v5264
        %v5266 = vrot.slane %v5265, 1
        %v5267 = vadd.f32 %v5265, %v5266
        %v5268 = vadd.f32 %v5222, %v5230
        %v5269 = vrot.slane %v5268, 4
        %v5270 = vadd.f32 %v5268, %v5269
        %v5271 = vrot.slane %v5270, 2
        %v5272 = vadd.f32 %v5270, %v5271
        %v5273 = vrot.slane %v5272, 1
        %v5274 = vadd.f32 %v5272, %v5273
        %v5275 = vadd.f32 %v5223, %v5231
        %v5276 = vrot.slane %v5275, 4
        %v5277 = vadd.f32 %v5275, %v5276
        %v5278 = vrot.slane %v5277, 2
        %v5279 = vadd.f32 %v5277, %v5278
        %v5280 = vrot.slane %v5279, 1
        %v5281 = vadd.f32 %v5279, %v5280
        %v5282 = vadd.f32 %v5224, %v5232
        %v5283 = vrot.slane %v5282, 4
        %v5284 = vadd.f32 %v5282, %v5283
        %v5285 = vrot.slane %v5284, 2
        %v5286 = vadd.f32 %v5284, %v5285
        %v5287 = vrot.slane %v5286, 1
        %v5288 = vadd.f32 %v5286, %v5287
        %v5289 = vmul.f32 %v5239, %v1362
        %v5290 = vmul.f32 %v5246, %v1362
        %v5291 = vmul.f32 %v5253, %v1362
        %v5292 = vmul.f32 %v5260, %v1362
        %v5293 = vmul.f32 %v5267, %v1362
        %v5294 = vmul.f32 %v5274, %v1362
        %v5295 = vmul.f32 %v5281, %v1362
        %v5296 = vmul.f32 %v5288, %v1362
        %v5297 = vadd.f32 %v5289, 1e-06
        %v5298 = vadd.f32 %v5290, 1e-06
        %v5299 = vadd.f32 %v5291, 1e-06
        %v5300 = vadd.f32 %v5292, 1e-06
        %v5301 = vadd.f32 %v5293, 1e-06
        %v5302 = vadd.f32 %v5294, 1e-06
        %v5303 = vadd.f32 %v5295, 1e-06
        %v5304 = vadd.f32 %v5296, 1e-06
        %v5305 = vrsqrt.pop %v5297
        %v5306 = vrsqrt.pop %v5298
        %v5307 = vrsqrt.pop %v5299
        %v5308 = vrsqrt.pop %v5300
        %v5309 = vrsqrt.pop %v5301
        %v5310 = vrsqrt.pop %v5302
        %v5311 = vrsqrt.pop %v5303
        %v5312 = vrsqrt.pop %v5304
        %v5313 = vmul.f32 %v5201, %v5305
        %v5314 = vmul.f32 %v5202, %v5306
        %v5315 = vmul.f32 %v5203, %v5307
        %v5316 = vmul.f32 %v5204, %v5308
        %v5317 = vmul.f32 %v5205, %v5309
        %v5318 = vmul.f32 %v5206, %v5310
        %v5319 = vmul.f32 %v5207, %v5311
        %v5320 = vmul.f32 %v5208, %v5312
        %v5321 = vmul.f32 %v5209, %v5305
        %v5322 = vmul.f32 %v5210, %v5306
        %v5323 = vmul.f32 %v5211, %v5307
        %v5324 = vmul.f32 %v5212, %v5308
        %v5325 = vmul.f32 %v5213, %v5309
        %v5326 = vmul.f32 %v5214, %v5310
        %v5327 = vmul.f32 %v5215, %v5311
        %v5328 = vmul.f32 %v5216, %v5312
        %v5329 = vld [vmem:[%s2 + $0xe0] sm:$0xff]
        %v5330 = vld [vmem:[%s2 + $0xf0] sm:$0xff]
        %v5331 = vld [vmem:[%s2 + $0x100] sm:$0xff]
        %v5332 = vld [vmem:[%s2 + $0x110] sm:$0xff]
        %5334 = vset.pattern.permute.xlu0 16
        %5335 = vperm.xlu0 %5334, %v5329
        %v5336 = vpop.permute.xlu0 %5335
        %5339 = vset.pattern.permute.xlu0 16
        %5340 = vperm.xlu0 %5339, %v5330
        %v5341 = vpop.permute.xlu0 %5340
        %5344 = vset.pattern.permute.xlu0 16
        %5345 = vperm.xlu0 %5344, %v5331
        %v5346 = vpop.permute.xlu0 %5345
        %5349 = vset.pattern.permute.xlu0 16
        %5350 = vperm.xlu0 %5349, %v5332
        %v5351 = vpop.permute.xlu0 %5350
        %v5353 = vsel %vm1523, %v5329, 0
        %v5355 = vsel %vm1523, %v5330, 0
        %v5357 = vsel %vm1523, %v5331, 0
        %v5359 = vsel %vm1523, %v5332, 0
        %5361 = vmatprep.subr.mxu0 %v5314
        %5362 = vmatpush1.msra.mxu0 %v5313
        %5363 = vmatprep.subr.mxu0 %v5322
        %5364 = vmatpush1.msra.mxu0 %v5321
        %5365 = vmatprep.subr.mxu0 0.0
        %5366 = vmatpush1.msra.mxu0 0.0
        %5367 = vmatprep.subr.mxu0 0.0
        %5368 = vmatpush1.msra.mxu0 0.0
        %5369 = vmatprep.subr.mxu0 0.0
        %5370 = vmatpush1.msra.mxu0 0.0
        %5371 = vmatprep.subr.mxu0 0.0
        %5372 = vmatpush1.msra.mxu0 0.0
        %5373 = vmatprep.subr.mxu0 0.0
        %5374 = vmatpush1.msra.mxu0 0.0
        %5375 = vmatprep.subr.mxu0 0.0
        %5376 = vmatpush1.msra.mxu0 0.0
        %5377 = vmatprep.subr.mxu0 0.0
        %5378 = vmatpush1.msra.mxu0 0.0
        %5379 = vmatprep.subr.mxu0 0.0
        %5380 = vmatpush1.msra.mxu0 0.0
        %5381 = vmatprep.subr.mxu0 0.0
        %5382 = vmatpush1.msra.mxu0 0.0
        %5383 = vmatprep.subr.mxu0 0.0
        %5384 = vmatpush1.msra.mxu0 0.0
        %5385 = vmatprep.subr.mxu0 0.0
        %5386 = vmatpush1.msra.mxu0 0.0
        %5387 = vmatprep.subr.mxu0 0.0
        %5388 = vmatpush1.msra.mxu0 0.0
        %5389 = vmatprep.subr.mxu0 0.0
        %5390 = vmatpush1.msra.mxu0 0.0
        %5391 = vmatprep.subr.mxu0 0.0
        %5392 = vmatpush1.msra.mxu0 0.0
        %5393 = vmatprep.subr.mxu0 0.0
        %5394 = vmatpush1.msra.mxu0 0.0
        %5395 = vmatprep.subr.mxu0 0.0
        %5396 = vmatpush1.msra.mxu0 0.0
        %5397 = vmatprep.subr.mxu0 0.0
        %5398 = vmatpush1.msra.mxu0 0.0
        %5399 = vmatprep.subr.mxu0 0.0
        %5400 = vmatpush1.msra.mxu0 0.0
        %5401 = vmatprep.subr.mxu0 0.0
        %5402 = vmatpush1.msra.mxu0 0.0
        %5403 = vmatprep.subr.mxu0 0.0
        %5404 = vmatpush1.msra.mxu0 0.0
        %5405 = vmatprep.subr.mxu0 0.0
        %5406 = vmatpush1.msra.mxu0 0.0
        %5407 = vmatprep.subr.mxu0 0.0
        %5408 = vmatpush1.msra.mxu0 0.0
        %5409 = vmatprep.subr.mxu0 0.0
        %5410 = vmatpush1.msra.mxu0 0.0
        %5411 = vmatprep.subr.mxu0 0.0
        %5412 = vmatpush1.msra.mxu0 0.0
        %5413 = vmatprep.subr.mxu0 0.0
        %5414 = vmatpush1.msra.mxu0 0.0
        %5415 = vmatprep.subr.mxu0 0.0
        %5416 = vmatpush1.msra.mxu0 0.0
        %5417 = vmatprep.subr.mxu0 0.0
        %5418 = vmatpush1.msra.mxu0 0.0
        %5419 = vmatprep.subr.mxu0 0.0
        %5420 = vmatpush1.msra.mxu0 0.0
        %5421 = vmatprep.subr.mxu0 0.0
        %5422 = vmatpush1.msra.mxu0 0.0
        %5423 = vmatprep.subr.mxu0 0.0
        %5424 = vmatpush1.msra.mxu0 0.0
        %5425 = vmatprep.mubr.f32.mxu0 0.0
        %5426 = vmatmul.mubr.f32.gmra.mrb[0].mxu0 %v5353
        %v5427 = vpop.f32.mrb[0].mxu0
        %v5428 = vadd.f32 %v5336, %v5427
        %v5429 = vpop.f32.mrb[0].mxu0
        %v5430 = vadd.f32 %v5336, %v5429
        %5431 = vmatprep.mubr.f32.mxu0 0.0
        %5432 = vmatmul.mubr.f32.gmra.mrb[0].mxu0 %v5355
        %v5433 = vpop.f32.mrb[0].mxu0
        %v5434 = vadd.f32 %v5341, %v5433
        %v5435 = vpop.f32.mrb[0].mxu0
        %v5436 = vadd.f32 %v5341, %v5435
        %5437 = vmatprep.mubr.f32.mxu0 0.0
        %5438 = vmatmul.mubr.f32.gmra.mrb[0].mxu0 %v5357
        %v5439 = vpop.f32.mrb[0].mxu0
        %v5440 = vadd.f32 %v5346, %v5439
        %v5441 = vpop.f32.mrb[0].mxu0
        %v5442 = vadd.f32 %v5346, %v5441
        %5443 = vmatprep.mubr.f32.mxu0 0.0
        %5444 = vmatmul.mubr.f32.gmra.mrb[0].mxu0 %v5359
        %v5445 = vpop.f32.mrb[0].mxu0
        %v5446 = vadd.f32 %v5351, %v5445
        %v5447 = vpop.f32.mrb[0].mxu0
        %v5448 = vadd.f32 %v5351, %v5447
        %5449 = vdwg.mxu0
        %5450 = vmatprep.subr.mxu0 %v5316
        %5451 = vmatpush1.msra.mxu0 %v5315
        %5452 = vmatprep.subr.mxu0 %v5324
        %5453 = vmatpush1.msra.mxu0 %v5323
        %5454 = vmatprep.subr.mxu0 0.0
        %5455 = vmatpush1.msra.mxu0 0.0
        %5456 = vmatprep.subr.mxu0 0.0
        %5457 = vmatpush1.msra.mxu0 0.0
        %5458 = vmatprep.subr.mxu0 0.0
        %5459 = vmatpush1.msra.mxu0 0.0
        %5460 = vmatprep.subr.mxu0 0.0
        %5461 = vmatpush1.msra.mxu0 0.0
        %5462 = vmatprep.subr.mxu0 0.0
        %5463 = vmatpush1.msra.mxu0 0.0
        %5464 = vmatprep.subr.mxu0 0.0
        %5465 = vmatpush1.msra.mxu0 0.0
        %5466 = vmatprep.subr.mxu0 0.0
        %5467 = vmatpush1.msra.mxu0 0.0
        %5468 = vmatprep.subr.mxu0 0.0
        %5469 = vmatpush1.msra.mxu0 0.0
        %5470 = vmatprep.subr.mxu0 0.0
        %5471 = vmatpush1.msra.mxu0 0.0
        %5472 = vmatprep.subr.mxu0 0.0
        %5473 = vmatpush1.msra.mxu0 0.0
        %5474 = vmatprep.subr.mxu0 0.0
        %5475 = vmatpush1.msra.mxu0 0.0
        %5476 = vmatprep.subr.mxu0 0.0
        %5477 = vmatpush1.msra.mxu0 0.0
        %5478 = vmatprep.subr.mxu0 0.0
        %5479 = vmatpush1.msra.mxu0 0.0
        %5480 = vmatprep.subr.mxu0 0.0
        %5481 = vmatpush1.msra.mxu0 0.0
        %5482 = vmatprep.subr.mxu0 0.0
        %5483 = vmatpush1.msra.mxu0 0.0
        %5484 = vmatprep.subr.mxu0 0.0
        %5485 = vmatpush1.msra.mxu0 0.0
        %5486 = vmatprep.subr.mxu0 0.0
        %5487 = vmatpush1.msra.mxu0 0.0
        %5488 = vmatprep.subr.mxu0 0.0
        %5489 = vmatpush1.msra.mxu0 0.0
        %5490 = vmatprep.subr.mxu0 0.0
        %5491 = vmatpush1.msra.mxu0 0.0
        %5492 = vmatprep.subr.mxu0 0.0
        %5493 = vmatpush1.msra.mxu0 0.0
        %5494 = vmatprep.subr.mxu0 0.0
        %5495 = vmatpush1.msra.mxu0 0.0
        %5496 = vmatprep.subr.mxu0 0.0
        %5497 = vmatpush1.msra.mxu0 0.0
        %5498 = vmatprep.subr.mxu0 0.0
        %5499 = vmatpush1.msra.mxu0 0.0
        %5500 = vmatprep.subr.mxu0 0.0
        %5501 = vmatpush1.msra.mxu0 0.0
        %5502 = vmatprep.subr.mxu0 0.0
        %5503 = vmatpush1.msra.mxu0 0.0
        %5504 = vmatprep.subr.mxu0 0.0
        %5505 = vmatpush1.msra.mxu0 0.0
        %5506 = vmatprep.subr.mxu0 0.0
        %5507 = vmatpush1.msra.mxu0 0.0
        %5508 = vmatprep.subr.mxu0 0.0
        %5509 = vmatpush1.msra.mxu0 0.0
        %5510 = vmatprep.subr.mxu0 0.0
        %5511 = vmatpush1.msra.mxu0 0.0
        %5512 = vmatprep.subr.mxu0 0.0
        %5513 = vmatpush1.msra.mxu0 0.0
        %5514 = vmatprep.mubr.f32.mxu0 0.0
        %5515 = vmatmul.mubr.f32.gmra.mrb[0].mxu0 %v5353
        %v5516 = vpop.f32.mrb[0].mxu0
        %v5517 = vadd.f32 %v5336, %v5516
        %v5518 = vpop.f32.mrb[0].mxu0
        %v5519 = vadd.f32 %v5336, %v5518
        %5520 = vmatprep.mubr.f32.mxu0 0.0
        %5521 = vmatmul.mubr.f32.gmra.mrb[0].mxu0 %v5355
        %v5522 = vpop.f32.mrb[0].mxu0
        %v5523 = vadd.f32 %v5341, %v5522
        %v5524 = vpop.f32.mrb[0].mxu0
        %v5525 = vadd.f32 %v5341, %v5524
        %5526 = vmatprep.mubr.f32.mxu0 0.0
        %5527 = vmatmul.mubr.f32.gmra.mrb[0].mxu0 %v5357
        %v5528 = vpop.f32.mrb[0].mxu0
        %v5529 = vadd.f32 %v5346, %v5528
        %v5530 = vpop.f32.mrb[0].mxu0
        %v5531 = vadd.f32 %v5346, %v5530
        %5532 = vmatprep.mubr.f32.mxu0 0.0
        %5533 = vmatmul.mubr.f32.gmra.mrb[0].mxu0 %v5359
        %v5534 = vpop.f32.mrb[0].mxu0
        %v5535 = vadd.f32 %v5351, %v5534
        %v5536 = vpop.f32.mrb[0].mxu0
        %v5537 = vadd.f32 %v5351, %v5536
        %5538 = vdwg.mxu0
        %5539 = vmatprep.subr.mxu0 %v5318
        %5540 = vmatpush1.msra.mxu0 %v5317
        %5541 = vmatprep.subr.mxu0 %v5326
        %5542 = vmatpush1.msra.mxu0 %v5325
        %5543 = vmatprep.subr.mxu0 0.0
        %5544 = vmatpush1.msra.mxu0 0.0
        %5545 = vmatprep.subr.mxu0 0.0
        %5546 = vmatpush1.msra.mxu0 0.0
        %5547 = vmatprep.subr.mxu0 0.0
        %5548 = vmatpush1.msra.mxu0 0.0
        %5549 = vmatprep.subr.mxu0 0.0
        %5550 = vmatpush1.msra.mxu0 0.0
        %5551 = vmatprep.subr.mxu0 0.0
        %5552 = vmatpush1.msra.mxu0 0.0
        %5553 = vmatprep.subr.mxu0 0.0
        %5554 = vmatpush1.msra.mxu0 0.0
        %5555 = vmatprep.subr.mxu0 0.0
        %5556 = vmatpush1.msra.mxu0 0.0
        %5557 = vmatprep.subr.mxu0 0.0
        %5558 = vmatpush1.msra.mxu0 0.0
        %5559 = vmatprep.subr.mxu0 0.0
        %5560 = vmatpush1.msra.mxu0 0.0
        %5561 = vmatprep.subr.mxu0 0.0
        %5562 = vmatpush1.msra.mxu0 0.0
        %5563 = vmatprep.subr.mxu0 0.0
        %5564 = vmatpush1.msra.mxu0 0.0
        %5565 = vmatprep.subr.mxu0 0.0
        %5566 = vmatpush1.msra.mxu0 0.0
        %5567 = vmatprep.subr.mxu0 0.0
        %5568 = vmatpush1.msra.mxu0 0.0
        %5569 = vmatprep.subr.mxu0 0.0
        %5570 = vmatpush1.msra.mxu0 0.0
        %5571 = vmatprep.subr.mxu0 0.0
        %5572 = vmatpush1.msra.mxu0 0.0
        %5573 = vmatprep.subr.mxu0 0.0
        %5574 = vmatpush1.msra.mxu0 0.0
        %5575 = vmatprep.subr.mxu0 0.0
        %5576 = vmatpush1.msra.mxu0 0.0
        %5577 = vmatprep.subr.mxu0 0.0
        %5578 = vmatpush1.msra.mxu0 0.0
        %5579 = vmatprep.subr.mxu0 0.0
        %5580 = vmatpush1.msra.mxu0 0.0
        %5581 = vmatprep.subr.mxu0 0.0
        %5582 = vmatpush1.msra.mxu0 0.0
        %5583 = vmatprep.subr.mxu0 0.0
        %5584 = vmatpush1.msra.mxu0 0.0
        %5585 = vmatprep.subr.mxu0 0.0
        %5586 = vmatpush1.msra.mxu0 0.0
        %5587 = vmatprep.subr.mxu0 0.0
        %5588 = vmatpush1.msra.mxu0 0.0
        %5589 = vmatprep.subr.mxu0 0.0
        %5590 = vmatpush1.msra.mxu0 0.0
        %5591 = vmatprep.subr.mxu0 0.0
        %5592 = vmatpush1.msra.mxu0 0.0
        %5593 = vmatprep.subr.mxu0 0.0
        %5594 = vmatpush1.msra.mxu0 0.0
        %5595 = vmatprep.subr.mxu0 0.0
        %5596 = vmatpush1.msra.mxu0 0.0
        %5597 = vmatprep.subr.mxu0 0.0
        %5598 = vmatpush1.msra.mxu0 0.0
        %5599 = vmatprep.subr.mxu0 0.0
        %5600 = vmatpush1.msra.mxu0 0.0
        %5601 = vmatprep.subr.mxu0 0.0
        %5602 = vmatpush1.msra.mxu0 0.0
        %5603 = vmatprep.mubr.f32.mxu0 0.0
        %5604 = vmatmul.mubr.f32.gmra.mrb[0].mxu0 %v5353
        %v5605 = vpop.f32.mrb[0].mxu0
        %v5606 = vadd.f32 %v5336, %v5605
        %v5607 = vpop.f32.mrb[0].mxu0
        %v5608 = vadd.f32 %v5336, %v5607
        %5609 = vmatprep.mubr.f32.mxu0 0.0
        %5610 = vmatmul.mubr.f32.gmra.mrb[0].mxu0 %v5355
        %v5611 = vpop.f32.mrb[0].mxu0
        %v5612 = vadd.f32 %v5341, %v5611
        %v5613 = vpop.f32.mrb[0].mxu0
        %v5614 = vadd.f32 %v5341, %v5613
        %5615 = vmatprep.mubr.f32.mxu0 0.0
        %5616 = vmatmul.mubr.f32.gmra.mrb[0].mxu0 %v5357
        %v5617 = vpop.f32.mrb[0].mxu0
        %v5618 = vadd.f32 %v5346, %v5617
        %v5619 = vpop.f32.mrb[0].mxu0
        %v5620 = vadd.f32 %v5346, %v5619
        %5621 = vmatprep.mubr.f32.mxu0 0.0
        %5622 = vmatmul.mubr.f32.gmra.mrb[0].mxu0 %v5359
        %v5623 = vpop.f32.mrb[0].mxu0
        %v5624 = vadd.f32 %v5351, %v5623
        %v5625 = vpop.f32.mrb[0].mxu0
        %v5626 = vadd.f32 %v5351, %v5625
        %5627 = vdwg.mxu0
        %5628 = vmatprep.subr.mxu0 %v5320
        %5629 = vmatpush1.msra.mxu0 %v5319
        %5630 = vmatprep.subr.mxu0 %v5328
        %5631 = vmatpush1.msra.mxu0 %v5327
        %5632 = vmatprep.subr.mxu0 0.0
        %5633 = vmatpush1.msra.mxu0 0.0
        %5634 = vmatprep.subr.mxu0 0.0
        %5635 = vmatpush1.msra.mxu0 0.0
        %5636 = vmatprep.subr.mxu0 0.0
        %5637 = vmatpush1.msra.mxu0 0.0
        %5638 = vmatprep.subr.mxu0 0.0
        %5639 = vmatpush1.msra.mxu0 0.0
        %5640 = vmatprep.subr.mxu0 0.0
        %5641 = vmatpush1.msra.mxu0 0.0
        %5642 = vmatprep.subr.mxu0 0.0
        %5643 = vmatpush1.msra.mxu0 0.0
        %5644 = vmatprep.subr.mxu0 0.0
        %5645 = vmatpush1.msra.mxu0 0.0
        %5646 = vmatprep.subr.mxu0 0.0
        %5647 = vmatpush1.msra.mxu0 0.0
        %5648 = vmatprep.subr.mxu0 0.0
        %5649 = vmatpush1.msra.mxu0 0.0
        %5650 = vmatprep.subr.mxu0 0.0
        %5651 = vmatpush1.msra.mxu0 0.0
        %5652 = vmatprep.subr.mxu0 0.0
        %5653 = vmatpush1.msra.mxu0 0.0
        %5654 = vmatprep.subr.mxu0 0.0
        %5655 = vmatpush1.msra.mxu0 0.0
        %5656 = vmatprep.subr.mxu0 0.0
        %5657 = vmatpush1.msra.mxu0 0.0
        %5658 = vmatprep.subr.mxu0 0.0
        %5659 = vmatpush1.msra.mxu0 0.0
        %5660 = vmatprep.subr.mxu0 0.0
        %5661 = vmatpush1.msra.mxu0 0.0
        %5662 = vmatprep.subr.mxu0 0.0
        %5663 = vmatpush1.msra.mxu0 0.0
        %5664 = vmatprep.subr.mxu0 0.0
        %5665 = vmatpush1.msra.mxu0 0.0
        %5666 = vmatprep.subr.mxu0 0.0
        %5667 = vmatpush1.msra.mxu0 0.0
        %5668 = vmatprep.subr.mxu0 0.0
        %5669 = vmatpush1.msra.mxu0 0.0
        %5670 = vmatprep.subr.mxu0 0.0
        %5671 = vmatpush1.msra.mxu0 0.0
        %5672 = vmatprep.subr.mxu0 0.0
        %5673 = vmatpush1.msra.mxu0 0.0
        %5674 = vmatprep.subr.mxu0 0.0
        %5675 = vmatpush1.msra.mxu0 0.0
        %5676 = vmatprep.subr.mxu0 0.0
        %5677 = vmatpush1.msra.mxu0 0.0
        %5678 = vmatprep.subr.mxu0 0.0
        %5679 = vmatpush1.msra.mxu0 0.0
        %5680 = vmatprep.subr.mxu0 0.0
        %5681 = vmatpush1.msra.mxu0 0.0
        %5682 = vmatprep.subr.mxu0 0.0
        %5683 = vmatpush1.msra.mxu0 0.0
        %5684 = vmatprep.subr.mxu0 0.0
        %5685 = vmatpush1.msra.mxu0 0.0
        %5686 = vmatprep.subr.mxu0 0.0
        %5687 = vmatpush1.msra.mxu0 0.0
        %5688 = vmatprep.subr.mxu0 0.0
        %5689 = vmatpush1.msra.mxu0 0.0
        %5690 = vmatprep.subr.mxu0 0.0
        %5691 = vmatpush1.msra.mxu0 0.0
        %5692 = vmatprep.mubr.f32.mxu0 0.0
        %5693 = vmatmul.mubr.f32.gmra.mrb[0].mxu0 %v5353
        %v5694 = vpop.f32.mrb[0].mxu0
        %v5695 = vadd.f32 %v5336, %v5694
        %v5696 = vpop.f32.mrb[0].mxu0
        %v5697 = vadd.f32 %v5336, %v5696
        %5698 = vmatprep.mubr.f32.mxu0 0.0
        %5699 = vmatmul.mubr.f32.gmra.mrb[0].mxu0 %v5355
        %v5700 = vpop.f32.mrb[0].mxu0
        %v5701 = vadd.f32 %v5341, %v5700
        %v5702 = vpop.f32.mrb[0].mxu0
        %v5703 = vadd.f32 %v5341, %v5702
        %5704 = vmatprep.mubr.f32.mxu0 0.0
        %5705 = vmatmul.mubr.f32.gmra.mrb[0].mxu0 %v5357
        %v5706 = vpop.f32.mrb[0].mxu0
        %v5707 = vadd.f32 %v5346, %v5706
        %v5708 = vpop.f32.mrb[0].mxu0
        %v5709 = vadd.f32 %v5346, %v5708
        %5710 = vmatprep.mubr.f32.mxu0 0.0
        %5711 = vmatmul.mubr.f32.gmra.mrb[0].mxu0 %v5359
        %v5712 = vpop.f32.mrb[0].mxu0
        %v5713 = vadd.f32 %v5351, %v5712
        %v5714 = vpop.f32.mrb[0].mxu0
        %v5715 = vadd.f32 %v5351, %v5714
        %5716 = vdwg.mxu0
        %v5717 = vmul.f32 %v5428, %v5440
        %v5718 = vmul.f32 %v5430, %v5442
        %v5719 = vmul.f32 %v5517, %v5529
        %v5720 = vmul.f32 %v5519, %v5531
        %v5721 = vmul.f32 %v5606, %v5618
        %v5722 = vmul.f32 %v5608, %v5620
        %v5723 = vmul.f32 %v5695, %v5707
        %v5724 = vmul.f32 %v5697, %v5709
        %v5725 = vmul.f32 %v5434, %v5446
        %v5726 = vmul.f32 %v5436, %v5448
        %v5727 = vmul.f32 %v5523, %v5535
        %v5728 = vmul.f32 %v5525, %v5537
        %v5729 = vmul.f32 %v5612, %v5624
        %v5730 = vmul.f32 %v5614, %v5626
        %v5731 = vmul.f32 %v5701, %v5713
        %v5732 = vmul.f32 %v5703, %v5715
        %v5733 = vld [vmem:[%s2 + $0x120] sm:$0xff]
        %v5734 = vld [vmem:[%s2 + $0x130] sm:$0xff]
        %5736 = vset.pattern.permute.xlu0 16
        %5737 = vperm.xlu0 %5736, %v5733
        %v5738 = vpop.permute.xlu0 %5737
        %5741 = vset.pattern.permute.xlu0 16
        %5742 = vperm.xlu0 %5741, %v5734
        %v5743 = vpop.permute.xlu0 %5742
        %v5745 = vsel %vm1523, %v5733, 0
        %v5747 = vsel %vm1523, %v5734, 0
        %5749 = vmatprep.subr.mxu0 %v5718
        %5750 = vmatpush1.msra.mxu0 %v5717
        %5751 = vmatprep.subr.mxu0 %v5726
        %5752 = vmatpush1.msra.mxu0 %v5725
        %5753 = vmatprep.subr.mxu0 0.0
        %5754 = vmatpush1.msra.mxu0 0.0
        %5755 = vmatprep.subr.mxu0 0.0
        %5756 = vmatpush1.msra.mxu0 0.0
        %5757 = vmatprep.subr.mxu0 0.0
        %5758 = vmatpush1.msra.mxu0 0.0
        %5759 = vmatprep.subr.mxu0 0.0
        %5760 = vmatpush1.msra.mxu0 0.0
        %5761 = vmatprep.subr.mxu0 0.0
        %5762 = vmatpush1.msra.mxu0 0.0
        %5763 = vmatprep.subr.mxu0 0.0
        %5764 = vmatpush1.msra.mxu0 0.0
        %5765 = vmatprep.subr.mxu0 0.0
        %5766 = vmatpush1.msra.mxu0 0.0
        %5767 = vmatprep.subr.mxu0 0.0
        %5768 = vmatpush1.msra.mxu0 0.0
        %5769 = vmatprep.subr.mxu0 0.0
        %5770 = vmatpush1.msra.mxu0 0.0
        %5771 = vmatprep.subr.mxu0 0.0
        %5772 = vmatpush1.msra.mxu0 0.0
        %5773 = vmatprep.subr.mxu0 0.0
        %5774 = vmatpush1.msra.mxu0 0.0
        %5775 = vmatprep.subr.mxu0 0.0
        %5776 = vmatpush1.msra.mxu0 0.0
        %5777 = vmatprep.subr.mxu0 0.0
        %5778 = vmatpush1.msra.mxu0 0.0
        %5779 = vmatprep.subr.mxu0 0.0
        %5780 = vmatpush1.msra.mxu0 0.0
        %5781 = vmatprep.subr.mxu0 0.0
        %5782 = vmatpush1.msra.mxu0 0.0
        %5783 = vmatprep.subr.mxu0 0.0
        %5784 = vmatpush1.msra.mxu0 0.0
        %5785 = vmatprep.subr.mxu0 0.0
        %5786 = vmatpush1.msra.mxu0 0.0
        %5787 = vmatprep.subr.mxu0 0.0
        %5788 = vmatpush1.msra.mxu0 0.0
        %5789 = vmatprep.subr.mxu0 0.0
        %5790 = vmatpush1.msra.mxu0 0.0
        %5791 = vmatprep.subr.mxu0 0.0
        %5792 = vmatpush1.msra.mxu0 0.0
        %5793 = vmatprep.subr.mxu0 0.0
        %5794 = vmatpush1.msra.mxu0 0.0
        %5795 = vmatprep.subr.mxu0 0.0
        %5796 = vmatpush1.msra.mxu0 0.0
        %5797 = vmatprep.subr.mxu0 0.0
        %5798 = vmatpush1.msra.mxu0 0.0
        %5799 = vmatprep.subr.mxu0 0.0
        %5800 = vmatpush1.msra.mxu0 0.0
        %5801 = vmatprep.subr.mxu0 0.0
        %5802 = vmatpush1.msra.mxu0 0.0
        %5803 = vmatprep.subr.mxu0 0.0
        %5804 = vmatpush1.msra.mxu0 0.0
        %5805 = vmatprep.subr.mxu0 0.0
        %5806 = vmatpush1.msra.mxu0 0.0
        %5807 = vmatprep.subr.mxu0 0.0
        %5808 = vmatpush1.msra.mxu0 0.0
        %5809 = vmatprep.subr.mxu0 0.0
        %5810 = vmatpush1.msra.mxu0 0.0
        %5811 = vmatprep.subr.mxu0 0.0
        %5812 = vmatpush1.msra.mxu0 0.0
        %5813 = vmatprep.mubr.f32.mxu0 0.0
        %5814 = vmatmul.mubr.f32.gmra.mrb[0].mxu0 %v5745
        %v5815 = vpop.f32.mrb[0].mxu0
        %v5816 = vadd.f32 %v5738, %v5815
        %v5817 = vpop.f32.mrb[0].mxu0
        %v5818 = vadd.f32 %v5738, %v5817
        %5819 = vmatprep.mubr.f32.mxu0 0.0
        %5820 = vmatmul.mubr.f32.gmra.mrb[0].mxu0 %v5747
        %v5821 = vpop.f32.mrb[0].mxu0
        %v5822 = vadd.f32 %v5743, %v5821
        %v5823 = vpop.f32.mrb[0].mxu0
        %v5824 = vadd.f32 %v5743, %v5823
        %5825 = vdwg.mxu0
        %5826 = vmatprep.subr.mxu0 %v5720
        %5827 = vmatpush1.msra.mxu0 %v5719
        %5828 = vmatprep.subr.mxu0 %v5728
        %5829 = vmatpush1.msra.mxu0 %v5727
        %5830 = vmatprep.subr.mxu0 0.0
        %5831 = vmatpush1.msra.mxu0 0.0
        %5832 = vmatprep.subr.mxu0 0.0
        %5833 = vmatpush1.msra.mxu0 0.0
        %5834 = vmatprep.subr.mxu0 0.0
        %5835 = vmatpush1.msra.mxu0 0.0
        %5836 = vmatprep.subr.mxu0 0.0
        %5837 = vmatpush1.msra.mxu0 0.0
        %5838 = vmatprep.subr.mxu0 0.0
        %5839 = vmatpush1.msra.mxu0 0.0
        %5840 = vmatprep.subr.mxu0 0.0
        %5841 = vmatpush1.msra.mxu0 0.0
        %5842 = vmatprep.subr.mxu0 0.0
        %5843 = vmatpush1.msra.mxu0 0.0
        %5844 = vmatprep.subr.mxu0 0.0
        %5845 = vmatpush1.msra.mxu0 0.0
        %5846 = vmatprep.subr.mxu0 0.0
        %5847 = vmatpush1.msra.mxu0 0.0
        %5848 = vmatprep.subr.mxu0 0.0
        %5849 = vmatpush1.msra.mxu0 0.0
        %5850 = vmatprep.subr.mxu0 0.0
        %5851 = vmatpush1.msra.mxu0 0.0
        %5852 = vmatprep.subr.mxu0 0.0
        %5853 = vmatpush1.msra.mxu0 0.0
        %5854 = vmatprep.subr.mxu0 0.0
        %5855 = vmatpush1.msra.mxu0 0.0
        %5856 = vmatprep.subr.mxu0 0.0
        %5857 = vmatpush1.msra.mxu0 0.0
        %5858 = vmatprep.subr.mxu0 0.0
        %5859 = vmatpush1.msra.mxu0 0.0
        %5860 = vmatprep.subr.mxu0 0.0
        %5861 = vmatpush1.msra.mxu0 0.0
        %5862 = vmatprep.subr.mxu0 0.0
        %5863 = vmatpush1.msra.mxu0 0.0
        %5864 = vmatprep.subr.mxu0 0.0
        %5865 = vmatpush1.msra.mxu0 0.0
        %5866 = vmatprep.subr.mxu0 0.0
        %5867 = vmatpush1.msra.mxu0 0.0
        %5868 = vmatprep.subr.mxu0 0.0
        %5869 = vmatpush1.msra.mxu0 0.0
        %5870 = vmatprep.subr.mxu0 0.0
        %5871 = vmatpush1.msra.mxu0 0.0
        %5872 = vmatprep.subr.mxu0 0.0
        %5873 = vmatpush1.msra.mxu0 0.0
        %5874 = vmatprep.subr.mxu0 0.0
        %5875 = vmatpush1.msra.mxu0 0.0
        %5876 = vmatprep.subr.mxu0 0.0
        %5877 = vmatpush1.msra.mxu0 0.0
        %5878 = vmatprep.subr.mxu0 0.0
        %5879 = vmatpush1.msra.mxu0 0.0
        %5880 = vmatprep.subr.mxu0 0.0
        %5881 = vmatpush1.msra.mxu0 0.0
        %5882 = vmatprep.subr.mxu0 0.0
        %5883 = vmatpush1.msra.mxu0 0.0
        %5884 = vmatprep.subr.mxu0 0.0
        %5885 = vmatpush1.msra.mxu0 0.0
        %5886 = vmatprep.subr.mxu0 0.0
        %5887 = vmatpush1.msra.mxu0 0.0
        %5888 = vmatprep.subr.mxu0 0.0
        %5889 = vmatpush1.msra.mxu0 0.0
        %5890 = vmatprep.mubr.f32.mxu0 0.0
        %5891 = vmatmul.mubr.f32.gmra.mrb[0].mxu0 %v5745
        %v5892 = vpop.f32.mrb[0].mxu0
        %v5893 = vadd.f32 %v5738, %v5892
        %v5894 = vpop.f32.mrb[0].mxu0
        %v5895 = vadd.f32 %v5738, %v5894
        %5896 = vmatprep.mubr.f32.mxu0 0.0
        %5897 = vmatmul.mubr.f32.gmra.mrb[0].mxu0 %v5747
        %v5898 = vpop.f32.mrb[0].mxu0
        %v5899 = vadd.f32 %v5743, %v5898
        %v5900 = vpop.f32.mrb[0].mxu0
        %v5901 = vadd.f32 %v5743, %v5900
        %5902 = vdwg.mxu0
        %5903 = vmatprep.subr.mxu0 %v5722
        %5904 = vmatpush1.msra.mxu0 %v5721
        %5905 = vmatprep.subr.mxu0 %v5730
        %5906 = vmatpush1.msra.mxu0 %v5729
        %5907 = vmatprep.subr.mxu0 0.0
        %5908 = vmatpush1.msra.mxu0 0.0
        %5909 = vmatprep.subr.mxu0 0.0
        %5910 = vmatpush1.msra.mxu0 0.0
        %5911 = vmatprep.subr.mxu0 0.0
        %5912 = vmatpush1.msra.mxu0 0.0
        %5913 = vmatprep.subr.mxu0 0.0
        %5914 = vmatpush1.msra.mxu0 0.0
        %5915 = vmatprep.subr.mxu0 0.0
        %5916 = vmatpush1.msra.mxu0 0.0
        %5917 = vmatprep.subr.mxu0 0.0
        %5918 = vmatpush1.msra.mxu0 0.0
        %5919 = vmatprep.subr.mxu0 0.0
        %5920 = vmatpush1.msra.mxu0 0.0
        %5921 = vmatprep.subr.mxu0 0.0
        %5922 = vmatpush1.msra.mxu0 0.0
        %5923 = vmatprep.subr.mxu0 0.0
        %5924 = vmatpush1.msra.mxu0 0.0
        %5925 = vmatprep.subr.mxu0 0.0
        %5926 = vmatpush1.msra.mxu0 0.0
        %5927 = vmatprep.subr.mxu0 0.0
        %5928 = vmatpush1.msra.mxu0 0.0
        %5929 = vmatprep.subr.mxu0 0.0
        %5930 = vmatpush1.msra.mxu0 0.0
        %5931 = vmatprep.subr.mxu0 0.0
        %5932 = vmatpush1.msra.mxu0 0.0
        %5933 = vmatprep.subr.mxu0 0.0
        %5934 = vmatpush1.msra.mxu0 0.0
        %5935 = vmatprep.subr.mxu0 0.0
        %5936 = vmatpush1.msra.mxu0 0.0
        %5937 = vmatprep.subr.mxu0 0.0
        %5938 = vmatpush1.msra.mxu0 0.0
        %5939 = vmatprep.subr.mxu0 0.0
        %5940 = vmatpush1.msra.mxu0 0.0
        %5941 = vmatprep.subr.mxu0 0.0
        %5942 = vmatpush1.msra.mxu0 0.0
        %5943 = vmatprep.subr.mxu0 0.0
        %5944 = vmatpush1.msra.mxu0 0.0
        %5945 = vmatprep.subr.mxu0 0.0
        %5946 = vmatpush1.msra.mxu0 0.0
        %5947 = vmatprep.subr.mxu0 0.0
        %5948 = vmatpush1.msra.mxu0 0.0
        %5949 = vmatprep.subr.mxu0 0.0
        %5950 = vmatpush1.msra.mxu0 0.0
        %5951 = vmatprep.subr.mxu0 0.0
        %5952 = vmatpush1.msra.mxu0 0.0
        %5953 = vmatprep.subr.mxu0 0.0
        %5954 = vmatpush1.msra.mxu0 0.0
        %5955 = vmatprep.subr.mxu0 0.0
        %5956 = vmatpush1.msra.mxu0 0.0
        %5957 = vmatprep.subr.mxu0 0.0
        %5958 = vmatpush1.msra.mxu0 0.0
        %5959 = vmatprep.subr.mxu0 0.0
        %5960 = vmatpush1.msra.mxu0 0.0
        %5961 = vmatprep.subr.mxu0 0.0
        %5962 = vmatpush1.msra.mxu0 0.0
        %5963 = vmatprep.subr.mxu0 0.0
        %5964 = vmatpush1.msra.mxu0 0.0
        %5965 = vmatprep.subr.mxu0 0.0
        %5966 = vmatpush1.msra.mxu0 0.0
        %5967 = vmatprep.mubr.f32.mxu0 0.0
        %5968 = vmatmul.mubr.f32.gmra.mrb[0].mxu0 %v5745
        %v5969 = vpop.f32.mrb[0].mxu0
        %v5970 = vadd.f32 %v5738, %v5969
        %v5971 = vpop.f32.mrb[0].mxu0
        %v5972 = vadd.f32 %v5738, %v5971
        %5973 = vmatprep.mubr.f32.mxu0 0.0
        %5974 = vmatmul.mubr.f32.gmra.mrb[0].mxu0 %v5747
        %v5975 = vpop.f32.mrb[0].mxu0
        %v5976 = vadd.f32 %v5743, %v5975
        %v5977 = vpop.f32.mrb[0].mxu0
        %v5978 = vadd.f32 %v5743, %v5977
        %5979 = vdwg.mxu0
        %5980 = vmatprep.subr.mxu0 %v5724
        %5981 = vmatpush1.msra.mxu0 %v5723
        %5982 = vmatprep.subr.mxu0 %v5732
        %5983 = vmatpush1.msra.mxu0 %v5731
        %5984 = vmatprep.subr.mxu0 0.0
        %5985 = vmatpush1.msra.mxu0 0.0
        %5986 = vmatprep.subr.mxu0 0.0
        %5987 = vmatpush1.msra.mxu0 0.0
        %5988 = vmatprep.subr.mxu0 0.0
        %5989 = vmatpush1.msra.mxu0 0.0
        %5990 = vmatprep.subr.mxu0 0.0
        %5991 = vmatpush1.msra.mxu0 0.0
        %5992 = vmatprep.subr.mxu0 0.0
        %5993 = vmatpush1.msra.mxu0 0.0
        %5994 = vmatprep.subr.mxu0 0.0
        %5995 = vmatpush1.msra.mxu0 0.0
        %5996 = vmatprep.subr.mxu0 0.0
        %5997 = vmatpush1.msra.mxu0 0.0
        %5998 = vmatprep.subr.mxu0 0.0
        %5999 = vmatpush1.msra.mxu0 0.0
        %6000 = vmatprep.subr.mxu0 0.0
        %6001 = vmatpush1.msra.mxu0 0.0
        %6002 = vmatprep.subr.mxu0 0.0
        %6003 = vmatpush1.msra.mxu0 0.0
        %6004 = vmatprep.subr.mxu0 0.0
        %6005 = vmatpush1.msra.mxu0 0.0
        %6006 = vmatprep.subr.mxu0 0.0
        %6007 = vmatpush1.msra.mxu0 0.0
        %6008 = vmatprep.subr.mxu0 0.0
        %6009 = vmatpush1.msra.mxu0 0.0
        %6010 = vmatprep.subr.mxu0 0.0
        %6011 = vmatpush1.msra.mxu0 0.0
        %6012 = vmatprep.subr.mxu0 0.0
        %6013 = vmatpush1.msra.mxu0 0.0
        %6014 = vmatprep.subr.mxu0 0.0
        %6015 = vmatpush1.msra.mxu0 0.0
        %6016 = vmatprep.subr.mxu0 0.0
        %6017 = vmatpush1.msra.mxu0 0.0
        %6018 = vmatprep.subr.mxu0 0.0
        %6019 = vmatpush1.msra.mxu0 0.0
        %6020 = vmatprep.subr.mxu0 0.0
        %6021 = vmatpush1.msra.mxu0 0.0
        %6022 = vmatprep.subr.mxu0 0.0
        %6023 = vmatpush1.msra.mxu0 0.0
        %6024 = vmatprep.subr.mxu0 0.0
        %6025 = vmatpush1.msra.mxu0 0.0
        %6026 = vmatprep.subr.mxu0 0.0
        %6027 = vmatpush1.msra.mxu0 0.0
        %6028 = vmatprep.subr.mxu0 0.0
        %6029 = vmatpush1.msra.mxu0 0.0
        %6030 = vmatprep.subr.mxu0 0.0
        %6031 = vmatpush1.msra.mxu0 0.0
        %6032 = vmatprep.subr.mxu0 0.0
        %6033 = vmatpush1.msra.mxu0 0.0
        %6034 = vmatprep.subr.mxu0 0.0
        %6035 = vmatpush1.msra.mxu0 0.0
        %6036 = vmatprep.subr.mxu0 0.0
        %6037 = vmatpush1.msra.mxu0 0.0
        %6038 = vmatprep.subr.mxu0 0.0
        %6039 = vmatpush1.msra.mxu0 0.0
        %6040 = vmatprep.subr.mxu0 0.0
        %6041 = vmatpush1.msra.mxu0 0.0
        %6042 = vmatprep.subr.mxu0 0.0
        %6043 = vmatpush1.msra.mxu0 0.0
        %6044 = vmatprep.mubr.f32.mxu0 0.0
        %6045 = vmatmul.mubr.f32.gmra.mrb[0].mxu0 %v5745
        %v6046 = vpop.f32.mrb[0].mxu0
        %v6047 = vadd.f32 %v5738, %v6046
        %v6048 = vpop.f32.mrb[0].mxu0
        %v6049 = vadd.f32 %v5738, %v6048
        %6050 = vmatprep.mubr.f32.mxu0 0.0
        %6051 = vmatmul.mubr.f32.gmra.mrb[0].mxu0 %v5747
        %v6052 = vpop.f32.mrb[0].mxu0
        %v6053 = vadd.f32 %v5743, %v6052
        %v6054 = vpop.f32.mrb[0].mxu0
        %v6055 = vadd.f32 %v5743, %v6054
        %6056 = vdwg.mxu0
        %v6057 = vadd.f32 %v5121, %v5816
        %v6058 = vadd.f32 %v5122, %v5818
        %v6059 = vadd.f32 %v5123, %v5893
        %v6060 = vadd.f32 %v5124, %v5895
        %v6061 = vadd.f32 %v5125, %v5970
        %v6062 = vadd.f32 %v5126, %v5972
        %v6063 = vadd.f32 %v5127, %v6047
        %v6064 = vadd.f32 %v5128, %v6049
        %v6065 = vadd.f32 %v5129, %v5822
        %v6066 = vadd.f32 %v5130, %v5824
        %v6067 = vadd.f32 %v5131, %v5899
        %v6068 = vadd.f32 %v5132, %v5901
        %v6069 = vadd.f32 %v5133, %v5976
        %v6070 = vadd.f32 %v5134, %v5978
        %v6071 = vadd.f32 %v5135, %v6053
        %v6072 = vadd.f32 %v5136, %v6055
        %6073 = vrot.lane.b32.xlu0 %v6057, 17
        %v6074 = vpop.permute.xlu0 %6073
        %6075 = vrot.lane.b32.xlu0 %v6065, 17
        %v6076 = vpop.permute.xlu0 %6075
        %6077 = vrot.lane.b32.xlu0 %v6058, 17
        %v6078 = vpop.permute.xlu0 %6077
        %6079 = vrot.lane.b32.xlu0 %v6066, 17
        %v6080 = vpop.permute.xlu0 %6079
        %6081 = vrot.lane.b32.xlu0 %v6059, 17
        %v6082 = vpop.permute.xlu0 %6081
        %6083 = vrot.lane.b32.xlu0 %v6067, 17
        %v6084 = vpop.permute.xlu0 %6083
        %6085 = vrot.lane.b32.xlu0 %v6060, 17
        %v6086 = vpop.permute.xlu0 %6085
        %6087 = vrot.lane.b32.xlu0 %v6068, 17
        %v6088 = vpop.permute.xlu0 %6087
        %6089 = vrot.lane.b32.xlu0 %v6061, 17
        %v6090 = vpop.permute.xlu0 %6089
        %6091 = vrot.lane.b32.xlu0 %v6069, 17
        %v6092 = vpop.permute.xlu0 %6091
        %6093 = vrot.lane.b32.xlu0 %v6062, 17
        %v6094 = vpop.permute.xlu0 %6093
        %6095 = vrot.lane.b32.xlu0 %v6070, 17
        %v6096 = vpop.permute.xlu0 %6095
        %6097 = vrot.lane.b32.xlu0 %v6063, 17
        %v6098 = vpop.permute.xlu0 %6097
        %6099 = vrot.lane.b32.xlu0 %v6071, 17
        %v6100 = vpop.permute.xlu0 %6099
        %6101 = vrot.lane.b32.xlu0 %v6064, 17
        %v6102 = vpop.permute.xlu0 %6101
        %6103 = vrot.lane.b32.xlu0 %v6072, 17
        %v6104 = vpop.permute.xlu0 %6103
        %v6105 = vsel %vm198, %v6098, %v6102
        %v6106 = vsel %vm198, %v6100, %v6104
        %v6107 = vsel %vm198, %v6094, %v6098
        %v6108 = vsel %vm198, %v6096, %v6100
        %v6109 = vsel %vm198, %v6090, %v6094
        %v6110 = vsel %vm198, %v6092, %v6096
        %v6111 = vsel %vm198, %v6086, %v6090
        %v6112 = vsel %vm198, %v6088, %v6092
        %v6113 = vsel %vm198, %v6082, %v6086
        %v6114 = vsel %vm198, %v6084, %v6088
        %v6115 = vsel %vm198, %v6078, %v6082
        %v6116 = vsel %vm198, %v6080, %v6084
        %v6117 = vsel %vm198, %v6074, %v6078
        %v6118 = vsel %vm198, %v6076, %v6080
        %v6119 = vsel %vm198, %v6102, %v6074
        %v6120 = vsel %vm198, %v6104, %v6076
        %v6121 = vmul.f32 %v6119, %v2095
        %v6122 = vmul.f32 %v6117, %v2099
        %v6123 = vmul.f32 %v6115, %v2103
        %v6124 = vmul.f32 %v6113, %v2107
        %v6125 = vmul.f32 %v6111, %v2111
        %v6126 = vmul.f32 %v6109, %v2115
        %v6127 = vmul.f32 %v6107, %v2119
        %v6128 = vmul.f32 %v6105, %v2123
        %v6129 = vmul.f32 %v6120, %v2095
        %v6130 = vmul.f32 %v6118, %v2099
        %v6131 = vmul.f32 %v6116, %v2103
        %v6132 = vmul.f32 %v6114, %v2107
        %v6133 = vmul.f32 %v6112, %v2111
        %v6134 = vmul.f32 %v6110, %v2115
        %v6135 = vmul.f32 %v6108, %v2119
        %v6136 = vmul.f32 %v6106, %v2123
        %6137 = vst [vmem:[#allocation2] sm:$0xff] %v6121
        %6138 = vst [vmem:[#allocation2 + $0x8] sm:$0xff] %v6122
        %6139 = vst [vmem:[#allocation2 + $0x10] sm:$0xff] %v6123
        %6140 = vst [vmem:[#allocation2 + $0x18] sm:$0xff] %v6124
        %6141 = vst [vmem:[#allocation2 + $0x20] sm:$0xff] %v6125
        %6142 = vst [vmem:[#allocation2 + $0x28] sm:$0xff] %v6126
        %6143 = vst [vmem:[#allocation2 + $0x30] sm:$0xff] %v6127
        %6144 = vst [vmem:[#allocation2 + $0x38] sm:$0xff] %v6128
        %6145 = vst [vmem:[#allocation2 + $0x40] sm:$0xff] %v6129
        %6146 = vst [vmem:[#allocation2 + $0x48] sm:$0xff] %v6130
        %6147 = vst [vmem:[#allocation2 + $0x50] sm:$0xff] %v6131
        %6148 = vst [vmem:[#allocation2 + $0x58] sm:$0xff] %v6132
        %6149 = vst [vmem:[#allocation2 + $0x60] sm:$0xff] %v6133
        %6150 = vst [vmem:[#allocation2 + $0x68] sm:$0xff] %v6134
        %6151 = vst [vmem:[#allocation2 + $0x70] sm:$0xff] %v6135
        %6152 = vst [vmem:[#allocation2 + $0x78] sm:$0xff] %v6136
        %6153 = vrot.lane.b32.xlu0 %v6057, 16
        %v6154 = vpop.permute.xlu0 %6153
        %6155 = vrot.lane.b32.xlu0 %v6065, 16
        %v6156 = vpop.permute.xlu0 %6155
        %6157 = vrot.lane.b32.xlu0 %v6058, 16
        %v6158 = vpop.permute.xlu0 %6157
        %6159 = vrot.lane.b32.xlu0 %v6066, 16
        %v6160 = vpop.permute.xlu0 %6159
        %6161 = vrot.lane.b32.xlu0 %v6059, 16
        %v6162 = vpop.permute.xlu0 %6161
        %6163 = vrot.lane.b32.xlu0 %v6067, 16
        %v6164 = vpop.permute.xlu0 %6163
        %6165 = vrot.lane.b32.xlu0 %v6060, 16
        %v6166 = vpop.permute.xlu0 %6165
        %6167 = vrot.lane.b32.xlu0 %v6068, 16
        %v6168 = vpop.permute.xlu0 %6167
        %6169 = vrot.lane.b32.xlu0 %v6061, 16
        %v6170 = vpop.permute.xlu0 %6169
        %6171 = vrot.lane.b32.xlu0 %v6069, 16
        %v6172 = vpop.permute.xlu0 %6171
        %6173 = vrot.lane.b32.xlu0 %v6062, 16
        %v6174 = vpop.permute.xlu0 %6173
        %6175 = vrot.lane.b32.xlu0 %v6070, 16
        %v6176 = vpop.permute.xlu0 %6175
        %6177 = vrot.lane.b32.xlu0 %v6063, 16
        %v6178 = vpop.permute.xlu0 %6177
        %6179 = vrot.lane.b32.xlu0 %v6071, 16
        %v6180 = vpop.permute.xlu0 %6179
        %6181 = vrot.lane.b32.xlu0 %v6064, 16
        %v6182 = vpop.permute.xlu0 %6181
        %6183 = vrot.lane.b32.xlu0 %v6072, 16
        %v6184 = vpop.permute.xlu0 %6183
        %v6185 = vsel %vm283, %v6178, %v6182
        %v6186 = vsel %vm283, %v6180, %v6184
        %v6187 = vsel %vm283, %v6174, %v6178
        %v6188 = vsel %vm283, %v6176, %v6180
        %v6189 = vsel %vm283, %v6170, %v6174
        %v6190 = vsel %vm283, %v6172, %v6176
        %v6191 = vsel %vm283, %v6166, %v6170
        %v6192 = vsel %vm283, %v6168, %v6172
        %v6193 = vsel %vm283, %v6162, %v6166
        %v6194 = vsel %vm283, %v6164, %v6168
        %v6195 = vsel %vm283, %v6158, %v6162
        %v6196 = vsel %vm283, %v6160, %v6164
        %v6197 = vsel %vm283, %v6154, %v6158
        %v6198 = vsel %vm283, %v6156, %v6160
        %v6199 = vsel %vm283, %v6182, %v6154
        %v6200 = vsel %vm283, %v6184, %v6156
        %v6201 = vld [vmem:[%s292] ss:$8 sm:$0xf]
        %v6202 = vld [vmem:[%s292] ss:$8 sm:$0xf0]
        %v6203 = vor.u32 %v6201, %v6202
        %v6205 = vlaneseq
        %v6206 = vshrl.u32 %v6205, 7
        %v6207 = vsub.s32 0, %v6206
        %v6208 = vrot.slane %v6203, %v6207
        %v6209 = vlaneseq
        %v6210 = vshrl.u32 %v6209, 7
        %v6211 = vsub.s32 1, %v6210
        %v6212 = vrot.slane %v6203, %v6211
        %v6213 = vlaneseq
        %v6214 = vshrl.u32 %v6213, 7
        %v6215 = vsub.s32 2, %v6214
        %v6216 = vrot.slane %v6203, %v6215
        %v6217 = vlaneseq
        %v6218 = vshrl.u32 %v6217, 7
        %v6219 = vsub.s32 3, %v6218
        %v6220 = vrot.slane %v6203, %v6219
        %v6221 = vlaneseq
        %v6222 = vshrl.u32 %v6221, 7
        %v6223 = vsub.s32 4, %v6222
        %v6224 = vrot.slane %v6203, %v6223
        %v6225 = vlaneseq
        %v6226 = vshrl.u32 %v6225, 7
        %v6227 = vsub.s32 5, %v6226
        %v6228 = vrot.slane %v6203, %v6227
        %v6229 = vlaneseq
        %v6230 = vshrl.u32 %v6229, 7
        %v6231 = vsub.s32 6, %v6230
        %v6232 = vrot.slane %v6203, %v6231
        %v6233 = vlaneseq
        %v6234 = vshrl.u32 %v6233, 7
        %v6235 = vsub.s32 7, %v6234
        %v6236 = vrot.slane %v6203, %v6235
        %v6245 = vmul.f32 %v6199, %v6208
        %v6246 = vmul.f32 %v6197, %v6212
        %v6247 = vmul.f32 %v6195, %v6216
        %v6248 = vmul.f32 %v6193, %v6220
        %v6249 = vmul.f32 %v6191, %v6224
        %v6250 = vmul.f32 %v6189, %v6228
        %v6251 = vmul.f32 %v6187, %v6232
        %v6252 = vmul.f32 %v6185, %v6236
        %v6253 = vmul.f32 %v6200, %v6208
        %v6254 = vmul.f32 %v6198, %v6212
        %v6255 = vmul.f32 %v6196, %v6216
        %v6256 = vmul.f32 %v6194, %v6220
        %v6257 = vmul.f32 %v6192, %v6224
        %v6258 = vmul.f32 %v6190, %v6228
        %v6259 = vmul.f32 %v6188, %v6232
        %v6260 = vmul.f32 %v6186, %v6236
        %6261 = vst [vmem:[#allocation2 + $0x80] sm:$0xff] %v6245
        %6262 = vst [vmem:[#allocation2 + $0x88] sm:$0xff] %v6246
        %6263 = vst [vmem:[#allocation2 + $0x90] sm:$0xff] %v6247
        %6264 = vst [vmem:[#allocation2 + $0x98] sm:$0xff] %v6248
        %6265 = vst [vmem:[#allocation2 + $0xa0] sm:$0xff] %v6249
        %6266 = vst [vmem:[#allocation2 + $0xa8] sm:$0xff] %v6250
        %6267 = vst [vmem:[#allocation2 + $0xb0] sm:$0xff] %v6251
        %6268 = vst [vmem:[#allocation2 + $0xb8] sm:$0xff] %v6252
        %6269 = vst [vmem:[#allocation2 + $0xc0] sm:$0xff] %v6253
        %6270 = vst [vmem:[#allocation2 + $0xc8] sm:$0xff] %v6254
        %6271 = vst [vmem:[#allocation2 + $0xd0] sm:$0xff] %v6255
        %6272 = vst [vmem:[#allocation2 + $0xd8] sm:$0xff] %v6256
        %6273 = vst [vmem:[#allocation2 + $0xe0] sm:$0xff] %v6257
        %6274 = vst [vmem:[#allocation2 + $0xe8] sm:$0xff] %v6258
        %6275 = vst [vmem:[#allocation2 + $0xf0] sm:$0xff] %v6259
        %6276 = vst [vmem:[#allocation2 + $0xf8] sm:$0xff] %v6260
        %6277 = vrot.lane.b32.xlu0 %v6057, 15
        %v6278 = vpop.permute.xlu0 %6277
        %6279 = vrot.lane.b32.xlu0 %v6065, 15
        %v6280 = vpop.permute.xlu0 %6279
        %6281 = vrot.lane.b32.xlu0 %v6058, 15
        %v6282 = vpop.permute.xlu0 %6281
        %6283 = vrot.lane.b32.xlu0 %v6066, 15
        %v6284 = vpop.permute.xlu0 %6283
        %6285 = vrot.lane.b32.xlu0 %v6059, 15
        %v6286 = vpop.permute.xlu0 %6285
        %6287 = vrot.lane.b32.xlu0 %v6067, 15
        %v6288 = vpop.permute.xlu0 %6287
        %6289 = vrot.lane.b32.xlu0 %v6060, 15
        %v6290 = vpop.permute.xlu0 %6289
        %6291 = vrot.lane.b32.xlu0 %v6068, 15
        %v6292 = vpop.permute.xlu0 %6291
        %6293 = vrot.lane.b32.xlu0 %v6061, 15
        %v6294 = vpop.permute.xlu0 %6293
        %6295 = vrot.lane.b32.xlu0 %v6069, 15
        %v6296 = vpop.permute.xlu0 %6295
        %6297 = vrot.lane.b32.xlu0 %v6062, 15
        %v6298 = vpop.permute.xlu0 %6297
        %6299 = vrot.lane.b32.xlu0 %v6070, 15
        %v6300 = vpop.permute.xlu0 %6299
        %6301 = vrot.lane.b32.xlu0 %v6063, 15
        %v6302 = vpop.permute.xlu0 %6301
        %6303 = vrot.lane.b32.xlu0 %v6071, 15
        %v6304 = vpop.permute.xlu0 %6303
        %6305 = vrot.lane.b32.xlu0 %v6064, 15
        %v6306 = vpop.permute.xlu0 %6305
        %6307 = vrot.lane.b32.xlu0 %v6072, 15
        %v6308 = vpop.permute.xlu0 %6307
        %v6309 = vsel %vm369, %v6302, %v6306
        %v6310 = vsel %vm369, %v6304, %v6308
        %v6311 = vsel %vm369, %v6298, %v6302
        %v6312 = vsel %vm369, %v6300, %v6304
        %v6313 = vsel %vm369, %v6294, %v6298
        %v6314 = vsel %vm369, %v6296, %v6300
        %v6315 = vsel %vm369, %v6290, %v6294
        %v6316 = vsel %vm369, %v6292, %v6296
        %v6317 = vsel %vm369, %v6286, %v6290
        %v6318 = vsel %vm369, %v6288, %v6292
        %v6319 = vsel %vm369, %v6282, %v6286
        %v6320 = vsel %vm369, %v6284, %v6288
        %v6321 = vsel %vm369, %v6278, %v6282
        %v6322 = vsel %vm369, %v6280, %v6284
        %v6323 = vsel %vm369, %v6306, %v6278
        %v6324 = vsel %vm369, %v6308, %v6280
        %v6325 = vld [vmem:[%s378] ss:$8 sm:$0xf]
        %v6326 = vld [vmem:[%s378] ss:$8 sm:$0xf0]
        %v6327 = vor.u32 %v6325, %v6326
        %v6329 = vlaneseq
        %v6330 = vshrl.u32 %v6329, 7
        %v6331 = vsub.s32 0, %v6330
        %v6332 = vrot.slane %v6327, %v6331
        %v6333 = vlaneseq
        %v6334 = vshrl.u32 %v6333, 7
        %v6335 = vsub.s32 1, %v6334
        %v6336 = vrot.slane %v6327, %v6335
        %v6337 = vlaneseq
        %v6338 = vshrl.u32 %v6337, 7
        %v6339 = vsub.s32 2, %v6338
        %v6340 = vrot.slane %v6327, %v6339
        %v6341 = vlaneseq
        %v6342 = vshrl.u32 %v6341, 7
        %v6343 = vsub.s32 3, %v6342
        %v6344 = vrot.slane %v6327, %v6343
        %v6345 = vlaneseq
        %v6346 = vshrl.u32 %v6345, 7
        %v6347 = vsub.s32 4, %v6346
        %v6348 = vrot.slane %v6327, %v6347
        %v6349 = vlaneseq
        %v6350 = vshrl.u32 %v6349, 7
        %v6351 = vsub.s32 5, %v6350
        %v6352 = vrot.slane %v6327, %v6351
        %v6353 = vlaneseq
        %v6354 = vshrl.u32 %v6353, 7
        %v6355 = vsub.s32 6, %v6354
        %v6356 = vrot.slane %v6327, %v6355
        %v6357 = vlaneseq
        %v6358 = vshrl.u32 %v6357, 7
        %v6359 = vsub.s32 7, %v6358
        %v6360 = vrot.slane %v6327, %v6359
        %v6369 = vmul.f32 %v6323, %v6332
        %v6370 = vmul.f32 %v6321, %v6336
        %v6371 = vmul.f32 %v6319, %v6340
        %v6372 = vmul.f32 %v6317, %v6344
        %v6373 = vmul.f32 %v6315, %v6348
        %v6374 = vmul.f32 %v6313, %v6352
        %v6375 = vmul.f32 %v6311, %v6356
        %v6376 = vmul.f32 %v6309, %v6360
        %v6377 = vmul.f32 %v6324, %v6332
        %v6378 = vmul.f32 %v6322, %v6336
        %v6379 = vmul.f32 %v6320, %v6340
        %v6380 = vmul.f32 %v6318, %v6344
        %v6381 = vmul.f32 %v6316, %v6348
        %v6382 = vmul.f32 %v6314, %v6352
        %v6383 = vmul.f32 %v6312, %v6356
        %v6384 = vmul.f32 %v6310, %v6360
        %6385 = vst [vmem:[#allocation2 + $0x100] sm:$0xff] %v6369
        %6386 = vst [vmem:[#allocation2 + $0x108] sm:$0xff] %v6370
        %6387 = vst [vmem:[#allocation2 + $0x110] sm:$0xff] %v6371
        %6388 = vst [vmem:[#allocation2 + $0x118] sm:$0xff] %v6372
        %6389 = vst [vmem:[#allocation2 + $0x120] sm:$0xff] %v6373
        %6390 = vst [vmem:[#allocation2 + $0x128] sm:$0xff] %v6374
        %6391 = vst [vmem:[#allocation2 + $0x130] sm:$0xff] %v6375
        %6392 = vst [vmem:[#allocation2 + $0x138] sm:$0xff] %v6376
        %6393 = vst [vmem:[#allocation2 + $0x140] sm:$0xff] %v6377
        %6394 = vst [vmem:[#allocation2 + $0x148] sm:$0xff] %v6378
        %6395 = vst [vmem:[#allocation2 + $0x150] sm:$0xff] %v6379
        %6396 = vst [vmem:[#allocation2 + $0x158] sm:$0xff] %v6380
        %6397 = vst [vmem:[#allocation2 + $0x160] sm:$0xff] %v6381
        %6398 = vst [vmem:[#allocation2 + $0x168] sm:$0xff] %v6382
        %6399 = vst [vmem:[#allocation2 + $0x170] sm:$0xff] %v6383
        %6400 = vst [vmem:[#allocation2 + $0x178] sm:$0xff] %v6384
        %6401 = vrot.lane.b32.xlu0 %v6057, 1
        %v6402 = vpop.permute.xlu0 %6401
        %6403 = vrot.lane.b32.xlu0 %v6065, 1
        %v6404 = vpop.permute.xlu0 %6403
        %6405 = vrot.lane.b32.xlu0 %v6058, 1
        %v6406 = vpop.permute.xlu0 %6405
        %6407 = vrot.lane.b32.xlu0 %v6066, 1
        %v6408 = vpop.permute.xlu0 %6407
        %6409 = vrot.lane.b32.xlu0 %v6059, 1
        %v6410 = vpop.permute.xlu0 %6409
        %6411 = vrot.lane.b32.xlu0 %v6067, 1
        %v6412 = vpop.permute.xlu0 %6411
        %6413 = vrot.lane.b32.xlu0 %v6060, 1
        %v6414 = vpop.permute.xlu0 %6413
        %6415 = vrot.lane.b32.xlu0 %v6068, 1
        %v6416 = vpop.permute.xlu0 %6415
        %6417 = vrot.lane.b32.xlu0 %v6061, 1
        %v6418 = vpop.permute.xlu0 %6417
        %6419 = vrot.lane.b32.xlu0 %v6069, 1
        %v6420 = vpop.permute.xlu0 %6419
        %6421 = vrot.lane.b32.xlu0 %v6062, 1
        %v6422 = vpop.permute.xlu0 %6421
        %6423 = vrot.lane.b32.xlu0 %v6070, 1
        %v6424 = vpop.permute.xlu0 %6423
        %6425 = vrot.lane.b32.xlu0 %v6063, 1
        %v6426 = vpop.permute.xlu0 %6425
        %6427 = vrot.lane.b32.xlu0 %v6071, 1
        %v6428 = vpop.permute.xlu0 %6427
        %6429 = vrot.lane.b32.xlu0 %v6064, 1
        %v6430 = vpop.permute.xlu0 %6429
        %6431 = vrot.lane.b32.xlu0 %v6072, 1
        %v6432 = vpop.permute.xlu0 %6431
        %v6433 = vsel %vm455, %v6426, %v6430
        %v6434 = vsel %vm455, %v6428, %v6432
        %v6435 = vsel %vm455, %v6422, %v6426
        %v6436 = vsel %vm455, %v6424, %v6428
        %v6437 = vsel %vm455, %v6418, %v6422
        %v6438 = vsel %vm455, %v6420, %v6424
        %v6439 = vsel %vm455, %v6414, %v6418
        %v6440 = vsel %vm455, %v6416, %v6420
        %v6441 = vsel %vm455, %v6410, %v6414
        %v6442 = vsel %vm455, %v6412, %v6416
        %v6443 = vsel %vm455, %v6406, %v6410
        %v6444 = vsel %vm455, %v6408, %v6412
        %v6445 = vsel %vm455, %v6402, %v6406
        %v6446 = vsel %vm455, %v6404, %v6408
        %v6447 = vsel %vm455, %v6430, %v6402
        %v6448 = vsel %vm455, %v6432, %v6404
        %v6449 = vld [vmem:[%s464] ss:$8 sm:$0xf]
        %v6450 = vld [vmem:[%s464] ss:$8 sm:$0xf0]
        %v6451 = vor.u32 %v6449, %v6450
        %v6453 = vlaneseq
        %v6454 = vshrl.u32 %v6453, 7
        %v6455 = vsub.s32 0, %v6454
        %v6456 = vrot.slane %v6451, %v6455
        %v6457 = vlaneseq
        %v6458 = vshrl.u32 %v6457, 7
        %v6459 = vsub.s32 1, %v6458
        %v6460 = vrot.slane %v6451, %v6459
        %v6461 = vlaneseq
        %v6462 = vshrl.u32 %v6461, 7
        %v6463 = vsub.s32 2, %v6462
        %v6464 = vrot.slane %v6451, %v6463
        %v6465 = vlaneseq
        %v6466 = vshrl.u32 %v6465, 7
        %v6467 = vsub.s32 3, %v6466
        %v6468 = vrot.slane %v6451, %v6467
        %v6469 = vlaneseq
        %v6470 = vshrl.u32 %v6469, 7
        %v6471 = vsub.s32 4, %v6470
        %v6472 = vrot.slane %v6451, %v6471
        %v6473 = vlaneseq
        %v6474 = vshrl.u32 %v6473, 7
        %v6475 = vsub.s32 5, %v6474
        %v6476 = vrot.slane %v6451, %v6475
        %v6477 = vlaneseq
        %v6478 = vshrl.u32 %v6477, 7
        %v6479 = vsub.s32 6, %v6478
        %v6480 = vrot.slane %v6451, %v6479
        %v6481 = vlaneseq
        %v6482 = vshrl.u32 %v6481, 7
        %v6483 = vsub.s32 7, %v6482
        %v6484 = vrot.slane %v6451, %v6483
        %v6493 = vmul.f32 %v6447, %v6456
        %v6494 = vmul.f32 %v6445, %v6460
        %v6495 = vmul.f32 %v6443, %v6464
        %v6496 = vmul.f32 %v6441, %v6468
        %v6497 = vmul.f32 %v6439, %v6472
        %v6498 = vmul.f32 %v6437, %v6476
        %v6499 = vmul.f32 %v6435, %v6480
        %v6500 = vmul.f32 %v6433, %v6484
        %v6501 = vmul.f32 %v6448, %v6456
        %v6502 = vmul.f32 %v6446, %v6460
        %v6503 = vmul.f32 %v6444, %v6464
        %v6504 = vmul.f32 %v6442, %v6468
        %v6505 = vmul.f32 %v6440, %v6472
        %v6506 = vmul.f32 %v6438, %v6476
        %v6507 = vmul.f32 %v6436, %v6480
        %v6508 = vmul.f32 %v6434, %v6484
        %6509 = vst [vmem:[#allocation2 + $0x180] sm:$0xff] %v6493
        %6510 = vst [vmem:[#allocation2 + $0x188] sm:$0xff] %v6494
        %6511 = vst [vmem:[#allocation2 + $0x190] sm:$0xff] %v6495
        %6512 = vst [vmem:[#allocation2 + $0x198] sm:$0xff] %v6496
        %6513 = vst [vmem:[#allocation2 + $0x1a0] sm:$0xff] %v6497
        %6514 = vst [vmem:[#allocation2 + $0x1a8] sm:$0xff] %v6498
        %6515 = vst [vmem:[#allocation2 + $0x1b0] sm:$0xff] %v6499
        %6516 = vst [vmem:[#allocation2 + $0x1b8] sm:$0xff] %v6500
        %6517 = vst [vmem:[#allocation2 + $0x1c0] sm:$0xff] %v6501
        %6518 = vst [vmem:[#allocation2 + $0x1c8] sm:$0xff] %v6502
        %6519 = vst [vmem:[#allocation2 + $0x1d0] sm:$0xff] %v6503
        %6520 = vst [vmem:[#allocation2 + $0x1d8] sm:$0xff] %v6504
        %6521 = vst [vmem:[#allocation2 + $0x1e0] sm:$0xff] %v6505
        %6522 = vst [vmem:[#allocation2 + $0x1e8] sm:$0xff] %v6506
        %6523 = vst [vmem:[#allocation2 + $0x1f0] sm:$0xff] %v6507
        %6524 = vst [vmem:[#allocation2 + $0x1f8] sm:$0xff] %v6508
        %6525 = vst [vmem:[#allocation2 + $0x200] sm:$0xff] %v6057
        %6526 = vst [vmem:[#allocation2 + $0x208] sm:$0xff] %v6058
        %6527 = vst [vmem:[#allocation2 + $0x210] sm:$0xff] %v6059
        %6528 = vst [vmem:[#allocation2 + $0x218] sm:$0xff] %v6060
        %6529 = vst [vmem:[#allocation2 + $0x220] sm:$0xff] %v6061
        %6530 = vst [vmem:[#allocation2 + $0x228] sm:$0xff] %v6062
        %6531 = vst [vmem:[#allocation2 + $0x230] sm:$0xff] %v6063
        %6532 = vst [vmem:[#allocation2 + $0x238] sm:$0xff] %v6064
        %6533 = vst [vmem:[#allocation2 + $0x240] sm:$0xff] %v6065
        %6534 = vst [vmem:[#allocation2 + $0x248] sm:$0xff] %v6066
        %6535 = vst [vmem:[#allocation2 + $0x250] sm:$0xff] %v6067
        %6536 = vst [vmem:[#allocation2 + $0x258] sm:$0xff] %v6068
        %6537 = vst [vmem:[#allocation2 + $0x260] sm:$0xff] %v6069
        %6538 = vst [vmem:[#allocation2 + $0x268] sm:$0xff] %v6070
        %6539 = vst [vmem:[#allocation2 + $0x270] sm:$0xff] %v6071
        %6540 = vst [vmem:[#allocation2 + $0x278] sm:$0xff] %v6072
        %6541 = vrot.lane.b32.xlu0 %v6057, 127
        %v6542 = vpop.permute.xlu0 %6541
        %6543 = vrot.lane.b32.xlu0 %v6065, 127
        %v6544 = vpop.permute.xlu0 %6543
        %6545 = vrot.lane.b32.xlu0 %v6058, 127
        %v6546 = vpop.permute.xlu0 %6545
        %6547 = vrot.lane.b32.xlu0 %v6066, 127
        %v6548 = vpop.permute.xlu0 %6547
        %6549 = vrot.lane.b32.xlu0 %v6059, 127
        %v6550 = vpop.permute.xlu0 %6549
        %6551 = vrot.lane.b32.xlu0 %v6067, 127
        %v6552 = vpop.permute.xlu0 %6551
        %6553 = vrot.lane.b32.xlu0 %v6060, 127
        %v6554 = vpop.permute.xlu0 %6553
        %6555 = vrot.lane.b32.xlu0 %v6068, 127
        %v6556 = vpop.permute.xlu0 %6555
        %6557 = vrot.lane.b32.xlu0 %v6061, 127
        %v6558 = vpop.permute.xlu0 %6557
        %6559 = vrot.lane.b32.xlu0 %v6069, 127
        %v6560 = vpop.permute.xlu0 %6559
        %6561 = vrot.lane.b32.xlu0 %v6062, 127
        %v6562 = vpop.permute.xlu0 %6561
        %6563 = vrot.lane.b32.xlu0 %v6070, 127
        %v6564 = vpop.permute.xlu0 %6563
        %6565 = vrot.lane.b32.xlu0 %v6063, 127
        %v6566 = vpop.permute.xlu0 %6565
        %6567 = vrot.lane.b32.xlu0 %v6071, 127
        %v6568 = vpop.permute.xlu0 %6567
        %6569 = vrot.lane.b32.xlu0 %v6064, 127
        %v6570 = vpop.permute.xlu0 %6569
        %6571 = vrot.lane.b32.xlu0 %v6072, 127
        %v6572 = vpop.permute.xlu0 %6571
        %v6573 = vsel %vm549, %v6566, %v6570
        %v6574 = vsel %vm549, %v6568, %v6572
        %v6575 = vsel %vm549, %v6562, %v6566
        %v6576 = vsel %vm549, %v6564, %v6568
        %v6577 = vsel %vm549, %v6558, %v6562
        %v6578 = vsel %vm549, %v6560, %v6564
        %v6579 = vsel %vm549, %v6554, %v6558
        %v6580 = vsel %vm549, %v6556, %v6560
        %v6581 = vsel %vm549, %v6550, %v6554
        %v6582 = vsel %vm549, %v6552, %v6556
        %v6583 = vsel %vm549, %v6546, %v6550
        %v6584 = vsel %vm549, %v6548, %v6552
        %v6585 = vsel %vm549, %v6542, %v6546
        %v6586 = vsel %vm549, %v6544, %v6548
        %v6587 = vsel %vm549, %v6570, %v6542
        %v6588 = vsel %vm549, %v6572, %v6544
        %v6589 = vld [vmem:[%s558] ss:$8 sm:$0xf]
        %v6590 = vld [vmem:[%s558] ss:$8 sm:$0xf0]
        %v6591 = vor.u32 %v6589, %v6590
        %v6593 = vlaneseq
        %v6594 = vshrl.u32 %v6593, 7
        %v6595 = vsub.s32 0, %v6594
        %v6596 = vrot.slane %v6591, %v6595
        %v6597 = vlaneseq
        %v6598 = vshrl.u32 %v6597, 7
        %v6599 = vsub.s32 1, %v6598
        %v6600 = vrot.slane %v6591, %v6599
        %v6601 = vlaneseq
        %v6602 = vshrl.u32 %v6601, 7
        %v6603 = vsub.s32 2, %v6602
        %v6604 = vrot.slane %v6591, %v6603
        %v6605 = vlaneseq
        %v6606 = vshrl.u32 %v6605, 7
        %v6607 = vsub.s32 3, %v6606
        %v6608 = vrot.slane %v6591, %v6607
        %v6609 = vlaneseq
        %v6610 = vshrl.u32 %v6609, 7
        %v6611 = vsub.s32 4, %v6610
        %v6612 = vrot.slane %v6591, %v6611
        %v6613 = vlaneseq
        %v6614 = vshrl.u32 %v6613, 7
        %v6615 = vsub.s32 5, %v6614
        %v6616 = vrot.slane %v6591, %v6615
        %v6617 = vlaneseq
        %v6618 = vshrl.u32 %v6617, 7
        %v6619 = vsub.s32 6, %v6618
        %v6620 = vrot.slane %v6591, %v6619
        %v6621 = vlaneseq
        %v6622 = vshrl.u32 %v6621, 7
        %v6623 = vsub.s32 7, %v6622
        %v6624 = vrot.slane %v6591, %v6623
        %v6633 = vmul.f32 %v6585, %v6596
        %v6634 = vmul.f32 %v6583, %v6600
        %v6635 = vmul.f32 %v6581, %v6604
        %v6636 = vmul.f32 %v6579, %v6608
        %v6637 = vmul.f32 %v6577, %v6612
        %v6638 = vmul.f32 %v6575, %v6616
        %v6639 = vmul.f32 %v6573, %v6620
        %v6640 = vmul.f32 %v6587, %v6624
        %v6641 = vmul.f32 %v6586, %v6596
        %v6642 = vmul.f32 %v6584, %v6600
        %v6643 = vmul.f32 %v6582, %v6604
        %v6644 = vmul.f32 %v6580, %v6608
        %v6645 = vmul.f32 %v6578, %v6612
        %v6646 = vmul.f32 %v6576, %v6616
        %v6647 = vmul.f32 %v6574, %v6620
        %v6648 = vmul.f32 %v6588, %v6624
        %6649 = vst [vmem:[#allocation2 + $0x280] sm:$0xff] %v6633
        %6650 = vst [vmem:[#allocation2 + $0x288] sm:$0xff] %v6634
        %6651 = vst [vmem:[#allocation2 + $0x290] sm:$0xff] %v6635
        %6652 = vst [vmem:[#allocation2 + $0x298] sm:$0xff] %v6636
        %6653 = vst [vmem:[#allocation2 + $0x2a0] sm:$0xff] %v6637
        %6654 = vst [vmem:[#allocation2 + $0x2a8] sm:$0xff] %v6638
        %6655 = vst [vmem:[#allocation2 + $0x2b0] sm:$0xff] %v6639
        %6656 = vst [vmem:[#allocation2 + $0x2b8] sm:$0xff] %v6640
        %6657 = vst [vmem:[#allocation2 + $0x2c0] sm:$0xff] %v6641
        %6658 = vst [vmem:[#allocation2 + $0x2c8] sm:$0xff] %v6642
        %6659 = vst [vmem:[#allocation2 + $0x2d0] sm:$0xff] %v6643
        %6660 = vst [vmem:[#allocation2 + $0x2d8] sm:$0xff] %v6644
        %6661 = vst [vmem:[#allocation2 + $0x2e0] sm:$0xff] %v6645
        %6662 = vst [vmem:[#allocation2 + $0x2e8] sm:$0xff] %v6646
        %6663 = vst [vmem:[#allocation2 + $0x2f0] sm:$0xff] %v6647
        %6664 = vst [vmem:[#allocation2 + $0x2f8] sm:$0xff] %v6648
        %6665 = vrot.lane.b32.xlu0 %v6057, 113
        %v6666 = vpop.permute.xlu0 %6665
        %6667 = vrot.lane.b32.xlu0 %v6065, 113
        %v6668 = vpop.permute.xlu0 %6667
        %6669 = vrot.lane.b32.xlu0 %v6058, 113
        %v6670 = vpop.permute.xlu0 %6669
        %6671 = vrot.lane.b32.xlu0 %v6066, 113
        %v6672 = vpop.permute.xlu0 %6671
        %6673 = vrot.lane.b32.xlu0 %v6059, 113
        %v6674 = vpop.permute.xlu0 %6673
        %6675 = vrot.lane.b32.xlu0 %v6067, 113
        %v6676 = vpop.permute.xlu0 %6675
        %6677 = vrot.lane.b32.xlu0 %v6060, 113
        %v6678 = vpop.permute.xlu0 %6677
        %6679 = vrot.lane.b32.xlu0 %v6068, 113
        %v6680 = vpop.permute.xlu0 %6679
        %6681 = vrot.lane.b32.xlu0 %v6061, 113
        %v6682 = vpop.permute.xlu0 %6681
        %6683 = vrot.lane.b32.xlu0 %v6069, 113
        %v6684 = vpop.permute.xlu0 %6683
        %6685 = vrot.lane.b32.xlu0 %v6062, 113
        %v6686 = vpop.permute.xlu0 %6685
        %6687 = vrot.lane.b32.xlu0 %v6070, 113
        %v6688 = vpop.permute.xlu0 %6687
        %6689 = vrot.lane.b32.xlu0 %v6063, 113
        %v6690 = vpop.permute.xlu0 %6689
        %6691 = vrot.lane.b32.xlu0 %v6071, 113
        %v6692 = vpop.permute.xlu0 %6691
        %6693 = vrot.lane.b32.xlu0 %v6064, 113
        %v6694 = vpop.permute.xlu0 %6693
        %6695 = vrot.lane.b32.xlu0 %v6072, 113
        %v6696 = vpop.permute.xlu0 %6695
        %v6697 = vsel %vm635, %v6690, %v6694
        %v6698 = vsel %vm635, %v6692, %v6696
        %v6699 = vsel %vm635, %v6686, %v6690
        %v6700 = vsel %vm635, %v6688, %v6692
        %v6701 = vsel %vm635, %v6682, %v6686
        %v6702 = vsel %vm635, %v6684, %v6688
        %v6703 = vsel %vm635, %v6678, %v6682
        %v6704 = vsel %vm635, %v6680, %v6684
        %v6705 = vsel %vm635, %v6674, %v6678
        %v6706 = vsel %vm635, %v6676, %v6680
        %v6707 = vsel %vm635, %v6670, %v6674
        %v6708 = vsel %vm635, %v6672, %v6676
        %v6709 = vsel %vm635, %v6666, %v6670
        %v6710 = vsel %vm635, %v6668, %v6672
        %v6711 = vsel %vm635, %v6694, %v6666
        %v6712 = vsel %vm635, %v6696, %v6668
        %v6713 = vld [vmem:[%s644] ss:$8 sm:$0xf]
        %v6714 = vld [vmem:[%s644] ss:$8 sm:$0xf0]
        %v6715 = vor.u32 %v6713, %v6714
        %v6717 = vlaneseq
        %v6718 = vshrl.u32 %v6717, 7
        %v6719 = vsub.s32 0, %v6718
        %v6720 = vrot.slane %v6715, %v6719
        %v6721 = vlaneseq
        %v6722 = vshrl.u32 %v6721, 7
        %v6723 = vsub.s32 1, %v6722
        %v6724 = vrot.slane %v6715, %v6723
        %v6725 = vlaneseq
        %v6726 = vshrl.u32 %v6725, 7
        %v6727 = vsub.s32 2, %v6726
        %v6728 = vrot.slane %v6715, %v6727
        %v6729 = vlaneseq
        %v6730 = vshrl.u32 %v6729, 7
        %v6731 = vsub.s32 3, %v6730
        %v6732 = vrot.slane %v6715, %v6731
        %v6733 = vlaneseq
        %v6734 = vshrl.u32 %v6733, 7
        %v6735 = vsub.s32 4, %v6734
        %v6736 = vrot.slane %v6715, %v6735
        %v6737 = vlaneseq
        %v6738 = vshrl.u32 %v6737, 7
        %v6739 = vsub.s32 5, %v6738
        %v6740 = vrot.slane %v6715, %v6739
        %v6741 = vlaneseq
        %v6742 = vshrl.u32 %v6741, 7
        %v6743 = vsub.s32 6, %v6742
        %v6744 = vrot.slane %v6715, %v6743
        %v6745 = vlaneseq
        %v6746 = vshrl.u32 %v6745, 7
        %v6747 = vsub.s32 7, %v6746
        %v6748 = vrot.slane %v6715, %v6747
        %v6757 = vmul.f32 %v6709, %v6720
        %v6758 = vmul.f32 %v6707, %v6724
        %v6759 = vmul.f32 %v6705, %v6728
        %v6760 = vmul.f32 %v6703, %v6732
        %v6761 = vmul.f32 %v6701, %v6736
        %v6762 = vmul.f32 %v6699, %v6740
        %v6763 = vmul.f32 %v6697, %v6744
        %v6764 = vmul.f32 %v6711, %v6748
        %v6765 = vmul.f32 %v6710, %v6720
        %v6766 = vmul.f32 %v6708, %v6724
        %v6767 = vmul.f32 %v6706, %v6728
        %v6768 = vmul.f32 %v6704, %v6732
        %v6769 = vmul.f32 %v6702, %v6736
        %v6770 = vmul.f32 %v6700, %v6740
        %v6771 = vmul.f32 %v6698, %v6744
        %v6772 = vmul.f32 %v6712, %v6748
        %6773 = vst [vmem:[#allocation2 + $0x300] sm:$0xff] %v6757
        %6774 = vst [vmem:[#allocation2 + $0x308] sm:$0xff] %v6758
        %6775 = vst [vmem:[#allocation2 + $0x310] sm:$0xff] %v6759
        %6776 = vst [vmem:[#allocation2 + $0x318] sm:$0xff] %v6760
        %6777 = vst [vmem:[#allocation2 + $0x320] sm:$0xff] %v6761
        %6778 = vst [vmem:[#allocation2 + $0x328] sm:$0xff] %v6762
        %6779 = vst [vmem:[#allocation2 + $0x330] sm:$0xff] %v6763
        %6780 = vst [vmem:[#allocation2 + $0x338] sm:$0xff] %v6764
        %6781 = vst [vmem:[#allocation2 + $0x340] sm:$0xff] %v6765
        %6782 = vst [vmem:[#allocation2 + $0x348] sm:$0xff] %v6766
        %6783 = vst [vmem:[#allocation2 + $0x350] sm:$0xff] %v6767
        %6784 = vst [vmem:[#allocation2 + $0x358] sm:$0xff] %v6768
        %6785 = vst [vmem:[#allocation2 + $0x360] sm:$0xff] %v6769
        %6786 = vst [vmem:[#allocation2 + $0x368] sm:$0xff] %v6770
        %6787 = vst [vmem:[#allocation2 + $0x370] sm:$0xff] %v6771
        %6788 = vst [vmem:[#allocation2 + $0x378] sm:$0xff] %v6772
        %6789 = vrot.lane.b32.xlu0 %v6057, 112
        %v6790 = vpop.permute.xlu0 %6789
        %6791 = vrot.lane.b32.xlu0 %v6065, 112
        %v6792 = vpop.permute.xlu0 %6791
        %6793 = vrot.lane.b32.xlu0 %v6058, 112
        %v6794 = vpop.permute.xlu0 %6793
        %6795 = vrot.lane.b32.xlu0 %v6066, 112
        %v6796 = vpop.permute.xlu0 %6795
        %6797 = vrot.lane.b32.xlu0 %v6059, 112
        %v6798 = vpop.permute.xlu0 %6797
        %6799 = vrot.lane.b32.xlu0 %v6067, 112
        %v6800 = vpop.permute.xlu0 %6799
        %6801 = vrot.lane.b32.xlu0 %v6060, 112
        %v6802 = vpop.permute.xlu0 %6801
        %6803 = vrot.lane.b32.xlu0 %v6068, 112
        %v6804 = vpop.permute.xlu0 %6803
        %6805 = vrot.lane.b32.xlu0 %v6061, 112
        %v6806 = vpop.permute.xlu0 %6805
        %6807 = vrot.lane.b32.xlu0 %v6069, 112
        %v6808 = vpop.permute.xlu0 %6807
        %6809 = vrot.lane.b32.xlu0 %v6062, 112
        %v6810 = vpop.permute.xlu0 %6809
        %6811 = vrot.lane.b32.xlu0 %v6070, 112
        %v6812 = vpop.permute.xlu0 %6811
        %6813 = vrot.lane.b32.xlu0 %v6063, 112
        %v6814 = vpop.permute.xlu0 %6813
        %6815 = vrot.lane.b32.xlu0 %v6071, 112
        %v6816 = vpop.permute.xlu0 %6815
        %6817 = vrot.lane.b32.xlu0 %v6064, 112
        %v6818 = vpop.permute.xlu0 %6817
        %6819 = vrot.lane.b32.xlu0 %v6072, 112
        %v6820 = vpop.permute.xlu0 %6819
        %v6821 = vsel %vm721, %v6814, %v6818
        %v6822 = vsel %vm721, %v6816, %v6820
        %v6823 = vsel %vm721, %v6810, %v6814
        %v6824 = vsel %vm721, %v6812, %v6816
        %v6825 = vsel %vm721, %v6806, %v6810
        %v6826 = vsel %vm721, %v6808, %v6812
        %v6827 = vsel %vm721, %v6802, %v6806
        %v6828 = vsel %vm721, %v6804, %v6808
        %v6829 = vsel %vm721, %v6798, %v6802
        %v6830 = vsel %vm721, %v6800, %v6804
        %v6831 = vsel %vm721, %v6794, %v6798
        %v6832 = vsel %vm721, %v6796, %v6800
        %v6833 = vsel %vm721, %v6790, %v6794
        %v6834 = vsel %vm721, %v6792, %v6796
        %v6835 = vsel %vm721, %v6818, %v6790
        %v6836 = vsel %vm721, %v6820, %v6792
        %v6837 = vld [vmem:[%s730] ss:$8 sm:$0xf]
        %v6838 = vld [vmem:[%s730] ss:$8 sm:$0xf0]
        %v6839 = vor.u32 %v6837, %v6838
        %v6841 = vlaneseq
        %v6842 = vshrl.u32 %v6841, 7
        %v6843 = vsub.s32 0, %v6842
        %v6844 = vrot.slane %v6839, %v6843
        %v6845 = vlaneseq
        %v6846 = vshrl.u32 %v6845, 7
        %v6847 = vsub.s32 1, %v6846
        %v6848 = vrot.slane %v6839, %v6847
        %v6849 = vlaneseq
        %v6850 = vshrl.u32 %v6849, 7
        %v6851 = vsub.s32 2, %v6850
        %v6852 = vrot.slane %v6839, %v6851
        %v6853 = vlaneseq
        %v6854 = vshrl.u32 %v6853, 7
        %v6855 = vsub.s32 3, %v6854
        %v6856 = vrot.slane %v6839, %v6855
        %v6857 = vlaneseq
        %v6858 = vshrl.u32 %v6857, 7
        %v6859 = vsub.s32 4, %v6858
        %v6860 = vrot.slane %v6839, %v6859
        %v6861 = vlaneseq
        %v6862 = vshrl.u32 %v6861, 7
        %v6863 = vsub.s32 5, %v6862
        %v6864 = vrot.slane %v6839, %v6863
        %v6865 = vlaneseq
        %v6866 = vshrl.u32 %v6865, 7
        %v6867 = vsub.s32 6, %v6866
        %v6868 = vrot.slane %v6839, %v6867
        %v6869 = vlaneseq
        %v6870 = vshrl.u32 %v6869, 7
        %v6871 = vsub.s32 7, %v6870
        %v6872 = vrot.slane %v6839, %v6871
        %v6881 = vmul.f32 %v6833, %v6844
        %v6882 = vmul.f32 %v6831, %v6848
        %v6883 = vmul.f32 %v6829, %v6852
        %v6884 = vmul.f32 %v6827, %v6856
        %v6885 = vmul.f32 %v6825, %v6860
        %v6886 = vmul.f32 %v6823, %v6864
        %v6887 = vmul.f32 %v6821, %v6868
        %v6888 = vmul.f32 %v6835, %v6872
        %v6889 = vmul.f32 %v6834, %v6844
        %v6890 = vmul.f32 %v6832, %v6848
        %v6891 = vmul.f32 %v6830, %v6852
        %v6892 = vmul.f32 %v6828, %v6856
        %v6893 = vmul.f32 %v6826, %v6860
        %v6894 = vmul.f32 %v6824, %v6864
        %v6895 = vmul.f32 %v6822, %v6868
        %v6896 = vmul.f32 %v6836, %v6872
        %6897 = vst [vmem:[#allocation2 + $0x380] sm:$0xff] %v6881
        %6898 = vst [vmem:[#allocation2 + $0x388] sm:$0xff] %v6882
        %6899 = vst [vmem:[#allocation2 + $0x390] sm:$0xff] %v6883
        %6900 = vst [vmem:[#allocation2 + $0x398] sm:$0xff] %v6884
        %6901 = vst [vmem:[#allocation2 + $0x3a0] sm:$0xff] %v6885
        %6902 = vst [vmem:[#allocation2 + $0x3a8] sm:$0xff] %v6886
        %6903 = vst [vmem:[#allocation2 + $0x3b0] sm:$0xff] %v6887
        %6904 = vst [vmem:[#allocation2 + $0x3b8] sm:$0xff] %v6888
        %6905 = vst [vmem:[#allocation2 + $0x3c0] sm:$0xff] %v6889
        %6906 = vst [vmem:[#allocation2 + $0x3c8] sm:$0xff] %v6890
        %6907 = vst [vmem:[#allocation2 + $0x3d0] sm:$0xff] %v6891
        %6908 = vst [vmem:[#allocation2 + $0x3d8] sm:$0xff] %v6892
        %6909 = vst [vmem:[#allocation2 + $0x3e0] sm:$0xff] %v6893
        %6910 = vst [vmem:[#allocation2 + $0x3e8] sm:$0xff] %v6894
        %6911 = vst [vmem:[#allocation2 + $0x3f0] sm:$0xff] %v6895
        %6912 = vst [vmem:[#allocation2 + $0x3f8] sm:$0xff] %v6896
        %6913 = vrot.lane.b32.xlu0 %v6057, 111
        %v6914 = vpop.permute.xlu0 %6913
        %6915 = vrot.lane.b32.xlu0 %v6065, 111
        %v6916 = vpop.permute.xlu0 %6915
        %6917 = vrot.lane.b32.xlu0 %v6058, 111
        %v6918 = vpop.permute.xlu0 %6917
        %6919 = vrot.lane.b32.xlu0 %v6066, 111
        %v6920 = vpop.permute.xlu0 %6919
        %6921 = vrot.lane.b32.xlu0 %v6059, 111
        %v6922 = vpop.permute.xlu0 %6921
        %6923 = vrot.lane.b32.xlu0 %v6067, 111
        %v6924 = vpop.permute.xlu0 %6923
        %6925 = vrot.lane.b32.xlu0 %v6060, 111
        %v6926 = vpop.permute.xlu0 %6925
        %6927 = vrot.lane.b32.xlu0 %v6068, 111
        %v6928 = vpop.permute.xlu0 %6927
        %6929 = vrot.lane.b32.xlu0 %v6061, 111
        %v6930 = vpop.permute.xlu0 %6929
        %6931 = vrot.lane.b32.xlu0 %v6069, 111
        %v6932 = vpop.permute.xlu0 %6931
        %6933 = vrot.lane.b32.xlu0 %v6062, 111
        %v6934 = vpop.permute.xlu0 %6933
        %6935 = vrot.lane.b32.xlu0 %v6070, 111
        %v6936 = vpop.permute.xlu0 %6935
        %6937 = vrot.lane.b32.xlu0 %v6063, 111
        %v6938 = vpop.permute.xlu0 %6937
        %6939 = vrot.lane.b32.xlu0 %v6071, 111
        %v6940 = vpop.permute.xlu0 %6939
        %6941 = vrot.lane.b32.xlu0 %v6064, 111
        %v6942 = vpop.permute.xlu0 %6941
        %6943 = vrot.lane.b32.xlu0 %v6072, 111
        %v6944 = vpop.permute.xlu0 %6943
        %v6945 = vsel %vm807, %v6938, %v6942
        %v6946 = vsel %vm807, %v6940, %v6944
        %v6947 = vsel %vm807, %v6934, %v6938
        %v6948 = vsel %vm807, %v6936, %v6940
        %v6949 = vsel %vm807, %v6930, %v6934
        %v6950 = vsel %vm807, %v6932, %v6936
        %v6951 = vsel %vm807, %v6926, %v6930
        %v6952 = vsel %vm807, %v6928, %v6932
        %v6953 = vsel %vm807, %v6922, %v6926
        %v6954 = vsel %vm807, %v6924, %v6928
        %v6955 = vsel %vm807, %v6918, %v6922
        %v6956 = vsel %vm807, %v6920, %v6924
        %v6957 = vsel %vm807, %v6914, %v6918
        %v6958 = vsel %vm807, %v6916, %v6920
        %v6959 = vsel %vm807, %v6942, %v6914
        %v6960 = vsel %vm807, %v6944, %v6916
        %v6961 = vld [vmem:[%s816] ss:$8 sm:$0xf]
        %v6962 = vld [vmem:[%s816] ss:$8 sm:$0xf0]
        %v6963 = vor.u32 %v6961, %v6962
        %v6965 = vlaneseq
        %v6966 = vshrl.u32 %v6965, 7
        %v6967 = vsub.s32 0, %v6966
        %v6968 = vrot.slane %v6963, %v6967
        %v6969 = vlaneseq
        %v6970 = vshrl.u32 %v6969, 7
        %v6971 = vsub.s32 1, %v6970
        %v6972 = vrot.slane %v6963, %v6971
        %v6973 = vlaneseq
        %v6974 = vshrl.u32 %v6973, 7
        %v6975 = vsub.s32 2, %v6974
        %v6976 = vrot.slane %v6963, %v6975
        %v6977 = vlaneseq
        %v6978 = vshrl.u32 %v6977, 7
        %v6979 = vsub.s32 3, %v6978
        %v6980 = vrot.slane %v6963, %v6979
        %v6981 = vlaneseq
        %v6982 = vshrl.u32 %v6981, 7
        %v6983 = vsub.s32 4, %v6982
        %v6984 = vrot.slane %v6963, %v6983
        %v6985 = vlaneseq
        %v6986 = vshrl.u32 %v6985, 7
        %v6987 = vsub.s32 5, %v6986
        %v6988 = vrot.slane %v6963, %v6987
        %v6989 = vlaneseq
        %v6990 = vshrl.u32 %v6989, 7
        %v6991 = vsub.s32 6, %v6990
        %v6992 = vrot.slane %v6963, %v6991
        %v6993 = vlaneseq
        %v6994 = vshrl.u32 %v6993, 7
        %v6995 = vsub.s32 7, %v6994
        %v6996 = vrot.slane %v6963, %v6995
        %v7005 = vmul.f32 %v6957, %v6968
        %v7006 = vmul.f32 %v6955, %v6972
        %v7007 = vmul.f32 %v6953, %v6976
        %v7008 = vmul.f32 %v6951, %v6980
        %v7009 = vmul.f32 %v6949, %v6984
        %v7010 = vmul.f32 %v6947, %v6988
        %v7011 = vmul.f32 %v6945, %v6992
        %v7012 = vmul.f32 %v6959, %v6996
        %v7013 = vmul.f32 %v6958, %v6968
        %v7014 = vmul.f32 %v6956, %v6972
        %v7015 = vmul.f32 %v6954, %v6976
        %v7016 = vmul.f32 %v6952, %v6980
        %v7017 = vmul.f32 %v6950, %v6984
        %v7018 = vmul.f32 %v6948, %v6988
        %v7019 = vmul.f32 %v6946, %v6992
        %v7020 = vmul.f32 %v6960, %v6996
        %7021 = vst [vmem:[#allocation2 + $0x400] sm:$0xff] %v7005
        %7022 = vst [vmem:[#allocation2 + $0x408] sm:$0xff] %v7006
        %7023 = vst [vmem:[#allocation2 + $0x410] sm:$0xff] %v7007
        %7024 = vst [vmem:[#allocation2 + $0x418] sm:$0xff] %v7008
        %7025 = vst [vmem:[#allocation2 + $0x420] sm:$0xff] %v7009
        %7026 = vst [vmem:[#allocation2 + $0x428] sm:$0xff] %v7010
        %7027 = vst [vmem:[#allocation2 + $0x430] sm:$0xff] %v7011
        %7028 = vst [vmem:[#allocation2 + $0x438] sm:$0xff] %v7012
        %7029 = vst [vmem:[#allocation2 + $0x440] sm:$0xff] %v7013
        %7030 = vst [vmem:[#allocation2 + $0x448] sm:$0xff] %v7014
        %7031 = vst [vmem:[#allocation2 + $0x450] sm:$0xff] %v7015
        %7032 = vst [vmem:[#allocation2 + $0x458] sm:$0xff] %v7016
        %7033 = vst [vmem:[#allocation2 + $0x460] sm:$0xff] %v7017
        %7034 = vst [vmem:[#allocation2 + $0x468] sm:$0xff] %v7018
        %7035 = vst [vmem:[#allocation2 + $0x470] sm:$0xff] %v7019
        %7036 = vst [vmem:[#allocation2 + $0x478] sm:$0xff] %v7020
        %v7037 = vld [vmem:[%s877] ss:$8 sm:$0xf]
        %v7038 = vld [vmem:[%s877] ss:$8 sm:$0xf0]
        %v7039 = vor.u32 %v7037, %v7038
        %s7040 = scalar_lea.vmem [#allocation2], 1152
        %7041 = vst [vmem:[%s7040] ss:$8 sm:$0xf] %v7039
        %7042 = vst [vmem:[%s7040] ss:$8 sm:$0xf0] %v7039
        %v7043 = vld [vmem:[%s2 + $0x140] sm:$0x7]
        %v7044 = vld [vmem:[%s2 + $0x148] sm:$0x7]
        %v7045 = vld [vmem:[#allocation2] sm:$0xff]
        %v7046 = vld [vmem:[#allocation2 + $0x8] sm:$0xff]
        %v7047 = vld [vmem:[#allocation2 + $0x10] sm:$0xff]
        %v7048 = vld [vmem:[#allocation2 + $0x18] sm:$0xff]
        %v7049 = vld [vmem:[#allocation2 + $0x20] sm:$0xff]
        %v7050 = vld [vmem:[#allocation2 + $0x28] sm:$0xff]
        %v7051 = vld [vmem:[#allocation2 + $0x30] sm:$0xff]
        %v7052 = vld [vmem:[#allocation2 + $0x38] sm:$0xff]
        %v7053 = vld [vmem:[#allocation2 + $0x40] sm:$0xff]
        %v7054 = vld [vmem:[#allocation2 + $0x48] sm:$0xff]
        %v7055 = vld [vmem:[#allocation2 + $0x50] sm:$0xff]
        %v7056 = vld [vmem:[#allocation2 + $0x58] sm:$0xff]
        %v7057 = vld [vmem:[#allocation2 + $0x60] sm:$0xff]
        %v7058 = vld [vmem:[#allocation2 + $0x68] sm:$0xff]
        %v7059 = vld [vmem:[#allocation2 + $0x70] sm:$0xff]
        %v7060 = vld [vmem:[#allocation2 + $0x78] sm:$0xff]
        %v7061 = vld [vmem:[#allocation2 + $0x80] sm:$0xff]
        %v7062 = vld [vmem:[#allocation2 + $0x88] sm:$0xff]
        %v7063 = vld [vmem:[#allocation2 + $0x90] sm:$0xff]
        %v7064 = vld [vmem:[#allocation2 + $0x98] sm:$0xff]
        %v7065 = vld [vmem:[#allocation2 + $0xa0] sm:$0xff]
        %v7066 = vld [vmem:[#allocation2 + $0xa8] sm:$0xff]
        %v7067 = vld [vmem:[#allocation2 + $0xb0] sm:$0xff]
        %v7068 = vld [vmem:[#allocation2 + $0xb8] sm:$0xff]
        %v7069 = vld [vmem:[#allocation2 + $0xc0] sm:$0xff]
        %v7070 = vld [vmem:[#allocation2 + $0xc8] sm:$0xff]
        %v7071 = vld [vmem:[#allocation2 + $0xd0] sm:$0xff]
        %v7072 = vld [vmem:[#allocation2 + $0xd8] sm:$0xff]
        %v7073 = vld [vmem:[#allocation2 + $0xe0] sm:$0xff]
        %v7074 = vld [vmem:[#allocation2 + $0xe8] sm:$0xff]
        %v7075 = vld [vmem:[#allocation2 + $0xf0] sm:$0xff]
        %v7076 = vld [vmem:[#allocation2 + $0xf8] sm:$0xff]
        %v7077 = vld [vmem:[#allocation2 + $0x100] sm:$0xff]
        %v7078 = vld [vmem:[#allocation2 + $0x108] sm:$0xff]
        %v7079 = vld [vmem:[#allocation2 + $0x110] sm:$0xff]
        %v7080 = vld [vmem:[#allocation2 + $0x118] sm:$0xff]
        %v7081 = vld [vmem:[#allocation2 + $0x120] sm:$0xff]
        %v7082 = vld [vmem:[#allocation2 + $0x128] sm:$0xff]
        %v7083 = vld [vmem:[#allocation2 + $0x130] sm:$0xff]
        %v7084 = vld [vmem:[#allocation2 + $0x138] sm:$0xff]
        %v7085 = vld [vmem:[#allocation2 + $0x140] sm:$0xff]
        %v7086 = vld [vmem:[#allocation2 + $0x148] sm:$0xff]
        %v7087 = vld [vmem:[#allocation2 + $0x150] sm:$0xff]
        %v7088 = vld [vmem:[#allocation2 + $0x158] sm:$0xff]
        %v7089 = vld [vmem:[#allocation2 + $0x160] sm:$0xff]
        %v7090 = vld [vmem:[#allocation2 + $0x168] sm:$0xff]
        %v7091 = vld [vmem:[#allocation2 + $0x170] sm:$0xff]
        %v7092 = vld [vmem:[#allocation2 + $0x178] sm:$0xff]
        %v7093 = vld [vmem:[#allocation2 + $0x180] sm:$0xff]
        %v7094 = vld [vmem:[#allocation2 + $0x188] sm:$0xff]
        %v7095 = vld [vmem:[#allocation2 + $0x190] sm:$0xff]
        %v7096 = vld [vmem:[#allocation2 + $0x198] sm:$0xff]
        %v7097 = vld [vmem:[#allocation2 + $0x1a0] sm:$0xff]
        %v7098 = vld [vmem:[#allocation2 + $0x1a8] sm:$0xff]
        %v7099 = vld [vmem:[#allocation2 + $0x1b0] sm:$0xff]
        %v7100 = vld [vmem:[#allocation2 + $0x1b8] sm:$0xff]
        %v7101 = vld [vmem:[#allocation2 + $0x1c0] sm:$0xff]
        %v7102 = vld [vmem:[#allocation2 + $0x1c8] sm:$0xff]
        %v7103 = vld [vmem:[#allocation2 + $0x1d0] sm:$0xff]
        %v7104 = vld [vmem:[#allocation2 + $0x1d8] sm:$0xff]
        %v7105 = vld [vmem:[#allocation2 + $0x1e0] sm:$0xff]
        %v7106 = vld [vmem:[#allocation2 + $0x1e8] sm:$0xff]
        %v7107 = vld [vmem:[#allocation2 + $0x1f0] sm:$0xff]
        %v7108 = vld [vmem:[#allocation2 + $0x1f8] sm:$0xff]
        %v7109 = vld [vmem:[#allocation2 + $0x200] sm:$0xff]
        %v7110 = vld [vmem:[#allocation2 + $0x208] sm:$0xff]
        %v7111 = vld [vmem:[#allocation2 + $0x210] sm:$0xff]
        %v7112 = vld [vmem:[#allocation2 + $0x218] sm:$0xff]
        %v7113 = vld [vmem:[#allocation2 + $0x220] sm:$0xff]
        %v7114 = vld [vmem:[#allocation2 + $0x228] sm:$0xff]
        %v7115 = vld [vmem:[#allocation2 + $0x230] sm:$0xff]
        %v7116 = vld [vmem:[#allocation2 + $0x238] sm:$0xff]
        %v7117 = vld [vmem:[#allocation2 + $0x240] sm:$0xff]
        %v7118 = vld [vmem:[#allocation2 + $0x248] sm:$0xff]
        %v7119 = vld [vmem:[#allocation2 + $0x250] sm:$0xff]
        %v7120 = vld [vmem:[#allocation2 + $0x258] sm:$0xff]
        %v7121 = vld [vmem:[#allocation2 + $0x260] sm:$0xff]
        %v7122 = vld [vmem:[#allocation2 + $0x268] sm:$0xff]
        %v7123 = vld [vmem:[#allocation2 + $0x270] sm:$0xff]
        %v7124 = vld [vmem:[#allocation2 + $0x278] sm:$0xff]
        %v7125 = vld [vmem:[#allocation2 + $0x280] sm:$0xff]
        %v7126 = vld [vmem:[#allocation2 + $0x288] sm:$0xff]
        %v7127 = vld [vmem:[#allocation2 + $0x290] sm:$0xff]
        %v7128 = vld [vmem:[#allocation2 + $0x298] sm:$0xff]
        %v7129 = vld [vmem:[#allocation2 + $0x2a0] sm:$0xff]
        %v7130 = vld [vmem:[#allocation2 + $0x2a8] sm:$0xff]
        %v7131 = vld [vmem:[#allocation2 + $0x2b0] sm:$0xff]
        %v7132 = vld [vmem:[#allocation2 + $0x2b8] sm:$0xff]
        %v7133 = vld [vmem:[#allocation2 + $0x2c0] sm:$0xff]
        %v7134 = vld [vmem:[#allocation2 + $0x2c8] sm:$0xff]
        %v7135 = vld [vmem:[#allocation2 + $0x2d0] sm:$0xff]
        %v7136 = vld [vmem:[#allocation2 + $0x2d8] sm:$0xff]
        %v7137 = vld [vmem:[#allocation2 + $0x2e0] sm:$0xff]
        %v7138 = vld [vmem:[#allocation2 + $0x2e8] sm:$0xff]
        %v7139 = vld [vmem:[#allocation2 + $0x2f0] sm:$0xff]
        %v7140 = vld [vmem:[#allocation2 + $0x2f8] sm:$0xff]
        %v7141 = vld [vmem:[#allocation2 + $0x300] sm:$0xff]
        %v7142 = vld [vmem:[#allocation2 + $0x308] sm:$0xff]
        %v7143 = vld [vmem:[#allocation2 + $0x310] sm:$0xff]
        %v7144 = vld [vmem:[#allocation2 + $0x318] sm:$0xff]
        %v7145 = vld [vmem:[#allocation2 + $0x320] sm:$0xff]
        %v7146 = vld [vmem:[#allocation2 + $0x328] sm:$0xff]
        %v7147 = vld [vmem:[#allocation2 + $0x330] sm:$0xff]
        %v7148 = vld [vmem:[#allocation2 + $0x338] sm:$0xff]
        %v7149 = vld [vmem:[#allocation2 + $0x340] sm:$0xff]
        %v7150 = vld [vmem:[#allocation2 + $0x348] sm:$0xff]
        %v7151 = vld [vmem:[#allocation2 + $0x350] sm:$0xff]
        %v7152 = vld [vmem:[#allocation2 + $0x358] sm:$0xff]
        %v7153 = vld [vmem:[#allocation2 + $0x360] sm:$0xff]
        %v7154 = vld [vmem:[#allocation2 + $0x368] sm:$0xff]
        %v7155 = vld [vmem:[#allocation2 + $0x370] sm:$0xff]
        %v7156 = vld [vmem:[#allocation2 + $0x378] sm:$0xff]
        %v7157 = vld [vmem:[#allocation2 + $0x380] sm:$0xff]
        %v7158 = vld [vmem:[#allocation2 + $0x388] sm:$0xff]
        %v7159 = vld [vmem:[#allocation2 + $0x390] sm:$0xff]
        %v7160 = vld [vmem:[#allocation2 + $0x398] sm:$0xff]
        %v7161 = vld [vmem:[#allocation2 + $0x3a0] sm:$0xff]
        %v7162 = vld [vmem:[#allocation2 + $0x3a8] sm:$0xff]
        %v7163 = vld [vmem:[#allocation2 + $0x3b0] sm:$0xff]
        %v7164 = vld [vmem:[#allocation2 + $0x3b8] sm:$0xff]
        %v7165 = vld [vmem:[#allocation2 + $0x3c0] sm:$0xff]
        %v7166 = vld [vmem:[#allocation2 + $0x3c8] sm:$0xff]
        %v7167 = vld [vmem:[#allocation2 + $0x3d0] sm:$0xff]
        %v7168 = vld [vmem:[#allocation2 + $0x3d8] sm:$0xff]
        %v7169 = vld [vmem:[#allocation2 + $0x3e0] sm:$0xff]
        %v7170 = vld [vmem:[#allocation2 + $0x3e8] sm:$0xff]
        %v7171 = vld [vmem:[#allocation2 + $0x3f0] sm:$0xff]
        %v7172 = vld [vmem:[#allocation2 + $0x3f8] sm:$0xff]
        %v7173 = vld [vmem:[#allocation2 + $0x400] sm:$0xff]
        %v7174 = vld [vmem:[#allocation2 + $0x408] sm:$0xff]
        %v7175 = vld [vmem:[#allocation2 + $0x410] sm:$0xff]
        %v7176 = vld [vmem:[#allocation2 + $0x418] sm:$0xff]
        %v7177 = vld [vmem:[#allocation2 + $0x420] sm:$0xff]
        %v7178 = vld [vmem:[#allocation2 + $0x428] sm:$0xff]
        %v7179 = vld [vmem:[#allocation2 + $0x430] sm:$0xff]
        %v7180 = vld [vmem:[#allocation2 + $0x438] sm:$0xff]
        %v7181 = vld [vmem:[#allocation2 + $0x440] sm:$0xff]
        %v7182 = vld [vmem:[#allocation2 + $0x448] sm:$0xff]
        %v7183 = vld [vmem:[#allocation2 + $0x450] sm:$0xff]
        %v7184 = vld [vmem:[#allocation2 + $0x458] sm:$0xff]
        %v7185 = vld [vmem:[#allocation2 + $0x460] sm:$0xff]
        %v7186 = vld [vmem:[#allocation2 + $0x468] sm:$0xff]
        %v7187 = vld [vmem:[#allocation2 + $0x470] sm:$0xff]
        %v7188 = vld [vmem:[#allocation2 + $0x478] sm:$0xff]
        %v7189 = vld [vmem:[#allocation2 + $0x480] sm:$0x1]
        %v7190 = vld [vmem:[#allocation2 + $0x488] sm:$0x1]
        %v7191 = vld [vmem:[#allocation2 + $0x490] sm:$0x1]
        %v7192 = vld [vmem:[#allocation2 + $0x498] sm:$0x1]
        %v7193 = vld [vmem:[#allocation2 + $0x4a0] sm:$0x1]
        %v7194 = vld [vmem:[#allocation2 + $0x4a8] sm:$0x1]
        %v7195 = vld [vmem:[#allocation2 + $0x4b0] sm:$0x1]
        %v7196 = vld [vmem:[#allocation2 + $0x4b8] sm:$0x1]
        %v7197 = vld [vmem:[%s169] sm:$0x7]
        %v7198 = vld [vmem:[%s169 + $0x8] sm:$0x7]
        %v7199 = vld [vmem:[%s169 + $0x10] sm:$0x7]
        %v7200 = vld [vmem:[%s169 + $0x18] sm:$0x7]
        %v7201 = vld [vmem:[%s169 + $0x20] sm:$0x7]
        %v7202 = vld [vmem:[%s169 + $0x28] sm:$0x7]
        %v7203 = vld [vmem:[%s169 + $0x30] sm:$0x7]
        %v7204 = vld [vmem:[%s169 + $0x38] sm:$0x7]
        %vm7205 = vcmask 138240
        %v7207 = vsel %vm7205, %v7044, 0
        %v7210 = vsel %vm973, %v7189, 0
        %v7213 = vsel %vm973, %v7190, 0
        %v7216 = vsel %vm973, %v7191, 0
        %v7219 = vsel %vm973, %v7192, 0
        %v7222 = vsel %vm973, %v7193, 0
        %v7225 = vsel %vm973, %v7194, 0
        %v7228 = vsel %vm973, %v7195, 0
        %v7231 = vsel %vm973, %v7196, 0
        %7233 = vmatprep.subr.mxu0 %v7046
        %7234 = vmatpush1.msra.mxu0 %v7045
        %7235 = vmatprep.subr.mxu0 %v7054
        %7236 = vmatpush1.msra.mxu0 %v7053
        %7237 = vmatprep.subr.mxu0 %v7062
        %7238 = vmatpush1.msra.mxu0 %v7061
        %7239 = vmatprep.subr.mxu0 %v7070
        %7240 = vmatpush1.msra.mxu0 %v7069
        %7241 = vmatprep.subr.mxu0 %v7078
        %7242 = vmatpush1.msra.mxu0 %v7077
        %7243 = vmatprep.subr.mxu0 %v7086
        %7244 = vmatpush1.msra.mxu0 %v7085
        %7245 = vmatprep.subr.mxu0 %v7094
        %7246 = vmatpush1.msra.mxu0 %v7093
        %7247 = vmatprep.subr.mxu0 %v7102
        %7248 = vmatpush1.msra.mxu0 %v7101
        %7249 = vmatprep.subr.mxu0 %v7110
        %7250 = vmatpush1.msra.mxu0 %v7109
        %7251 = vmatprep.subr.mxu0 %v7118
        %7252 = vmatpush1.msra.mxu0 %v7117
        %7253 = vmatprep.subr.mxu0 %v7126
        %7254 = vmatpush1.msra.mxu0 %v7125
        %7255 = vmatprep.subr.mxu0 %v7134
        %7256 = vmatpush1.msra.mxu0 %v7133
        %7257 = vmatprep.subr.mxu0 %v7142
        %7258 = vmatpush1.msra.mxu0 %v7141
        %7259 = vmatprep.subr.mxu0 %v7150
        %7260 = vmatpush1.msra.mxu0 %v7149
        %7261 = vmatprep.subr.mxu0 %v7158
        %7262 = vmatpush1.msra.mxu0 %v7157
        %7263 = vmatprep.subr.mxu0 %v7166
        %7264 = vmatpush1.msra.mxu0 %v7165
        %7265 = vmatprep.subr.mxu0 %v7174
        %7266 = vmatpush1.msra.mxu0 %v7173
        %7267 = vmatprep.subr.mxu0 %v7182
        %7268 = vmatpush1.msra.mxu0 %v7181
        %7269 = vmatprep.subr.mxu0 %v7213
        %7270 = vmatpush1.msra.mxu0 %v7210
        %7271 = vmatprep.subr.mxu0 0.0
        %7272 = vmatpush1.msra.mxu0 0.0
        %7273 = vmatprep.subr.mxu0 0.0
        %7274 = vmatpush1.msra.mxu0 0.0
        %7275 = vmatprep.subr.mxu0 0.0
        %7276 = vmatpush1.msra.mxu0 0.0
        %7277 = vmatprep.subr.mxu0 0.0
        %7278 = vmatpush1.msra.mxu0 0.0
        %7279 = vmatprep.subr.mxu0 0.0
        %7280 = vmatpush1.msra.mxu0 0.0
        %7281 = vmatprep.subr.mxu0 0.0
        %7282 = vmatpush1.msra.mxu0 0.0
        %7283 = vmatprep.subr.mxu0 0.0
        %7284 = vmatpush1.msra.mxu0 0.0
        %7285 = vmatprep.subr.mxu0 0.0
        %7286 = vmatpush1.msra.mxu0 0.0
        %7287 = vmatprep.subr.mxu0 0.0
        %7288 = vmatpush1.msra.mxu0 0.0
        %7289 = vmatprep.subr.mxu0 0.0
        %7290 = vmatpush1.msra.mxu0 0.0
        %7291 = vmatprep.subr.mxu0 0.0
        %7292 = vmatpush1.msra.mxu0 0.0
        %7293 = vmatprep.subr.mxu0 0.0
        %7294 = vmatpush1.msra.mxu0 0.0
        %7295 = vmatprep.subr.mxu0 0.0
        %7296 = vmatpush1.msra.mxu0 0.0
        %7297 = vmatprep.mubr.f32.mxu0 %v7207
        %7298 = vmatmul.mubr.f32.gmra.mrb[0].mxu0 %v7043
        %v7299 = vpop.f32.mrb[0].mxu0
        %v7300 = vadd.f32 %v7197, %v7299
        %v7301 = vpop.f32.mrb[0].mxu0
        %v7302 = vadd.f32 %v7198, %v7301
        %7303 = vdwg.mxu0
        %7304 = vmatprep.subr.mxu0 %v7048
        %7305 = vmatpush1.msra.mxu0 %v7047
        %7306 = vmatprep.subr.mxu0 %v7056
        %7307 = vmatpush1.msra.mxu0 %v7055
        %7308 = vmatprep.subr.mxu0 %v7064
        %7309 = vmatpush1.msra.mxu0 %v7063
        %7310 = vmatprep.subr.mxu0 %v7072
        %7311 = vmatpush1.msra.mxu0 %v7071
        %7312 = vmatprep.subr.mxu0 %v7080
        %7313 = vmatpush1.msra.mxu0 %v7079
        %7314 = vmatprep.subr.mxu0 %v7088
        %7315 = vmatpush1.msra.mxu0 %v7087
        %7316 = vmatprep.subr.mxu0 %v7096
        %7317 = vmatpush1.msra.mxu0 %v7095
        %7318 = vmatprep.subr.mxu0 %v7104
        %7319 = vmatpush1.msra.mxu0 %v7103
        %7320 = vmatprep.subr.mxu0 %v7112
        %7321 = vmatpush1.msra.mxu0 %v7111
        %7322 = vmatprep.subr.mxu0 %v7120
        %7323 = vmatpush1.msra.mxu0 %v7119
        %7324 = vmatprep.subr.mxu0 %v7128
        %7325 = vmatpush1.msra.mxu0 %v7127
        %7326 = vmatprep.subr.mxu0 %v7136
        %7327 = vmatpush1.msra.mxu0 %v7135
        %7328 = vmatprep.subr.mxu0 %v7144
        %7329 = vmatpush1.msra.mxu0 %v7143
        %7330 = vmatprep.subr.mxu0 %v7152
        %7331 = vmatpush1.msra.mxu0 %v7151
        %7332 = vmatprep.subr.mxu0 %v7160
        %7333 = vmatpush1.msra.mxu0 %v7159
        %7334 = vmatprep.subr.mxu0 %v7168
        %7335 = vmatpush1.msra.mxu0 %v7167
        %7336 = vmatprep.subr.mxu0 %v7176
        %7337 = vmatpush1.msra.mxu0 %v7175
        %7338 = vmatprep.subr.mxu0 %v7184
        %7339 = vmatpush1.msra.mxu0 %v7183
        %7340 = vmatprep.subr.mxu0 %v7219
        %7341 = vmatpush1.msra.mxu0 %v7216
        %7342 = vmatprep.subr.mxu0 0.0
        %7343 = vmatpush1.msra.mxu0 0.0
        %7344 = vmatprep.subr.mxu0 0.0
        %7345 = vmatpush1.msra.mxu0 0.0
        %7346 = vmatprep.subr.mxu0 0.0
        %7347 = vmatpush1.msra.mxu0 0.0
        %7348 = vmatprep.subr.mxu0 0.0
        %7349 = vmatpush1.msra.mxu0 0.0
        %7350 = vmatprep.subr.mxu0 0.0
        %7351 = vmatpush1.msra.mxu0 0.0
        %7352 = vmatprep.subr.mxu0 0.0
        %7353 = vmatpush1.msra.mxu0 0.0
        %7354 = vmatprep.subr.mxu0 0.0
        %7355 = vmatpush1.msra.mxu0 0.0
        %7356 = vmatprep.subr.mxu0 0.0
        %7357 = vmatpush1.msra.mxu0 0.0
        %7358 = vmatprep.subr.mxu0 0.0
        %7359 = vmatpush1.msra.mxu0 0.0
        %7360 = vmatprep.subr.mxu0 0.0
        %7361 = vmatpush1.msra.mxu0 0.0
        %7362 = vmatprep.subr.mxu0 0.0
        %7363 = vmatpush1.msra.mxu0 0.0
        %7364 = vmatprep.subr.mxu0 0.0
        %7365 = vmatpush1.msra.mxu0 0.0
        %7366 = vmatprep.subr.mxu0 0.0
        %7367 = vmatpush1.msra.mxu0 0.0
        %7368 = vmatprep.mubr.f32.mxu0 %v7207
        %7369 = vmatmul.mubr.f32.gmra.mrb[0].mxu0 %v7043
        %v7370 = vpop.f32.mrb[0].mxu0
        %v7371 = vadd.f32 %v7199, %v7370
        %v7372 = vpop.f32.mrb[0].mxu0
        %v7373 = vadd.f32 %v7200, %v7372
        %7374 = vdwg.mxu0
        %7375 = vmatprep.subr.mxu0 %v7050
        %7376 = vmatpush1.msra.mxu0 %v7049
        %7377 = vmatprep.subr.mxu0 %v7058
        %7378 = vmatpush1.msra.mxu0 %v7057
        %7379 = vmatprep.subr.mxu0 %v7066
        %7380 = vmatpush1.msra.mxu0 %v7065
        %7381 = vmatprep.subr.mxu0 %v7074
        %7382 = vmatpush1.msra.mxu0 %v7073
        %7383 = vmatprep.subr.mxu0 %v7082
        %7384 = vmatpush1.msra.mxu0 %v7081
        %7385 = vmatprep.subr.mxu0 %v7090
        %7386 = vmatpush1.msra.mxu0 %v7089
        %7387 = vmatprep.subr.mxu0 %v7098
        %7388 = vmatpush1.msra.mxu0 %v7097
        %7389 = vmatprep.subr.mxu0 %v7106
        %7390 = vmatpush1.msra.mxu0 %v7105
        %7391 = vmatprep.subr.mxu0 %v7114
        %7392 = vmatpush1.msra.mxu0 %v7113
        %7393 = vmatprep.subr.mxu0 %v7122
        %7394 = vmatpush1.msra.mxu0 %v7121
        %7395 = vmatprep.subr.mxu0 %v7130
        %7396 = vmatpush1.msra.mxu0 %v7129
        %7397 = vmatprep.subr.mxu0 %v7138
        %7398 = vmatpush1.msra.mxu0 %v7137
        %7399 = vmatprep.subr.mxu0 %v7146
        %7400 = vmatpush1.msra.mxu0 %v7145
        %7401 = vmatprep.subr.mxu0 %v7154
        %7402 = vmatpush1.msra.mxu0 %v7153
        %7403 = vmatprep.subr.mxu0 %v7162
        %7404 = vmatpush1.msra.mxu0 %v7161
        %7405 = vmatprep.subr.mxu0 %v7170
        %7406 = vmatpush1.msra.mxu0 %v7169
        %7407 = vmatprep.subr.mxu0 %v7178
        %7408 = vmatpush1.msra.mxu0 %v7177
        %7409 = vmatprep.subr.mxu0 %v7186
        %7410 = vmatpush1.msra.mxu0 %v7185
        %7411 = vmatprep.subr.mxu0 %v7225
        %7412 = vmatpush1.msra.mxu0 %v7222
        %7413 = vmatprep.subr.mxu0 0.0
        %7414 = vmatpush1.msra.mxu0 0.0
        %7415 = vmatprep.subr.mxu0 0.0
        %7416 = vmatpush1.msra.mxu0 0.0
        %7417 = vmatprep.subr.mxu0 0.0
        %7418 = vmatpush1.msra.mxu0 0.0
        %7419 = vmatprep.subr.mxu0 0.0
        %7420 = vmatpush1.msra.mxu0 0.0
        %7421 = vmatprep.subr.mxu0 0.0
        %7422 = vmatpush1.msra.mxu0 0.0
        %7423 = vmatprep.subr.mxu0 0.0
        %7424 = vmatpush1.msra.mxu0 0.0
        %7425 = vmatprep.subr.mxu0 0.0
        %7426 = vmatpush1.msra.mxu0 0.0
        %7427 = vmatprep.subr.mxu0 0.0
        %7428 = vmatpush1.msra.mxu0 0.0
        %7429 = vmatprep.subr.mxu0 0.0
        %7430 = vmatpush1.msra.mxu0 0.0
        %7431 = vmatprep.subr.mxu0 0.0
        %7432 = vmatpush1.msra.mxu0 0.0
        %7433 = vmatprep.subr.mxu0 0.0
        %7434 = vmatpush1.msra.mxu0 0.0
        %7435 = vmatprep.subr.mxu0 0.0
        %7436 = vmatpush1.msra.mxu0 0.0
        %7437 = vmatprep.subr.mxu0 0.0
        %7438 = vmatpush1.msra.mxu0 0.0
        %7439 = vmatprep.mubr.f32.mxu0 %v7207
        %7440 = vmatmul.mubr.f32.gmra.mrb[0].mxu0 %v7043
        %v7441 = vpop.f32.mrb[0].mxu0
        %v7442 = vadd.f32 %v7201, %v7441
        %v7443 = vpop.f32.mrb[0].mxu0
        %v7444 = vadd.f32 %v7202, %v7443
        %7445 = vdwg.mxu0
        %7446 = vmatprep.subr.mxu0 %v7052
        %7447 = vmatpush1.msra.mxu0 %v7051
        %7448 = vmatprep.subr.mxu0 %v7060
        %7449 = vmatpush1.msra.mxu0 %v7059
        %7450 = vmatprep.subr.mxu0 %v7068
        %7451 = vmatpush1.msra.mxu0 %v7067
        %7452 = vmatprep.subr.mxu0 %v7076
        %7453 = vmatpush1.msra.mxu0 %v7075
        %7454 = vmatprep.subr.mxu0 %v7084
        %7455 = vmatpush1.msra.mxu0 %v7083
        %7456 = vmatprep.subr.mxu0 %v7092
        %7457 = vmatpush1.msra.mxu0 %v7091
        %7458 = vmatprep.subr.mxu0 %v7100
        %7459 = vmatpush1.msra.mxu0 %v7099
        %7460 = vmatprep.subr.mxu0 %v7108
        %7461 = vmatpush1.msra.mxu0 %v7107
        %7462 = vmatprep.subr.mxu0 %v7116
        %7463 = vmatpush1.msra.mxu0 %v7115
        %7464 = vmatprep.subr.mxu0 %v7124
        %7465 = vmatpush1.msra.mxu0 %v7123
        %7466 = vmatprep.subr.mxu0 %v7132
        %7467 = vmatpush1.msra.mxu0 %v7131
        %7468 = vmatprep.subr.mxu0 %v7140
        %7469 = vmatpush1.msra.mxu0 %v7139
        %7470 = vmatprep.subr.mxu0 %v7148
        %7471 = vmatpush1.msra.mxu0 %v7147
        %7472 = vmatprep.subr.mxu0 %v7156
        %7473 = vmatpush1.msra.mxu0 %v7155
        %7474 = vmatprep.subr.mxu0 %v7164
        %7475 = vmatpush1.msra.mxu0 %v7163
        %7476 = vmatprep.subr.mxu0 %v7172
        %7477 = vmatpush1.msra.mxu0 %v7171
        %7478 = vmatprep.subr.mxu0 %v7180
        %7479 = vmatpush1.msra.mxu0 %v7179
        %7480 = vmatprep.subr.mxu0 %v7188
        %7481 = vmatpush1.msra.mxu0 %v7187
        %7482 = vmatprep.subr.mxu0 %v7231
        %7483 = vmatpush1.msra.mxu0 %v7228
        %7484 = vmatprep.subr.mxu0 0.0
        %7485 = vmatpush1.msra.mxu0 0.0
        %7486 = vmatprep.subr.mxu0 0.0
        %7487 = vmatpush1.msra.mxu0 0.0
        %7488 = vmatprep.subr.mxu0 0.0
        %7489 = vmatpush1.msra.mxu0 0.0
        %7490 = vmatprep.subr.mxu0 0.0
        %7491 = vmatpush1.msra.mxu0 0.0
        %7492 = vmatprep.subr.mxu0 0.0
        %7493 = vmatpush1.msra.mxu0 0.0
        %7494 = vmatprep.subr.mxu0 0.0
        %7495 = vmatpush1.msra.mxu0 0.0
        %7496 = vmatprep.subr.mxu0 0.0
        %7497 = vmatpush1.msra.mxu0 0.0
        %7498 = vmatprep.subr.mxu0 0.0
        %7499 = vmatpush1.msra.mxu0 0.0
        %7500 = vmatprep.subr.mxu0 0.0
        %7501 = vmatpush1.msra.mxu0 0.0
        %7502 = vmatprep.subr.mxu0 0.0
        %7503 = vmatpush1.msra.mxu0 0.0
        %7504 = vmatprep.subr.mxu0 0.0
        %7505 = vmatpush1.msra.mxu0 0.0
        %7506 = vmatprep.subr.mxu0 0.0
        %7507 = vmatpush1.msra.mxu0 0.0
        %7508 = vmatprep.subr.mxu0 0.0
        %7509 = vmatpush1.msra.mxu0 0.0
        %7510 = vmatprep.mubr.f32.mxu0 %v7207
        %7511 = vmatmul.mubr.f32.gmra.mrb[0].mxu0 %v7043
        %v7512 = vpop.f32.mrb[0].mxu0
        %v7513 = vadd.f32 %v7203, %v7512
        %v7514 = vpop.f32.mrb[0].mxu0
        %v7515 = vadd.f32 %v7204, %v7514
        %7516 = vdwg.mxu0
        %v7525 = vcombine.low %v7300, %v7302
        %v7526 = vcombine.low %v7371, %v7373
        %v7527 = vcombine.low %v7442, %v7444
        %v7528 = vcombine.low %v7513, %v7515
        %7533 = vst [vmem:[%s164] sm:$0x77] %v7525
        %7534 = vst [vmem:[%s164 + $0x8] sm:$0x77] %v7526
        %7535 = vst [vmem:[%s164 + $0x10] sm:$0x77] %v7527
        %7536 = vst [vmem:[%s164 + $0x18] sm:$0x77] %v7528
        %s7537 = sand.u32 %s93, 1
        %s7538 = scalar_lea.sflag [#allocation4], %s7537
        %s7539 = sand.u32 %s93, 1
        %s7540 = smul.addr %s7539, 32
        %s7541 = scalar_lea.vmem [#allocation3], %s7540
        // Predicated region
        $region33: #{tpu_custom_call.1} parent=31 // pred_check
          %p7542 = pneg %p103
        $region34: #{tpu_custom_call.1} parent=31 // pred_check_branch
          %7544 = sbr.rel (%p7542) target = $region36
        $region35: #{tpu_custom_call.1} parent=31 // pred_region
          %s7545 = smul.u32 8, %s17
          %s7547 = ssub.s32 512, 512
          %7548 = vsyncadd %s7538, %s7547
          %s7549 = smul.addr %s7545, 64
          %s7550 = scalar_lea.hbm %s3, %s7549
          %s7552 = sshll.u32 %s7541, 4
          %s7553 = int_to_ptr.vmem [resolvable:$true] %s7552
          %7555 = dma.vmem_to_hbm [thread:$0]  %s7553, 512, %s7550, %s7538
        $region36: #{tpu_custom_call.1} parent=31 // pred_fallthru
          _
      $region32: #{tpu_custom_call.1} parent=5 // pred_fallthru
        _
      %p7556 = scmp.le.s32.totalorder 2, %s12
      // Predicated region
      $region37: #{tpu_custom_call.1} parent=5 // pred_check
        %p7557 = pneg %p7556
      $region38: #{tpu_custom_call.1} parent=5 // pred_check_branch
        %7559 = sbr.rel (%p7557) target = $region40
      $region39: #{tpu_custom_call.1} parent=5 // pred_region
        %s7560 = ssub.s32 %s12, 2
        // Predicated region
        $region41: #{tpu_custom_call.1} parent=39 // pred_check
          %p7561 = pneg %p109
        $region42: #{tpu_custom_call.1} parent=39 // pred_check_branch
          %7563 = sbr.rel (%p7561) target = $region44
        $region43: #{tpu_custom_call.1} parent=39 // pred_region
          %s7564 = sand.u32 %s94, 1
          %s7565 = scalar_lea.sflag [#allocation4], %s7564
          %s7566 = sand.u32 %s94, 1
          %s7567 = smul.addr %s7566, 32
          %s7568 = scalar_lea.vmem [#allocation3], %s7567
          %7569 = dma.done %s7565, 512
        $region44: #{tpu_custom_call.1} parent=39 // pred_fallthru
          _
      $region40: #{tpu_custom_call.1} parent=5 // pred_fallthru
        _
    $region6: #{tpu_custom_call.1} parent=1 // loop_footer
      %s16 = sadd.s32 1, %s12
    $region7: #{tpu_custom_call.1} parent=1 // loop_footer_branch
      %11 = sbr.rel target = $region3
    $region8: #{tpu_custom_call.1} parent=1 // loop_exit
      _
    %7570 = vsyncpa [#allocation4], 1
    %s7571 = scalar_lea.sflag [#allocation4], 1
    %7572 = vsyncpa %s7571, 1

</llo_original>
